<compile_context>
chip_gen: v7x
topology: tpu7x:2x2x1
jax: 0.10.0
libtpu: 0.0.40
codegen_flags: <defaults>
</compile_context>

<pallas_src>
import math

import jax
import jax.numpy as jnp
from jax.experimental import pallas as pl
from jax.experimental.pallas import tpu as pltpu

EPS = 1e-5
LANE = 128
TILE_M = 512          # row tile for the (M, K) @ (K, Cpad) conv matmuls


# ------------------------------ small helpers -------------------------------

def _round_up(x, m):
    return (x + m - 1) // m * m


def _pick_tile(m):
    """Pad M and pick a row tile that divides the padded M."""
    if m <= TILE_M:
        mp = _round_up(m, 8)
        return mp, mp
    mp = _round_up(m, TILE_M)
    return mp, TILE_M


# --------------------------- fused conv+BN kernel ----------------------------

def _make_fused_kernel(tm, m_pad, m_true, c_pad, c_tot, relu, dual, has_res, has_head):
    """Kernel: streamed matmul over M tiles into a VMEM-resident y scratch,
    then (last grid step) batch stats -> scale/shift -> BN apply
    [+ residual] [+ ReLU] [+ split downsample half] [+ avgpool & linear head]."""
    inv_m = 1.0 / float(m_true)
    pad_rows = float(m_pad - m_true)          # zero rows appended to patches

    def kernel(*refs):
        it = iter(refs)
        patch_ref = next(it)
        w_ref = next(it)
        gb_ref = next(it)                     # (2, c_tot): row0 gamma, row1 beta
        res_ref = next(it) if has_res else None
        if has_head:
            pool_ref = next(it)               # (N, m_pad) avg-pool matrix
            lw_ref = next(it)                 # (c_pad, cls_pad)
            lb_ref = next(it)                 # (1, cls_pad)
        out_ref = next(it)                    # (m_pad, c_pad) bf16 activation
        ds_ref = next(it) if dual else None   # (m_pad, c_tot - c_pad) f32
        logits_ref = next(it) if has_head else None
        y_scr = next(it)                      # (m_pad, c_tot) f32 scratch

        i = pl.program_id(0)

        # MXU: bf16 x bf16 -> f32 accumulate for this M tile.
        y = jnp.dot(patch_ref[...], w_ref[...], preferred_element_type=jnp.float32)
        if m_pad == tm:                       # single-tile case (always true here)
            y_scr[...] = y
        else:
            off = pl.multiple_of(i * tm, tm)
            y_scr[pl.ds(off, tm), :] = y

        @pl.when(i == pl.num_programs(0) - 1)
        def _tail():
            yf = y_scr[...]                                       # (m_pad, c_tot)
            # Training-mode BatchNorm batch stats over the true M rows.
            mean = jnp.sum(yf, axis=0, keepdims=True) * inv_m
            d = yf - mean
            csum = jnp.sum(d * d, axis=0, keepdims=True)
            # exact correction: zero pad rows each contribute mean^2 to csum
            var = jnp.maximum((csum - pad_rows * mean * mean) * inv_m, 0.0)
            scale = gb_ref[0:1, :] * jax.lax.rsqrt(var + EPS)     # EUP
            shift = gb_ref[1:2, :] - mean * scale
            z = yf * scale + shift

            if dual:
                # left half: conv1 branch (+ReLU); right half: downsample branch
                z1 = z[:, :c_pad]
                act = jnp.maximum(z1, 0.0) if relu else z1
                out_ref[...] = act.astype(out_ref.dtype)
                ds_ref[...] = z[:, c_pad:].astype(ds_ref.dtype)
            else:
                if has_res:
                    z = z + res_ref[...].astype(jnp.float32)
                act = jnp.maximum(z, 0.0) if relu else z
                out_ref[...] = act.astype(out_ref.dtype)
                if has_head:
                    # global avg-pool expressed as a tiny matmul, then Linear
                    pooled = jnp.dot(pool_ref[...], act,
                                     preferred_element_type=jnp.float32)
                    logits_ref[...] = (jnp.dot(pooled, lw_ref[...],
                                               preferred_element_type=jnp.float32)
                                       + lb_ref[...])

    return kernel


def _fused_conv_call(patches, wmat, gb, *, m_true, c_pad, tm, relu,
                     residual=None, head=None):
    """patches: bf16 (m_pad, k_pad); wmat: bf16 (k_pad, c_tot); gb: f32 (2, c_tot)."""
    m_pad, k_pad = patches.shape
    c_tot = wmat.shape[1]
    dual = c_tot > c_pad
    has_res = residual is not None
    has_head = head is not None

    in_specs = [pl.BlockSpec((tm, k_pad), lambda i: (i, 0)),       # pipelined
                pl.BlockSpec((k_pad, c_tot), lambda i: (0, 0)),
                pl.BlockSpec((2, c_tot), lambda i: (0, 0))]
    args = [patches, wmat, gb]
    if has_res:
        in_specs.append(pl.BlockSpec(residual.shape, lambda i: (0, 0)))
        args.append(residual)
    if has_head:
        pool, lw, lb = head
        for a in (pool, lw, lb):
            in_specs.append(pl.BlockSpec(a.shape, lambda i: (0, 0)))
            args.append(a)

    out_shape = [jax.ShapeDtypeStruct((m_pad, c_pad), jnp.bfloat16)]
    out_specs = [pl.BlockSpec((m_pad, c_pad), lambda i: (0, 0))]
    if dual:
        out_shape.append(jax.ShapeDtypeStruct((m_pad, c_tot - c_pad), jnp.float32))
        out_specs.append(pl.BlockSpec((m_pad, c_tot - c_pad), lambda i: (0, 0)))
    if has_head:
        pool, lw, _ = head
        out_shape.append(jax.ShapeDtypeStruct((pool.shape[0], lw.shape[1]), jnp.float32))
        out_specs.append(pl.BlockSpec((pool.shape[0], lw.shape[1]), lambda i: (0, 0)))

    kernel = _make_fused_kernel(tm, m_pad, m_true, c_pad, c_tot,
                                relu, dual, has_res, has_head)
    return pl.pallas_call(
        kernel,
        out_shape=tuple(out_shape),
        grid=(m_pad // tm,),
        in_specs=in_specs,
        out_specs=tuple(out_specs),
        scratch_shapes=[pltpu.VMEM((m_pad, c_tot), jnp.float32)],
        compiler_params=pltpu.CompilerParams(dimension_semantics=("arbitrary",)),
    )(*args)


# ------------------------------ conv glue -----------------------------------

def _im2col(x, c_true, kh, kw, stride, pad):
    """NHWC (possibly channel-padded) -> bf16 (N*Ho*Wo, kh*kw*c_true) patches.
    TODO(synk): fuse this tap gather into the conv kernel to avoid the HBM
    materialization of the kh*kw-expanded patch matrix."""
    x = x[..., :c_true]
    n, h, w, _ = x.shape
    xp = jnp.pad(x, ((0, 0), (pad, pad), (pad, pad), (0, 0)))
    ho = (h + 2 * pad - kh) // stride + 1
    wo = (w + 2 * pad - kw) // stride + 1
    taps = []
    for i in range(kh):
        for j in range(kw):
            taps.append(xp[:, i:i + stride * ho:stride, j:j + stride * wo:stride, :])
    patches = taps[0] if len(taps) == 1 else jnp.concatenate(taps, axis=-1)
    return patches.reshape(n * ho * wo, kh * kw * c_true).astype(jnp.bfloat16), (n, ho, wo)


def _conv_bn_fused(x, w_hwio, gamma, beta, *, stride, relu=True,
                   ds_params=None, residual=None, head=None):
    """One fused pallas_call: conv (+ optional fused 1x1 downsample columns),
    BN batch stats + apply, optional residual add, ReLU, optional avgpool+linear head.
    Returns (activation NHWC bf16 channel-padded, downsample residual or None,
    logits or None)."""
    kh, kw, cin, cout = w_hwio.shape
    pad = (kh - 1) // 2
    patches, (n, ho, wo) = _im2col(x, cin, kh, kw, stride, pad)
    m, k = patches.shape
    m_pad, tm = _pick_tile(m)
    k_pad = _round_up(k, LANE)
    if (m_pad, k_pad) != (m, k):                      # zero pad: no stat pollution
        patches = jnp.pad(patches, ((0, m_pad - m), (0, k_pad - k)))

    c_pad = _round_up(cout, LANE)
    w1 = jnp.pad(w_hwio.reshape(k, cout).astype(jnp.float32),
                 ((0, k_pad - k), (0, c_pad - cout)))
    g1 = jnp.pad(gamma, (0, c_pad - cout))
    b1 = jnp.pad(beta, (0, c_pad - cout))

    if ds_params is not None:
        # Fuse the 1x1 stride-s downsample conv as extra output columns whose
        # only nonzero K rows are the center tap of the 3x3 patch.
        dw, dg, db = ds_params
        cds = dw.shape[-1]
        cd_pad = _round_up(cds, LANE)
        center = (kh // 2) * kw + (kw // 2)
        wd = jnp.zeros((k_pad, cd_pad), jnp.float32)
        wd = wd.at[center * cin:(center + 1) * cin, :cds].set(dw.reshape(cin, cds))
        wmat = jnp.concatenate([w1, wd], axis=1)
        gvec = jnp.concatenate([g1, jnp.pad(dg, (0, cd_pad - cds))])
        bvec = jnp.concatenate([b1, jnp.pad(db, (0, cd_pad - cds))])
    else:
        wmat, gvec, bvec = w1, g1, b1
    wmat = wmat.astype(jnp.bfloat16)
    gb = jnp.stack([gvec, bvec]).astype(jnp.float32)

    res_arr = None
    if residual is not None:
        res_arr = residual
        if res_arr.shape[0] != m_pad:
            res_arr = jnp.pad(res_arr, ((0, m_pad - res_arr.shape[0]), (0, 0)))

    head_args = None
    if head is not None:
        lin_w, lin_b = head
        c_real, classes = lin_w.shape
        cls_pad = _round_up(classes, LANE)
        lw = jnp.pad(lin_w, ((0, c_pad - c_real), (0, cls_pad - classes)))
        lb = jnp.pad(lin_b, (0, cls_pad - classes)).reshape(1, cls_pad)
        samp = jnp.arange(m_pad) // (ho * wo)          # row -> sample id
        pool = (samp[None, :] == jnp.arange(n)[:, None]).astype(jnp.float32)
        pool = pool / float(ho * wo)
        head_args = (pool, lw, lb)

    outs = list(_fused_conv_call(patches, wmat, gb, m_true=m, c_pad=c_pad, tm=tm,
                                 relu=relu, residual=res_arr, head=head_args))
    act = outs.pop(0)[:m].reshape(n, ho, wo, c_pad)
    ds = outs.pop(0)[:m] if ds_params is not None else None
    logits = outs.pop(0) if head is not None else None
    return act, ds, logits


def _basic_block(x, blk, stride, head=None):
    if 'dw' in blk:
        # conv1 + downsample fused into one 256-column matmul; both BN'd in-kernel.
        h1, ds, _ = _conv_bn_fused(x, blk['w1'], blk['g1'], blk['b1'],
                                   stride=stride, relu=True,
                                   ds_params=(blk['dw'], blk['dg'], blk['db']))
        residual = ds                                   # f32, already BN'd, no ReLU
    else:
        h1, _, _ = _conv_bn_fused(x, blk['w1'], blk['g1'], blk['b1'],
                                  stride=stride, relu=True)
        residual = x.reshape(-1, x.shape[-1])           # identity (bf16, channel-padded)
    # conv2 + BN + residual add + ReLU (+ optional fused classifier head)
    out, _, logits = _conv_bn_fused(h1, blk['w2'], blk['g2'], blk['b2'],
                                    stride=1, relu=True,
                                    residual=residual, head=head)
    return out, logits


# --------------------------- parameters & forward ---------------------------

WIDTHS = [16, 32, 64, 128]          # width_per_group=16, BasicBlock, layers=[1,1,1,1]
STRIDES = [1, 2, 2, 2]
CHANNELS = 3
CLASSES = 10


def init_params(key):
    keys = iter(jax.random.split(key, 64))

    def conv_w(kh, kw, cin, cout):
        fan_out = kh * kw * cout                     # kaiming_normal_, mode='fan_out'
        std = math.sqrt(2.0 / fan_out)
        return std * jax.random.normal(next(keys), (kh, kw, cin, cout), jnp.float32)

    params = {
        'stem_w': conv_w(3, 3, CHANNELS, WIDTHS[0]),
        'stem_g': jnp.ones((WIDTHS[0],), jnp.float32),
        'stem_b': jnp.zeros((WIDTHS[0],), jnp.float32),
        'blocks': [],
    }
    inplanes = WIDTHS[0]
    for planes, stride in zip(WIDTHS, STRIDES):
        blk = {
            'w1': conv_w(3, 3, inplanes, planes),
            'g1': jnp.ones((planes,), jnp.float32),
            'b1': jnp.zeros((planes,), jnp.float32),
            'w2': conv_w(3, 3, planes, planes),
            'g2': jnp.ones((planes,), jnp.float32),
            'b2': jnp.zeros((planes,), jnp.float32),
        }
        if stride != 1 or inplanes != planes:        # downsample='B': 1x1 conv + BN
            blk['dw'] = conv_w(1, 1, inplanes, planes)
            blk['dg'] = jnp.ones((planes,), jnp.float32)
            blk['db'] = jnp.zeros((planes,), jnp.float32)
        params['blocks'].append(blk)
        inplanes = planes

    bound = 1.0 / math.sqrt(inplanes)                # torch.nn.Linear default init
    params['lin_w'] = jax.random.uniform(next(keys), (inplanes, CLASSES), jnp.float32,
                                         -bound, bound)
    params['lin_b'] = jax.random.uniform(next(keys), (CLASSES,), jnp.float32,
                                         -bound, bound)
    return params


def resnet_forward(x_nchw, params):
    x = jnp.transpose(x_nchw, (0, 2, 3, 1)).astype(jnp.float32)   # NCHW -> NHWC
    # CIFAR stem: conv3x3 s1 + BN + ReLU (one fused kernel)
    x, _, _ = _conv_bn_fused(x, params['stem_w'], params['stem_g'], params['stem_b'],
                             stride=1, relu=True)
    # residual stages (one BasicBlock each); the classifier head is fused into
    # the last block's conv2 kernel.
    logits = None
    last = len(params['blocks']) - 1
    for bi, (blk, stride) in enumerate(zip(params['blocks'], STRIDES)):
        head = (params['lin_w'], params['lin_b']) if bi == last else None
        x, logits = _basic_block(x, blk, stride, head=head)
    return logits[:, :CLASSES]


# ---------------------------------- main ------------------------------------

if __name__ == "__main__":
    key = jax.random.PRNGKey(0)
    k_x, k_p = jax.random.split(key)
    x = jax.random.normal(k_x, (2, CHANNELS, 16, 16), jnp.float32)   # NCHW like torch
    params = init_params(k_p)

    fwd = jax.jit(resnet_forward)
    logits = jax.block_until_ready(fwd(x, params))

    assert logits.shape == (2, CLASSES), logits.shape
    assert bool(jnp.all(jnp.isfinite(logits)))
    print("KERNEL_OK")
</pallas_src>

<mosaic_0001>
module attributes {stable_mosaic.version = 11 : i64} {
  func.func @kernel(%arg0: i32, %arg1: memref<512x128xbf16, #tpu.memory_space<vmem>>, %arg2: memref<128x128xbf16, #tpu.memory_space<vmem>>, %arg3: memref<2x128xf32, #tpu.memory_space<vmem>>, %arg4: memref<512x128xbf16, #tpu.memory_space<vmem>>, %arg5: memref<512x128xf32, #tpu.memory_space<vmem>>) attributes {dimension_semantics = [#tpu.dimension_semantics<arbitrary>], iteration_bounds = array<i64: 1>, scalar_prefetch = 0 : i64, scratch_operands = 1 : i64, tpu.core_type = #tpu.core_type<tc>, window_params = [{transform_indices = @transform_0, window_bounds = array<i64: 512, 128>}, {pipeline_mode = #tpu.pipeline_mode<synchronous>, transform_indices = @transform_1, window_bounds = array<i64: 128, 128>}, {pipeline_mode = #tpu.pipeline_mode<synchronous>, transform_indices = @transform_2, window_bounds = array<i64: 2, 128>}, {pipeline_mode = #tpu.pipeline_mode<synchronous>, transform_indices = @transform_3, window_bounds = array<i64: 512, 128>}]} {
    %c0 = arith.constant 0 : index
    %c0_0 = arith.constant 0 : index
    %0 = vector.load %arg1[%c0, %c0_0] : memref<512x128xbf16, #tpu.memory_space<vmem>>, vector<512x128xbf16>
    %c0_1 = arith.constant 0 : index
    %c0_2 = arith.constant 0 : index
    %1 = vector.load %arg2[%c0_1, %c0_2] : memref<128x128xbf16, #tpu.memory_space<vmem>>, vector<128x128xbf16>
    %cst = arith.constant dense<0.000000e+00> : vector<512x128xf32>
    %2 = tpu.matmul %0, %1, %cst {dimension_numbers = #tpu.dot_dimension_numbers<[1], [0], [0], [1], [0, 0, 1, 1], [], []>} : vector<512x128xbf16>, vector<128x128xbf16>, vector<512x128xf32> -> vector<512x128xf32>
    %c0_3 = arith.constant 0 : index
    %c0_4 = arith.constant 0 : index
    %3 = vector.load %arg5[%c0_3, %c0_4] : memref<512x128xf32, #tpu.memory_space<vmem>>, vector<512x128xf32>
    tpu.vector_store %arg5[%c0_3, %c0_4], %2 {strides = array<i32>} : memref<512x128xf32, #tpu.memory_space<vmem>>, vector<512x128xf32>,
    %c0_i32 = arith.constant 0 : i32
    %4 = arith.cmpi eq, %arg0, %c0_i32 : i32
    %5 = arith.extui %4 : i1 to i32
    %c0_i32_5 = arith.constant 0 : i32
    %6 = arith.cmpi ne, %5, %c0_i32_5 : i32
    scf.if %6 {
      %c0_6 = arith.constant 0 : index
      %c0_7 = arith.constant 0 : index
      %7 = vector.load %arg5[%c0_6, %c0_7] : memref<512x128xf32, #tpu.memory_space<vmem>>, vector<512x128xf32>
      %cst_8 = arith.constant dense<0.000000e+00> : vector<128xf32>
      %8 = vector.multi_reduction <add>, %7, %cst_8 [0] : vector<512x128xf32> to vector<128xf32>
      %9 = vector.shape_cast %8 : vector<128xf32> to vector<1x128xf32>
      %cst_9 = arith.constant 0.001953125 : f32
      %10 = vector.broadcast %cst_9 : f32 to vector<1x128xf32>
      %11 = arith.mulf %9, %10 : vector<1x128xf32>
      %12 = vector.broadcast %11 : vector<1x128xf32> to vector<512x128xf32>
      %13 = arith.subf %7, %12 : vector<512x128xf32>
      %14 = arith.mulf %13, %13 : vector<512x128xf32>
      %cst_10 = arith.constant dense<0.000000e+00> : vector<128xf32>
      %15 = vector.multi_reduction <add>, %14, %cst_10 [0] : vector<512x128xf32> to vector<128xf32>
      %16 = vector.shape_cast %15 : vector<128xf32> to vector<1x128xf32>
      %cst_11 = arith.constant 0.000000e+00 : f32
      %17 = vector.broadcast %cst_11 : f32 to vector<1x128xf32>
      %18 = arith.mulf %17, %11 : vector<1x128xf32>
      %19 = arith.mulf %18, %11 : vector<1x128xf32>
      %20 = arith.subf %16, %19 : vector<1x128xf32>
      %cst_12 = arith.constant 0.001953125 : f32
      %21 = vector.broadcast %cst_12 : f32 to vector<1x128xf32>
      %22 = arith.mulf %20, %21 : vector<1x128xf32>
      %cst_13 = arith.constant 0.000000e+00 : f32
      %23 = vector.broadcast %cst_13 : f32 to vector<1x128xf32>
      %24 = arith.maximumf %22, %23 : vector<1x128xf32>
      %c0_14 = arith.constant 0 : index
      %c0_15 = arith.constant 0 : index
      %25 = vector.load %arg3[%c0_14, %c0_15] : memref<2x128xf32, #tpu.memory_space<vmem>>, vector<1x128xf32>
      %cst_16 = arith.constant 9.99999974E-6 : f32
      %26 = vector.broadcast %cst_16 : f32 to vector<1x128xf32>
      %27 = arith.addf %24, %26 : vector<1x128xf32>
      %28 = math.rsqrt %27 : vector<1x128xf32>
      %29 = arith.mulf %25, %28 : vector<1x128xf32>
      %c1 = arith.constant 1 : index
      %c0_17 = arith.constant 0 : index
      %30 = vector.load %arg3[%c1, %c0_17] : memref<2x128xf32, #tpu.memory_space<vmem>>, vector<1x128xf32>
      %31 = arith.mulf %11, %29 : vector<1x128xf32>
      %32 = arith.subf %30, %31 : vector<1x128xf32>
      %33 = vector.broadcast %29 : vector<1x128xf32> to vector<512x128xf32>
      %34 = arith.mulf %7, %33 : vector<512x128xf32>
      %35 = vector.broadcast %32 : vector<1x128xf32> to vector<512x128xf32>
      %36 = arith.addf %34, %35 : vector<512x128xf32>
      %cst_18 = arith.constant 0.000000e+00 : f32
      %37 = vector.broadcast %cst_18 : f32 to vector<512x128xf32>
      %38 = arith.maximumf %36, %37 : vector<512x128xf32>
      %39 = arith.truncf %38 : vector<512x128xf32> to vector<512x128xbf16>
      %c0_19 = arith.constant 0 : index
      %c0_20 = arith.constant 0 : index
      %40 = vector.load %arg4[%c0_19, %c0_20] : memref<512x128xbf16, #tpu.memory_space<vmem>>, vector<512x128xbf16>
      tpu.vector_store %arg4[%c0_19, %c0_20], %39 {strides = array<i32>} : memref<512x128xbf16, #tpu.memory_space<vmem>>, vector<512x128xbf16>,
    } else {
    }
    return
  }
  func.func @transform_0(%arg0: i32) -> (i32, i32) {
    %c0_i32 = arith.constant 0 : i32
    %c0_i32_0 = arith.constant 0 : i32
    return %arg0, %c0_i32 : i32, i32
  }
  func.func @transform_1(%arg0: i32) -> (i32, i32) {
    %c0_i32 = arith.constant 0 : i32
    %c0_i32_0 = arith.constant 0 : i32
    %c0_i32_1 = arith.constant 0 : i32
    return %c0_i32, %c0_i32_0 : i32, i32
  }
  func.func @transform_2(%arg0: i32) -> (i32, i32) {
    %c0_i32 = arith.constant 0 : i32
    %c0_i32_0 = arith.constant 0 : i32
    %c0_i32_1 = arith.constant 0 : i32
    return %c0_i32, %c0_i32_0 : i32, i32
  }
  func.func @transform_3(%arg0: i32) -> (i32, i32) {
    %c0_i32 = arith.constant 0 : i32
    %c0_i32_0 = arith.constant 0 : i32
    %c0_i32_1 = arith.constant 0 : i32
    return %c0_i32, %c0_i32_0 : i32, i32
  }
}

module attributes {stable_mosaic.version = 11 : i64} {
  func.func @kernel(%arg0: i32, %arg1: memref<512x256xbf16, #tpu.memory_space<vmem>>, %arg2: memref<256x128xbf16, #tpu.memory_space<vmem>>, %arg3: memref<2x128xf32, #tpu.memory_space<vmem>>, %arg4: memref<512x128xbf16, #tpu.memory_space<vmem>>, %arg5: memref<512x128xf32, #tpu.memory_space<vmem>>) attributes {dimension_semantics = [#tpu.dimension_semantics<arbitrary>], iteration_bounds = array<i64: 1>, scalar_prefetch = 0 : i64, scratch_operands = 1 : i64, tpu.core_type = #tpu.core_type<tc>, window_params = [{transform_indices = @transform_0, window_bounds = array<i64: 512, 256>}, {pipeline_mode = #tpu.pipeline_mode<synchronous>, transform_indices = @transform_1, window_bounds = array<i64: 256, 128>}, {pipeline_mode = #tpu.pipeline_mode<synchronous>, transform_indices = @transform_2, window_bounds = array<i64: 2, 128>}, {pipeline_mode = #tpu.pipeline_mode<synchronous>, transform_indices = @transform_3, window_bounds = array<i64: 512, 128>}]} {
    %c0 = arith.constant 0 : index
    %c0_0 = arith.constant 0 : index
    %0 = vector.load %arg1[%c0, %c0_0] : memref<512x256xbf16, #tpu.memory_space<vmem>>, vector<512x256xbf16>
    %c0_1 = arith.constant 0 : index
    %c0_2 = arith.constant 0 : index
    %1 = vector.load %arg2[%c0_1, %c0_2] : memref<256x128xbf16, #tpu.memory_space<vmem>>, vector<256x128xbf16>
    %cst = arith.constant dense<0.000000e+00> : vector<512x128xf32>
    %2 = tpu.matmul %0, %1, %cst {dimension_numbers = #tpu.dot_dimension_numbers<[1], [0], [0], [1], [0, 0, 1, 1], [], []>} : vector<512x256xbf16>, vector<256x128xbf16>, vector<512x128xf32> -> vector<512x128xf32>
    %c0_3 = arith.constant 0 : index
    %c0_4 = arith.constant 0 : index
    %3 = vector.load %arg5[%c0_3, %c0_4] : memref<512x128xf32, #tpu.memory_space<vmem>>, vector<512x128xf32>
    tpu.vector_store %arg5[%c0_3, %c0_4], %2 {strides = array<i32>} : memref<512x128xf32, #tpu.memory_space<vmem>>, vector<512x128xf32>,
    %c0_i32 = arith.constant 0 : i32
    %4 = arith.cmpi eq, %arg0, %c0_i32 : i32
    %5 = arith.extui %4 : i1 to i32
    %c0_i32_5 = arith.constant 0 : i32
    %6 = arith.cmpi ne, %5, %c0_i32_5 : i32
    scf.if %6 {
      %c0_6 = arith.constant 0 : index
      %c0_7 = arith.constant 0 : index
      %7 = vector.load %arg5[%c0_6, %c0_7] : memref<512x128xf32, #tpu.memory_space<vmem>>, vector<512x128xf32>
      %cst_8 = arith.constant dense<0.000000e+00> : vector<128xf32>
      %8 = vector.multi_reduction <add>, %7, %cst_8 [0] : vector<512x128xf32> to vector<128xf32>
      %9 = vector.shape_cast %8 : vector<128xf32> to vector<1x128xf32>
      %cst_9 = arith.constant 0.001953125 : f32
      %10 = vector.broadcast %cst_9 : f32 to vector<1x128xf32>
      %11 = arith.mulf %9, %10 : vector<1x128xf32>
      %12 = vector.broadcast %11 : vector<1x128xf32> to vector<512x128xf32>
      %13 = arith.subf %7, %12 : vector<512x128xf32>
      %14 = arith.mulf %13, %13 : vector<512x128xf32>
      %cst_10 = arith.constant dense<0.000000e+00> : vector<128xf32>
      %15 = vector.multi_reduction <add>, %14, %cst_10 [0] : vector<512x128xf32> to vector<128xf32>
      %16 = vector.shape_cast %15 : vector<128xf32> to vector<1x128xf32>
      %cst_11 = arith.constant 0.000000e+00 : f32
      %17 = vector.broadcast %cst_11 : f32 to vector<1x128xf32>
      %18 = arith.mulf %17, %11 : vector<1x128xf32>
      %19 = arith.mulf %18, %11 : vector<1x128xf32>
      %20 = arith.subf %16, %19 : vector<1x128xf32>
      %cst_12 = arith.constant 0.001953125 : f32
      %21 = vector.broadcast %cst_12 : f32 to vector<1x128xf32>
      %22 = arith.mulf %20, %21 : vector<1x128xf32>
      %cst_13 = arith.constant 0.000000e+00 : f32
      %23 = vector.broadcast %cst_13 : f32 to vector<1x128xf32>
      %24 = arith.maximumf %22, %23 : vector<1x128xf32>
      %c0_14 = arith.constant 0 : index
      %c0_15 = arith.constant 0 : index
      %25 = vector.load %arg3[%c0_14, %c0_15] : memref<2x128xf32, #tpu.memory_space<vmem>>, vector<1x128xf32>
      %cst_16 = arith.constant 9.99999974E-6 : f32
      %26 = vector.broadcast %cst_16 : f32 to vector<1x128xf32>
      %27 = arith.addf %24, %26 : vector<1x128xf32>
      %28 = math.rsqrt %27 : vector<1x128xf32>
      %29 = arith.mulf %25, %28 : vector<1x128xf32>
      %c1 = arith.constant 1 : index
      %c0_17 = arith.constant 0 : index
      %30 = vector.load %arg3[%c1, %c0_17] : memref<2x128xf32, #tpu.memory_space<vmem>>, vector<1x128xf32>
      %31 = arith.mulf %11, %29 : vector<1x128xf32>
      %32 = arith.subf %30, %31 : vector<1x128xf32>
      %33 = vector.broadcast %29 : vector<1x128xf32> to vector<512x128xf32>
      %34 = arith.mulf %7, %33 : vector<512x128xf32>
      %35 = vector.broadcast %32 : vector<1x128xf32> to vector<512x128xf32>
      %36 = arith.addf %34, %35 : vector<512x128xf32>
      %cst_18 = arith.constant 0.000000e+00 : f32
      %37 = vector.broadcast %cst_18 : f32 to vector<512x128xf32>
      %38 = arith.maximumf %36, %37 : vector<512x128xf32>
      %39 = arith.truncf %38 : vector<512x128xf32> to vector<512x128xbf16>
      %c0_19 = arith.constant 0 : index
      %c0_20 = arith.constant 0 : index
      %40 = vector.load %arg4[%c0_19, %c0_20] : memref<512x128xbf16, #tpu.memory_space<vmem>>, vector<512x128xbf16>
      tpu.vector_store %arg4[%c0_19, %c0_20], %39 {strides = array<i32>} : memref<512x128xbf16, #tpu.memory_space<vmem>>, vector<512x128xbf16>,
    } else {
    }
    return
  }
  func.func @transform_0(%arg0: i32) -> (i32, i32) {
    %c0_i32 = arith.constant 0 : i32
    %c0_i32_0 = arith.constant 0 : i32
    return %arg0, %c0_i32 : i32, i32
  }
  func.func @transform_1(%arg0: i32) -> (i32, i32) {
    %c0_i32 = arith.constant 0 : i32
    %c0_i32_0 = arith.constant 0 : i32
    %c0_i32_1 = arith.constant 0 : i32
    return %c0_i32, %c0_i32_0 : i32, i32
  }
  func.func @transform_2(%arg0: i32) -> (i32, i32) {
    %c0_i32 = arith.constant 0 : i32
    %c0_i32_0 = arith.constant 0 : i32
    %c0_i32_1 = arith.constant 0 : i32
    return %c0_i32, %c0_i32_0 : i32, i32
  }
  func.func @transform_3(%arg0: i32) -> (i32, i32) {
    %c0_i32 = arith.constant 0 : i32
    %c0_i32_0 = arith.constant 0 : i32
    %c0_i32_1 = arith.constant 0 : i32
    return %c0_i32, %c0_i32_0 : i32, i32
  }
}

module attributes {stable_mosaic.version = 11 : i64} {
  func.func @kernel(%arg0: i32, %arg1: memref<512x256xbf16, #tpu.memory_space<vmem>>, %arg2: memref<256x128xbf16, #tpu.memory_space<vmem>>, %arg3: memref<2x128xf32, #tpu.memory_space<vmem>>, %arg4: memref<512x128xbf16, #tpu.memory_space<vmem>>, %arg5: memref<512x128xbf16, #tpu.memory_space<vmem>>, %arg6: memref<512x128xf32, #tpu.memory_space<vmem>>) attributes {dimension_semantics = [#tpu.dimension_semantics<arbitrary>], iteration_bounds = array<i64: 1>, scalar_prefetch = 0 : i64, scratch_operands = 1 : i64, tpu.core_type = #tpu.core_type<tc>, window_params = [{transform_indices = @transform_0, window_bounds = array<i64: 512, 256>}, {pipeline_mode = #tpu.pipeline_mode<synchronous>, transform_indices = @transform_1, window_bounds = array<i64: 256, 128>}, {pipeline_mode = #tpu.pipeline_mode<synchronous>, transform_indices = @transform_2, window_bounds = array<i64: 2, 128>}, {pipeline_mode = #tpu.pipeline_mode<synchronous>, transform_indices = @transform_3, window_bounds = array<i64: 512, 128>}, {pipeline_mode = #tpu.pipeline_mode<synchronous>, transform_indices = @transform_4, window_bounds = array<i64: 512, 128>}]} {
    %c0 = arith.constant 0 : index
    %c0_0 = arith.constant 0 : index
    %0 = vector.load %arg1[%c0, %c0_0] : memref<512x256xbf16, #tpu.memory_space<vmem>>, vector<512x256xbf16>
    %c0_1 = arith.constant 0 : index
    %c0_2 = arith.constant 0 : index
    %1 = vector.load %arg2[%c0_1, %c0_2] : memref<256x128xbf16, #tpu.memory_space<vmem>>, vector<256x128xbf16>
    %cst = arith.constant dense<0.000000e+00> : vector<512x128xf32>
    %2 = tpu.matmul %0, %1, %cst {dimension_numbers = #tpu.dot_dimension_numbers<[1], [0], [0], [1], [0, 0, 1, 1], [], []>} : vector<512x256xbf16>, vector<256x128xbf16>, vector<512x128xf32> -> vector<512x128xf32>
    %c0_3 = arith.constant 0 : index
    %c0_4 = arith.constant 0 : index
    %3 = vector.load %arg6[%c0_3, %c0_4] : memref<512x128xf32, #tpu.memory_space<vmem>>, vector<512x128xf32>
    tpu.vector_store %arg6[%c0_3, %c0_4], %2 {strides = array<i32>} : memref<512x128xf32, #tpu.memory_space<vmem>>, vector<512x128xf32>,
    %c0_i32 = arith.constant 0 : i32
    %4 = arith.cmpi eq, %arg0, %c0_i32 : i32
    %5 = arith.extui %4 : i1 to i32
    %c0_i32_5 = arith.constant 0 : i32
    %6 = arith.cmpi ne, %5, %c0_i32_5 : i32
    scf.if %6 {
      %c0_6 = arith.constant 0 : index
      %c0_7 = arith.constant 0 : index
      %7 = vector.load %arg6[%c0_6, %c0_7] : memref<512x128xf32, #tpu.memory_space<vmem>>, vector<512x128xf32>
      %cst_8 = arith.constant dense<0.000000e+00> : vector<128xf32>
      %8 = vector.multi_reduction <add>, %7, %cst_8 [0] : vector<512x128xf32> to vector<128xf32>
      %9 = vector.shape_cast %8 : vector<128xf32> to vector<1x128xf32>
      %cst_9 = arith.constant 0.001953125 : f32
      %10 = vector.broadcast %cst_9 : f32 to vector<1x128xf32>
      %11 = arith.mulf %9, %10 : vector<1x128xf32>
      %12 = vector.broadcast %11 : vector<1x128xf32> to vector<512x128xf32>
      %13 = arith.subf %7, %12 : vector<512x128xf32>
      %14 = arith.mulf %13, %13 : vector<512x128xf32>
      %cst_10 = arith.constant dense<0.000000e+00> : vector<128xf32>
      %15 = vector.multi_reduction <add>, %14, %cst_10 [0] : vector<512x128xf32> to vector<128xf32>
      %16 = vector.shape_cast %15 : vector<128xf32> to vector<1x128xf32>
      %cst_11 = arith.constant 0.000000e+00 : f32
      %17 = vector.broadcast %cst_11 : f32 to vector<1x128xf32>
      %18 = arith.mulf %17, %11 : vector<1x128xf32>
      %19 = arith.mulf %18, %11 : vector<1x128xf32>
      %20 = arith.subf %16, %19 : vector<1x128xf32>
      %cst_12 = arith.constant 0.001953125 : f32
      %21 = vector.broadcast %cst_12 : f32 to vector<1x128xf32>
      %22 = arith.mulf %20, %21 : vector<1x128xf32>
      %cst_13 = arith.constant 0.000000e+00 : f32
      %23 = vector.broadcast %cst_13 : f32 to vector<1x128xf32>
      %24 = arith.maximumf %22, %23 : vector<1x128xf32>
      %c0_14 = arith.constant 0 : index
      %c0_15 = arith.constant 0 : index
      %25 = vector.load %arg3[%c0_14, %c0_15] : memref<2x128xf32, #tpu.memory_space<vmem>>, vector<1x128xf32>
      %cst_16 = arith.constant 9.99999974E-6 : f32
      %26 = vector.broadcast %cst_16 : f32 to vector<1x128xf32>
      %27 = arith.addf %24, %26 : vector<1x128xf32>
      %28 = math.rsqrt %27 : vector<1x128xf32>
      %29 = arith.mulf %25, %28 : vector<1x128xf32>
      %c1 = arith.constant 1 : index
      %c0_17 = arith.constant 0 : index
      %30 = vector.load %arg3[%c1, %c0_17] : memref<2x128xf32, #tpu.memory_space<vmem>>, vector<1x128xf32>
      %31 = arith.mulf %11, %29 : vector<1x128xf32>
      %32 = arith.subf %30, %31 : vector<1x128xf32>
      %33 = vector.broadcast %29 : vector<1x128xf32> to vector<512x128xf32>
      %34 = arith.mulf %7, %33 : vector<512x128xf32>
      %35 = vector.broadcast %32 : vector<1x128xf32> to vector<512x128xf32>
      %36 = arith.addf %34, %35 : vector<512x128xf32>
      %c0_18 = arith.constant 0 : index
      %c0_19 = arith.constant 0 : index
      %37 = vector.load %arg4[%c0_18, %c0_19] : memref<512x128xbf16, #tpu.memory_space<vmem>>, vector<512x128xbf16>
      %38 = arith.extf %37 : vector<512x128xbf16> to vector<512x128xf32>
      %39 = arith.addf %36, %38 : vector<512x128xf32>
      %cst_20 = arith.constant 0.000000e+00 : f32
      %40 = vector.broadcast %cst_20 : f32 to vector<512x128xf32>
      %41 = arith.maximumf %39, %40 : vector<512x128xf32>
      %42 = arith.truncf %41 : vector<512x128xf32> to vector<512x128xbf16>
      %c0_21 = arith.constant 0 : index
      %c0_22 = arith.constant 0 : index
      %43 = vector.load %arg5[%c0_21, %c0_22] : memref<512x128xbf16, #tpu.memory_space<vmem>>, vector<512x128xbf16>
      tpu.vector_store %arg5[%c0_21, %c0_22], %42 {strides = array<i32>} : memref<512x128xbf16, #tpu.memory_space<vmem>>, vector<512x128xbf16>,
    } else {
    }
    return
  }
  func.func @transform_0(%arg0: i32) -> (i32, i32) {
    %c0_i32 = arith.constant 0 : i32
    %c0_i32_0 = arith.constant 0 : i32
    return %arg0, %c0_i32 : i32, i32
  }
  func.func @transform_1(%arg0: i32) -> (i32, i32) {
    %c0_i32 = arith.constant 0 : i32
    %c0_i32_0 = arith.constant 0 : i32
    %c0_i32_1 = arith.constant 0 : i32
    return %c0_i32, %c0_i32_0 : i32, i32
  }
  func.func @transform_2(%arg0: i32) -> (i32, i32) {
    %c0_i32 = arith.constant 0 : i32
    %c0_i32_0 = arith.constant 0 : i32
    %c0_i32_1 = arith.constant 0 : i32
    return %c0_i32, %c0_i32_0 : i32, i32
  }
  func.func @transform_3(%arg0: i32) -> (i32, i32) {
    %c0_i32 = arith.constant 0 : i32
    %c0_i32_0 = arith.constant 0 : i32
    %c0_i32_1 = arith.constant 0 : i32
    return %c0_i32, %c0_i32_0 : i32, i32
  }
  func.func @transform_4(%arg0: i32) -> (i32, i32) {
    %c0_i32 = arith.constant 0 : i32
    %c0_i32_0 = arith.constant 0 : i32
    %c0_i32_1 = arith.constant 0 : i32
    return %c0_i32, %c0_i32_0 : i32, i32
  }
}

module attributes {stable_mosaic.version = 11 : i64} {
  func.func @kernel(%arg0: i32, %arg1: memref<128x256xbf16, #tpu.memory_space<vmem>>, %arg2: memref<256x256xbf16, #tpu.memory_space<vmem>>, %arg3: memref<2x256xf32, #tpu.memory_space<vmem>>, %arg4: memref<128x128xbf16, #tpu.memory_space<vmem>>, %arg5: memref<128x128xf32, #tpu.memory_space<vmem>>, %arg6: memref<128x256xf32, #tpu.memory_space<vmem>>) attributes {dimension_semantics = [#tpu.dimension_semantics<arbitrary>], iteration_bounds = array<i64: 1>, scalar_prefetch = 0 : i64, scratch_operands = 1 : i64, tpu.core_type = #tpu.core_type<tc>, window_params = [{transform_indices = @transform_0, window_bounds = array<i64: 128, 256>}, {pipeline_mode = #tpu.pipeline_mode<synchronous>, transform_indices = @transform_1, window_bounds = array<i64: 256, 256>}, {pipeline_mode = #tpu.pipeline_mode<synchronous>, transform_indices = @transform_2, window_bounds = array<i64: 2, 256>}, {pipeline_mode = #tpu.pipeline_mode<synchronous>, transform_indices = @transform_3, window_bounds = array<i64: 128, 128>}, {pipeline_mode = #tpu.pipeline_mode<synchronous>, transform_indices = @transform_4, window_bounds = array<i64: 128, 128>}]} {
    %c0 = arith.constant 0 : index
    %c0_0 = arith.constant 0 : index
    %0 = vector.load %arg1[%c0, %c0_0] : memref<128x256xbf16, #tpu.memory_space<vmem>>, vector<128x256xbf16>
    %c0_1 = arith.constant 0 : index
    %c0_2 = arith.constant 0 : index
    %1 = vector.load %arg2[%c0_1, %c0_2] : memref<256x256xbf16, #tpu.memory_space<vmem>>, vector<256x256xbf16>
    %cst = arith.constant dense<0.000000e+00> : vector<128x256xf32>
    %2 = tpu.matmul %0, %1, %cst {dimension_numbers = #tpu.dot_dimension_numbers<[1], [0], [0], [1], [0, 0, 1, 1], [], []>} : vector<128x256xbf16>, vector<256x256xbf16>, vector<128x256xf32> -> vector<128x256xf32>
    %c0_3 = arith.constant 0 : index
    %c0_4 = arith.constant 0 : index
    %3 = vector.load %arg6[%c0_3, %c0_4] : memref<128x256xf32, #tpu.memory_space<vmem>>, vector<128x256xf32>
    tpu.vector_store %arg6[%c0_3, %c0_4], %2 {strides = array<i32>} : memref<128x256xf32, #tpu.memory_space<vmem>>, vector<128x256xf32>,
    %c0_i32 = arith.constant 0 : i32
    %4 = arith.cmpi eq, %arg0, %c0_i32 : i32
    %5 = arith.extui %4 : i1 to i32
    %c0_i32_5 = arith.constant 0 : i32
    %6 = arith.cmpi ne, %5, %c0_i32_5 : i32
    scf.if %6 {
      %c0_6 = arith.constant 0 : index
      %c0_7 = arith.constant 0 : index
      %7 = vector.load %arg6[%c0_6, %c0_7] : memref<128x256xf32, #tpu.memory_space<vmem>>, vector<128x256xf32>
      %cst_8 = arith.constant dense<0.000000e+00> : vector<256xf32>
      %8 = vector.multi_reduction <add>, %7, %cst_8 [0] : vector<128x256xf32> to vector<256xf32>
      %9 = vector.shape_cast %8 : vector<256xf32> to vector<1x256xf32>
      %cst_9 = arith.constant 7.812500e-03 : f32
      %10 = vector.broadcast %cst_9 : f32 to vector<1x256xf32>
      %11 = arith.mulf %9, %10 : vector<1x256xf32>
      %12 = vector.broadcast %11 : vector<1x256xf32> to vector<128x256xf32>
      %13 = arith.subf %7, %12 : vector<128x256xf32>
      %14 = arith.mulf %13, %13 : vector<128x256xf32>
      %cst_10 = arith.constant dense<0.000000e+00> : vector<256xf32>
      %15 = vector.multi_reduction <add>, %14, %cst_10 [0] : vector<128x256xf32> to vector<256xf32>
      %16 = vector.shape_cast %15 : vector<256xf32> to vector<1x256xf32>
      %cst_11 = arith.constant 0.000000e+00 : f32
      %17 = vector.broadcast %cst_11 : f32 to vector<1x256xf32>
      %18 = arith.mulf %17, %11 : vector<1x256xf32>
      %19 = arith.mulf %18, %11 : vector<1x256xf32>
      %20 = arith.subf %16, %19 : vector<1x256xf32>
      %cst_12 = arith.constant 7.812500e-03 : f32
      %21 = vector.broadcast %cst_12 : f32 to vector<1x256xf32>
      %22 = arith.mulf %20, %21 : vector<1x256xf32>
      %cst_13 = arith.constant 0.000000e+00 : f32
      %23 = vector.broadcast %cst_13 : f32 to vector<1x256xf32>
      %24 = arith.maximumf %22, %23 : vector<1x256xf32>
      %c0_14 = arith.constant 0 : index
      %c0_15 = arith.constant 0 : index
      %25 = vector.load %arg3[%c0_14, %c0_15] : memref<2x256xf32, #tpu.memory_space<vmem>>, vector<1x256xf32>
      %cst_16 = arith.constant 9.99999974E-6 : f32
      %26 = vector.broadcast %cst_16 : f32 to vector<1x256xf32>
      %27 = arith.addf %24, %26 : vector<1x256xf32>
      %28 = math.rsqrt %27 : vector<1x256xf32>
      %29 = arith.mulf %25, %28 : vector<1x256xf32>
      %c1 = arith.constant 1 : index
      %c0_17 = arith.constant 0 : index
      %30 = vector.load %arg3[%c1, %c0_17] : memref<2x256xf32, #tpu.memory_space<vmem>>, vector<1x256xf32>
      %31 = arith.mulf %11, %29 : vector<1x256xf32>
      %32 = arith.subf %30, %31 : vector<1x256xf32>
      %33 = vector.broadcast %29 : vector<1x256xf32> to vector<128x256xf32>
      %34 = arith.mulf %7, %33 : vector<128x256xf32>
      %35 = vector.broadcast %32 : vector<1x256xf32> to vector<128x256xf32>
      %36 = arith.addf %34, %35 : vector<128x256xf32>
      %37 = vector.extract_strided_slice %36 {offsets = [0, 0], sizes = [128, 128], strides = [1, 1]} : vector<128x256xf32> to vector<128x128xf32>
      %cst_18 = arith.constant 0.000000e+00 : f32
      %38 = vector.broadcast %cst_18 : f32 to vector<128x128xf32>
      %39 = arith.maximumf %37, %38 : vector<128x128xf32>
      %40 = arith.truncf %39 : vector<128x128xf32> to vector<128x128xbf16>
      %c0_19 = arith.constant 0 : index
      %c0_20 = arith.constant 0 : index
      %41 = vector.load %arg4[%c0_19, %c0_20] : memref<128x128xbf16, #tpu.memory_space<vmem>>, vector<128x128xbf16>
      tpu.vector_store %arg4[%c0_19, %c0_20], %40 {strides = array<i32>} : memref<128x128xbf16, #tpu.memory_space<vmem>>, vector<128x128xbf16>,
      %42 = vector.extract_strided_slice %36 {offsets = [0, 128], sizes = [128, 128], strides = [1, 1]} : vector<128x256xf32> to vector<128x128xf32>
      %c0_21 = arith.constant 0 : index
      %c0_22 = arith.constant 0 : index
      %43 = vector.load %arg5[%c0_21, %c0_22] : memref<128x128xf32, #tpu.memory_space<vmem>>, vector<128x128xf32>
      tpu.vector_store %arg5[%c0_21, %c0_22], %42 {strides = array<i32>} : memref<128x128xf32, #tpu.memory_space<vmem>>, vector<128x128xf32>,
    } else {
    }
    return
  }
  func.func @transform_0(%arg0: i32) -> (i32, i32) {
    %c0_i32 = arith.constant 0 : i32
    %c0_i32_0 = arith.constant 0 : i32
    return %arg0, %c0_i32 : i32, i32
  }
  func.func @transform_1(%arg0: i32) -> (i32, i32) {
    %c0_i32 = arith.constant 0 : i32
    %c0_i32_0 = arith.constant 0 : i32
    %c0_i32_1 = arith.constant 0 : i32
    return %c0_i32, %c0_i32_0 : i32, i32
  }
  func.func @transform_2(%arg0: i32) -> (i32, i32) {
    %c0_i32 = arith.constant 0 : i32
    %c0_i32_0 = arith.constant 0 : i32
    %c0_i32_1 = arith.constant 0 : i32
    return %c0_i32, %c0_i32_0 : i32, i32
  }
  func.func @transform_3(%arg0: i32) -> (i32, i32) {
    %c0_i32 = arith.constant 0 : i32
    %c0_i32_0 = arith.constant 0 : i32
    %c0_i32_1 = arith.constant 0 : i32
    return %c0_i32, %c0_i32_0 : i32, i32
  }
  func.func @transform_4(%arg0: i32) -> (i32, i32) {
    %c0_i32 = arith.constant 0 : i32
    %c0_i32_0 = arith.constant 0 : i32
    %c0_i32_1 = arith.constant 0 : i32
    return %c0_i32, %c0_i32_0 : i32, i32
  }
}

module attributes {stable_mosaic.version = 11 : i64} {
  func.func @kernel(%arg0: i32, %arg1: memref<128x384xbf16, #tpu.memory_space<vmem>>, %arg2: memref<384x128xbf16, #tpu.memory_space<vmem>>, %arg3: memref<2x128xf32, #tpu.memory_space<vmem>>, %arg4: memref<128x128xf32, #tpu.memory_space<vmem>>, %arg5: memref<128x128xbf16, #tpu.memory_space<vmem>>, %arg6: memref<128x128xf32, #tpu.memory_space<vmem>>) attributes {dimension_semantics = [#tpu.dimension_semantics<arbitrary>], iteration_bounds = array<i64: 1>, scalar_prefetch = 0 : i64, scratch_operands = 1 : i64, tpu.core_type = #tpu.core_type<tc>, window_params = [{transform_indices = @transform_0, window_bounds = array<i64: 128, 384>}, {pipeline_mode = #tpu.pipeline_mode<synchronous>, transform_indices = @transform_1, window_bounds = array<i64: 384, 128>}, {pipeline_mode = #tpu.pipeline_mode<synchronous>, transform_indices = @transform_2, window_bounds = array<i64: 2, 128>}, {pipeline_mode = #tpu.pipeline_mode<synchronous>, transform_indices = @transform_3, window_bounds = array<i64: 128, 128>}, {pipeline_mode = #tpu.pipeline_mode<synchronous>, transform_indices = @transform_4, window_bounds = array<i64: 128, 128>}]} {
    %c0 = arith.constant 0 : index
    %c0_0 = arith.constant 0 : index
    %0 = vector.load %arg1[%c0, %c0_0] : memref<128x384xbf16, #tpu.memory_space<vmem>>, vector<128x384xbf16>
    %c0_1 = arith.constant 0 : index
    %c0_2 = arith.constant 0 : index
    %1 = vector.load %arg2[%c0_1, %c0_2] : memref<384x128xbf16, #tpu.memory_space<vmem>>, vector<384x128xbf16>
    %cst = arith.constant dense<0.000000e+00> : vector<128x128xf32>
    %2 = tpu.matmul %0, %1, %cst {dimension_numbers = #tpu.dot_dimension_numbers<[1], [0], [0], [1], [0, 0, 1, 1], [], []>} : vector<128x384xbf16>, vector<384x128xbf16>, vector<128x128xf32> -> vector<128x128xf32>
    %c0_3 = arith.constant 0 : index
    %c0_4 = arith.constant 0 : index
    %3 = vector.load %arg6[%c0_3, %c0_4] : memref<128x128xf32, #tpu.memory_space<vmem>>, vector<128x128xf32>
    tpu.vector_store %arg6[%c0_3, %c0_4], %2 {strides = array<i32>} : memref<128x128xf32, #tpu.memory_space<vmem>>, vector<128x128xf32>,
    %c0_i32 = arith.constant 0 : i32
    %4 = arith.cmpi eq, %arg0, %c0_i32 : i32
    %5 = arith.extui %4 : i1 to i32
    %c0_i32_5 = arith.constant 0 : i32
    %6 = arith.cmpi ne, %5, %c0_i32_5 : i32
    scf.if %6 {
      %c0_6 = arith.constant 0 : index
      %c0_7 = arith.constant 0 : index
      %7 = vector.load %arg6[%c0_6, %c0_7] : memref<128x128xf32, #tpu.memory_space<vmem>>, vector<128x128xf32>
      %cst_8 = arith.constant dense<0.000000e+00> : vector<128xf32>
      %8 = vector.multi_reduction <add>, %7, %cst_8 [0] : vector<128x128xf32> to vector<128xf32>
      %9 = vector.shape_cast %8 : vector<128xf32> to vector<1x128xf32>
      %cst_9 = arith.constant 7.812500e-03 : f32
      %10 = vector.broadcast %cst_9 : f32 to vector<1x128xf32>
      %11 = arith.mulf %9, %10 : vector<1x128xf32>
      %12 = vector.broadcast %11 : vector<1x128xf32> to vector<128x128xf32>
      %13 = arith.subf %7, %12 : vector<128x128xf32>
      %14 = arith.mulf %13, %13 : vector<128x128xf32>
      %cst_10 = arith.constant dense<0.000000e+00> : vector<128xf32>
      %15 = vector.multi_reduction <add>, %14, %cst_10 [0] : vector<128x128xf32> to vector<128xf32>
      %16 = vector.shape_cast %15 : vector<128xf32> to vector<1x128xf32>
      %cst_11 = arith.constant 0.000000e+00 : f32
      %17 = vector.broadcast %cst_11 : f32 to vector<1x128xf32>
      %18 = arith.mulf %17, %11 : vector<1x128xf32>
      %19 = arith.mulf %18, %11 : vector<1x128xf32>
      %20 = arith.subf %16, %19 : vector<1x128xf32>
      %cst_12 = arith.constant 7.812500e-03 : f32
      %21 = vector.broadcast %cst_12 : f32 to vector<1x128xf32>
      %22 = arith.mulf %20, %21 : vector<1x128xf32>
      %cst_13 = arith.constant 0.000000e+00 : f32
      %23 = vector.broadcast %cst_13 : f32 to vector<1x128xf32>
      %24 = arith.maximumf %22, %23 : vector<1x128xf32>
      %c0_14 = arith.constant 0 : index
      %c0_15 = arith.constant 0 : index
      %25 = vector.load %arg3[%c0_14, %c0_15] : memref<2x128xf32, #tpu.memory_space<vmem>>, vector<1x128xf32>
      %cst_16 = arith.constant 9.99999974E-6 : f32
      %26 = vector.broadcast %cst_16 : f32 to vector<1x128xf32>
      %27 = arith.addf %24, %26 : vector<1x128xf32>
      %28 = math.rsqrt %27 : vector<1x128xf32>
      %29 = arith.mulf %25, %28 : vector<1x128xf32>
      %c1 = arith.constant 1 : index
      %c0_17 = arith.constant 0 : index
      %30 = vector.load %arg3[%c1, %c0_17] : memref<2x128xf32, #tpu.memory_space<vmem>>, vector<1x128xf32>
      %31 = arith.mulf %11, %29 : vector<1x128xf32>
      %32 = arith.subf %30, %31 : vector<1x128xf32>
      %33 = vector.broadcast %29 : vector<1x128xf32> to vector<128x128xf32>
      %34 = arith.mulf %7, %33 : vector<128x128xf32>
      %35 = vector.broadcast %32 : vector<1x128xf32> to vector<128x128xf32>
      %36 = arith.addf %34, %35 : vector<128x128xf32>
      %c0_18 = arith.constant 0 : index
      %c0_19 = arith.constant 0 : index
      %37 = vector.load %arg4[%c0_18, %c0_19] : memref<128x128xf32, #tpu.memory_space<vmem>>, vector<128x128xf32>
      %38 = arith.addf %36, %37 : vector<128x128xf32>
      %cst_20 = arith.constant 0.000000e+00 : f32
      %39 = vector.broadcast %cst_20 : f32 to vector<128x128xf32>
      %40 = arith.maximumf %38, %39 : vector<128x128xf32>
      %41 = arith.truncf %40 : vector<128x128xf32> to vector<128x128xbf16>
      %c0_21 = arith.constant 0 : index
      %c0_22 = arith.constant 0 : index
      %42 = vector.load %arg5[%c0_21, %c0_22] : memref<128x128xbf16, #tpu.memory_space<vmem>>, vector<128x128xbf16>
      tpu.vector_store %arg5[%c0_21, %c0_22], %41 {strides = array<i32>} : memref<128x128xbf16, #tpu.memory_space<vmem>>, vector<128x128xbf16>,
    } else {
    }
    return
  }
  func.func @transform_0(%arg0: i32) -> (i32, i32) {
    %c0_i32 = arith.constant 0 : i32
    %c0_i32_0 = arith.constant 0 : i32
    return %arg0, %c0_i32 : i32, i32
  }
  func.func @transform_1(%arg0: i32) -> (i32, i32) {
    %c0_i32 = arith.constant 0 : i32
    %c0_i32_0 = arith.constant 0 : i32
    %c0_i32_1 = arith.constant 0 : i32
    return %c0_i32, %c0_i32_0 : i32, i32
  }
  func.func @transform_2(%arg0: i32) -> (i32, i32) {
    %c0_i32 = arith.constant 0 : i32
    %c0_i32_0 = arith.constant 0 : i32
    %c0_i32_1 = arith.constant 0 : i32
    return %c0_i32, %c0_i32_0 : i32, i32
  }
  func.func @transform_3(%arg0: i32) -> (i32, i32) {
    %c0_i32 = arith.constant 0 : i32
    %c0_i32_0 = arith.constant 0 : i32
    %c0_i32_1 = arith.constant 0 : i32
    return %c0_i32, %c0_i32_0 : i32, i32
  }
  func.func @transform_4(%arg0: i32) -> (i32, i32) {
    %c0_i32 = arith.constant 0 : i32
    %c0_i32_0 = arith.constant 0 : i32
    %c0_i32_1 = arith.constant 0 : i32
    return %c0_i32, %c0_i32_0 : i32, i32
  }
}

module attributes {stable_mosaic.version = 11 : i64} {
  func.func @kernel(%arg0: i32, %arg1: memref<32x384xbf16, #tpu.memory_space<vmem>>, %arg2: memref<384x256xbf16, #tpu.memory_space<vmem>>, %arg3: memref<2x256xf32, #tpu.memory_space<vmem>>, %arg4: memref<32x128xbf16, #tpu.memory_space<vmem>>, %arg5: memref<32x128xf32, #tpu.memory_space<vmem>>, %arg6: memref<32x256xf32, #tpu.memory_space<vmem>>) attributes {dimension_semantics = [#tpu.dimension_semantics<arbitrary>], iteration_bounds = array<i64: 1>, scalar_prefetch = 0 : i64, scratch_operands = 1 : i64, tpu.core_type = #tpu.core_type<tc>, window_params = [{transform_indices = @transform_0, window_bounds = array<i64: 32, 384>}, {pipeline_mode = #tpu.pipeline_mode<synchronous>, transform_indices = @transform_1, window_bounds = array<i64: 384, 256>}, {pipeline_mode = #tpu.pipeline_mode<synchronous>, transform_indices = @transform_2, window_bounds = array<i64: 2, 256>}, {pipeline_mode = #tpu.pipeline_mode<synchronous>, transform_indices = @transform_3, window_bounds = array<i64: 32, 128>}, {pipeline_mode = #tpu.pipeline_mode<synchronous>, transform_indices = @transform_4, window_bounds = array<i64: 32, 128>}]} {
    %c0 = arith.constant 0 : index
    %c0_0 = arith.constant 0 : index
    %0 = vector.load %arg1[%c0, %c0_0] : memref<32x384xbf16, #tpu.memory_space<vmem>>, vector<32x384xbf16>
    %c0_1 = arith.constant 0 : index
    %c0_2 = arith.constant 0 : index
    %1 = vector.load %arg2[%c0_1, %c0_2] : memref<384x256xbf16, #tpu.memory_space<vmem>>, vector<384x256xbf16>
    %cst = arith.constant dense<0.000000e+00> : vector<32x256xf32>
    %2 = tpu.matmul %0, %1, %cst {dimension_numbers = #tpu.dot_dimension_numbers<[1], [0], [0], [1], [0, 0, 1, 1], [], []>} : vector<32x384xbf16>, vector<384x256xbf16>, vector<32x256xf32> -> vector<32x256xf32>
    %c0_3 = arith.constant 0 : index
    %c0_4 = arith.constant 0 : index
    %3 = vector.load %arg6[%c0_3, %c0_4] : memref<32x256xf32, #tpu.memory_space<vmem>>, vector<32x256xf32>
    tpu.vector_store %arg6[%c0_3, %c0_4], %2 {strides = array<i32>} : memref<32x256xf32, #tpu.memory_space<vmem>>, vector<32x256xf32>,
    %c0_i32 = arith.constant 0 : i32
    %4 = arith.cmpi eq, %arg0, %c0_i32 : i32
    %5 = arith.extui %4 : i1 to i32
    %c0_i32_5 = arith.constant 0 : i32
    %6 = arith.cmpi ne, %5, %c0_i32_5 : i32
    scf.if %6 {
      %c0_6 = arith.constant 0 : index
      %c0_7 = arith.constant 0 : index
      %7 = vector.load %arg6[%c0_6, %c0_7] : memref<32x256xf32, #tpu.memory_space<vmem>>, vector<32x256xf32>
      %cst_8 = arith.constant dense<0.000000e+00> : vector<256xf32>
      %8 = vector.multi_reduction <add>, %7, %cst_8 [0] : vector<32x256xf32> to vector<256xf32>
      %9 = vector.shape_cast %8 : vector<256xf32> to vector<1x256xf32>
      %cst_9 = arith.constant 3.125000e-02 : f32
      %10 = vector.broadcast %cst_9 : f32 to vector<1x256xf32>
      %11 = arith.mulf %9, %10 : vector<1x256xf32>
      %12 = vector.broadcast %11 : vector<1x256xf32> to vector<32x256xf32>
      %13 = arith.subf %7, %12 : vector<32x256xf32>
      %14 = arith.mulf %13, %13 : vector<32x256xf32>
      %cst_10 = arith.constant dense<0.000000e+00> : vector<256xf32>
      %15 = vector.multi_reduction <add>, %14, %cst_10 [0] : vector<32x256xf32> to vector<256xf32>
      %16 = vector.shape_cast %15 : vector<256xf32> to vector<1x256xf32>
      %cst_11 = arith.constant 0.000000e+00 : f32
      %17 = vector.broadcast %cst_11 : f32 to vector<1x256xf32>
      %18 = arith.mulf %17, %11 : vector<1x256xf32>
      %19 = arith.mulf %18, %11 : vector<1x256xf32>
      %20 = arith.subf %16, %19 : vector<1x256xf32>
      %cst_12 = arith.constant 3.125000e-02 : f32
      %21 = vector.broadcast %cst_12 : f32 to vector<1x256xf32>
      %22 = arith.mulf %20, %21 : vector<1x256xf32>
      %cst_13 = arith.constant 0.000000e+00 : f32
      %23 = vector.broadcast %cst_13 : f32 to vector<1x256xf32>
      %24 = arith.maximumf %22, %23 : vector<1x256xf32>
      %c0_14 = arith.constant 0 : index
      %c0_15 = arith.constant 0 : index
      %25 = vector.load %arg3[%c0_14, %c0_15] : memref<2x256xf32, #tpu.memory_space<vmem>>, vector<1x256xf32>
      %cst_16 = arith.constant 9.99999974E-6 : f32
      %26 = vector.broadcast %cst_16 : f32 to vector<1x256xf32>
      %27 = arith.addf %24, %26 : vector<1x256xf32>
      %28 = math.rsqrt %27 : vector<1x256xf32>
      %29 = arith.mulf %25, %28 : vector<1x256xf32>
      %c1 = arith.constant 1 : index
      %c0_17 = arith.constant 0 : index
      %30 = vector.load %arg3[%c1, %c0_17] : memref<2x256xf32, #tpu.memory_space<vmem>>, vector<1x256xf32>
      %31 = arith.mulf %11, %29 : vector<1x256xf32>
      %32 = arith.subf %30, %31 : vector<1x256xf32>
      %33 = vector.broadcast %29 : vector<1x256xf32> to vector<32x256xf32>
      %34 = arith.mulf %7, %33 : vector<32x256xf32>
      %35 = vector.broadcast %32 : vector<1x256xf32> to vector<32x256xf32>
      %36 = arith.addf %34, %35 : vector<32x256xf32>
      %37 = vector.extract_strided_slice %36 {offsets = [0, 0], sizes = [32, 128], strides = [1, 1]} : vector<32x256xf32> to vector<32x128xf32>
      %cst_18 = arith.constant 0.000000e+00 : f32
      %38 = vector.broadcast %cst_18 : f32 to vector<32x128xf32>
      %39 = arith.maximumf %37, %38 : vector<32x128xf32>
      %40 = arith.truncf %39 : vector<32x128xf32> to vector<32x128xbf16>
      %c0_19 = arith.constant 0 : index
      %c0_20 = arith.constant 0 : index
      %41 = vector.load %arg4[%c0_19, %c0_20] : memref<32x128xbf16, #tpu.memory_space<vmem>>, vector<32x128xbf16>
      tpu.vector_store %arg4[%c0_19, %c0_20], %40 {strides = array<i32>} : memref<32x128xbf16, #tpu.memory_space<vmem>>, vector<32x128xbf16>,
      %42 = vector.extract_strided_slice %36 {offsets = [0, 128], sizes = [32, 128], strides = [1, 1]} : vector<32x256xf32> to vector<32x128xf32>
      %c0_21 = arith.constant 0 : index
      %c0_22 = arith.constant 0 : index
      %43 = vector.load %arg5[%c0_21, %c0_22] : memref<32x128xf32, #tpu.memory_space<vmem>>, vector<32x128xf32>
      tpu.vector_store %arg5[%c0_21, %c0_22], %42 {strides = array<i32>} : memref<32x128xf32, #tpu.memory_space<vmem>>, vector<32x128xf32>,
    } else {
    }
    return
  }
  func.func @transform_0(%arg0: i32) -> (i32, i32) {
    %c0_i32 = arith.constant 0 : i32
    %c0_i32_0 = arith.constant 0 : i32
    return %arg0, %c0_i32 : i32, i32
  }
  func.func @transform_1(%arg0: i32) -> (i32, i32) {
    %c0_i32 = arith.constant 0 : i32
    %c0_i32_0 = arith.constant 0 : i32
    %c0_i32_1 = arith.constant 0 : i32
    return %c0_i32, %c0_i32_0 : i32, i32
  }
  func.func @transform_2(%arg0: i32) -> (i32, i32) {
    %c0_i32 = arith.constant 0 : i32
    %c0_i32_0 = arith.constant 0 : i32
    %c0_i32_1 = arith.constant 0 : i32
    return %c0_i32, %c0_i32_0 : i32, i32
  }
  func.func @transform_3(%arg0: i32) -> (i32, i32) {
    %c0_i32 = arith.constant 0 : i32
    %c0_i32_0 = arith.constant 0 : i32
    %c0_i32_1 = arith.constant 0 : i32
    return %c0_i32, %c0_i32_0 : i32, i32
  }
  func.func @transform_4(%arg0: i32) -> (i32, i32) {
    %c0_i32 = arith.constant 0 : i32
    %c0_i32_0 = arith.constant 0 : i32
    %c0_i32_1 = arith.constant 0 : i32
    return %c0_i32, %c0_i32_0 : i32, i32
  }
}

module attributes {stable_mosaic.version = 11 : i64} {
  func.func @kernel(%arg0: i32, %arg1: memref<32x640xbf16, #tpu.memory_space<vmem>>, %arg2: memref<640x128xbf16, #tpu.memory_space<vmem>>, %arg3: memref<2x128xf32, #tpu.memory_space<vmem>>, %arg4: memref<32x128xf32, #tpu.memory_space<vmem>>, %arg5: memref<32x128xbf16, #tpu.memory_space<vmem>>, %arg6: memref<32x128xf32, #tpu.memory_space<vmem>>) attributes {dimension_semantics = [#tpu.dimension_semantics<arbitrary>], iteration_bounds = array<i64: 1>, scalar_prefetch = 0 : i64, scratch_operands = 1 : i64, tpu.core_type = #tpu.core_type<tc>, window_params = [{transform_indices = @transform_0, window_bounds = array<i64: 32, 640>}, {pipeline_mode = #tpu.pipeline_mode<synchronous>, transform_indices = @transform_1, window_bounds = array<i64: 640, 128>}, {pipeline_mode = #tpu.pipeline_mode<synchronous>, transform_indices = @transform_2, window_bounds = array<i64: 2, 128>}, {pipeline_mode = #tpu.pipeline_mode<synchronous>, transform_indices = @transform_3, window_bounds = array<i64: 32, 128>}, {pipeline_mode = #tpu.pipeline_mode<synchronous>, transform_indices = @transform_4, window_bounds = array<i64: 32, 128>}]} {
    %c0 = arith.constant 0 : index
    %c0_0 = arith.constant 0 : index
    %0 = vector.load %arg1[%c0, %c0_0] : memref<32x640xbf16, #tpu.memory_space<vmem>>, vector<32x640xbf16>
    %c0_1 = arith.constant 0 : index
    %c0_2 = arith.constant 0 : index
    %1 = vector.load %arg2[%c0_1, %c0_2] : memref<640x128xbf16, #tpu.memory_space<vmem>>, vector<640x128xbf16>
    %cst = arith.constant dense<0.000000e+00> : vector<32x128xf32>
    %2 = tpu.matmul %0, %1, %cst {dimension_numbers = #tpu.dot_dimension_numbers<[1], [0], [0], [1], [0, 0, 1, 1], [], []>} : vector<32x640xbf16>, vector<640x128xbf16>, vector<32x128xf32> -> vector<32x128xf32>
    %c0_3 = arith.constant 0 : index
    %c0_4 = arith.constant 0 : index
    %3 = vector.load %arg6[%c0_3, %c0_4] : memref<32x128xf32, #tpu.memory_space<vmem>>, vector<32x128xf32>
    tpu.vector_store %arg6[%c0_3, %c0_4], %2 {strides = array<i32>} : memref<32x128xf32, #tpu.memory_space<vmem>>, vector<32x128xf32>,
    %c0_i32 = arith.constant 0 : i32
    %4 = arith.cmpi eq, %arg0, %c0_i32 : i32
    %5 = arith.extui %4 : i1 to i32
    %c0_i32_5 = arith.constant 0 : i32
    %6 = arith.cmpi ne, %5, %c0_i32_5 : i32
    scf.if %6 {
      %c0_6 = arith.constant 0 : index
      %c0_7 = arith.constant 0 : index
      %7 = vector.load %arg6[%c0_6, %c0_7] : memref<32x128xf32, #tpu.memory_space<vmem>>, vector<32x128xf32>
      %cst_8 = arith.constant dense<0.000000e+00> : vector<128xf32>
      %8 = vector.multi_reduction <add>, %7, %cst_8 [0] : vector<32x128xf32> to vector<128xf32>
      %9 = vector.shape_cast %8 : vector<128xf32> to vector<1x128xf32>
      %cst_9 = arith.constant 3.125000e-02 : f32
      %10 = vector.broadcast %cst_9 : f32 to vector<1x128xf32>
      %11 = arith.mulf %9, %10 : vector<1x128xf32>
      %12 = vector.broadcast %11 : vector<1x128xf32> to vector<32x128xf32>
      %13 = arith.subf %7, %12 : vector<32x128xf32>
      %14 = arith.mulf %13, %13 : vector<32x128xf32>
      %cst_10 = arith.constant dense<0.000000e+00> : vector<128xf32>
      %15 = vector.multi_reduction <add>, %14, %cst_10 [0] : vector<32x128xf32> to vector<128xf32>
      %16 = vector.shape_cast %15 : vector<128xf32> to vector<1x128xf32>
      %cst_11 = arith.constant 0.000000e+00 : f32
      %17 = vector.broadcast %cst_11 : f32 to vector<1x128xf32>
      %18 = arith.mulf %17, %11 : vector<1x128xf32>
      %19 = arith.mulf %18, %11 : vector<1x128xf32>
      %20 = arith.subf %16, %19 : vector<1x128xf32>
      %cst_12 = arith.constant 3.125000e-02 : f32
      %21 = vector.broadcast %cst_12 : f32 to vector<1x128xf32>
      %22 = arith.mulf %20, %21 : vector<1x128xf32>
      %cst_13 = arith.constant 0.000000e+00 : f32
      %23 = vector.broadcast %cst_13 : f32 to vector<1x128xf32>
      %24 = arith.maximumf %22, %23 : vector<1x128xf32>
      %c0_14 = arith.constant 0 : index
      %c0_15 = arith.constant 0 : index
      %25 = vector.load %arg3[%c0_14, %c0_15] : memref<2x128xf32, #tpu.memory_space<vmem>>, vector<1x128xf32>
      %cst_16 = arith.constant 9.99999974E-6 : f32
      %26 = vector.broadcast %cst_16 : f32 to vector<1x128xf32>
      %27 = arith.addf %24, %26 : vector<1x128xf32>
      %28 = math.rsqrt %27 : vector<1x128xf32>
      %29 = arith.mulf %25, %28 : vector<1x128xf32>
      %c1 = arith.constant 1 : index
      %c0_17 = arith.constant 0 : index
      %30 = vector.load %arg3[%c1, %c0_17] : memref<2x128xf32, #tpu.memory_space<vmem>>, vector<1x128xf32>
      %31 = arith.mulf %11, %29 : vector<1x128xf32>
      %32 = arith.subf %30, %31 : vector<1x128xf32>
      %33 = vector.broadcast %29 : vector<1x128xf32> to vector<32x128xf32>
      %34 = arith.mulf %7, %33 : vector<32x128xf32>
      %35 = vector.broadcast %32 : vector<1x128xf32> to vector<32x128xf32>
      %36 = arith.addf %34, %35 : vector<32x128xf32>
      %c0_18 = arith.constant 0 : index
      %c0_19 = arith.constant 0 : index
      %37 = vector.load %arg4[%c0_18, %c0_19] : memref<32x128xf32, #tpu.memory_space<vmem>>, vector<32x128xf32>
      %38 = arith.addf %36, %37 : vector<32x128xf32>
      %cst_20 = arith.constant 0.000000e+00 : f32
      %39 = vector.broadcast %cst_20 : f32 to vector<32x128xf32>
      %40 = arith.maximumf %38, %39 : vector<32x128xf32>
      %41 = arith.truncf %40 : vector<32x128xf32> to vector<32x128xbf16>
      %c0_21 = arith.constant 0 : index
      %c0_22 = arith.constant 0 : index
      %42 = vector.load %arg5[%c0_21, %c0_22] : memref<32x128xbf16, #tpu.memory_space<vmem>>, vector<32x128xbf16>
      tpu.vector_store %arg5[%c0_21, %c0_22], %41 {strides = array<i32>} : memref<32x128xbf16, #tpu.memory_space<vmem>>, vector<32x128xbf16>,
    } else {
    }
    return
  }
  func.func @transform_0(%arg0: i32) -> (i32, i32) {
    %c0_i32 = arith.constant 0 : i32
    %c0_i32_0 = arith.constant 0 : i32
    return %arg0, %c0_i32 : i32, i32
  }
  func.func @transform_1(%arg0: i32) -> (i32, i32) {
    %c0_i32 = arith.constant 0 : i32
    %c0_i32_0 = arith.constant 0 : i32
    %c0_i32_1 = arith.constant 0 : i32
    return %c0_i32, %c0_i32_0 : i32, i32
  }
  func.func @transform_2(%arg0: i32) -> (i32, i32) {
    %c0_i32 = arith.constant 0 : i32
    %c0_i32_0 = arith.constant 0 : i32
    %c0_i32_1 = arith.constant 0 : i32
    return %c0_i32, %c0_i32_0 : i32, i32
  }
  func.func @transform_3(%arg0: i32) -> (i32, i32) {
    %c0_i32 = arith.constant 0 : i32
    %c0_i32_0 = arith.constant 0 : i32
    %c0_i32_1 = arith.constant 0 : i32
    return %c0_i32, %c0_i32_0 : i32, i32
  }
  func.func @transform_4(%arg0: i32) -> (i32, i32) {
    %c0_i32 = arith.constant 0 : i32
    %c0_i32_0 = arith.constant 0 : i32
    %c0_i32_1 = arith.constant 0 : i32
    return %c0_i32, %c0_i32_0 : i32, i32
  }
}

module attributes {stable_mosaic.version = 11 : i64} {
  func.func @kernel(%arg0: i32, %arg1: memref<8x640xbf16, #tpu.memory_space<vmem>>, %arg2: memref<640x256xbf16, #tpu.memory_space<vmem>>, %arg3: memref<2x256xf32, #tpu.memory_space<vmem>>, %arg4: memref<8x128xbf16, #tpu.memory_space<vmem>>, %arg5: memref<8x128xf32, #tpu.memory_space<vmem>>, %arg6: memref<8x256xf32, #tpu.memory_space<vmem>>) attributes {dimension_semantics = [#tpu.dimension_semantics<arbitrary>], iteration_bounds = array<i64: 1>, scalar_prefetch = 0 : i64, scratch_operands = 1 : i64, tpu.core_type = #tpu.core_type<tc>, window_params = [{transform_indices = @transform_0, window_bounds = array<i64: 8, 640>}, {pipeline_mode = #tpu.pipeline_mode<synchronous>, transform_indices = @transform_1, window_bounds = array<i64: 640, 256>}, {pipeline_mode = #tpu.pipeline_mode<synchronous>, transform_indices = @transform_2, window_bounds = array<i64: 2, 256>}, {pipeline_mode = #tpu.pipeline_mode<synchronous>, transform_indices = @transform_3, window_bounds = array<i64: 8, 128>}, {pipeline_mode = #tpu.pipeline_mode<synchronous>, transform_indices = @transform_4, window_bounds = array<i64: 8, 128>}]} {
    %c0 = arith.constant 0 : index
    %c0_0 = arith.constant 0 : index
    %0 = vector.load %arg1[%c0, %c0_0] : memref<8x640xbf16, #tpu.memory_space<vmem>>, vector<8x640xbf16>
    %c0_1 = arith.constant 0 : index
    %c0_2 = arith.constant 0 : index
    %1 = vector.load %arg2[%c0_1, %c0_2] : memref<640x256xbf16, #tpu.memory_space<vmem>>, vector<640x256xbf16>
    %cst = arith.constant dense<0.000000e+00> : vector<8x256xf32>
    %2 = tpu.matmul %0, %1, %cst {dimension_numbers = #tpu.dot_dimension_numbers<[1], [0], [0], [1], [0, 0, 1, 1], [], []>} : vector<8x640xbf16>, vector<640x256xbf16>, vector<8x256xf32> -> vector<8x256xf32>
    %c0_3 = arith.constant 0 : index
    %c0_4 = arith.constant 0 : index
    %3 = vector.load %arg6[%c0_3, %c0_4] : memref<8x256xf32, #tpu.memory_space<vmem>>, vector<8x256xf32>
    tpu.vector_store %arg6[%c0_3, %c0_4], %2 {strides = array<i32>} : memref<8x256xf32, #tpu.memory_space<vmem>>, vector<8x256xf32>,
    %c0_i32 = arith.constant 0 : i32
    %4 = arith.cmpi eq, %arg0, %c0_i32 : i32
    %5 = arith.extui %4 : i1 to i32
    %c0_i32_5 = arith.constant 0 : i32
    %6 = arith.cmpi ne, %5, %c0_i32_5 : i32
    scf.if %6 {
      %c0_6 = arith.constant 0 : index
      %c0_7 = arith.constant 0 : index
      %7 = vector.load %arg6[%c0_6, %c0_7] : memref<8x256xf32, #tpu.memory_space<vmem>>, vector<8x256xf32>
      %cst_8 = arith.constant dense<0.000000e+00> : vector<256xf32>
      %8 = vector.multi_reduction <add>, %7, %cst_8 [0] : vector<8x256xf32> to vector<256xf32>
      %9 = vector.shape_cast %8 : vector<256xf32> to vector<1x256xf32>
      %cst_9 = arith.constant 1.250000e-01 : f32
      %10 = vector.broadcast %cst_9 : f32 to vector<1x256xf32>
      %11 = arith.mulf %9, %10 : vector<1x256xf32>
      %12 = vector.broadcast %11 : vector<1x256xf32> to vector<8x256xf32>
      %13 = arith.subf %7, %12 : vector<8x256xf32>
      %14 = arith.mulf %13, %13 : vector<8x256xf32>
      %cst_10 = arith.constant dense<0.000000e+00> : vector<256xf32>
      %15 = vector.multi_reduction <add>, %14, %cst_10 [0] : vector<8x256xf32> to vector<256xf32>
      %16 = vector.shape_cast %15 : vector<256xf32> to vector<1x256xf32>
      %cst_11 = arith.constant 0.000000e+00 : f32
      %17 = vector.broadcast %cst_11 : f32 to vector<1x256xf32>
      %18 = arith.mulf %17, %11 : vector<1x256xf32>
      %19 = arith.mulf %18, %11 : vector<1x256xf32>
      %20 = arith.subf %16, %19 : vector<1x256xf32>
      %cst_12 = arith.constant 1.250000e-01 : f32
      %21 = vector.broadcast %cst_12 : f32 to vector<1x256xf32>
      %22 = arith.mulf %20, %21 : vector<1x256xf32>
      %cst_13 = arith.constant 0.000000e+00 : f32
      %23 = vector.broadcast %cst_13 : f32 to vector<1x256xf32>
      %24 = arith.maximumf %22, %23 : vector<1x256xf32>
      %c0_14 = arith.constant 0 : index
      %c0_15 = arith.constant 0 : index
      %25 = vector.load %arg3[%c0_14, %c0_15] : memref<2x256xf32, #tpu.memory_space<vmem>>, vector<1x256xf32>
      %cst_16 = arith.constant 9.99999974E-6 : f32
      %26 = vector.broadcast %cst_16 : f32 to vector<1x256xf32>
      %27 = arith.addf %24, %26 : vector<1x256xf32>
      %28 = math.rsqrt %27 : vector<1x256xf32>
      %29 = arith.mulf %25, %28 : vector<1x256xf32>
      %c1 = arith.constant 1 : index
      %c0_17 = arith.constant 0 : index
      %30 = vector.load %arg3[%c1, %c0_17] : memref<2x256xf32, #tpu.memory_space<vmem>>, vector<1x256xf32>
      %31 = arith.mulf %11, %29 : vector<1x256xf32>
      %32 = arith.subf %30, %31 : vector<1x256xf32>
      %33 = vector.broadcast %29 : vector<1x256xf32> to vector<8x256xf32>
      %34 = arith.mulf %7, %33 : vector<8x256xf32>
      %35 = vector.broadcast %32 : vector<1x256xf32> to vector<8x256xf32>
      %36 = arith.addf %34, %35 : vector<8x256xf32>
      %37 = vector.extract_strided_slice %36 {offsets = [0, 0], sizes = [8, 128], strides = [1, 1]} : vector<8x256xf32> to vector<8x128xf32>
      %cst_18 = arith.constant 0.000000e+00 : f32
      %38 = vector.broadcast %cst_18 : f32 to vector<8x128xf32>
      %39 = arith.maximumf %37, %38 : vector<8x128xf32>
      %40 = arith.truncf %39 : vector<8x128xf32> to vector<8x128xbf16>
      %c0_19 = arith.constant 0 : index
      %c0_20 = arith.constant 0 : index
      %41 = vector.load %arg4[%c0_19, %c0_20] : memref<8x128xbf16, #tpu.memory_space<vmem>>, vector<8x128xbf16>
      tpu.vector_store %arg4[%c0_19, %c0_20], %40 {strides = array<i32>} : memref<8x128xbf16, #tpu.memory_space<vmem>>, vector<8x128xbf16>,
      %42 = vector.extract_strided_slice %36 {offsets = [0, 128], sizes = [8, 128], strides = [1, 1]} : vector<8x256xf32> to vector<8x128xf32>
      %c0_21 = arith.constant 0 : index
      %c0_22 = arith.constant 0 : index
      %43 = vector.load %arg5[%c0_21, %c0_22] : memref<8x128xf32, #tpu.memory_space<vmem>>, vector<8x128xf32>
      tpu.vector_store %arg5[%c0_21, %c0_22], %42 {strides = array<i32>} : memref<8x128xf32, #tpu.memory_space<vmem>>, vector<8x128xf32>,
    } else {
    }
    return
  }
  func.func @transform_0(%arg0: i32) -> (i32, i32) {
    %c0_i32 = arith.constant 0 : i32
    %c0_i32_0 = arith.constant 0 : i32
    return %arg0, %c0_i32 : i32, i32
  }
  func.func @transform_1(%arg0: i32) -> (i32, i32) {
    %c0_i32 = arith.constant 0 : i32
    %c0_i32_0 = arith.constant 0 : i32
    %c0_i32_1 = arith.constant 0 : i32
    return %c0_i32, %c0_i32_0 : i32, i32
  }
  func.func @transform_2(%arg0: i32) -> (i32, i32) {
    %c0_i32 = arith.constant 0 : i32
    %c0_i32_0 = arith.constant 0 : i32
    %c0_i32_1 = arith.constant 0 : i32
    return %c0_i32, %c0_i32_0 : i32, i32
  }
  func.func @transform_3(%arg0: i32) -> (i32, i32) {
    %c0_i32 = arith.constant 0 : i32
    %c0_i32_0 = arith.constant 0 : i32
    %c0_i32_1 = arith.constant 0 : i32
    return %c0_i32, %c0_i32_0 : i32, i32
  }
  func.func @transform_4(%arg0: i32) -> (i32, i32) {
    %c0_i32 = arith.constant 0 : i32
    %c0_i32_0 = arith.constant 0 : i32
    %c0_i32_1 = arith.constant 0 : i32
    return %c0_i32, %c0_i32_0 : i32, i32
  }
}

module attributes {stable_mosaic.version = 11 : i64} {
  func.func @kernel(%arg0: i32, %arg1: memref<8x1152xbf16, #tpu.memory_space<vmem>>, %arg2: memref<1152x128xbf16, #tpu.memory_space<vmem>>, %arg3: memref<2x128xf32, #tpu.memory_space<vmem>>, %arg4: memref<8x128xf32, #tpu.memory_space<vmem>>, %arg5: memref<2x8xf32, #tpu.memory_space<vmem>>, %arg6: memref<128x128xf32, #tpu.memory_space<vmem>>, %arg7: memref<1x128xf32, #tpu.memory_space<vmem>>, %arg8: memref<8x128xbf16, #tpu.memory_space<vmem>>, %arg9: memref<2x128xf32, #tpu.memory_space<vmem>>, %arg10: memref<8x128xf32, #tpu.memory_space<vmem>>) attributes {dimension_semantics = [#tpu.dimension_semantics<arbitrary>], iteration_bounds = array<i64: 1>, scalar_prefetch = 0 : i64, scratch_operands = 1 : i64, tpu.core_type = #tpu.core_type<tc>, window_params = [{transform_indices = @transform_0, window_bounds = array<i64: 8, 1152>}, {pipeline_mode = #tpu.pipeline_mode<synchronous>, transform_indices = @transform_1, window_bounds = array<i64: 1152, 128>}, {pipeline_mode = #tpu.pipeline_mode<synchronous>, transform_indices = @transform_2, window_bounds = array<i64: 2, 128>}, {pipeline_mode = #tpu.pipeline_mode<synchronous>, transform_indices = @transform_3, window_bounds = array<i64: 8, 128>}, {pipeline_mode = #tpu.pipeline_mode<synchronous>, transform_indices = @transform_4, window_bounds = array<i64: 2, 8>}, {pipeline_mode = #tpu.pipeline_mode<synchronous>, transform_indices = @transform_5, window_bounds = array<i64: 128, 128>}, {pipeline_mode = #tpu.pipeline_mode<synchronous>, transform_indices = @transform_6, window_bounds = array<i64: 1, 128>}, {pipeline_mode = #tpu.pipeline_mode<synchronous>, transform_indices = @transform_7, window_bounds = array<i64: 8, 128>}, {pipeline_mode = #tpu.pipeline_mode<synchronous>, transform_indices = @transform_8, window_bounds = array<i64: 2, 128>}]} {
    %c0 = arith.constant 0 : index
    %c0_0 = arith.constant 0 : index
    %0 = vector.load %arg1[%c0, %c0_0] : memref<8x1152xbf16, #tpu.memory_space<vmem>>, vector<8x1152xbf16>
    %c0_1 = arith.constant 0 : index
    %c0_2 = arith.constant 0 : index
    %1 = vector.load %arg2[%c0_1, %c0_2] : memref<1152x128xbf16, #tpu.memory_space<vmem>>, vector<1152x128xbf16>
    %cst = arith.constant dense<0.000000e+00> : vector<8x128xf32>
    %2 = tpu.matmul %0, %1, %cst {dimension_numbers = #tpu.dot_dimension_numbers<[1], [0], [0], [1], [0, 0, 1, 1], [], []>} : vector<8x1152xbf16>, vector<1152x128xbf16>, vector<8x128xf32> -> vector<8x128xf32>
    %c0_3 = arith.constant 0 : index
    %c0_4 = arith.constant 0 : index
    %3 = vector.load %arg10[%c0_3, %c0_4] : memref<8x128xf32, #tpu.memory_space<vmem>>, vector<8x128xf32>
    tpu.vector_store %arg10[%c0_3, %c0_4], %2 {strides = array<i32>} : memref<8x128xf32, #tpu.memory_space<vmem>>, vector<8x128xf32>,
    %c0_i32 = arith.constant 0 : i32
    %4 = arith.cmpi eq, %arg0, %c0_i32 : i32
    %5 = arith.extui %4 : i1 to i32
    %c0_i32_5 = arith.constant 0 : i32
    %6 = arith.cmpi ne, %5, %c0_i32_5 : i32
    scf.if %6 {
      %c0_6 = arith.constant 0 : index
      %c0_7 = arith.constant 0 : index
      %7 = vector.load %arg10[%c0_6, %c0_7] : memref<8x128xf32, #tpu.memory_space<vmem>>, vector<8x128xf32>
      %cst_8 = arith.constant dense<0.000000e+00> : vector<128xf32>
      %8 = vector.multi_reduction <add>, %7, %cst_8 [0] : vector<8x128xf32> to vector<128xf32>
      %9 = vector.shape_cast %8 : vector<128xf32> to vector<1x128xf32>
      %cst_9 = arith.constant 1.250000e-01 : f32
      %10 = vector.broadcast %cst_9 : f32 to vector<1x128xf32>
      %11 = arith.mulf %9, %10 : vector<1x128xf32>
      %12 = vector.broadcast %11 : vector<1x128xf32> to vector<8x128xf32>
      %13 = arith.subf %7, %12 : vector<8x128xf32>
      %14 = arith.mulf %13, %13 : vector<8x128xf32>
      %cst_10 = arith.constant dense<0.000000e+00> : vector<128xf32>
      %15 = vector.multi_reduction <add>, %14, %cst_10 [0] : vector<8x128xf32> to vector<128xf32>
      %16 = vector.shape_cast %15 : vector<128xf32> to vector<1x128xf32>
      %cst_11 = arith.constant 0.000000e+00 : f32
      %17 = vector.broadcast %cst_11 : f32 to vector<1x128xf32>
      %18 = arith.mulf %17, %11 : vector<1x128xf32>
      %19 = arith.mulf %18, %11 : vector<1x128xf32>
      %20 = arith.subf %16, %19 : vector<1x128xf32>
      %cst_12 = arith.constant 1.250000e-01 : f32
      %21 = vector.broadcast %cst_12 : f32 to vector<1x128xf32>
      %22 = arith.mulf %20, %21 : vector<1x128xf32>
      %cst_13 = arith.constant 0.000000e+00 : f32
      %23 = vector.broadcast %cst_13 : f32 to vector<1x128xf32>
      %24 = arith.maximumf %22, %23 : vector<1x128xf32>
      %c0_14 = arith.constant 0 : index
      %c0_15 = arith.constant 0 : index
      %25 = vector.load %arg3[%c0_14, %c0_15] : memref<2x128xf32, #tpu.memory_space<vmem>>, vector<1x128xf32>
      %cst_16 = arith.constant 9.99999974E-6 : f32
      %26 = vector.broadcast %cst_16 : f32 to vector<1x128xf32>
      %27 = arith.addf %24, %26 : vector<1x128xf32>
      %28 = math.rsqrt %27 : vector<1x128xf32>
      %29 = arith.mulf %25, %28 : vector<1x128xf32>
      %c1 = arith.constant 1 : index
      %c0_17 = arith.constant 0 : index
      %30 = vector.load %arg3[%c1, %c0_17] : memref<2x128xf32, #tpu.memory_space<vmem>>, vector<1x128xf32>
      %31 = arith.mulf %11, %29 : vector<1x128xf32>
      %32 = arith.subf %30, %31 : vector<1x128xf32>
      %33 = vector.broadcast %29 : vector<1x128xf32> to vector<8x128xf32>
      %34 = arith.mulf %7, %33 : vector<8x128xf32>
      %35 = vector.broadcast %32 : vector<1x128xf32> to vector<8x128xf32>
      %36 = arith.addf %34, %35 : vector<8x128xf32>
      %c0_18 = arith.constant 0 : index
      %c0_19 = arith.constant 0 : index
      %37 = vector.load %arg4[%c0_18, %c0_19] : memref<8x128xf32, #tpu.memory_space<vmem>>, vector<8x128xf32>
      %38 = arith.addf %36, %37 : vector<8x128xf32>
      %cst_20 = arith.constant 0.000000e+00 : f32
      %39 = vector.broadcast %cst_20 : f32 to vector<8x128xf32>
      %40 = arith.maximumf %38, %39 : vector<8x128xf32>
      %41 = arith.truncf %40 : vector<8x128xf32> to vector<8x128xbf16>
      %c0_21 = arith.constant 0 : index
      %c0_22 = arith.constant 0 : index
      %42 = vector.load %arg8[%c0_21, %c0_22] : memref<8x128xbf16, #tpu.memory_space<vmem>>, vector<8x128xbf16>
      tpu.vector_store %arg8[%c0_21, %c0_22], %41 {strides = array<i32>} : memref<8x128xbf16, #tpu.memory_space<vmem>>, vector<8x128xbf16>,
      %c0_23 = arith.constant 0 : index
      %c0_24 = arith.constant 0 : index
      %43 = vector.load %arg5[%c0_23, %c0_24] : memref<2x8xf32, #tpu.memory_space<vmem>>, vector<2x8xf32>
      %cst_25 = arith.constant dense<0.000000e+00> : vector<2x128xf32>
      %44 = tpu.matmul %43, %40, %cst_25 {dimension_numbers = #tpu.dot_dimension_numbers<[1], [0], [0], [1], [0, 0, 1, 1], [], []>} : vector<2x8xf32>, vector<8x128xf32>, vector<2x128xf32> -> vector<2x128xf32>
      %c0_26 = arith.constant 0 : index
      %c0_27 = arith.constant 0 : index
      %45 = vector.load %arg6[%c0_26, %c0_27] : memref<128x128xf32, #tpu.memory_space<vmem>>, vector<128x128xf32>
      %cst_28 = arith.constant dense<0.000000e+00> : vector<2x128xf32>
      %46 = tpu.matmul %44, %45, %cst_28 {dimension_numbers = #tpu.dot_dimension_numbers<[1], [0], [0], [1], [0, 0, 1, 1], [], []>} : vector<2x128xf32>, vector<128x128xf32>, vector<2x128xf32> -> vector<2x128xf32>
      %c0_29 = arith.constant 0 : index
      %c0_30 = arith.constant 0 : index
      %47 = vector.load %arg7[%c0_29, %c0_30] : memref<1x128xf32, #tpu.memory_space<vmem>>, vector<1x128xf32>
      %48 = vector.broadcast %47 : vector<1x128xf32> to vector<2x128xf32>
      %49 = arith.addf %46, %48 : vector<2x128xf32>
      %c0_31 = arith.constant 0 : index
      %c0_32 = arith.constant 0 : index
      %50 = vector.load %arg9[%c0_31, %c0_32] : memref<2x128xf32, #tpu.memory_space<vmem>>, vector<2x128xf32>
      tpu.vector_store %arg9[%c0_31, %c0_32], %49 {strides = array<i32>} : memref<2x128xf32, #tpu.memory_space<vmem>>, vector<2x128xf32>,
    } else {
    }
    return
  }
  func.func @transform_0(%arg0: i32) -> (i32, i32) {
    %c0_i32 = arith.constant 0 : i32
    %c0_i32_0 = arith.constant 0 : i32
    return %arg0, %c0_i32 : i32, i32
  }
  func.func @transform_1(%arg0: i32) -> (i32, i32) {
    %c0_i32 = arith.constant 0 : i32
    %c0_i32_0 = arith.constant 0 : i32
    %c0_i32_1 = arith.constant 0 : i32
    return %c0_i32, %c0_i32_0 : i32, i32
  }
  func.func @transform_2(%arg0: i32) -> (i32, i32) {
    %c0_i32 = arith.constant 0 : i32
    %c0_i32_0 = arith.constant 0 : i32
    %c0_i32_1 = arith.constant 0 : i32
    return %c0_i32, %c0_i32_0 : i32, i32
  }
  func.func @transform_3(%arg0: i32) -> (i32, i32) {
    %c0_i32 = arith.constant 0 : i32
    %c0_i32_0 = arith.constant 0 : i32
    %c0_i32_1 = arith.constant 0 : i32
    return %c0_i32, %c0_i32_0 : i32, i32
  }
  func.func @transform_4(%arg0: i32) -> (i32, i32) {
    %c0_i32 = arith.constant 0 : i32
    %c0_i32_0 = arith.constant 0 : i32
    %c0_i32_1 = arith.constant 0 : i32
    return %c0_i32, %c0_i32_0 : i32, i32
  }
  func.func @transform_5(%arg0: i32) -> (i32, i32) {
    %c0_i32 = arith.constant 0 : i32
    %c0_i32_0 = arith.constant 0 : i32
    %c0_i32_1 = arith.constant 0 : i32
    return %c0_i32, %c0_i32_0 : i32, i32
  }
  func.func @transform_6(%arg0: i32) -> (i32, i32) {
    %c0_i32 = arith.constant 0 : i32
    %c0_i32_0 = arith.constant 0 : i32
    %c0_i32_1 = arith.constant 0 : i32
    return %c0_i32, %c0_i32_0 : i32, i32
  }
  func.func @transform_7(%arg0: i32) -> (i32, i32) {
    %c0_i32 = arith.constant 0 : i32
    %c0_i32_0 = arith.constant 0 : i32
    %c0_i32_1 = arith.constant 0 : i32
    return %c0_i32, %c0_i32_0 : i32, i32
  }
  func.func @transform_8(%arg0: i32) -> (i32, i32) {
    %c0_i32 = arith.constant 0 : i32
    %c0_i32_0 = arith.constant 0 : i32
    %c0_i32_1 = arith.constant 0 : i32
    return %c0_i32, %c0_i32_0 : i32, i32
  }
}

</mosaic_0001>

<llo_original>
// kernel: resnet_forward.9
$region0: #{resnet_forward.9}
  #allocation0 [shape = 'u32[]', space=smem, size = 0x4, offset = 0x4, fixed_abs, tag = 'smem constant byte address 0x4 - core index']
  #allocation1 [shape = 'u32[144,128]{1,0:T(1,128)}', space=vmem, size = 0x12000, scoped, tag = 'internal scratch']
  #allocation2 [shape = 'f32[512,128]{1,0:T(8,128)}', space=vmem, size = 0x40000, scoped, tag = 'scratch operand']
  %s0 = inlined_call_operand.vmem [shape: bf16[512,128], index: 0, kind: input, shape index: {}]
  %s1 = inlined_call_operand.vmem [shape: bf16[128,128], index: 1, kind: input, shape index: {}]
  %s2 = inlined_call_operand.vmem [shape: f32[2,128], index: 2, kind: input, shape index: {}]
  %s3 = inlined_call_operand.vmem [shape: bf16[512,128], index: 3, kind: output, shape index: {}]
  %s4 = sld [smem:[#allocation0]]
  $region26: #{resnet_forward.9} parent=0
    _
  %s6 = ssub.s32 1, %s4
  %s7 = scalar_select 0, %s6, %s4
  // Predicated region
  $region2: #{resnet_forward.9} parent=0 // pred_check
    _
  $region3: #{resnet_forward.9} parent=0 // pred_check_branch
    %9 = sbr.rel (0) target = $region5
  $region4: #{resnet_forward.9} parent=0 // pred_region
    _
  $region5: #{resnet_forward.9} parent=0 // pred_fallthru
    _
  // Predicated region
  $region6: #{resnet_forward.9} parent=0 // pred_check
    _
  $region7: #{resnet_forward.9} parent=0 // pred_check_branch
    %11 = sbr.rel (0) target = $region9
  $region8: #{resnet_forward.9} parent=0 // pred_region
    _
  $region9: #{resnet_forward.9} parent=0 // pred_fallthru
    _
  // Predicated region
  $region10: #{resnet_forward.9} parent=0 // pred_check
    _
  $region11: #{resnet_forward.9} parent=0 // pred_check_branch
    %13 = sbr.rel (0) target = $region13
  $region12: #{resnet_forward.9} parent=0 // pred_region
    _
  $region13: #{resnet_forward.9} parent=0 // pred_fallthru
    _
  %v15 = vld [vmem:[%s0] sm:$0xf]
  %v16 = vld [vmem:[%s0 + $0x4] sm:$0xf]
  %v17 = vld [vmem:[%s0 + $0x8] sm:$0xf]
  %v18 = vld [vmem:[%s0 + $0xc] sm:$0xf]
  %v19 = vld [vmem:[%s0 + $0x10] sm:$0xf]
  %v20 = vld [vmem:[%s0 + $0x14] sm:$0xf]
  %v21 = vld [vmem:[%s0 + $0x18] sm:$0xf]
  %v22 = vld [vmem:[%s0 + $0x1c] sm:$0xf]
  %v23 = vld [vmem:[%s0 + $0x20] sm:$0xf]
  %v24 = vld [vmem:[%s0 + $0x24] sm:$0xf]
  %v25 = vld [vmem:[%s0 + $0x28] sm:$0xf]
  %v26 = vld [vmem:[%s0 + $0x2c] sm:$0xf]
  %v27 = vld [vmem:[%s0 + $0x30] sm:$0xf]
  %v28 = vld [vmem:[%s0 + $0x34] sm:$0xf]
  %v29 = vld [vmem:[%s0 + $0x38] sm:$0xf]
  %v30 = vld [vmem:[%s0 + $0x3c] sm:$0xf]
  %v31 = vld [vmem:[%s0 + $0x40] sm:$0xf]
  %v32 = vld [vmem:[%s0 + $0x44] sm:$0xf]
  %v33 = vld [vmem:[%s0 + $0x48] sm:$0xf]
  %v34 = vld [vmem:[%s0 + $0x4c] sm:$0xf]
  %v35 = vld [vmem:[%s0 + $0x50] sm:$0xf]
  %v36 = vld [vmem:[%s0 + $0x54] sm:$0xf]
  %v37 = vld [vmem:[%s0 + $0x58] sm:$0xf]
  %v38 = vld [vmem:[%s0 + $0x5c] sm:$0xf]
  %v39 = vld [vmem:[%s0 + $0x60] sm:$0xf]
  %v40 = vld [vmem:[%s0 + $0x64] sm:$0xf]
  %v41 = vld [vmem:[%s0 + $0x68] sm:$0xf]
  %v42 = vld [vmem:[%s0 + $0x6c] sm:$0xf]
  %v43 = vld [vmem:[%s0 + $0x70] sm:$0xf]
  %v44 = vld [vmem:[%s0 + $0x74] sm:$0xf]
  %v45 = vld [vmem:[%s0 + $0x78] sm:$0xf]
  %v46 = vld [vmem:[%s0 + $0x7c] sm:$0xf]
  %v47 = vld [vmem:[%s0 + $0x80] sm:$0xf]
  %v48 = vld [vmem:[%s0 + $0x84] sm:$0xf]
  %v49 = vld [vmem:[%s0 + $0x88] sm:$0xf]
  %v50 = vld [vmem:[%s0 + $0x8c] sm:$0xf]
  %v51 = vld [vmem:[%s0 + $0x90] sm:$0xf]
  %v52 = vld [vmem:[%s0 + $0x94] sm:$0xf]
  %v53 = vld [vmem:[%s0 + $0x98] sm:$0xf]
  %v54 = vld [vmem:[%s0 + $0x9c] sm:$0xf]
  %v55 = vld [vmem:[%s0 + $0xa0] sm:$0xf]
  %v56 = vld [vmem:[%s0 + $0xa4] sm:$0xf]
  %v57 = vld [vmem:[%s0 + $0xa8] sm:$0xf]
  %v58 = vld [vmem:[%s0 + $0xac] sm:$0xf]
  %v59 = vld [vmem:[%s0 + $0xb0] sm:$0xf]
  %v60 = vld [vmem:[%s0 + $0xb4] sm:$0xf]
  %v61 = vld [vmem:[%s0 + $0xb8] sm:$0xf]
  %v62 = vld [vmem:[%s0 + $0xbc] sm:$0xf]
  %v63 = vld [vmem:[%s0 + $0xc0] sm:$0xf]
  %v64 = vld [vmem:[%s0 + $0xc4] sm:$0xf]
  %v65 = vld [vmem:[%s0 + $0xc8] sm:$0xf]
  %v66 = vld [vmem:[%s0 + $0xcc] sm:$0xf]
  %v67 = vld [vmem:[%s0 + $0xd0] sm:$0xf]
  %v68 = vld [vmem:[%s0 + $0xd4] sm:$0xf]
  %v69 = vld [vmem:[%s0 + $0xd8] sm:$0xf]
  %v70 = vld [vmem:[%s0 + $0xdc] sm:$0xf]
  %v71 = vld [vmem:[%s0 + $0xe0] sm:$0xf]
  %v72 = vld [vmem:[%s0 + $0xe4] sm:$0xf]
  %v73 = vld [vmem:[%s0 + $0xe8] sm:$0xf]
  %v74 = vld [vmem:[%s0 + $0xec] sm:$0xf]
  %v75 = vld [vmem:[%s0 + $0xf0] sm:$0xf]
  %v76 = vld [vmem:[%s0 + $0xf4] sm:$0xf]
  %v77 = vld [vmem:[%s0 + $0xf8] sm:$0xf]
  %v78 = vld [vmem:[%s0 + $0xfc] sm:$0xf]
  %v79 = vld [vmem:[%s1] sm:$0xf]
  %v80 = vld [vmem:[%s1 + $0x4] sm:$0xf]
  %v81 = vld [vmem:[%s1 + $0x8] sm:$0xf]
  %v82 = vld [vmem:[%s1 + $0xc] sm:$0xf]
  %v83 = vld [vmem:[%s1 + $0x10] sm:$0xf]
  %v84 = vld [vmem:[%s1 + $0x14] sm:$0xf]
  %v85 = vld [vmem:[%s1 + $0x18] sm:$0xf]
  %v86 = vld [vmem:[%s1 + $0x1c] sm:$0xf]
  %v87 = vld [vmem:[%s1 + $0x20] sm:$0xf]
  %v88 = vld [vmem:[%s1 + $0x24] sm:$0xf]
  %v89 = vld [vmem:[%s1 + $0x28] sm:$0xf]
  %v90 = vld [vmem:[%s1 + $0x2c] sm:$0xf]
  %v91 = vld [vmem:[%s1 + $0x30] sm:$0xf]
  %v92 = vld [vmem:[%s1 + $0x34] sm:$0xf]
  %v93 = vld [vmem:[%s1 + $0x38] sm:$0xf]
  %v94 = vld [vmem:[%s1 + $0x3c] sm:$0xf]
  %v159 = vunpack.c.l.b16 %v15
  %v160 = vunpack.c.l.b16 %v16
  %v161 = vunpack.c.l.b16 %v17
  %v162 = vunpack.c.l.b16 %v18
  %v163 = vunpack.c.l.b16 %v19
  %v164 = vunpack.c.l.b16 %v20
  %v165 = vunpack.c.l.b16 %v21
  %v166 = vunpack.c.l.b16 %v22
  %v167 = vunpack.c.l.b16 %v23
  %v168 = vunpack.c.l.b16 %v24
  %v169 = vunpack.c.l.b16 %v25
  %v170 = vunpack.c.l.b16 %v26
  %v171 = vunpack.c.l.b16 %v27
  %v172 = vunpack.c.l.b16 %v28
  %v173 = vunpack.c.l.b16 %v29
  %v174 = vunpack.c.l.b16 %v30
  %v175 = vunpack.c.l.b16 %v31
  %v176 = vunpack.c.l.b16 %v32
  %v177 = vunpack.c.l.b16 %v33
  %v178 = vunpack.c.l.b16 %v34
  %v179 = vunpack.c.l.b16 %v35
  %v180 = vunpack.c.l.b16 %v36
  %v181 = vunpack.c.l.b16 %v37
  %v182 = vunpack.c.l.b16 %v38
  %v183 = vunpack.c.l.b16 %v39
  %v184 = vunpack.c.l.b16 %v40
  %v185 = vunpack.c.l.b16 %v41
  %v186 = vunpack.c.l.b16 %v42
  %v187 = vunpack.c.l.b16 %v43
  %v188 = vunpack.c.l.b16 %v44
  %v189 = vunpack.c.l.b16 %v45
  %v190 = vunpack.c.l.b16 %v46
  %v191 = vunpack.c.l.b16 %v47
  %v192 = vunpack.c.l.b16 %v48
  %v193 = vunpack.c.l.b16 %v49
  %v194 = vunpack.c.l.b16 %v50
  %v195 = vunpack.c.l.b16 %v51
  %v196 = vunpack.c.l.b16 %v52
  %v197 = vunpack.c.l.b16 %v53
  %v198 = vunpack.c.l.b16 %v54
  %v199 = vunpack.c.l.b16 %v55
  %v200 = vunpack.c.l.b16 %v56
  %v201 = vunpack.c.l.b16 %v57
  %v202 = vunpack.c.l.b16 %v58
  %v203 = vunpack.c.l.b16 %v59
  %v204 = vunpack.c.l.b16 %v60
  %v205 = vunpack.c.l.b16 %v61
  %v206 = vunpack.c.l.b16 %v62
  %v207 = vunpack.c.l.b16 %v63
  %v208 = vunpack.c.l.b16 %v64
  %v209 = vunpack.c.l.b16 %v65
  %v210 = vunpack.c.l.b16 %v66
  %v211 = vunpack.c.l.b16 %v67
  %v212 = vunpack.c.l.b16 %v68
  %v213 = vunpack.c.l.b16 %v69
  %v214 = vunpack.c.l.b16 %v70
  %v215 = vunpack.c.l.b16 %v71
  %v216 = vunpack.c.l.b16 %v72
  %v217 = vunpack.c.l.b16 %v73
  %v218 = vunpack.c.l.b16 %v74
  %v219 = vunpack.c.l.b16 %v75
  %v220 = vunpack.c.l.b16 %v76
  %v221 = vunpack.c.l.b16 %v77
  %v222 = vunpack.c.l.b16 %v78
  %v223 = vpack.c.b16 %v160, %v159
  %v224 = vpack.c.b16 %v162, %v161
  %v225 = vpack.c.b16 %v164, %v163
  %v226 = vpack.c.b16 %v166, %v165
  %v227 = vpack.c.b16 %v168, %v167
  %v228 = vpack.c.b16 %v170, %v169
  %v229 = vpack.c.b16 %v172, %v171
  %v230 = vpack.c.b16 %v174, %v173
  %v231 = vpack.c.b16 %v176, %v175
  %v232 = vpack.c.b16 %v178, %v177
  %v233 = vpack.c.b16 %v180, %v179
  %v234 = vpack.c.b16 %v182, %v181
  %v235 = vpack.c.b16 %v184, %v183
  %v236 = vpack.c.b16 %v186, %v185
  %v237 = vpack.c.b16 %v188, %v187
  %v238 = vpack.c.b16 %v190, %v189
  %v239 = vpack.c.b16 %v192, %v191
  %v240 = vpack.c.b16 %v194, %v193
  %v241 = vpack.c.b16 %v196, %v195
  %v242 = vpack.c.b16 %v198, %v197
  %v243 = vpack.c.b16 %v200, %v199
  %v244 = vpack.c.b16 %v202, %v201
  %v245 = vpack.c.b16 %v204, %v203
  %v246 = vpack.c.b16 %v206, %v205
  %v247 = vpack.c.b16 %v208, %v207
  %v248 = vpack.c.b16 %v210, %v209
  %v249 = vpack.c.b16 %v212, %v211
  %v250 = vpack.c.b16 %v214, %v213
  %v251 = vpack.c.b16 %v216, %v215
  %v252 = vpack.c.b16 %v218, %v217
  %v253 = vpack.c.b16 %v220, %v219
  %v254 = vpack.c.b16 %v222, %v221
  %v303 = vunpack.c.l.b16 %v79
  %v304 = vunpack.c.l.b16 %v80
  %v305 = vunpack.c.l.b16 %v81
  %v306 = vunpack.c.l.b16 %v82
  %v307 = vunpack.c.l.b16 %v83
  %v308 = vunpack.c.l.b16 %v84
  %v309 = vunpack.c.l.b16 %v85
  %v310 = vunpack.c.l.b16 %v86
  %v311 = vunpack.c.l.b16 %v87
  %v312 = vunpack.c.l.b16 %v88
  %v313 = vunpack.c.l.b16 %v89
  %v314 = vunpack.c.l.b16 %v90
  %v315 = vunpack.c.l.b16 %v91
  %v316 = vunpack.c.l.b16 %v92
  %v317 = vunpack.c.l.b16 %v93
  %v318 = vunpack.c.l.b16 %v94
  %v319 = vpack.c.b16 %v304, %v303
  %v320 = vpack.c.b16 %v306, %v305
  %v321 = vpack.c.b16 %v308, %v307
  %v322 = vpack.c.b16 %v310, %v309
  %v323 = vpack.c.b16 %v312, %v311
  %v324 = vpack.c.b16 %v314, %v313
  %v325 = vpack.c.b16 %v316, %v315
  %v326 = vpack.c.b16 %v318, %v317
  %335 = vmatprep.subr.bf16.mxu0 0
  %336 = vmatpush1.bf16.msra.mxu0 %v319
  %337 = vmatprep.subr.bf16.mxu0 0
  %338 = vmatpush1.bf16.msra.mxu0 %v320
  %339 = vmatprep.subr.bf16.mxu0 0
  %340 = vmatpush1.bf16.msra.mxu0 %v321
  %341 = vmatprep.subr.bf16.mxu0 0
  %342 = vmatpush1.bf16.msra.mxu0 %v322
  %343 = vmatprep.subr.bf16.mxu0 0
  %344 = vmatpush1.bf16.msra.mxu0 %v323
  %345 = vmatprep.subr.bf16.mxu0 0
  %346 = vmatpush1.bf16.msra.mxu0 %v324
  %347 = vmatprep.subr.bf16.mxu0 0
  %348 = vmatpush1.bf16.msra.mxu0 %v325
  %349 = vmatprep.subr.bf16.mxu0 0
  %350 = vmatpush1.bf16.msra.mxu0 %v326
  %351 = vmatprep.subr.bf16.mxu0 0
  %352 = vmatpush1.bf16.msra.mxu0 0
  %353 = vmatprep.subr.bf16.mxu0 0
  %354 = vmatpush1.bf16.msra.mxu0 0
  %355 = vmatprep.subr.bf16.mxu0 0
  %356 = vmatpush1.bf16.msra.mxu0 0
  %357 = vmatprep.subr.bf16.mxu0 0
  %358 = vmatpush1.bf16.msra.mxu0 0
  %359 = vmatprep.subr.bf16.mxu0 0
  %360 = vmatpush1.bf16.msra.mxu0 0
  %361 = vmatprep.subr.bf16.mxu0 0
  %362 = vmatpush1.bf16.msra.mxu0 0
  %363 = vmatprep.subr.bf16.mxu0 0
  %364 = vmatpush1.bf16.msra.mxu0 0
  %365 = vmatprep.subr.bf16.mxu0 0
  %366 = vmatpush1.bf16.msra.mxu0 0
  %367 = vmatprep.mubr.bf16.mxu0 0
  %368 = vmatmul.mubr.bf16.gmra.mrb[0].mxu0 %v223
  %v369 = vpop.f32.mrb[0].mxu0
  %v370 = vadd.f32 0.0, %v369
  %v371 = vpop.f32.mrb[0].mxu0
  %v372 = vpop.f32.mrb[0].mxu0
  %v373 = vadd.f32 0.0, %v372
  %v374 = vpop.f32.mrb[0].mxu0
  %375 = vmatprep.mubr.bf16.mxu0 0
  %376 = vmatmul.mubr.bf16.gmra.mrb[0].mxu0 %v224
  %v377 = vpop.f32.mrb[0].mxu0
  %v378 = vadd.f32 0.0, %v377
  %v379 = vpop.f32.mrb[0].mxu0
  %v380 = vpop.f32.mrb[0].mxu0
  %v381 = vadd.f32 0.0, %v380
  %v382 = vpop.f32.mrb[0].mxu0
  %383 = vmatprep.mubr.bf16.mxu0 0
  %384 = vmatmul.mubr.bf16.gmra.mrb[0].mxu0 %v225
  %v385 = vpop.f32.mrb[0].mxu0
  %v386 = vadd.f32 0.0, %v385
  %v387 = vpop.f32.mrb[0].mxu0
  %v388 = vpop.f32.mrb[0].mxu0
  %v389 = vadd.f32 0.0, %v388
  %v390 = vpop.f32.mrb[0].mxu0
  %391 = vmatprep.mubr.bf16.mxu0 0
  %392 = vmatmul.mubr.bf16.gmra.mrb[0].mxu0 %v226
  %v393 = vpop.f32.mrb[0].mxu0
  %v394 = vadd.f32 0.0, %v393
  %v395 = vpop.f32.mrb[0].mxu0
  %v396 = vpop.f32.mrb[0].mxu0
  %v397 = vadd.f32 0.0, %v396
  %v398 = vpop.f32.mrb[0].mxu0
  %399 = vmatprep.mubr.bf16.mxu0 0
  %400 = vmatmul.mubr.bf16.gmra.mrb[0].mxu0 %v227
  %v401 = vpop.f32.mrb[0].mxu0
  %v402 = vadd.f32 0.0, %v401
  %v403 = vpop.f32.mrb[0].mxu0
  %v404 = vpop.f32.mrb[0].mxu0
  %v405 = vadd.f32 0.0, %v404
  %v406 = vpop.f32.mrb[0].mxu0
  %407 = vmatprep.mubr.bf16.mxu0 0
  %408 = vmatmul.mubr.bf16.gmra.mrb[0].mxu0 %v228
  %v409 = vpop.f32.mrb[0].mxu0
  %v410 = vadd.f32 0.0, %v409
  %v411 = vpop.f32.mrb[0].mxu0
  %v412 = vpop.f32.mrb[0].mxu0
  %v413 = vadd.f32 0.0, %v412
  %v414 = vpop.f32.mrb[0].mxu0
  %415 = vmatprep.mubr.bf16.mxu0 0
  %416 = vmatmul.mubr.bf16.gmra.mrb[0].mxu0 %v229
  %v417 = vpop.f32.mrb[0].mxu0
  %v418 = vadd.f32 0.0, %v417
  %v419 = vpop.f32.mrb[0].mxu0
  %v420 = vpop.f32.mrb[0].mxu0
  %v421 = vadd.f32 0.0, %v420
  %v422 = vpop.f32.mrb[0].mxu0
  %423 = vmatprep.mubr.bf16.mxu0 0
  %424 = vmatmul.mubr.bf16.gmra.mrb[0].mxu0 %v230
  %v425 = vpop.f32.mrb[0].mxu0
  %v426 = vadd.f32 0.0, %v425
  %v427 = vpop.f32.mrb[0].mxu0
  %v428 = vpop.f32.mrb[0].mxu0
  %v429 = vadd.f32 0.0, %v428
  %v430 = vpop.f32.mrb[0].mxu0
  %431 = vmatprep.mubr.bf16.mxu0 0
  %432 = vmatmul.mubr.bf16.gmra.mrb[0].mxu0 %v231
  %v433 = vpop.f32.mrb[0].mxu0
  %v434 = vadd.f32 0.0, %v433
  %v435 = vpop.f32.mrb[0].mxu0
  %v436 = vpop.f32.mrb[0].mxu0
  %v437 = vadd.f32 0.0, %v436
  %v438 = vpop.f32.mrb[0].mxu0
  %439 = vmatprep.mubr.bf16.mxu0 0
  %440 = vmatmul.mubr.bf16.gmra.mrb[0].mxu0 %v232
  %v441 = vpop.f32.mrb[0].mxu0
  %v442 = vadd.f32 0.0, %v441
  %v443 = vpop.f32.mrb[0].mxu0
  %v444 = vpop.f32.mrb[0].mxu0
  %v445 = vadd.f32 0.0, %v444
  %v446 = vpop.f32.mrb[0].mxu0
  %447 = vmatprep.mubr.bf16.mxu0 0
  %448 = vmatmul.mubr.bf16.gmra.mrb[0].mxu0 %v233
  %v449 = vpop.f32.mrb[0].mxu0
  %v450 = vadd.f32 0.0, %v449
  %v451 = vpop.f32.mrb[0].mxu0
  %v452 = vpop.f32.mrb[0].mxu0
  %v453 = vadd.f32 0.0, %v452
  %v454 = vpop.f32.mrb[0].mxu0
  %455 = vmatprep.mubr.bf16.mxu0 0
  %456 = vmatmul.mubr.bf16.gmra.mrb[0].mxu0 %v234
  %v457 = vpop.f32.mrb[0].mxu0
  %v458 = vadd.f32 0.0, %v457
  %v459 = vpop.f32.mrb[0].mxu0
  %v460 = vpop.f32.mrb[0].mxu0
  %v461 = vadd.f32 0.0, %v460
  %v462 = vpop.f32.mrb[0].mxu0
  %463 = vmatprep.mubr.bf16.mxu0 0
  %464 = vmatmul.mubr.bf16.gmra.mrb[0].mxu0 %v235
  %v465 = vpop.f32.mrb[0].mxu0
  %v466 = vadd.f32 0.0, %v465
  %v467 = vpop.f32.mrb[0].mxu0
  %v468 = vpop.f32.mrb[0].mxu0
  %v469 = vadd.f32 0.0, %v468
  %v470 = vpop.f32.mrb[0].mxu0
  %471 = vmatprep.mubr.bf16.mxu0 0
  %472 = vmatmul.mubr.bf16.gmra.mrb[0].mxu0 %v236
  %v473 = vpop.f32.mrb[0].mxu0
  %v474 = vadd.f32 0.0, %v473
  %v475 = vpop.f32.mrb[0].mxu0
  %v476 = vpop.f32.mrb[0].mxu0
  %v477 = vadd.f32 0.0, %v476
  %v478 = vpop.f32.mrb[0].mxu0
  %479 = vmatprep.mubr.bf16.mxu0 0
  %480 = vmatmul.mubr.bf16.gmra.mrb[0].mxu0 %v237
  %v481 = vpop.f32.mrb[0].mxu0
  %v482 = vadd.f32 0.0, %v481
  %v483 = vpop.f32.mrb[0].mxu0
  %v484 = vpop.f32.mrb[0].mxu0
  %v485 = vadd.f32 0.0, %v484
  %v486 = vpop.f32.mrb[0].mxu0
  %487 = vmatprep.mubr.bf16.mxu0 0
  %488 = vmatmul.mubr.bf16.gmra.mrb[0].mxu0 %v238
  %v489 = vpop.f32.mrb[0].mxu0
  %v490 = vadd.f32 0.0, %v489
  %v491 = vpop.f32.mrb[0].mxu0
  %v492 = vpop.f32.mrb[0].mxu0
  %v493 = vadd.f32 0.0, %v492
  %v494 = vpop.f32.mrb[0].mxu0
  %495 = vmatprep.mubr.bf16.mxu0 0
  %496 = vmatmul.mubr.bf16.gmra.mrb[0].mxu0 %v239
  %v497 = vpop.f32.mrb[0].mxu0
  %v498 = vadd.f32 0.0, %v497
  %v499 = vpop.f32.mrb[0].mxu0
  %v500 = vpop.f32.mrb[0].mxu0
  %v501 = vadd.f32 0.0, %v500
  %v502 = vpop.f32.mrb[0].mxu0
  %503 = vmatprep.mubr.bf16.mxu0 0
  %504 = vmatmul.mubr.bf16.gmra.mrb[0].mxu0 %v240
  %v505 = vpop.f32.mrb[0].mxu0
  %v506 = vadd.f32 0.0, %v505
  %v507 = vpop.f32.mrb[0].mxu0
  %v508 = vpop.f32.mrb[0].mxu0
  %v509 = vadd.f32 0.0, %v508
  %v510 = vpop.f32.mrb[0].mxu0
  %511 = vmatprep.mubr.bf16.mxu0 0
  %512 = vmatmul.mubr.bf16.gmra.mrb[0].mxu0 %v241
  %v513 = vpop.f32.mrb[0].mxu0
  %v514 = vadd.f32 0.0, %v513
  %v515 = vpop.f32.mrb[0].mxu0
  %v516 = vpop.f32.mrb[0].mxu0
  %v517 = vadd.f32 0.0, %v516
  %v518 = vpop.f32.mrb[0].mxu0
  %519 = vmatprep.mubr.bf16.mxu0 0
  %520 = vmatmul.mubr.bf16.gmra.mrb[0].mxu0 %v242
  %v521 = vpop.f32.mrb[0].mxu0
  %v522 = vadd.f32 0.0, %v521
  %v523 = vpop.f32.mrb[0].mxu0
  %v524 = vpop.f32.mrb[0].mxu0
  %v525 = vadd.f32 0.0, %v524
  %v526 = vpop.f32.mrb[0].mxu0
  %527 = vmatprep.mubr.bf16.mxu0 0
  %528 = vmatmul.mubr.bf16.gmra.mrb[0].mxu0 %v243
  %v529 = vpop.f32.mrb[0].mxu0
  %v530 = vadd.f32 0.0, %v529
  %v531 = vpop.f32.mrb[0].mxu0
  %v532 = vpop.f32.mrb[0].mxu0
  %v533 = vadd.f32 0.0, %v532
  %v534 = vpop.f32.mrb[0].mxu0
  %535 = vmatprep.mubr.bf16.mxu0 0
  %536 = vmatmul.mubr.bf16.gmra.mrb[0].mxu0 %v244
  %v537 = vpop.f32.mrb[0].mxu0
  %v538 = vadd.f32 0.0, %v537
  %v539 = vpop.f32.mrb[0].mxu0
  %v540 = vpop.f32.mrb[0].mxu0
  %v541 = vadd.f32 0.0, %v540
  %v542 = vpop.f32.mrb[0].mxu0
  %543 = vmatprep.mubr.bf16.mxu0 0
  %544 = vmatmul.mubr.bf16.gmra.mrb[0].mxu0 %v245
  %v545 = vpop.f32.mrb[0].mxu0
  %v546 = vadd.f32 0.0, %v545
  %v547 = vpop.f32.mrb[0].mxu0
  %v548 = vpop.f32.mrb[0].mxu0
  %v549 = vadd.f32 0.0, %v548
  %v550 = vpop.f32.mrb[0].mxu0
  %551 = vmatprep.mubr.bf16.mxu0 0
  %552 = vmatmul.mubr.bf16.gmra.mrb[0].mxu0 %v246
  %v553 = vpop.f32.mrb[0].mxu0
  %v554 = vadd.f32 0.0, %v553
  %v555 = vpop.f32.mrb[0].mxu0
  %v556 = vpop.f32.mrb[0].mxu0
  %v557 = vadd.f32 0.0, %v556
  %v558 = vpop.f32.mrb[0].mxu0
  %559 = vmatprep.mubr.bf16.mxu0 0
  %560 = vmatmul.mubr.bf16.gmra.mrb[0].mxu0 %v247
  %v561 = vpop.f32.mrb[0].mxu0
  %v562 = vadd.f32 0.0, %v561
  %v563 = vpop.f32.mrb[0].mxu0
  %v564 = vpop.f32.mrb[0].mxu0
  %v565 = vadd.f32 0.0, %v564
  %v566 = vpop.f32.mrb[0].mxu0
  %567 = vmatprep.mubr.bf16.mxu0 0
  %568 = vmatmul.mubr.bf16.gmra.mrb[0].mxu0 %v248
  %v569 = vpop.f32.mrb[0].mxu0
  %v570 = vadd.f32 0.0, %v569
  %v571 = vpop.f32.mrb[0].mxu0
  %v572 = vpop.f32.mrb[0].mxu0
  %v573 = vadd.f32 0.0, %v572
  %v574 = vpop.f32.mrb[0].mxu0
  %575 = vmatprep.mubr.bf16.mxu0 0
  %576 = vmatmul.mubr.bf16.gmra.mrb[0].mxu0 %v249
  %v577 = vpop.f32.mrb[0].mxu0
  %v578 = vadd.f32 0.0, %v577
  %v579 = vpop.f32.mrb[0].mxu0
  %v580 = vpop.f32.mrb[0].mxu0
  %v581 = vadd.f32 0.0, %v580
  %v582 = vpop.f32.mrb[0].mxu0
  %583 = vmatprep.mubr.bf16.mxu0 0
  %584 = vmatmul.mubr.bf16.gmra.mrb[0].mxu0 %v250
  %v585 = vpop.f32.mrb[0].mxu0
  %v586 = vadd.f32 0.0, %v585
  %v587 = vpop.f32.mrb[0].mxu0
  %v588 = vpop.f32.mrb[0].mxu0
  %v589 = vadd.f32 0.0, %v588
  %v590 = vpop.f32.mrb[0].mxu0
  %591 = vmatprep.mubr.bf16.mxu0 0
  %592 = vmatmul.mubr.bf16.gmra.mrb[0].mxu0 %v251
  %v593 = vpop.f32.mrb[0].mxu0
  %v594 = vadd.f32 0.0, %v593
  %v595 = vpop.f32.mrb[0].mxu0
  %v596 = vpop.f32.mrb[0].mxu0
  %v597 = vadd.f32 0.0, %v596
  %v598 = vpop.f32.mrb[0].mxu0
  %599 = vmatprep.mubr.bf16.mxu0 0
  %600 = vmatmul.mubr.bf16.gmra.mrb[0].mxu0 %v252
  %v601 = vpop.f32.mrb[0].mxu0
  %v602 = vadd.f32 0.0, %v601
  %v603 = vpop.f32.mrb[0].mxu0
  %v604 = vpop.f32.mrb[0].mxu0
  %v605 = vadd.f32 0.0, %v604
  %v606 = vpop.f32.mrb[0].mxu0
  %607 = vmatprep.mubr.bf16.mxu0 0
  %608 = vmatmul.mubr.bf16.gmra.mrb[0].mxu0 %v253
  %v609 = vpop.f32.mrb[0].mxu0
  %v610 = vadd.f32 0.0, %v609
  %v611 = vpop.f32.mrb[0].mxu0
  %v612 = vpop.f32.mrb[0].mxu0
  %v613 = vadd.f32 0.0, %v612
  %v614 = vpop.f32.mrb[0].mxu0
  %615 = vmatprep.mubr.bf16.mxu0 0
  %616 = vmatmul.mubr.bf16.gmra.mrb[0].mxu0 %v254
  %v617 = vpop.f32.mrb[0].mxu0
  %v618 = vadd.f32 0.0, %v617
  %v619 = vpop.f32.mrb[0].mxu0
  %v620 = vpop.f32.mrb[0].mxu0
  %v621 = vadd.f32 0.0, %v620
  %v622 = vpop.f32.mrb[0].mxu0
  %623 = vdwg.mxu0
  %624 = vst [vmem:[#allocation2] sm:$0xff] %v370
  %625 = vst [vmem:[#allocation2 + $0x8] sm:$0xff] %v373
  %626 = vst [vmem:[#allocation2 + $0x10] sm:$0xff] %v378
  %627 = vst [vmem:[#allocation2 + $0x18] sm:$0xff] %v381
  %628 = vst [vmem:[#allocation2 + $0x20] sm:$0xff] %v386
  %629 = vst [vmem:[#allocation2 + $0x28] sm:$0xff] %v389
  %630 = vst [vmem:[#allocation2 + $0x30] sm:$0xff] %v394
  %631 = vst [vmem:[#allocation2 + $0x38] sm:$0xff] %v397
  %632 = vst [vmem:[#allocation2 + $0x40] sm:$0xff] %v402
  %633 = vst [vmem:[#allocation2 + $0x48] sm:$0xff] %v405
  %634 = vst [vmem:[#allocation2 + $0x50] sm:$0xff] %v410
  %635 = vst [vmem:[#allocation2 + $0x58] sm:$0xff] %v413
  %636 = vst [vmem:[#allocation2 + $0x60] sm:$0xff] %v418
  %637 = vst [vmem:[#allocation2 + $0x68] sm:$0xff] %v421
  %638 = vst [vmem:[#allocation2 + $0x70] sm:$0xff] %v426
  %639 = vst [vmem:[#allocation2 + $0x78] sm:$0xff] %v429
  %640 = vst [vmem:[#allocation2 + $0x80] sm:$0xff] %v434
  %641 = vst [vmem:[#allocation2 + $0x88] sm:$0xff] %v437
  %642 = vst [vmem:[#allocation2 + $0x90] sm:$0xff] %v442
  %643 = vst [vmem:[#allocation2 + $0x98] sm:$0xff] %v445
  %644 = vst [vmem:[#allocation2 + $0xa0] sm:$0xff] %v450
  %645 = vst [vmem:[#allocation2 + $0xa8] sm:$0xff] %v453
  %646 = vst [vmem:[#allocation2 + $0xb0] sm:$0xff] %v458
  %647 = vst [vmem:[#allocation2 + $0xb8] sm:$0xff] %v461
  %648 = vst [vmem:[#allocation2 + $0xc0] sm:$0xff] %v466
  %649 = vst [vmem:[#allocation2 + $0xc8] sm:$0xff] %v469
  %650 = vst [vmem:[#allocation2 + $0xd0] sm:$0xff] %v474
  %651 = vst [vmem:[#allocation2 + $0xd8] sm:$0xff] %v477
  %652 = vst [vmem:[#allocation2 + $0xe0] sm:$0xff] %v482
  %653 = vst [vmem:[#allocation2 + $0xe8] sm:$0xff] %v485
  %654 = vst [vmem:[#allocation2 + $0xf0] sm:$0xff] %v490
  %655 = vst [vmem:[#allocation2 + $0xf8] sm:$0xff] %v493
  %656 = vst [vmem:[#allocation2 + $0x100] sm:$0xff] %v498
  %657 = vst [vmem:[#allocation2 + $0x108] sm:$0xff] %v501
  %658 = vst [vmem:[#allocation2 + $0x110] sm:$0xff] %v506
  %659 = vst [vmem:[#allocation2 + $0x118] sm:$0xff] %v509
  %660 = vst [vmem:[#allocation2 + $0x120] sm:$0xff] %v514
  %661 = vst [vmem:[#allocation2 + $0x128] sm:$0xff] %v517
  %662 = vst [vmem:[#allocation2 + $0x130] sm:$0xff] %v522
  %663 = vst [vmem:[#allocation2 + $0x138] sm:$0xff] %v525
  %664 = vst [vmem:[#allocation2 + $0x140] sm:$0xff] %v530
  %665 = vst [vmem:[#allocation2 + $0x148] sm:$0xff] %v533
  %666 = vst [vmem:[#allocation2 + $0x150] sm:$0xff] %v538
  %667 = vst [vmem:[#allocation2 + $0x158] sm:$0xff] %v541
  %668 = vst [vmem:[#allocation2 + $0x160] sm:$0xff] %v546
  %669 = vst [vmem:[#allocation2 + $0x168] sm:$0xff] %v549
  %670 = vst [vmem:[#allocation2 + $0x170] sm:$0xff] %v554
  %671 = vst [vmem:[#allocation2 + $0x178] sm:$0xff] %v557
  %672 = vst [vmem:[#allocation2 + $0x180] sm:$0xff] %v562
  %673 = vst [vmem:[#allocation2 + $0x188] sm:$0xff] %v565
  %674 = vst [vmem:[#allocation2 + $0x190] sm:$0xff] %v570
  %675 = vst [vmem:[#allocation2 + $0x198] sm:$0xff] %v573
  %676 = vst [vmem:[#allocation2 + $0x1a0] sm:$0xff] %v578
  %677 = vst [vmem:[#allocation2 + $0x1a8] sm:$0xff] %v581
  %678 = vst [vmem:[#allocation2 + $0x1b0] sm:$0xff] %v586
  %679 = vst [vmem:[#allocation2 + $0x1b8] sm:$0xff] %v589
  %680 = vst [vmem:[#allocation2 + $0x1c0] sm:$0xff] %v594
  %681 = vst [vmem:[#allocation2 + $0x1c8] sm:$0xff] %v597
  %682 = vst [vmem:[#allocation2 + $0x1d0] sm:$0xff] %v602
  %683 = vst [vmem:[#allocation2 + $0x1d8] sm:$0xff] %v605
  %684 = vst [vmem:[#allocation2 + $0x1e0] sm:$0xff] %v610
  %685 = vst [vmem:[#allocation2 + $0x1e8] sm:$0xff] %v613
  %686 = vst [vmem:[#allocation2 + $0x1f0] sm:$0xff] %v618
  %687 = vst [vmem:[#allocation2 + $0x1f8] sm:$0xff] %v621
  %p688 = scmp.eq.s32.totalorder 0, 0
  // Predicated region
  $region14: #{resnet_forward.9} parent=0 // pred_check
    %p689 = pneg %p688
  $region15: #{resnet_forward.9} parent=0 // pred_check_branch
    %691 = sbr.rel (%p689) target = $region17
  $region16: #{resnet_forward.9} parent=0 // pred_region
    %v692 = vld [vmem:[#allocation2] sm:$0xff]
    %v693 = vld [vmem:[#allocation2 + $0x8] sm:$0xff]
    %v694 = vld [vmem:[#allocation2 + $0x10] sm:$0xff]
    %v695 = vld [vmem:[#allocation2 + $0x18] sm:$0xff]
    %v696 = vld [vmem:[#allocation2 + $0x20] sm:$0xff]
    %v697 = vld [vmem:[#allocation2 + $0x28] sm:$0xff]
    %v698 = vld [vmem:[#allocation2 + $0x30] sm:$0xff]
    %v699 = vld [vmem:[#allocation2 + $0x38] sm:$0xff]
    %v700 = vld [vmem:[#allocation2 + $0x40] sm:$0xff]
    %v701 = vld [vmem:[#allocation2 + $0x48] sm:$0xff]
    %v702 = vld [vmem:[#allocation2 + $0x50] sm:$0xff]
    %v703 = vld [vmem:[#allocation2 + $0x58] sm:$0xff]
    %v704 = vld [vmem:[#allocation2 + $0x60] sm:$0xff]
    %v705 = vld [vmem:[#allocation2 + $0x68] sm:$0xff]
    %v706 = vld [vmem:[#allocation2 + $0x70] sm:$0xff]
    %v707 = vld [vmem:[#allocation2 + $0x78] sm:$0xff]
    %v708 = vld [vmem:[#allocation2 + $0x80] sm:$0xff]
    %v709 = vld [vmem:[#allocation2 + $0x88] sm:$0xff]
    %v710 = vld [vmem:[#allocation2 + $0x90] sm:$0xff]
    %v711 = vld [vmem:[#allocation2 + $0x98] sm:$0xff]
    %v712 = vld [vmem:[#allocation2 + $0xa0] sm:$0xff]
    %v713 = vld [vmem:[#allocation2 + $0xa8] sm:$0xff]
    %v714 = vld [vmem:[#allocation2 + $0xb0] sm:$0xff]
    %v715 = vld [vmem:[#allocation2 + $0xb8] sm:$0xff]
    %v716 = vld [vmem:[#allocation2 + $0xc0] sm:$0xff]
    %v717 = vld [vmem:[#allocation2 + $0xc8] sm:$0xff]
    %v718 = vld [vmem:[#allocation2 + $0xd0] sm:$0xff]
    %v719 = vld [vmem:[#allocation2 + $0xd8] sm:$0xff]
    %v720 = vld [vmem:[#allocation2 + $0xe0] sm:$0xff]
    %v721 = vld [vmem:[#allocation2 + $0xe8] sm:$0xff]
    %v722 = vld [vmem:[#allocation2 + $0xf0] sm:$0xff]
    %v723 = vld [vmem:[#allocation2 + $0xf8] sm:$0xff]
    %v724 = vld [vmem:[#allocation2 + $0x100] sm:$0xff]
    %v725 = vld [vmem:[#allocation2 + $0x108] sm:$0xff]
    %v726 = vld [vmem:[#allocation2 + $0x110] sm:$0xff]
    %v727 = vld [vmem:[#allocation2 + $0x118] sm:$0xff]
    %v728 = vld [vmem:[#allocation2 + $0x120] sm:$0xff]
    %v729 = vld [vmem:[#allocation2 + $0x128] sm:$0xff]
    %v730 = vld [vmem:[#allocation2 + $0x130] sm:$0xff]
    %v731 = vld [vmem:[#allocation2 + $0x138] sm:$0xff]
    %v732 = vld [vmem:[#allocation2 + $0x140] sm:$0xff]
    %v733 = vld [vmem:[#allocation2 + $0x148] sm:$0xff]
    %v734 = vld [vmem:[#allocation2 + $0x150] sm:$0xff]
    %v735 = vld [vmem:[#allocation2 + $0x158] sm:$0xff]
    %v736 = vld [vmem:[#allocation2 + $0x160] sm:$0xff]
    %v737 = vld [vmem:[#allocation2 + $0x168] sm:$0xff]
    %v738 = vld [vmem:[#allocation2 + $0x170] sm:$0xff]
    %v739 = vld [vmem:[#allocation2 + $0x178] sm:$0xff]
    %v740 = vld [vmem:[#allocation2 + $0x180] sm:$0xff]
    %v741 = vld [vmem:[#allocation2 + $0x188] sm:$0xff]
    %v742 = vld [vmem:[#allocation2 + $0x190] sm:$0xff]
    %v743 = vld [vmem:[#allocation2 + $0x198] sm:$0xff]
    %v744 = vld [vmem:[#allocation2 + $0x1a0] sm:$0xff]
    %v745 = vld [vmem:[#allocation2 + $0x1a8] sm:$0xff]
    %v746 = vld [vmem:[#allocation2 + $0x1b0] sm:$0xff]
    %v747 = vld [vmem:[#allocation2 + $0x1b8] sm:$0xff]
    %v748 = vld [vmem:[#allocation2 + $0x1c0] sm:$0xff]
    %v749 = vld [vmem:[#allocation2 + $0x1c8] sm:$0xff]
    %v750 = vld [vmem:[#allocation2 + $0x1d0] sm:$0xff]
    %v751 = vld [vmem:[#allocation2 + $0x1d8] sm:$0xff]
    %v752 = vld [vmem:[#allocation2 + $0x1e0] sm:$0xff]
    %v753 = vld [vmem:[#allocation2 + $0x1e8] sm:$0xff]
    %v754 = vld [vmem:[#allocation2 + $0x1f0] sm:$0xff]
    %v755 = vld [vmem:[#allocation2 + $0x1f8] sm:$0xff]
    %v756 = vadd.f32 %v692, %v693
    %v757 = vadd.f32 %v756, %v694
    %v758 = vadd.f32 %v757, %v695
    %v759 = vadd.f32 %v758, %v696
    %v760 = vadd.f32 %v759, %v697
    %v761 = vadd.f32 %v760, %v698
    %v762 = vadd.f32 %v761, %v699
    %v763 = vadd.f32 %v762, %v700
    %v764 = vadd.f32 %v763, %v701
    %v765 = vadd.f32 %v764, %v702
    %v766 = vadd.f32 %v765, %v703
    %v767 = vadd.f32 %v766, %v704
    %v768 = vadd.f32 %v767, %v705
    %v769 = vadd.f32 %v768, %v706
    %v770 = vadd.f32 %v769, %v707
    %v771 = vadd.f32 %v770, %v708
    %v772 = vadd.f32 %v771, %v709
    %v773 = vadd.f32 %v772, %v710
    %v774 = vadd.f32 %v773, %v711
    %v775 = vadd.f32 %v774, %v712
    %v776 = vadd.f32 %v775, %v713
    %v777 = vadd.f32 %v776, %v714
    %v778 = vadd.f32 %v777, %v715
    %v779 = vadd.f32 %v778, %v716
    %v780 = vadd.f32 %v779, %v717
    %v781 = vadd.f32 %v780, %v718
    %v782 = vadd.f32 %v781, %v719
    %v783 = vadd.f32 %v782, %v720
    %v784 = vadd.f32 %v783, %v721
    %v785 = vadd.f32 %v784, %v722
    %v786 = vadd.f32 %v785, %v723
    %v787 = vadd.f32 %v786, %v724
    %v788 = vadd.f32 %v787, %v725
    %v789 = vadd.f32 %v788, %v726
    %v790 = vadd.f32 %v789, %v727
    %v791 = vadd.f32 %v790, %v728
    %v792 = vadd.f32 %v791, %v729
    %v793 = vadd.f32 %v792, %v730
    %v794 = vadd.f32 %v793, %v731
    %v795 = vadd.f32 %v794, %v732
    %v796 = vadd.f32 %v795, %v733
    %v797 = vadd.f32 %v796, %v734
    %v798 = vadd.f32 %v797, %v735
    %v799 = vadd.f32 %v798, %v736
    %v800 = vadd.f32 %v799, %v737
    %v801 = vadd.f32 %v800, %v738
    %v802 = vadd.f32 %v801, %v739
    %v803 = vadd.f32 %v802, %v740
    %v804 = vadd.f32 %v803, %v741
    %v805 = vadd.f32 %v804, %v742
    %v806 = vadd.f32 %v805, %v743
    %v807 = vadd.f32 %v806, %v744
    %v808 = vadd.f32 %v807, %v745
    %v809 = vadd.f32 %v808, %v746
    %v810 = vadd.f32 %v809, %v747
    %v811 = vadd.f32 %v810, %v748
    %v812 = vadd.f32 %v811, %v749
    %v813 = vadd.f32 %v812, %v750
    %v814 = vadd.f32 %v813, %v751
    %v815 = vadd.f32 %v814, %v752
    %v816 = vadd.f32 %v815, %v753
    %v817 = vadd.f32 %v816, %v754
    %v818 = vadd.f32 %v817, %v755
    %v819 = vrot.slane %v818, 4
    %v820 = vadd.f32 %v818, %v819
    %v821 = vrot.slane %v820, 2
    %v822 = vadd.f32 %v820, %v821
    %v823 = vrot.slane %v822, 1
    %v824 = vadd.f32 %v822, %v823
    %v825 = vmul.f32 %v824, 0.001953125
    %v826 = vsub.f32 %v692, %v825
    %v827 = vsub.f32 %v693, %v825
    %v828 = vsub.f32 %v694, %v825
    %v829 = vsub.f32 %v695, %v825
    %v830 = vsub.f32 %v696, %v825
    %v831 = vsub.f32 %v697, %v825
    %v832 = vsub.f32 %v698, %v825
    %v833 = vsub.f32 %v699, %v825
    %v834 = vsub.f32 %v700, %v825
    %v835 = vsub.f32 %v701, %v825
    %v836 = vsub.f32 %v702, %v825
    %v837 = vsub.f32 %v703, %v825
    %v838 = vsub.f32 %v704, %v825
    %v839 = vsub.f32 %v705, %v825
    %v840 = vsub.f32 %v706, %v825
    %v841 = vsub.f32 %v707, %v825
    %v842 = vsub.f32 %v708, %v825
    %v843 = vsub.f32 %v709, %v825
    %v844 = vsub.f32 %v710, %v825
    %v845 = vsub.f32 %v711, %v825
    %v846 = vsub.f32 %v712, %v825
    %v847 = vsub.f32 %v713, %v825
    %v848 = vsub.f32 %v714, %v825
    %v849 = vsub.f32 %v715, %v825
    %v850 = vsub.f32 %v716, %v825
    %v851 = vsub.f32 %v717, %v825
    %v852 = vsub.f32 %v718, %v825
    %v853 = vsub.f32 %v719, %v825
    %v854 = vsub.f32 %v720, %v825
    %v855 = vsub.f32 %v721, %v825
    %v856 = vsub.f32 %v722, %v825
    %v857 = vsub.f32 %v723, %v825
    %v858 = vsub.f32 %v724, %v825
    %v859 = vsub.f32 %v725, %v825
    %v860 = vsub.f32 %v726, %v825
    %v861 = vsub.f32 %v727, %v825
    %v862 = vsub.f32 %v728, %v825
    %v863 = vsub.f32 %v729, %v825
    %v864 = vsub.f32 %v730, %v825
    %v865 = vsub.f32 %v731, %v825
    %v866 = vsub.f32 %v732, %v825
    %v867 = vsub.f32 %v733, %v825
    %v868 = vsub.f32 %v734, %v825
    %v869 = vsub.f32 %v735, %v825
    %v870 = vsub.f32 %v736, %v825
    %v871 = vsub.f32 %v737, %v825
    %v872 = vsub.f32 %v738, %v825
    %v873 = vsub.f32 %v739, %v825
    %v874 = vsub.f32 %v740, %v825
    %v875 = vsub.f32 %v741, %v825
    %v876 = vsub.f32 %v742, %v825
    %v877 = vsub.f32 %v743, %v825
    %v878 = vsub.f32 %v744, %v825
    %v879 = vsub.f32 %v745, %v825
    %v880 = vsub.f32 %v746, %v825
    %v881 = vsub.f32 %v747, %v825
    %v882 = vsub.f32 %v748, %v825
    %v883 = vsub.f32 %v749, %v825
    %v884 = vsub.f32 %v750, %v825
    %v885 = vsub.f32 %v751, %v825
    %v886 = vsub.f32 %v752, %v825
    %v887 = vsub.f32 %v753, %v825
    %v888 = vsub.f32 %v754, %v825
    %v889 = vsub.f32 %v755, %v825
    %v890 = vmul.f32 %v826, %v826
    %v891 = vmul.f32 %v827, %v827
    %v892 = vmul.f32 %v828, %v828
    %v893 = vmul.f32 %v829, %v829
    %v894 = vmul.f32 %v830, %v830
    %v895 = vmul.f32 %v831, %v831
    %v896 = vmul.f32 %v832, %v832
    %v897 = vmul.f32 %v833, %v833
    %v898 = vmul.f32 %v834, %v834
    %v899 = vmul.f32 %v835, %v835
    %v900 = vmul.f32 %v836, %v836
    %v901 = vmul.f32 %v837, %v837
    %v902 = vmul.f32 %v838, %v838
    %v903 = vmul.f32 %v839, %v839
    %v904 = vmul.f32 %v840, %v840
    %v905 = vmul.f32 %v841, %v841
    %v906 = vmul.f32 %v842, %v842
    %v907 = vmul.f32 %v843, %v843
    %v908 = vmul.f32 %v844, %v844
    %v909 = vmul.f32 %v845, %v845
    %v910 = vmul.f32 %v846, %v846
    %v911 = vmul.f32 %v847, %v847
    %v912 = vmul.f32 %v848, %v848
    %v913 = vmul.f32 %v849, %v849
    %v914 = vmul.f32 %v850, %v850
    %v915 = vmul.f32 %v851, %v851
    %v916 = vmul.f32 %v852, %v852
    %v917 = vmul.f32 %v853, %v853
    %v918 = vmul.f32 %v854, %v854
    %v919 = vmul.f32 %v855, %v855
    %v920 = vmul.f32 %v856, %v856
    %v921 = vmul.f32 %v857, %v857
    %v922 = vmul.f32 %v858, %v858
    %v923 = vmul.f32 %v859, %v859
    %v924 = vmul.f32 %v860, %v860
    %v925 = vmul.f32 %v861, %v861
    %v926 = vmul.f32 %v862, %v862
    %v927 = vmul.f32 %v863, %v863
    %v928 = vmul.f32 %v864, %v864
    %v929 = vmul.f32 %v865, %v865
    %v930 = vmul.f32 %v866, %v866
    %v931 = vmul.f32 %v867, %v867
    %v932 = vmul.f32 %v868, %v868
    %v933 = vmul.f32 %v869, %v869
    %v934 = vmul.f32 %v870, %v870
    %v935 = vmul.f32 %v871, %v871
    %v936 = vmul.f32 %v872, %v872
    %v937 = vmul.f32 %v873, %v873
    %v938 = vmul.f32 %v874, %v874
    %v939 = vmul.f32 %v875, %v875
    %v940 = vmul.f32 %v876, %v876
    %v941 = vmul.f32 %v877, %v877
    %v942 = vmul.f32 %v878, %v878
    %v943 = vmul.f32 %v879, %v879
    %v944 = vmul.f32 %v880, %v880
    %v945 = vmul.f32 %v881, %v881
    %v946 = vmul.f32 %v882, %v882
    %v947 = vmul.f32 %v883, %v883
    %v948 = vmul.f32 %v884, %v884
    %v949 = vmul.f32 %v885, %v885
    %v950 = vmul.f32 %v886, %v886
    %v951 = vmul.f32 %v887, %v887
    %v952 = vmul.f32 %v888, %v888
    %v953 = vmul.f32 %v889, %v889
    %v954 = vadd.f32 %v890, %v891
    %v955 = vadd.f32 %v954, %v892
    %v956 = vadd.f32 %v955, %v893
    %v957 = vadd.f32 %v956, %v894
    %v958 = vadd.f32 %v957, %v895
    %v959 = vadd.f32 %v958, %v896
    %v960 = vadd.f32 %v959, %v897
    %v961 = vadd.f32 %v960, %v898
    %v962 = vadd.f32 %v961, %v899
    %v963 = vadd.f32 %v962, %v900
    %v964 = vadd.f32 %v963, %v901
    %v965 = vadd.f32 %v964, %v902
    %v966 = vadd.f32 %v965, %v903
    %v967 = vadd.f32 %v966, %v904
    %v968 = vadd.f32 %v967, %v905
    %v969 = vadd.f32 %v968, %v906
    %v970 = vadd.f32 %v969, %v907
    %v971 = vadd.f32 %v970, %v908
    %v972 = vadd.f32 %v971, %v909
    %v973 = vadd.f32 %v972, %v910
    %v974 = vadd.f32 %v973, %v911
    %v975 = vadd.f32 %v974, %v912
    %v976 = vadd.f32 %v975, %v913
    %v977 = vadd.f32 %v976, %v914
    %v978 = vadd.f32 %v977, %v915
    %v979 = vadd.f32 %v978, %v916
    %v980 = vadd.f32 %v979, %v917
    %v981 = vadd.f32 %v980, %v918
    %v982 = vadd.f32 %v981, %v919
    %v983 = vadd.f32 %v982, %v920
    %v984 = vadd.f32 %v983, %v921
    %v985 = vadd.f32 %v984, %v922
    %v986 = vadd.f32 %v985, %v923
    %v987 = vadd.f32 %v986, %v924
    %v988 = vadd.f32 %v987, %v925
    %v989 = vadd.f32 %v988, %v926
    %v990 = vadd.f32 %v989, %v927
    %v991 = vadd.f32 %v990, %v928
    %v992 = vadd.f32 %v991, %v929
    %v993 = vadd.f32 %v992, %v930
    %v994 = vadd.f32 %v993, %v931
    %v995 = vadd.f32 %v994, %v932
    %v996 = vadd.f32 %v995, %v933
    %v997 = vadd.f32 %v996, %v934
    %v998 = vadd.f32 %v997, %v935
    %v999 = vadd.f32 %v998, %v936
    %v1000 = vadd.f32 %v999, %v937
    %v1001 = vadd.f32 %v1000, %v938
    %v1002 = vadd.f32 %v1001, %v939
    %v1003 = vadd.f32 %v1002, %v940
    %v1004 = vadd.f32 %v1003, %v941
    %v1005 = vadd.f32 %v1004, %v942
    %v1006 = vadd.f32 %v1005, %v943
    %v1007 = vadd.f32 %v1006, %v944
    %v1008 = vadd.f32 %v1007, %v945
    %v1009 = vadd.f32 %v1008, %v946
    %v1010 = vadd.f32 %v1009, %v947
    %v1011 = vadd.f32 %v1010, %v948
    %v1012 = vadd.f32 %v1011, %v949
    %v1013 = vadd.f32 %v1012, %v950
    %v1014 = vadd.f32 %v1013, %v951
    %v1015 = vadd.f32 %v1014, %v952
    %v1016 = vadd.f32 %v1015, %v953
    %v1017 = vrot.slane %v1016, 4
    %v1018 = vadd.f32 %v1016, %v1017
    %v1019 = vrot.slane %v1018, 2
    %v1020 = vadd.f32 %v1018, %v1019
    %v1021 = vrot.slane %v1020, 1
    %v1022 = vadd.f32 %v1020, %v1021
    %v1023 = vmul.f32 %v825, 0.0
    %v1024 = vmul.f32 %v1023, %v825
    %v1025 = vsub.f32 %v1022, %v1024
    %v1026 = vmul.f32 %v1025, 0.001953125
    %v1027 = vmax.f32 %v1026, 0.0
    %v1028 = vld [vmem:[%s2] sm:$0x1]
    %v1029 = vadd.f32 %v1027, 1e-05
    %v1030 = vrsqrt.pop %v1029
    %v1031 = vmul.f32 %v1028, %v1030
    %v1032 = vld [vmem:[%s2 + $0x1] sm:$0x1]
    %v1033 = vmul.f32 %v825, %v1031
    %v1034 = vsub.f32 %v1032, %v1033
    %v1035 = vlaneseq
    %v1036 = vshrl.u32 %v1035, 7
    %v1037 = vsub.s32 0, %v1036
    %v1038 = vrot.slane %v1031, %v1037
    %v1039 = vmul.f32 %v692, %v1038
    %v1040 = vmul.f32 %v693, %v1038
    %v1041 = vmul.f32 %v694, %v1038
    %v1042 = vmul.f32 %v695, %v1038
    %v1043 = vmul.f32 %v696, %v1038
    %v1044 = vmul.f32 %v697, %v1038
    %v1045 = vmul.f32 %v698, %v1038
    %v1046 = vmul.f32 %v699, %v1038
    %v1047 = vmul.f32 %v700, %v1038
    %v1048 = vmul.f32 %v701, %v1038
    %v1049 = vmul.f32 %v702, %v1038
    %v1050 = vmul.f32 %v703, %v1038
    %v1051 = vmul.f32 %v704, %v1038
    %v1052 = vmul.f32 %v705, %v1038
    %v1053 = vmul.f32 %v706, %v1038
    %v1054 = vmul.f32 %v707, %v1038
    %v1055 = vmul.f32 %v708, %v1038
    %v1056 = vmul.f32 %v709, %v1038
    %v1057 = vmul.f32 %v710, %v1038
    %v1058 = vmul.f32 %v711, %v1038
    %v1059 = vmul.f32 %v712, %v1038
    %v1060 = vmul.f32 %v713, %v1038
    %v1061 = vmul.f32 %v714, %v1038
    %v1062 = vmul.f32 %v715, %v1038
    %v1063 = vmul.f32 %v716, %v1038
    %v1064 = vmul.f32 %v717, %v1038
    %v1065 = vmul.f32 %v718, %v1038
    %v1066 = vmul.f32 %v719, %v1038
    %v1067 = vmul.f32 %v720, %v1038
    %v1068 = vmul.f32 %v721, %v1038
    %v1069 = vmul.f32 %v722, %v1038
    %v1070 = vmul.f32 %v723, %v1038
    %v1071 = vmul.f32 %v724, %v1038
    %v1072 = vmul.f32 %v725, %v1038
    %v1073 = vmul.f32 %v726, %v1038
    %v1074 = vmul.f32 %v727, %v1038
    %v1075 = vmul.f32 %v728, %v1038
    %v1076 = vmul.f32 %v729, %v1038
    %v1077 = vmul.f32 %v730, %v1038
    %v1078 = vmul.f32 %v731, %v1038
    %v1079 = vmul.f32 %v732, %v1038
    %v1080 = vmul.f32 %v733, %v1038
    %v1081 = vmul.f32 %v734, %v1038
    %v1082 = vmul.f32 %v735, %v1038
    %v1083 = vmul.f32 %v736, %v1038
    %v1084 = vmul.f32 %v737, %v1038
    %v1085 = vmul.f32 %v738, %v1038
    %v1086 = vmul.f32 %v739, %v1038
    %v1087 = vmul.f32 %v740, %v1038
    %v1088 = vmul.f32 %v741, %v1038
    %v1089 = vmul.f32 %v742, %v1038
    %v1090 = vmul.f32 %v743, %v1038
    %v1091 = vmul.f32 %v744, %v1038
    %v1092 = vmul.f32 %v745, %v1038
    %v1093 = vmul.f32 %v746, %v1038
    %v1094 = vmul.f32 %v747, %v1038
    %v1095 = vmul.f32 %v748, %v1038
    %v1096 = vmul.f32 %v749, %v1038
    %v1097 = vmul.f32 %v750, %v1038
    %v1098 = vmul.f32 %v751, %v1038
    %v1099 = vmul.f32 %v752, %v1038
    %v1100 = vmul.f32 %v753, %v1038
    %v1101 = vmul.f32 %v754, %v1038
    %v1102 = vmul.f32 %v755, %v1038
    %v1103 = vlaneseq
    %v1104 = vshrl.u32 %v1103, 7
    %v1105 = vsub.s32 0, %v1104
    %v1106 = vrot.slane %v1034, %v1105
    %v1107 = vadd.f32 %v1039, %v1106
    %v1108 = vadd.f32 %v1040, %v1106
    %v1109 = vadd.f32 %v1041, %v1106
    %v1110 = vadd.f32 %v1042, %v1106
    %v1111 = vadd.f32 %v1043, %v1106
    %v1112 = vadd.f32 %v1044, %v1106
    %v1113 = vadd.f32 %v1045, %v1106
    %v1114 = vadd.f32 %v1046, %v1106
    %v1115 = vadd.f32 %v1047, %v1106
    %v1116 = vadd.f32 %v1048, %v1106
    %v1117 = vadd.f32 %v1049, %v1106
    %v1118 = vadd.f32 %v1050, %v1106
    %v1119 = vadd.f32 %v1051, %v1106
    %v1120 = vadd.f32 %v1052, %v1106
    %v1121 = vadd.f32 %v1053, %v1106
    %v1122 = vadd.f32 %v1054, %v1106
    %v1123 = vadd.f32 %v1055, %v1106
    %v1124 = vadd.f32 %v1056, %v1106
    %v1125 = vadd.f32 %v1057, %v1106
    %v1126 = vadd.f32 %v1058, %v1106
    %v1127 = vadd.f32 %v1059, %v1106
    %v1128 = vadd.f32 %v1060, %v1106
    %v1129 = vadd.f32 %v1061, %v1106
    %v1130 = vadd.f32 %v1062, %v1106
    %v1131 = vadd.f32 %v1063, %v1106
    %v1132 = vadd.f32 %v1064, %v1106
    %v1133 = vadd.f32 %v1065, %v1106
    %v1134 = vadd.f32 %v1066, %v1106
    %v1135 = vadd.f32 %v1067, %v1106
    %v1136 = vadd.f32 %v1068, %v1106
    %v1137 = vadd.f32 %v1069, %v1106
    %v1138 = vadd.f32 %v1070, %v1106
    %v1139 = vadd.f32 %v1071, %v1106
    %v1140 = vadd.f32 %v1072, %v1106
    %v1141 = vadd.f32 %v1073, %v1106
    %v1142 = vadd.f32 %v1074, %v1106
    %v1143 = vadd.f32 %v1075, %v1106
    %v1144 = vadd.f32 %v1076, %v1106
    %v1145 = vadd.f32 %v1077, %v1106
    %v1146 = vadd.f32 %v1078, %v1106
    %v1147 = vadd.f32 %v1079, %v1106
    %v1148 = vadd.f32 %v1080, %v1106
    %v1149 = vadd.f32 %v1081, %v1106
    %v1150 = vadd.f32 %v1082, %v1106
    %v1151 = vadd.f32 %v1083, %v1106
    %v1152 = vadd.f32 %v1084, %v1106
    %v1153 = vadd.f32 %v1085, %v1106
    %v1154 = vadd.f32 %v1086, %v1106
    %v1155 = vadd.f32 %v1087, %v1106
    %v1156 = vadd.f32 %v1088, %v1106
    %v1157 = vadd.f32 %v1089, %v1106
    %v1158 = vadd.f32 %v1090, %v1106
    %v1159 = vadd.f32 %v1091, %v1106
    %v1160 = vadd.f32 %v1092, %v1106
    %v1161 = vadd.f32 %v1093, %v1106
    %v1162 = vadd.f32 %v1094, %v1106
    %v1163 = vadd.f32 %v1095, %v1106
    %v1164 = vadd.f32 %v1096, %v1106
    %v1165 = vadd.f32 %v1097, %v1106
    %v1166 = vadd.f32 %v1098, %v1106
    %v1167 = vadd.f32 %v1099, %v1106
    %v1168 = vadd.f32 %v1100, %v1106
    %v1169 = vadd.f32 %v1101, %v1106
    %v1170 = vadd.f32 %v1102, %v1106
    %v1171 = vmax.f32 %v1107, 0.0
    %v1172 = vmax.f32 %v1108, 0.0
    %v1173 = vmax.f32 %v1109, 0.0
    %v1174 = vmax.f32 %v1110, 0.0
    %v1175 = vmax.f32 %v1111, 0.0
    %v1176 = vmax.f32 %v1112, 0.0
    %v1177 = vmax.f32 %v1113, 0.0
    %v1178 = vmax.f32 %v1114, 0.0
    %v1179 = vmax.f32 %v1115, 0.0
    %v1180 = vmax.f32 %v1116, 0.0
    %v1181 = vmax.f32 %v1117, 0.0
    %v1182 = vmax.f32 %v1118, 0.0
    %v1183 = vmax.f32 %v1119, 0.0
    %v1184 = vmax.f32 %v1120, 0.0
    %v1185 = vmax.f32 %v1121, 0.0
    %v1186 = vmax.f32 %v1122, 0.0
    %v1187 = vmax.f32 %v1123, 0.0
    %v1188 = vmax.f32 %v1124, 0.0
    %v1189 = vmax.f32 %v1125, 0.0
    %v1190 = vmax.f32 %v1126, 0.0
    %v1191 = vmax.f32 %v1127, 0.0
    %v1192 = vmax.f32 %v1128, 0.0
    %v1193 = vmax.f32 %v1129, 0.0
    %v1194 = vmax.f32 %v1130, 0.0
    %v1195 = vmax.f32 %v1131, 0.0
    %v1196 = vmax.f32 %v1132, 0.0
    %v1197 = vmax.f32 %v1133, 0.0
    %v1198 = vmax.f32 %v1134, 0.0
    %v1199 = vmax.f32 %v1135, 0.0
    %v1200 = vmax.f32 %v1136, 0.0
    %v1201 = vmax.f32 %v1137, 0.0
    %v1202 = vmax.f32 %v1138, 0.0
    %v1203 = vmax.f32 %v1139, 0.0
    %v1204 = vmax.f32 %v1140, 0.0
    %v1205 = vmax.f32 %v1141, 0.0
    %v1206 = vmax.f32 %v1142, 0.0
    %v1207 = vmax.f32 %v1143, 0.0
    %v1208 = vmax.f32 %v1144, 0.0
    %v1209 = vmax.f32 %v1145, 0.0
    %v1210 = vmax.f32 %v1146, 0.0
    %v1211 = vmax.f32 %v1147, 0.0
    %v1212 = vmax.f32 %v1148, 0.0
    %v1213 = vmax.f32 %v1149, 0.0
    %v1214 = vmax.f32 %v1150, 0.0
    %v1215 = vmax.f32 %v1151, 0.0
    %v1216 = vmax.f32 %v1152, 0.0
    %v1217 = vmax.f32 %v1153, 0.0
    %v1218 = vmax.f32 %v1154, 0.0
    %v1219 = vmax.f32 %v1155, 0.0
    %v1220 = vmax.f32 %v1156, 0.0
    %v1221 = vmax.f32 %v1157, 0.0
    %v1222 = vmax.f32 %v1158, 0.0
    %v1223 = vmax.f32 %v1159, 0.0
    %v1224 = vmax.f32 %v1160, 0.0
    %v1225 = vmax.f32 %v1161, 0.0
    %v1226 = vmax.f32 %v1162, 0.0
    %v1227 = vmax.f32 %v1163, 0.0
    %v1228 = vmax.f32 %v1164, 0.0
    %v1229 = vmax.f32 %v1165, 0.0
    %v1230 = vmax.f32 %v1166, 0.0
    %v1231 = vmax.f32 %v1167, 0.0
    %v1232 = vmax.f32 %v1168, 0.0
    %v1233 = vmax.f32 %v1169, 0.0
    %v1234 = vmax.f32 %v1170, 0.0
    %v1235 = vpack.c.bf16 %v1172, %v1171
    %v1236 = vpack.c.bf16 %v1174, %v1173
    %v1237 = vpack.c.bf16 %v1176, %v1175
    %v1238 = vpack.c.bf16 %v1178, %v1177
    %v1239 = vpack.c.bf16 %v1180, %v1179
    %v1240 = vpack.c.bf16 %v1182, %v1181
    %v1241 = vpack.c.bf16 %v1184, %v1183
    %v1242 = vpack.c.bf16 %v1186, %v1185
    %v1243 = vpack.c.bf16 %v1188, %v1187
    %v1244 = vpack.c.bf16 %v1190, %v1189
    %v1245 = vpack.c.bf16 %v1192, %v1191
    %v1246 = vpack.c.bf16 %v1194, %v1193
    %v1247 = vpack.c.bf16 %v1196, %v1195
    %v1248 = vpack.c.bf16 %v1198, %v1197
    %v1249 = vpack.c.bf16 %v1200, %v1199
    %v1250 = vpack.c.bf16 %v1202, %v1201
    %v1251 = vpack.c.bf16 %v1204, %v1203
    %v1252 = vpack.c.bf16 %v1206, %v1205
    %v1253 = vpack.c.bf16 %v1208, %v1207
    %v1254 = vpack.c.bf16 %v1210, %v1209
    %v1255 = vpack.c.bf16 %v1212, %v1211
    %v1256 = vpack.c.bf16 %v1214, %v1213
    %v1257 = vpack.c.bf16 %v1216, %v1215
    %v1258 = vpack.c.bf16 %v1218, %v1217
    %v1259 = vpack.c.bf16 %v1220, %v1219
    %v1260 = vpack.c.bf16 %v1222, %v1221
    %v1261 = vpack.c.bf16 %v1224, %v1223
    %v1262 = vpack.c.bf16 %v1226, %v1225
    %v1263 = vpack.c.bf16 %v1228, %v1227
    %v1264 = vpack.c.bf16 %v1230, %v1229
    %v1265 = vpack.c.bf16 %v1232, %v1231
    %v1266 = vpack.c.bf16 %v1234, %v1233
    %v1299 = vunpack.c.l.b16 %v1235
    %v1300 = vunpack.c.h.b16 %v1235
    %v1301 = vunpack.c.l.b16 %v1236
    %v1302 = vunpack.c.h.b16 %v1236
    %v1303 = vunpack.c.l.b16 %v1237
    %v1304 = vunpack.c.h.b16 %v1237
    %v1305 = vunpack.c.l.b16 %v1238
    %v1306 = vunpack.c.h.b16 %v1238
    %v1307 = vunpack.c.l.b16 %v1239
    %v1308 = vunpack.c.h.b16 %v1239
    %v1309 = vunpack.c.l.b16 %v1240
    %v1310 = vunpack.c.h.b16 %v1240
    %v1311 = vunpack.c.l.b16 %v1241
    %v1312 = vunpack.c.h.b16 %v1241
    %v1313 = vunpack.c.l.b16 %v1242
    %v1314 = vunpack.c.h.b16 %v1242
    %v1315 = vunpack.c.l.b16 %v1243
    %v1316 = vunpack.c.h.b16 %v1243
    %v1317 = vunpack.c.l.b16 %v1244
    %v1318 = vunpack.c.h.b16 %v1244
    %v1319 = vunpack.c.l.b16 %v1245
    %v1320 = vunpack.c.h.b16 %v1245
    %v1321 = vunpack.c.l.b16 %v1246
    %v1322 = vunpack.c.h.b16 %v1246
    %v1323 = vunpack.c.l.b16 %v1247
    %v1324 = vunpack.c.h.b16 %v1247
    %v1325 = vunpack.c.l.b16 %v1248
    %v1326 = vunpack.c.h.b16 %v1248
    %v1327 = vunpack.c.l.b16 %v1249
    %v1328 = vunpack.c.h.b16 %v1249
    %v1329 = vunpack.c.l.b16 %v1250
    %v1330 = vunpack.c.h.b16 %v1250
    %v1331 = vunpack.c.l.b16 %v1251
    %v1332 = vunpack.c.h.b16 %v1251
    %v1333 = vunpack.c.l.b16 %v1252
    %v1334 = vunpack.c.h.b16 %v1252
    %v1335 = vunpack.c.l.b16 %v1253
    %v1336 = vunpack.c.h.b16 %v1253
    %v1337 = vunpack.c.l.b16 %v1254
    %v1338 = vunpack.c.h.b16 %v1254
    %v1339 = vunpack.c.l.b16 %v1255
    %v1340 = vunpack.c.h.b16 %v1255
    %v1341 = vunpack.c.l.b16 %v1256
    %v1342 = vunpack.c.h.b16 %v1256
    %v1343 = vunpack.c.l.b16 %v1257
    %v1344 = vunpack.c.h.b16 %v1257
    %v1345 = vunpack.c.l.b16 %v1258
    %v1346 = vunpack.c.h.b16 %v1258
    %v1347 = vunpack.c.l.b16 %v1259
    %v1348 = vunpack.c.h.b16 %v1259
    %v1349 = vunpack.c.l.b16 %v1260
    %v1350 = vunpack.c.h.b16 %v1260
    %v1351 = vunpack.c.l.b16 %v1261
    %v1352 = vunpack.c.h.b16 %v1261
    %v1353 = vunpack.c.l.b16 %v1262
    %v1354 = vunpack.c.h.b16 %v1262
    %v1355 = vunpack.c.l.b16 %v1263
    %v1356 = vunpack.c.h.b16 %v1263
    %v1357 = vunpack.c.l.b16 %v1264
    %v1358 = vunpack.c.h.b16 %v1264
    %v1359 = vunpack.c.l.b16 %v1265
    %v1360 = vunpack.c.h.b16 %v1265
    %v1361 = vunpack.c.l.b16 %v1266
    %v1362 = vunpack.c.h.b16 %v1266
    %v1363 = vpack.c.b16 %v1299, %v1299
    %v1364 = vpack.c.b16 %v1300, %v1300
    %v1365 = vpack.c.b16 %v1301, %v1301
    %v1366 = vpack.c.b16 %v1302, %v1302
    %v1367 = vpack.c.b16 %v1303, %v1303
    %v1368 = vpack.c.b16 %v1304, %v1304
    %v1369 = vpack.c.b16 %v1305, %v1305
    %v1370 = vpack.c.b16 %v1306, %v1306
    %v1371 = vpack.c.b16 %v1307, %v1307
    %v1372 = vpack.c.b16 %v1308, %v1308
    %v1373 = vpack.c.b16 %v1309, %v1309
    %v1374 = vpack.c.b16 %v1310, %v1310
    %v1375 = vpack.c.b16 %v1311, %v1311
    %v1376 = vpack.c.b16 %v1312, %v1312
    %v1377 = vpack.c.b16 %v1313, %v1313
    %v1378 = vpack.c.b16 %v1314, %v1314
    %v1379 = vpack.c.b16 %v1315, %v1315
    %v1380 = vpack.c.b16 %v1316, %v1316
    %v1381 = vpack.c.b16 %v1317, %v1317
    %v1382 = vpack.c.b16 %v1318, %v1318
    %v1383 = vpack.c.b16 %v1319, %v1319
    %v1384 = vpack.c.b16 %v1320, %v1320
    %v1385 = vpack.c.b16 %v1321, %v1321
    %v1386 = vpack.c.b16 %v1322, %v1322
    %v1387 = vpack.c.b16 %v1323, %v1323
    %v1388 = vpack.c.b16 %v1324, %v1324
    %v1389 = vpack.c.b16 %v1325, %v1325
    %v1390 = vpack.c.b16 %v1326, %v1326
    %v1391 = vpack.c.b16 %v1327, %v1327
    %v1392 = vpack.c.b16 %v1328, %v1328
    %v1393 = vpack.c.b16 %v1329, %v1329
    %v1394 = vpack.c.b16 %v1330, %v1330
    %v1395 = vpack.c.b16 %v1331, %v1331
    %v1396 = vpack.c.b16 %v1332, %v1332
    %v1397 = vpack.c.b16 %v1333, %v1333
    %v1398 = vpack.c.b16 %v1334, %v1334
    %v1399 = vpack.c.b16 %v1335, %v1335
    %v1400 = vpack.c.b16 %v1336, %v1336
    %v1401 = vpack.c.b16 %v1337, %v1337
    %v1402 = vpack.c.b16 %v1338, %v1338
    %v1403 = vpack.c.b16 %v1339, %v1339
    %v1404 = vpack.c.b16 %v1340, %v1340
    %v1405 = vpack.c.b16 %v1341, %v1341
    %v1406 = vpack.c.b16 %v1342, %v1342
    %v1407 = vpack.c.b16 %v1343, %v1343
    %v1408 = vpack.c.b16 %v1344, %v1344
    %v1409 = vpack.c.b16 %v1345, %v1345
    %v1410 = vpack.c.b16 %v1346, %v1346
    %v1411 = vpack.c.b16 %v1347, %v1347
    %v1412 = vpack.c.b16 %v1348, %v1348
    %v1413 = vpack.c.b16 %v1349, %v1349
    %v1414 = vpack.c.b16 %v1350, %v1350
    %v1415 = vpack.c.b16 %v1351, %v1351
    %v1416 = vpack.c.b16 %v1352, %v1352
    %v1417 = vpack.c.b16 %v1353, %v1353
    %v1418 = vpack.c.b16 %v1354, %v1354
    %v1419 = vpack.c.b16 %v1355, %v1355
    %v1420 = vpack.c.b16 %v1356, %v1356
    %v1421 = vpack.c.b16 %v1357, %v1357
    %v1422 = vpack.c.b16 %v1358, %v1358
    %v1423 = vpack.c.b16 %v1359, %v1359
    %v1424 = vpack.c.b16 %v1360, %v1360
    %v1425 = vpack.c.b16 %v1361, %v1361
    %v1426 = vpack.c.b16 %v1362, %v1362
    %1491 = vst [vmem:[%s3] sm:$0xf] %v1363
    %1492 = vst [vmem:[%s3 + $0x4] sm:$0xf] %v1364
    %1493 = vst [vmem:[%s3 + $0x8] sm:$0xf] %v1365
    %1494 = vst [vmem:[%s3 + $0xc] sm:$0xf] %v1366
    %1495 = vst [vmem:[%s3 + $0x10] sm:$0xf] %v1367
    %1496 = vst [vmem:[%s3 + $0x14] sm:$0xf] %v1368
    %1497 = vst [vmem:[%s3 + $0x18] sm:$0xf] %v1369
    %1498 = vst [vmem:[%s3 + $0x1c] sm:$0xf] %v1370
    %1499 = vst [vmem:[%s3 + $0x20] sm:$0xf] %v1371
    %1500 = vst [vmem:[%s3 + $0x24] sm:$0xf] %v1372
    %1501 = vst [vmem:[%s3 + $0x28] sm:$0xf] %v1373
    %1502 = vst [vmem:[%s3 + $0x2c] sm:$0xf] %v1374
    %1503 = vst [vmem:[%s3 + $0x30] sm:$0xf] %v1375
    %1504 = vst [vmem:[%s3 + $0x34] sm:$0xf] %v1376
    %1505 = vst [vmem:[%s3 + $0x38] sm:$0xf] %v1377
    %1506 = vst [vmem:[%s3 + $0x3c] sm:$0xf] %v1378
    %1507 = vst [vmem:[%s3 + $0x40] sm:$0xf] %v1379
    %1508 = vst [vmem:[%s3 + $0x44] sm:$0xf] %v1380
    %1509 = vst [vmem:[%s3 + $0x48] sm:$0xf] %v1381
    %1510 = vst [vmem:[%s3 + $0x4c] sm:$0xf] %v1382
    %1511 = vst [vmem:[%s3 + $0x50] sm:$0xf] %v1383
    %1512 = vst [vmem:[%s3 + $0x54] sm:$0xf] %v1384
    %1513 = vst [vmem:[%s3 + $0x58] sm:$0xf] %v1385
    %1514 = vst [vmem:[%s3 + $0x5c] sm:$0xf] %v1386
    %1515 = vst [vmem:[%s3 + $0x60] sm:$0xf] %v1387
    %1516 = vst [vmem:[%s3 + $0x64] sm:$0xf] %v1388
    %1517 = vst [vmem:[%s3 + $0x68] sm:$0xf] %v1389
    %1518 = vst [vmem:[%s3 + $0x6c] sm:$0xf] %v1390
    %1519 = vst [vmem:[%s3 + $0x70] sm:$0xf] %v1391
    %1520 = vst [vmem:[%s3 + $0x74] sm:$0xf] %v1392
    %1521 = vst [vmem:[%s3 + $0x78] sm:$0xf] %v1393
    %1522 = vst [vmem:[%s3 + $0x7c] sm:$0xf] %v1394
    %1523 = vst [vmem:[%s3 + $0x80] sm:$0xf] %v1395
    %1524 = vst [vmem:[%s3 + $0x84] sm:$0xf] %v1396
    %1525 = vst [vmem:[%s3 + $0x88] sm:$0xf] %v1397
    %1526 = vst [vmem:[%s3 + $0x8c] sm:$0xf] %v1398
    %1527 = vst [vmem:[%s3 + $0x90] sm:$0xf] %v1399
    %1528 = vst [vmem:[%s3 + $0x94] sm:$0xf] %v1400
    %1529 = vst [vmem:[%s3 + $0x98] sm:$0xf] %v1401
    %1530 = vst [vmem:[%s3 + $0x9c] sm:$0xf] %v1402
    %1531 = vst [vmem:[%s3 + $0xa0] sm:$0xf] %v1403
    %1532 = vst [vmem:[%s3 + $0xa4] sm:$0xf] %v1404
    %1533 = vst [vmem:[%s3 + $0xa8] sm:$0xf] %v1405
    %1534 = vst [vmem:[%s3 + $0xac] sm:$0xf] %v1406
    %1535 = vst [vmem:[%s3 + $0xb0] sm:$0xf] %v1407
    %1536 = vst [vmem:[%s3 + $0xb4] sm:$0xf] %v1408
    %1537 = vst [vmem:[%s3 + $0xb8] sm:$0xf] %v1409
    %1538 = vst [vmem:[%s3 + $0xbc] sm:$0xf] %v1410
    %1539 = vst [vmem:[%s3 + $0xc0] sm:$0xf] %v1411
    %1540 = vst [vmem:[%s3 + $0xc4] sm:$0xf] %v1412
    %1541 = vst [vmem:[%s3 + $0xc8] sm:$0xf] %v1413
    %1542 = vst [vmem:[%s3 + $0xcc] sm:$0xf] %v1414
    %1543 = vst [vmem:[%s3 + $0xd0] sm:$0xf] %v1415
    %1544 = vst [vmem:[%s3 + $0xd4] sm:$0xf] %v1416
    %1545 = vst [vmem:[%s3 + $0xd8] sm:$0xf] %v1417
    %1546 = vst [vmem:[%s3 + $0xdc] sm:$0xf] %v1418
    %1547 = vst [vmem:[%s3 + $0xe0] sm:$0xf] %v1419
    %1548 = vst [vmem:[%s3 + $0xe4] sm:$0xf] %v1420
    %1549 = vst [vmem:[%s3 + $0xe8] sm:$0xf] %v1421
    %1550 = vst [vmem:[%s3 + $0xec] sm:$0xf] %v1422
    %1551 = vst [vmem:[%s3 + $0xf0] sm:$0xf] %v1423
    %1552 = vst [vmem:[%s3 + $0xf4] sm:$0xf] %v1424
    %1553 = vst [vmem:[%s3 + $0xf8] sm:$0xf] %v1425
    %1554 = vst [vmem:[%s3 + $0xfc] sm:$0xf] %v1426
  $region17: #{resnet_forward.9} parent=0 // pred_fallthru
    _
  // Predicated region
  $region18: #{resnet_forward.9} parent=0 // pred_check
    _
  $region19: #{resnet_forward.9} parent=0 // pred_check_branch
    %1556 = sbr.rel (0) target = $region21
  $region20: #{resnet_forward.9} parent=0 // pred_region
    _
  $region21: #{resnet_forward.9} parent=0 // pred_fallthru
    _
  // Predicated region
  $region22: #{resnet_forward.9} parent=0 // pred_check
    _
  $region23: #{resnet_forward.9} parent=0 // pred_check_branch
    %1558 = sbr.rel (0) target = $region25
  $region24: #{resnet_forward.9} parent=0 // pred_region
    _
  $region25: #{resnet_forward.9} parent=0 // pred_fallthru
    _

// kernel: resnet_forward.10
$region0: #{resnet_forward.10}
  #allocation0 [shape = 'u32[]', space=smem, size = 0x4, offset = 0x4, fixed_abs, tag = 'smem constant byte address 0x4 - core index']
  #allocation1 [shape = 'u32[144,128]{1,0:T(1,128)}', space=vmem, size = 0x12000, scoped, tag = 'internal scratch']
  #allocation2 [shape = 'f32[512,128]{1,0:T(8,128)}', space=vmem, size = 0x40000, scoped, tag = 'scratch operand']
  %s0 = inlined_call_operand.vmem [shape: bf16[512,256], index: 0, kind: input, shape index: {}]
  %s1 = inlined_call_operand.vmem [shape: bf16[256,128], index: 1, kind: input, shape index: {}]
  %s2 = inlined_call_operand.vmem [shape: f32[2,128], index: 2, kind: input, shape index: {}]
  %s3 = inlined_call_operand.vmem [shape: bf16[512,128], index: 3, kind: output, shape index: {}]
  %s4 = sld [smem:[#allocation0]]
  $region26: #{resnet_forward.10} parent=0
    _
  %s6 = ssub.s32 1, %s4
  %s7 = scalar_select 0, %s6, %s4
  // Predicated region
  $region2: #{resnet_forward.10} parent=0 // pred_check
    _
  $region3: #{resnet_forward.10} parent=0 // pred_check_branch
    %9 = sbr.rel (0) target = $region5
  $region4: #{resnet_forward.10} parent=0 // pred_region
    _
  $region5: #{resnet_forward.10} parent=0 // pred_fallthru
    _
  // Predicated region
  $region6: #{resnet_forward.10} parent=0 // pred_check
    _
  $region7: #{resnet_forward.10} parent=0 // pred_check_branch
    %11 = sbr.rel (0) target = $region9
  $region8: #{resnet_forward.10} parent=0 // pred_region
    _
  $region9: #{resnet_forward.10} parent=0 // pred_fallthru
    _
  // Predicated region
  $region10: #{resnet_forward.10} parent=0 // pred_check
    _
  $region11: #{resnet_forward.10} parent=0 // pred_check_branch
    %13 = sbr.rel (0) target = $region13
  $region12: #{resnet_forward.10} parent=0 // pred_region
    _
  $region13: #{resnet_forward.10} parent=0 // pred_fallthru
    _
  %v15 = vld [vmem:[%s0] sm:$0xff]
  %v16 = vld [vmem:[%s0 + $0x8] sm:$0xff]
  %v17 = vld [vmem:[%s0 + $0x10] sm:$0xff]
  %v18 = vld [vmem:[%s0 + $0x18] sm:$0xff]
  %v19 = vld [vmem:[%s0 + $0x20] sm:$0xff]
  %v20 = vld [vmem:[%s0 + $0x28] sm:$0xff]
  %v21 = vld [vmem:[%s0 + $0x30] sm:$0xff]
  %v22 = vld [vmem:[%s0 + $0x38] sm:$0xff]
  %v23 = vld [vmem:[%s0 + $0x40] sm:$0xff]
  %v24 = vld [vmem:[%s0 + $0x48] sm:$0xff]
  %v25 = vld [vmem:[%s0 + $0x50] sm:$0xff]
  %v26 = vld [vmem:[%s0 + $0x58] sm:$0xff]
  %v27 = vld [vmem:[%s0 + $0x60] sm:$0xff]
  %v28 = vld [vmem:[%s0 + $0x68] sm:$0xff]
  %v29 = vld [vmem:[%s0 + $0x70] sm:$0xff]
  %v30 = vld [vmem:[%s0 + $0x78] sm:$0xff]
  %v31 = vld [vmem:[%s0 + $0x80] sm:$0xff]
  %v32 = vld [vmem:[%s0 + $0x88] sm:$0xff]
  %v33 = vld [vmem:[%s0 + $0x90] sm:$0xff]
  %v34 = vld [vmem:[%s0 + $0x98] sm:$0xff]
  %v35 = vld [vmem:[%s0 + $0xa0] sm:$0xff]
  %v36 = vld [vmem:[%s0 + $0xa8] sm:$0xff]
  %v37 = vld [vmem:[%s0 + $0xb0] sm:$0xff]
  %v38 = vld [vmem:[%s0 + $0xb8] sm:$0xff]
  %v39 = vld [vmem:[%s0 + $0xc0] sm:$0xff]
  %v40 = vld [vmem:[%s0 + $0xc8] sm:$0xff]
  %v41 = vld [vmem:[%s0 + $0xd0] sm:$0xff]
  %v42 = vld [vmem:[%s0 + $0xd8] sm:$0xff]
  %v43 = vld [vmem:[%s0 + $0xe0] sm:$0xff]
  %v44 = vld [vmem:[%s0 + $0xe8] sm:$0xff]
  %v45 = vld [vmem:[%s0 + $0xf0] sm:$0xff]
  %v46 = vld [vmem:[%s0 + $0xf8] sm:$0xff]
  %v47 = vld [vmem:[%s0 + $0x100] sm:$0xff]
  %v48 = vld [vmem:[%s0 + $0x108] sm:$0xff]
  %v49 = vld [vmem:[%s0 + $0x110] sm:$0xff]
  %v50 = vld [vmem:[%s0 + $0x118] sm:$0xff]
  %v51 = vld [vmem:[%s0 + $0x120] sm:$0xff]
  %v52 = vld [vmem:[%s0 + $0x128] sm:$0xff]
  %v53 = vld [vmem:[%s0 + $0x130] sm:$0xff]
  %v54 = vld [vmem:[%s0 + $0x138] sm:$0xff]
  %v55 = vld [vmem:[%s0 + $0x140] sm:$0xff]
  %v56 = vld [vmem:[%s0 + $0x148] sm:$0xff]
  %v57 = vld [vmem:[%s0 + $0x150] sm:$0xff]
  %v58 = vld [vmem:[%s0 + $0x158] sm:$0xff]
  %v59 = vld [vmem:[%s0 + $0x160] sm:$0xff]
  %v60 = vld [vmem:[%s0 + $0x168] sm:$0xff]
  %v61 = vld [vmem:[%s0 + $0x170] sm:$0xff]
  %v62 = vld [vmem:[%s0 + $0x178] sm:$0xff]
  %v63 = vld [vmem:[%s0 + $0x180] sm:$0xff]
  %v64 = vld [vmem:[%s0 + $0x188] sm:$0xff]
  %v65 = vld [vmem:[%s0 + $0x190] sm:$0xff]
  %v66 = vld [vmem:[%s0 + $0x198] sm:$0xff]
  %v67 = vld [vmem:[%s0 + $0x1a0] sm:$0xff]
  %v68 = vld [vmem:[%s0 + $0x1a8] sm:$0xff]
  %v69 = vld [vmem:[%s0 + $0x1b0] sm:$0xff]
  %v70 = vld [vmem:[%s0 + $0x1b8] sm:$0xff]
  %v71 = vld [vmem:[%s0 + $0x1c0] sm:$0xff]
  %v72 = vld [vmem:[%s0 + $0x1c8] sm:$0xff]
  %v73 = vld [vmem:[%s0 + $0x1d0] sm:$0xff]
  %v74 = vld [vmem:[%s0 + $0x1d8] sm:$0xff]
  %v75 = vld [vmem:[%s0 + $0x1e0] sm:$0xff]
  %v76 = vld [vmem:[%s0 + $0x1e8] sm:$0xff]
  %v77 = vld [vmem:[%s0 + $0x1f0] sm:$0xff]
  %v78 = vld [vmem:[%s0 + $0x1f8] sm:$0xff]
  %v79 = vld [vmem:[%s1] sm:$0xf]
  %v80 = vld [vmem:[%s1 + $0x4] sm:$0xf]
  %v81 = vld [vmem:[%s1 + $0x8] sm:$0xf]
  %v82 = vld [vmem:[%s1 + $0xc] sm:$0xf]
  %v83 = vld [vmem:[%s1 + $0x10] sm:$0xf]
  %v84 = vld [vmem:[%s1 + $0x14] sm:$0xf]
  %v85 = vld [vmem:[%s1 + $0x18] sm:$0xf]
  %v86 = vld [vmem:[%s1 + $0x1c] sm:$0xf]
  %v87 = vld [vmem:[%s1 + $0x20] sm:$0xf]
  %v88 = vld [vmem:[%s1 + $0x24] sm:$0xf]
  %v89 = vld [vmem:[%s1 + $0x28] sm:$0xf]
  %v90 = vld [vmem:[%s1 + $0x2c] sm:$0xf]
  %v91 = vld [vmem:[%s1 + $0x30] sm:$0xf]
  %v92 = vld [vmem:[%s1 + $0x34] sm:$0xf]
  %v93 = vld [vmem:[%s1 + $0x38] sm:$0xf]
  %v94 = vld [vmem:[%s1 + $0x3c] sm:$0xf]
  %v95 = vld [vmem:[%s1 + $0x40] sm:$0xf]
  %v96 = vld [vmem:[%s1 + $0x44] sm:$0xf]
  %v97 = vld [vmem:[%s1 + $0x48] sm:$0xf]
  %v98 = vld [vmem:[%s1 + $0x4c] sm:$0xf]
  %v99 = vld [vmem:[%s1 + $0x50] sm:$0xf]
  %v100 = vld [vmem:[%s1 + $0x54] sm:$0xf]
  %v101 = vld [vmem:[%s1 + $0x58] sm:$0xf]
  %v102 = vld [vmem:[%s1 + $0x5c] sm:$0xf]
  %v103 = vld [vmem:[%s1 + $0x60] sm:$0xf]
  %v104 = vld [vmem:[%s1 + $0x64] sm:$0xf]
  %v105 = vld [vmem:[%s1 + $0x68] sm:$0xf]
  %v106 = vld [vmem:[%s1 + $0x6c] sm:$0xf]
  %v107 = vld [vmem:[%s1 + $0x70] sm:$0xf]
  %v108 = vld [vmem:[%s1 + $0x74] sm:$0xf]
  %v109 = vld [vmem:[%s1 + $0x78] sm:$0xf]
  %v110 = vld [vmem:[%s1 + $0x7c] sm:$0xf]
  %v175 = vunpack.c.l.b16 %v15
  %v176 = vunpack.c.h.b16 %v15
  %v177 = vunpack.c.l.b16 %v16
  %v178 = vunpack.c.h.b16 %v16
  %v179 = vunpack.c.l.b16 %v17
  %v180 = vunpack.c.h.b16 %v17
  %v181 = vunpack.c.l.b16 %v18
  %v182 = vunpack.c.h.b16 %v18
  %v183 = vunpack.c.l.b16 %v19
  %v184 = vunpack.c.h.b16 %v19
  %v185 = vunpack.c.l.b16 %v20
  %v186 = vunpack.c.h.b16 %v20
  %v187 = vunpack.c.l.b16 %v21
  %v188 = vunpack.c.h.b16 %v21
  %v189 = vunpack.c.l.b16 %v22
  %v190 = vunpack.c.h.b16 %v22
  %v191 = vunpack.c.l.b16 %v23
  %v192 = vunpack.c.h.b16 %v23
  %v193 = vunpack.c.l.b16 %v24
  %v194 = vunpack.c.h.b16 %v24
  %v195 = vunpack.c.l.b16 %v25
  %v196 = vunpack.c.h.b16 %v25
  %v197 = vunpack.c.l.b16 %v26
  %v198 = vunpack.c.h.b16 %v26
  %v199 = vunpack.c.l.b16 %v27
  %v200 = vunpack.c.h.b16 %v27
  %v201 = vunpack.c.l.b16 %v28
  %v202 = vunpack.c.h.b16 %v28
  %v203 = vunpack.c.l.b16 %v29
  %v204 = vunpack.c.h.b16 %v29
  %v205 = vunpack.c.l.b16 %v30
  %v206 = vunpack.c.h.b16 %v30
  %v207 = vunpack.c.l.b16 %v31
  %v208 = vunpack.c.h.b16 %v31
  %v209 = vunpack.c.l.b16 %v32
  %v210 = vunpack.c.h.b16 %v32
  %v211 = vunpack.c.l.b16 %v33
  %v212 = vunpack.c.h.b16 %v33
  %v213 = vunpack.c.l.b16 %v34
  %v214 = vunpack.c.h.b16 %v34
  %v215 = vunpack.c.l.b16 %v35
  %v216 = vunpack.c.h.b16 %v35
  %v217 = vunpack.c.l.b16 %v36
  %v218 = vunpack.c.h.b16 %v36
  %v219 = vunpack.c.l.b16 %v37
  %v220 = vunpack.c.h.b16 %v37
  %v221 = vunpack.c.l.b16 %v38
  %v222 = vunpack.c.h.b16 %v38
  %v223 = vunpack.c.l.b16 %v39
  %v224 = vunpack.c.h.b16 %v39
  %v225 = vunpack.c.l.b16 %v40
  %v226 = vunpack.c.h.b16 %v40
  %v227 = vunpack.c.l.b16 %v41
  %v228 = vunpack.c.h.b16 %v41
  %v229 = vunpack.c.l.b16 %v42
  %v230 = vunpack.c.h.b16 %v42
  %v231 = vunpack.c.l.b16 %v43
  %v232 = vunpack.c.h.b16 %v43
  %v233 = vunpack.c.l.b16 %v44
  %v234 = vunpack.c.h.b16 %v44
  %v235 = vunpack.c.l.b16 %v45
  %v236 = vunpack.c.h.b16 %v45
  %v237 = vunpack.c.l.b16 %v46
  %v238 = vunpack.c.h.b16 %v46
  %v239 = vunpack.c.l.b16 %v47
  %v240 = vunpack.c.h.b16 %v47
  %v241 = vunpack.c.l.b16 %v48
  %v242 = vunpack.c.h.b16 %v48
  %v243 = vunpack.c.l.b16 %v49
  %v244 = vunpack.c.h.b16 %v49
  %v245 = vunpack.c.l.b16 %v50
  %v246 = vunpack.c.h.b16 %v50
  %v247 = vunpack.c.l.b16 %v51
  %v248 = vunpack.c.h.b16 %v51
  %v249 = vunpack.c.l.b16 %v52
  %v250 = vunpack.c.h.b16 %v52
  %v251 = vunpack.c.l.b16 %v53
  %v252 = vunpack.c.h.b16 %v53
  %v253 = vunpack.c.l.b16 %v54
  %v254 = vunpack.c.h.b16 %v54
  %v255 = vunpack.c.l.b16 %v55
  %v256 = vunpack.c.h.b16 %v55
  %v257 = vunpack.c.l.b16 %v56
  %v258 = vunpack.c.h.b16 %v56
  %v259 = vunpack.c.l.b16 %v57
  %v260 = vunpack.c.h.b16 %v57
  %v261 = vunpack.c.l.b16 %v58
  %v262 = vunpack.c.h.b16 %v58
  %v263 = vunpack.c.l.b16 %v59
  %v264 = vunpack.c.h.b16 %v59
  %v265 = vunpack.c.l.b16 %v60
  %v266 = vunpack.c.h.b16 %v60
  %v267 = vunpack.c.l.b16 %v61
  %v268 = vunpack.c.h.b16 %v61
  %v269 = vunpack.c.l.b16 %v62
  %v270 = vunpack.c.h.b16 %v62
  %v271 = vunpack.c.l.b16 %v63
  %v272 = vunpack.c.h.b16 %v63
  %v273 = vunpack.c.l.b16 %v64
  %v274 = vunpack.c.h.b16 %v64
  %v275 = vunpack.c.l.b16 %v65
  %v276 = vunpack.c.h.b16 %v65
  %v277 = vunpack.c.l.b16 %v66
  %v278 = vunpack.c.h.b16 %v66
  %v279 = vunpack.c.l.b16 %v67
  %v280 = vunpack.c.h.b16 %v67
  %v281 = vunpack.c.l.b16 %v68
  %v282 = vunpack.c.h.b16 %v68
  %v283 = vunpack.c.l.b16 %v69
  %v284 = vunpack.c.h.b16 %v69
  %v285 = vunpack.c.l.b16 %v70
  %v286 = vunpack.c.h.b16 %v70
  %v287 = vunpack.c.l.b16 %v71
  %v288 = vunpack.c.h.b16 %v71
  %v289 = vunpack.c.l.b16 %v72
  %v290 = vunpack.c.h.b16 %v72
  %v291 = vunpack.c.l.b16 %v73
  %v292 = vunpack.c.h.b16 %v73
  %v293 = vunpack.c.l.b16 %v74
  %v294 = vunpack.c.h.b16 %v74
  %v295 = vunpack.c.l.b16 %v75
  %v296 = vunpack.c.h.b16 %v75
  %v297 = vunpack.c.l.b16 %v76
  %v298 = vunpack.c.h.b16 %v76
  %v299 = vunpack.c.l.b16 %v77
  %v300 = vunpack.c.h.b16 %v77
  %v301 = vunpack.c.l.b16 %v78
  %v302 = vunpack.c.h.b16 %v78
  %v303 = vpack.c.b16 %v177, %v175
  %v304 = vpack.c.b16 %v178, %v176
  %v305 = vpack.c.b16 %v181, %v179
  %v306 = vpack.c.b16 %v182, %v180
  %v307 = vpack.c.b16 %v185, %v183
  %v308 = vpack.c.b16 %v186, %v184
  %v309 = vpack.c.b16 %v189, %v187
  %v310 = vpack.c.b16 %v190, %v188
  %v311 = vpack.c.b16 %v193, %v191
  %v312 = vpack.c.b16 %v194, %v192
  %v313 = vpack.c.b16 %v197, %v195
  %v314 = vpack.c.b16 %v198, %v196
  %v315 = vpack.c.b16 %v201, %v199
  %v316 = vpack.c.b16 %v202, %v200
  %v317 = vpack.c.b16 %v205, %v203
  %v318 = vpack.c.b16 %v206, %v204
  %v319 = vpack.c.b16 %v209, %v207
  %v320 = vpack.c.b16 %v210, %v208
  %v321 = vpack.c.b16 %v213, %v211
  %v322 = vpack.c.b16 %v214, %v212
  %v323 = vpack.c.b16 %v217, %v215
  %v324 = vpack.c.b16 %v218, %v216
  %v325 = vpack.c.b16 %v221, %v219
  %v326 = vpack.c.b16 %v222, %v220
  %v327 = vpack.c.b16 %v225, %v223
  %v328 = vpack.c.b16 %v226, %v224
  %v329 = vpack.c.b16 %v229, %v227
  %v330 = vpack.c.b16 %v230, %v228
  %v331 = vpack.c.b16 %v233, %v231
  %v332 = vpack.c.b16 %v234, %v232
  %v333 = vpack.c.b16 %v237, %v235
  %v334 = vpack.c.b16 %v238, %v236
  %v335 = vpack.c.b16 %v241, %v239
  %v336 = vpack.c.b16 %v242, %v240
  %v337 = vpack.c.b16 %v245, %v243
  %v338 = vpack.c.b16 %v246, %v244
  %v339 = vpack.c.b16 %v249, %v247
  %v340 = vpack.c.b16 %v250, %v248
  %v341 = vpack.c.b16 %v253, %v251
  %v342 = vpack.c.b16 %v254, %v252
  %v343 = vpack.c.b16 %v257, %v255
  %v344 = vpack.c.b16 %v258, %v256
  %v345 = vpack.c.b16 %v261, %v259
  %v346 = vpack.c.b16 %v262, %v260
  %v347 = vpack.c.b16 %v265, %v263
  %v348 = vpack.c.b16 %v266, %v264
  %v349 = vpack.c.b16 %v269, %v267
  %v350 = vpack.c.b16 %v270, %v268
  %v351 = vpack.c.b16 %v273, %v271
  %v352 = vpack.c.b16 %v274, %v272
  %v353 = vpack.c.b16 %v277, %v275
  %v354 = vpack.c.b16 %v278, %v276
  %v355 = vpack.c.b16 %v281, %v279
  %v356 = vpack.c.b16 %v282, %v280
  %v357 = vpack.c.b16 %v285, %v283
  %v358 = vpack.c.b16 %v286, %v284
  %v359 = vpack.c.b16 %v289, %v287
  %v360 = vpack.c.b16 %v290, %v288
  %v361 = vpack.c.b16 %v293, %v291
  %v362 = vpack.c.b16 %v294, %v292
  %v363 = vpack.c.b16 %v297, %v295
  %v364 = vpack.c.b16 %v298, %v296
  %v365 = vpack.c.b16 %v301, %v299
  %v366 = vpack.c.b16 %v302, %v300
  %v463 = vunpack.c.l.b16 %v79
  %v464 = vunpack.c.l.b16 %v80
  %v465 = vunpack.c.l.b16 %v81
  %v466 = vunpack.c.l.b16 %v82
  %v467 = vunpack.c.l.b16 %v83
  %v468 = vunpack.c.l.b16 %v84
  %v469 = vunpack.c.l.b16 %v85
  %v470 = vunpack.c.l.b16 %v86
  %v471 = vunpack.c.l.b16 %v87
  %v472 = vunpack.c.l.b16 %v88
  %v473 = vunpack.c.l.b16 %v89
  %v474 = vunpack.c.l.b16 %v90
  %v475 = vunpack.c.l.b16 %v91
  %v476 = vunpack.c.l.b16 %v92
  %v477 = vunpack.c.l.b16 %v93
  %v478 = vunpack.c.l.b16 %v94
  %v479 = vunpack.c.l.b16 %v95
  %v480 = vunpack.c.l.b16 %v96
  %v481 = vunpack.c.l.b16 %v97
  %v482 = vunpack.c.l.b16 %v98
  %v483 = vunpack.c.l.b16 %v99
  %v484 = vunpack.c.l.b16 %v100
  %v485 = vunpack.c.l.b16 %v101
  %v486 = vunpack.c.l.b16 %v102
  %v487 = vunpack.c.l.b16 %v103
  %v488 = vunpack.c.l.b16 %v104
  %v489 = vunpack.c.l.b16 %v105
  %v490 = vunpack.c.l.b16 %v106
  %v491 = vunpack.c.l.b16 %v107
  %v492 = vunpack.c.l.b16 %v108
  %v493 = vunpack.c.l.b16 %v109
  %v494 = vunpack.c.l.b16 %v110
  %v495 = vpack.c.b16 %v464, %v463
  %v496 = vpack.c.b16 %v466, %v465
  %v497 = vpack.c.b16 %v468, %v467
  %v498 = vpack.c.b16 %v470, %v469
  %v499 = vpack.c.b16 %v472, %v471
  %v500 = vpack.c.b16 %v474, %v473
  %v501 = vpack.c.b16 %v476, %v475
  %v502 = vpack.c.b16 %v478, %v477
  %v503 = vpack.c.b16 %v480, %v479
  %v504 = vpack.c.b16 %v482, %v481
  %v505 = vpack.c.b16 %v484, %v483
  %v506 = vpack.c.b16 %v486, %v485
  %v507 = vpack.c.b16 %v488, %v487
  %v508 = vpack.c.b16 %v490, %v489
  %v509 = vpack.c.b16 %v492, %v491
  %v510 = vpack.c.b16 %v494, %v493
  %527 = vmatprep.subr.bf16.mxu0 0
  %528 = vmatpush1.bf16.msra.mxu0 %v495
  %529 = vmatprep.subr.bf16.mxu0 0
  %530 = vmatpush1.bf16.msra.mxu0 %v496
  %531 = vmatprep.subr.bf16.mxu0 0
  %532 = vmatpush1.bf16.msra.mxu0 %v497
  %533 = vmatprep.subr.bf16.mxu0 0
  %534 = vmatpush1.bf16.msra.mxu0 %v498
  %535 = vmatprep.subr.bf16.mxu0 0
  %536 = vmatpush1.bf16.msra.mxu0 %v499
  %537 = vmatprep.subr.bf16.mxu0 0
  %538 = vmatpush1.bf16.msra.mxu0 %v500
  %539 = vmatprep.subr.bf16.mxu0 0
  %540 = vmatpush1.bf16.msra.mxu0 %v501
  %541 = vmatprep.subr.bf16.mxu0 0
  %542 = vmatpush1.bf16.msra.mxu0 %v502
  %543 = vmatprep.subr.bf16.mxu0 0
  %544 = vmatpush1.bf16.msra.mxu0 %v503
  %545 = vmatprep.subr.bf16.mxu0 0
  %546 = vmatpush1.bf16.msra.mxu0 %v504
  %547 = vmatprep.subr.bf16.mxu0 0
  %548 = vmatpush1.bf16.msra.mxu0 %v505
  %549 = vmatprep.subr.bf16.mxu0 0
  %550 = vmatpush1.bf16.msra.mxu0 %v506
  %551 = vmatprep.subr.bf16.mxu0 0
  %552 = vmatpush1.bf16.msra.mxu0 %v507
  %553 = vmatprep.subr.bf16.mxu0 0
  %554 = vmatpush1.bf16.msra.mxu0 %v508
  %555 = vmatprep.subr.bf16.mxu0 0
  %556 = vmatpush1.bf16.msra.mxu0 %v509
  %557 = vmatprep.subr.bf16.mxu0 0
  %558 = vmatpush1.bf16.msra.mxu0 %v510
  %559 = vmatprep.mubr.bf16.mxu0 %v304
  %560 = vmatmul.mubr.bf16.gmra.mrb[0].mxu0 %v303
  %v561 = vpop.f32.mrb[0].mxu0
  %v562 = vadd.f32 0.0, %v561
  %v563 = vpop.f32.mrb[0].mxu0
  %v564 = vpop.f32.mrb[0].mxu0
  %v565 = vadd.f32 0.0, %v564
  %v566 = vpop.f32.mrb[0].mxu0
  %567 = vmatprep.mubr.bf16.mxu0 %v306
  %568 = vmatmul.mubr.bf16.gmra.mrb[0].mxu0 %v305
  %v569 = vpop.f32.mrb[0].mxu0
  %v570 = vadd.f32 0.0, %v569
  %v571 = vpop.f32.mrb[0].mxu0
  %v572 = vpop.f32.mrb[0].mxu0
  %v573 = vadd.f32 0.0, %v572
  %v574 = vpop.f32.mrb[0].mxu0
  %575 = vmatprep.mubr.bf16.mxu0 %v308
  %576 = vmatmul.mubr.bf16.gmra.mrb[0].mxu0 %v307
  %v577 = vpop.f32.mrb[0].mxu0
  %v578 = vadd.f32 0.0, %v577
  %v579 = vpop.f32.mrb[0].mxu0
  %v580 = vpop.f32.mrb[0].mxu0
  %v581 = vadd.f32 0.0, %v580
  %v582 = vpop.f32.mrb[0].mxu0
  %583 = vmatprep.mubr.bf16.mxu0 %v310
  %584 = vmatmul.mubr.bf16.gmra.mrb[0].mxu0 %v309
  %v585 = vpop.f32.mrb[0].mxu0
  %v586 = vadd.f32 0.0, %v585
  %v587 = vpop.f32.mrb[0].mxu0
  %v588 = vpop.f32.mrb[0].mxu0
  %v589 = vadd.f32 0.0, %v588
  %v590 = vpop.f32.mrb[0].mxu0
  %591 = vmatprep.mubr.bf16.mxu0 %v312
  %592 = vmatmul.mubr.bf16.gmra.mrb[0].mxu0 %v311
  %v593 = vpop.f32.mrb[0].mxu0
  %v594 = vadd.f32 0.0, %v593
  %v595 = vpop.f32.mrb[0].mxu0
  %v596 = vpop.f32.mrb[0].mxu0
  %v597 = vadd.f32 0.0, %v596
  %v598 = vpop.f32.mrb[0].mxu0
  %599 = vmatprep.mubr.bf16.mxu0 %v314
  %600 = vmatmul.mubr.bf16.gmra.mrb[0].mxu0 %v313
  %v601 = vpop.f32.mrb[0].mxu0
  %v602 = vadd.f32 0.0, %v601
  %v603 = vpop.f32.mrb[0].mxu0
  %v604 = vpop.f32.mrb[0].mxu0
  %v605 = vadd.f32 0.0, %v604
  %v606 = vpop.f32.mrb[0].mxu0
  %607 = vmatprep.mubr.bf16.mxu0 %v316
  %608 = vmatmul.mubr.bf16.gmra.mrb[0].mxu0 %v315
  %v609 = vpop.f32.mrb[0].mxu0
  %v610 = vadd.f32 0.0, %v609
  %v611 = vpop.f32.mrb[0].mxu0
  %v612 = vpop.f32.mrb[0].mxu0
  %v613 = vadd.f32 0.0, %v612
  %v614 = vpop.f32.mrb[0].mxu0
  %615 = vmatprep.mubr.bf16.mxu0 %v318
  %616 = vmatmul.mubr.bf16.gmra.mrb[0].mxu0 %v317
  %v617 = vpop.f32.mrb[0].mxu0
  %v618 = vadd.f32 0.0, %v617
  %v619 = vpop.f32.mrb[0].mxu0
  %v620 = vpop.f32.mrb[0].mxu0
  %v621 = vadd.f32 0.0, %v620
  %v622 = vpop.f32.mrb[0].mxu0
  %623 = vmatprep.mubr.bf16.mxu0 %v320
  %624 = vmatmul.mubr.bf16.gmra.mrb[0].mxu0 %v319
  %v625 = vpop.f32.mrb[0].mxu0
  %v626 = vadd.f32 0.0, %v625
  %v627 = vpop.f32.mrb[0].mxu0
  %v628 = vpop.f32.mrb[0].mxu0
  %v629 = vadd.f32 0.0, %v628
  %v630 = vpop.f32.mrb[0].mxu0
  %631 = vmatprep.mubr.bf16.mxu0 %v322
  %632 = vmatmul.mubr.bf16.gmra.mrb[0].mxu0 %v321
  %v633 = vpop.f32.mrb[0].mxu0
  %v634 = vadd.f32 0.0, %v633
  %v635 = vpop.f32.mrb[0].mxu0
  %v636 = vpop.f32.mrb[0].mxu0
  %v637 = vadd.f32 0.0, %v636
  %v638 = vpop.f32.mrb[0].mxu0
  %639 = vmatprep.mubr.bf16.mxu0 %v324
  %640 = vmatmul.mubr.bf16.gmra.mrb[0].mxu0 %v323
  %v641 = vpop.f32.mrb[0].mxu0
  %v642 = vadd.f32 0.0, %v641
  %v643 = vpop.f32.mrb[0].mxu0
  %v644 = vpop.f32.mrb[0].mxu0
  %v645 = vadd.f32 0.0, %v644
  %v646 = vpop.f32.mrb[0].mxu0
  %647 = vmatprep.mubr.bf16.mxu0 %v326
  %648 = vmatmul.mubr.bf16.gmra.mrb[0].mxu0 %v325
  %v649 = vpop.f32.mrb[0].mxu0
  %v650 = vadd.f32 0.0, %v649
  %v651 = vpop.f32.mrb[0].mxu0
  %v652 = vpop.f32.mrb[0].mxu0
  %v653 = vadd.f32 0.0, %v652
  %v654 = vpop.f32.mrb[0].mxu0
  %655 = vmatprep.mubr.bf16.mxu0 %v328
  %656 = vmatmul.mubr.bf16.gmra.mrb[0].mxu0 %v327
  %v657 = vpop.f32.mrb[0].mxu0
  %v658 = vadd.f32 0.0, %v657
  %v659 = vpop.f32.mrb[0].mxu0
  %v660 = vpop.f32.mrb[0].mxu0
  %v661 = vadd.f32 0.0, %v660
  %v662 = vpop.f32.mrb[0].mxu0
  %663 = vmatprep.mubr.bf16.mxu0 %v330
  %664 = vmatmul.mubr.bf16.gmra.mrb[0].mxu0 %v329
  %v665 = vpop.f32.mrb[0].mxu0
  %v666 = vadd.f32 0.0, %v665
  %v667 = vpop.f32.mrb[0].mxu0
  %v668 = vpop.f32.mrb[0].mxu0
  %v669 = vadd.f32 0.0, %v668
  %v670 = vpop.f32.mrb[0].mxu0
  %671 = vmatprep.mubr.bf16.mxu0 %v332
  %672 = vmatmul.mubr.bf16.gmra.mrb[0].mxu0 %v331
  %v673 = vpop.f32.mrb[0].mxu0
  %v674 = vadd.f32 0.0, %v673
  %v675 = vpop.f32.mrb[0].mxu0
  %v676 = vpop.f32.mrb[0].mxu0
  %v677 = vadd.f32 0.0, %v676
  %v678 = vpop.f32.mrb[0].mxu0
  %679 = vmatprep.mubr.bf16.mxu0 %v334
  %680 = vmatmul.mubr.bf16.gmra.mrb[0].mxu0 %v333
  %v681 = vpop.f32.mrb[0].mxu0
  %v682 = vadd.f32 0.0, %v681
  %v683 = vpop.f32.mrb[0].mxu0
  %v684 = vpop.f32.mrb[0].mxu0
  %v685 = vadd.f32 0.0, %v684
  %v686 = vpop.f32.mrb[0].mxu0
  %687 = vmatprep.mubr.bf16.mxu0 %v336
  %688 = vmatmul.mubr.bf16.gmra.mrb[0].mxu0 %v335
  %v689 = vpop.f32.mrb[0].mxu0
  %v690 = vadd.f32 0.0, %v689
  %v691 = vpop.f32.mrb[0].mxu0
  %v692 = vpop.f32.mrb[0].mxu0
  %v693 = vadd.f32 0.0, %v692
  %v694 = vpop.f32.mrb[0].mxu0
  %695 = vmatprep.mubr.bf16.mxu0 %v338
  %696 = vmatmul.mubr.bf16.gmra.mrb[0].mxu0 %v337
  %v697 = vpop.f32.mrb[0].mxu0
  %v698 = vadd.f32 0.0, %v697
  %v699 = vpop.f32.mrb[0].mxu0
  %v700 = vpop.f32.mrb[0].mxu0
  %v701 = vadd.f32 0.0, %v700
  %v702 = vpop.f32.mrb[0].mxu0
  %703 = vmatprep.mubr.bf16.mxu0 %v340
  %704 = vmatmul.mubr.bf16.gmra.mrb[0].mxu0 %v339
  %v705 = vpop.f32.mrb[0].mxu0
  %v706 = vadd.f32 0.0, %v705
  %v707 = vpop.f32.mrb[0].mxu0
  %v708 = vpop.f32.mrb[0].mxu0
  %v709 = vadd.f32 0.0, %v708
  %v710 = vpop.f32.mrb[0].mxu0
  %711 = vmatprep.mubr.bf16.mxu0 %v342
  %712 = vmatmul.mubr.bf16.gmra.mrb[0].mxu0 %v341
  %v713 = vpop.f32.mrb[0].mxu0
  %v714 = vadd.f32 0.0, %v713
  %v715 = vpop.f32.mrb[0].mxu0
  %v716 = vpop.f32.mrb[0].mxu0
  %v717 = vadd.f32 0.0, %v716
  %v718 = vpop.f32.mrb[0].mxu0
  %719 = vmatprep.mubr.bf16.mxu0 %v344
  %720 = vmatmul.mubr.bf16.gmra.mrb[0].mxu0 %v343
  %v721 = vpop.f32.mrb[0].mxu0
  %v722 = vadd.f32 0.0, %v721
  %v723 = vpop.f32.mrb[0].mxu0
  %v724 = vpop.f32.mrb[0].mxu0
  %v725 = vadd.f32 0.0, %v724
  %v726 = vpop.f32.mrb[0].mxu0
  %727 = vmatprep.mubr.bf16.mxu0 %v346
  %728 = vmatmul.mubr.bf16.gmra.mrb[0].mxu0 %v345
  %v729 = vpop.f32.mrb[0].mxu0
  %v730 = vadd.f32 0.0, %v729
  %v731 = vpop.f32.mrb[0].mxu0
  %v732 = vpop.f32.mrb[0].mxu0
  %v733 = vadd.f32 0.0, %v732
  %v734 = vpop.f32.mrb[0].mxu0
  %735 = vmatprep.mubr.bf16.mxu0 %v348
  %736 = vmatmul.mubr.bf16.gmra.mrb[0].mxu0 %v347
  %v737 = vpop.f32.mrb[0].mxu0
  %v738 = vadd.f32 0.0, %v737
  %v739 = vpop.f32.mrb[0].mxu0
  %v740 = vpop.f32.mrb[0].mxu0
  %v741 = vadd.f32 0.0, %v740
  %v742 = vpop.f32.mrb[0].mxu0
  %743 = vmatprep.mubr.bf16.mxu0 %v350
  %744 = vmatmul.mubr.bf16.gmra.mrb[0].mxu0 %v349
  %v745 = vpop.f32.mrb[0].mxu0
  %v746 = vadd.f32 0.0, %v745
  %v747 = vpop.f32.mrb[0].mxu0
  %v748 = vpop.f32.mrb[0].mxu0
  %v749 = vadd.f32 0.0, %v748
  %v750 = vpop.f32.mrb[0].mxu0
  %751 = vmatprep.mubr.bf16.mxu0 %v352
  %752 = vmatmul.mubr.bf16.gmra.mrb[0].mxu0 %v351
  %v753 = vpop.f32.mrb[0].mxu0
  %v754 = vadd.f32 0.0, %v753
  %v755 = vpop.f32.mrb[0].mxu0
  %v756 = vpop.f32.mrb[0].mxu0
  %v757 = vadd.f32 0.0, %v756
  %v758 = vpop.f32.mrb[0].mxu0
  %759 = vmatprep.mubr.bf16.mxu0 %v354
  %760 = vmatmul.mubr.bf16.gmra.mrb[0].mxu0 %v353
  %v761 = vpop.f32.mrb[0].mxu0
  %v762 = vadd.f32 0.0, %v761
  %v763 = vpop.f32.mrb[0].mxu0
  %v764 = vpop.f32.mrb[0].mxu0
  %v765 = vadd.f32 0.0, %v764
  %v766 = vpop.f32.mrb[0].mxu0
  %767 = vmatprep.mubr.bf16.mxu0 %v356
  %768 = vmatmul.mubr.bf16.gmra.mrb[0].mxu0 %v355
  %v769 = vpop.f32.mrb[0].mxu0
  %v770 = vadd.f32 0.0, %v769
  %v771 = vpop.f32.mrb[0].mxu0
  %v772 = vpop.f32.mrb[0].mxu0
  %v773 = vadd.f32 0.0, %v772
  %v774 = vpop.f32.mrb[0].mxu0
  %775 = vmatprep.mubr.bf16.mxu0 %v358
  %776 = vmatmul.mubr.bf16.gmra.mrb[0].mxu0 %v357
  %v777 = vpop.f32.mrb[0].mxu0
  %v778 = vadd.f32 0.0, %v777
  %v779 = vpop.f32.mrb[0].mxu0
  %v780 = vpop.f32.mrb[0].mxu0
  %v781 = vadd.f32 0.0, %v780
  %v782 = vpop.f32.mrb[0].mxu0
  %783 = vmatprep.mubr.bf16.mxu0 %v360
  %784 = vmatmul.mubr.bf16.gmra.mrb[0].mxu0 %v359
  %v785 = vpop.f32.mrb[0].mxu0
  %v786 = vadd.f32 0.0, %v785
  %v787 = vpop.f32.mrb[0].mxu0
  %v788 = vpop.f32.mrb[0].mxu0
  %v789 = vadd.f32 0.0, %v788
  %v790 = vpop.f32.mrb[0].mxu0
  %791 = vmatprep.mubr.bf16.mxu0 %v362
  %792 = vmatmul.mubr.bf16.gmra.mrb[0].mxu0 %v361
  %v793 = vpop.f32.mrb[0].mxu0
  %v794 = vadd.f32 0.0, %v793
  %v795 = vpop.f32.mrb[0].mxu0
  %v796 = vpop.f32.mrb[0].mxu0
  %v797 = vadd.f32 0.0, %v796
  %v798 = vpop.f32.mrb[0].mxu0
  %799 = vmatprep.mubr.bf16.mxu0 %v364
  %800 = vmatmul.mubr.bf16.gmra.mrb[0].mxu0 %v363
  %v801 = vpop.f32.mrb[0].mxu0
  %v802 = vadd.f32 0.0, %v801
  %v803 = vpop.f32.mrb[0].mxu0
  %v804 = vpop.f32.mrb[0].mxu0
  %v805 = vadd.f32 0.0, %v804
  %v806 = vpop.f32.mrb[0].mxu0
  %807 = vmatprep.mubr.bf16.mxu0 %v366
  %808 = vmatmul.mubr.bf16.gmra.mrb[0].mxu0 %v365
  %v809 = vpop.f32.mrb[0].mxu0
  %v810 = vadd.f32 0.0, %v809
  %v811 = vpop.f32.mrb[0].mxu0
  %v812 = vpop.f32.mrb[0].mxu0
  %v813 = vadd.f32 0.0, %v812
  %v814 = vpop.f32.mrb[0].mxu0
  %815 = vdwg.mxu0
  %816 = vst [vmem:[#allocation2] sm:$0xff] %v562
  %817 = vst [vmem:[#allocation2 + $0x8] sm:$0xff] %v565
  %818 = vst [vmem:[#allocation2 + $0x10] sm:$0xff] %v570
  %819 = vst [vmem:[#allocation2 + $0x18] sm:$0xff] %v573
  %820 = vst [vmem:[#allocation2 + $0x20] sm:$0xff] %v578
  %821 = vst [vmem:[#allocation2 + $0x28] sm:$0xff] %v581
  %822 = vst [vmem:[#allocation2 + $0x30] sm:$0xff] %v586
  %823 = vst [vmem:[#allocation2 + $0x38] sm:$0xff] %v589
  %824 = vst [vmem:[#allocation2 + $0x40] sm:$0xff] %v594
  %825 = vst [vmem:[#allocation2 + $0x48] sm:$0xff] %v597
  %826 = vst [vmem:[#allocation2 + $0x50] sm:$0xff] %v602
  %827 = vst [vmem:[#allocation2 + $0x58] sm:$0xff] %v605
  %828 = vst [vmem:[#allocation2 + $0x60] sm:$0xff] %v610
  %829 = vst [vmem:[#allocation2 + $0x68] sm:$0xff] %v613
  %830 = vst [vmem:[#allocation2 + $0x70] sm:$0xff] %v618
  %831 = vst [vmem:[#allocation2 + $0x78] sm:$0xff] %v621
  %832 = vst [vmem:[#allocation2 + $0x80] sm:$0xff] %v626
  %833 = vst [vmem:[#allocation2 + $0x88] sm:$0xff] %v629
  %834 = vst [vmem:[#allocation2 + $0x90] sm:$0xff] %v634
  %835 = vst [vmem:[#allocation2 + $0x98] sm:$0xff] %v637
  %836 = vst [vmem:[#allocation2 + $0xa0] sm:$0xff] %v642
  %837 = vst [vmem:[#allocation2 + $0xa8] sm:$0xff] %v645
  %838 = vst [vmem:[#allocation2 + $0xb0] sm:$0xff] %v650
  %839 = vst [vmem:[#allocation2 + $0xb8] sm:$0xff] %v653
  %840 = vst [vmem:[#allocation2 + $0xc0] sm:$0xff] %v658
  %841 = vst [vmem:[#allocation2 + $0xc8] sm:$0xff] %v661
  %842 = vst [vmem:[#allocation2 + $0xd0] sm:$0xff] %v666
  %843 = vst [vmem:[#allocation2 + $0xd8] sm:$0xff] %v669
  %844 = vst [vmem:[#allocation2 + $0xe0] sm:$0xff] %v674
  %845 = vst [vmem:[#allocation2 + $0xe8] sm:$0xff] %v677
  %846 = vst [vmem:[#allocation2 + $0xf0] sm:$0xff] %v682
  %847 = vst [vmem:[#allocation2 + $0xf8] sm:$0xff] %v685
  %848 = vst [vmem:[#allocation2 + $0x100] sm:$0xff] %v690
  %849 = vst [vmem:[#allocation2 + $0x108] sm:$0xff] %v693
  %850 = vst [vmem:[#allocation2 + $0x110] sm:$0xff] %v698
  %851 = vst [vmem:[#allocation2 + $0x118] sm:$0xff] %v701
  %852 = vst [vmem:[#allocation2 + $0x120] sm:$0xff] %v706
  %853 = vst [vmem:[#allocation2 + $0x128] sm:$0xff] %v709
  %854 = vst [vmem:[#allocation2 + $0x130] sm:$0xff] %v714
  %855 = vst [vmem:[#allocation2 + $0x138] sm:$0xff] %v717
  %856 = vst [vmem:[#allocation2 + $0x140] sm:$0xff] %v722
  %857 = vst [vmem:[#allocation2 + $0x148] sm:$0xff] %v725
  %858 = vst [vmem:[#allocation2 + $0x150] sm:$0xff] %v730
  %859 = vst [vmem:[#allocation2 + $0x158] sm:$0xff] %v733
  %860 = vst [vmem:[#allocation2 + $0x160] sm:$0xff] %v738
  %861 = vst [vmem:[#allocation2 + $0x168] sm:$0xff] %v741
  %862 = vst [vmem:[#allocation2 + $0x170] sm:$0xff] %v746
  %863 = vst [vmem:[#allocation2 + $0x178] sm:$0xff] %v749
  %864 = vst [vmem:[#allocation2 + $0x180] sm:$0xff] %v754
  %865 = vst [vmem:[#allocation2 + $0x188] sm:$0xff] %v757
  %866 = vst [vmem:[#allocation2 + $0x190] sm:$0xff] %v762
  %867 = vst [vmem:[#allocation2 + $0x198] sm:$0xff] %v765
  %868 = vst [vmem:[#allocation2 + $0x1a0] sm:$0xff] %v770
  %869 = vst [vmem:[#allocation2 + $0x1a8] sm:$0xff] %v773
  %870 = vst [vmem:[#allocation2 + $0x1b0] sm:$0xff] %v778
  %871 = vst [vmem:[#allocation2 + $0x1b8] sm:$0xff] %v781
  %872 = vst [vmem:[#allocation2 + $0x1c0] sm:$0xff] %v786
  %873 = vst [vmem:[#allocation2 + $0x1c8] sm:$0xff] %v789
  %874 = vst [vmem:[#allocation2 + $0x1d0] sm:$0xff] %v794
  %875 = vst [vmem:[#allocation2 + $0x1d8] sm:$0xff] %v797
  %876 = vst [vmem:[#allocation2 + $0x1e0] sm:$0xff] %v802
  %877 = vst [vmem:[#allocation2 + $0x1e8] sm:$0xff] %v805
  %878 = vst [vmem:[#allocation2 + $0x1f0] sm:$0xff] %v810
  %879 = vst [vmem:[#allocation2 + $0x1f8] sm:$0xff] %v813
  %p880 = scmp.eq.s32.totalorder 0, 0
  // Predicated region
  $region14: #{resnet_forward.10} parent=0 // pred_check
    %p881 = pneg %p880
  $region15: #{resnet_forward.10} parent=0 // pred_check_branch
    %883 = sbr.rel (%p881) target = $region17
  $region16: #{resnet_forward.10} parent=0 // pred_region
    %v884 = vld [vmem:[#allocation2] sm:$0xff]
    %v885 = vld [vmem:[#allocation2 + $0x8] sm:$0xff]
    %v886 = vld [vmem:[#allocation2 + $0x10] sm:$0xff]
    %v887 = vld [vmem:[#allocation2 + $0x18] sm:$0xff]
    %v888 = vld [vmem:[#allocation2 + $0x20] sm:$0xff]
    %v889 = vld [vmem:[#allocation2 + $0x28] sm:$0xff]
    %v890 = vld [vmem:[#allocation2 + $0x30] sm:$0xff]
    %v891 = vld [vmem:[#allocation2 + $0x38] sm:$0xff]
    %v892 = vld [vmem:[#allocation2 + $0x40] sm:$0xff]
    %v893 = vld [vmem:[#allocation2 + $0x48] sm:$0xff]
    %v894 = vld [vmem:[#allocation2 + $0x50] sm:$0xff]
    %v895 = vld [vmem:[#allocation2 + $0x58] sm:$0xff]
    %v896 = vld [vmem:[#allocation2 + $0x60] sm:$0xff]
    %v897 = vld [vmem:[#allocation2 + $0x68] sm:$0xff]
    %v898 = vld [vmem:[#allocation2 + $0x70] sm:$0xff]
    %v899 = vld [vmem:[#allocation2 + $0x78] sm:$0xff]
    %v900 = vld [vmem:[#allocation2 + $0x80] sm:$0xff]
    %v901 = vld [vmem:[#allocation2 + $0x88] sm:$0xff]
    %v902 = vld [vmem:[#allocation2 + $0x90] sm:$0xff]
    %v903 = vld [vmem:[#allocation2 + $0x98] sm:$0xff]
    %v904 = vld [vmem:[#allocation2 + $0xa0] sm:$0xff]
    %v905 = vld [vmem:[#allocation2 + $0xa8] sm:$0xff]
    %v906 = vld [vmem:[#allocation2 + $0xb0] sm:$0xff]
    %v907 = vld [vmem:[#allocation2 + $0xb8] sm:$0xff]
    %v908 = vld [vmem:[#allocation2 + $0xc0] sm:$0xff]
    %v909 = vld [vmem:[#allocation2 + $0xc8] sm:$0xff]
    %v910 = vld [vmem:[#allocation2 + $0xd0] sm:$0xff]
    %v911 = vld [vmem:[#allocation2 + $0xd8] sm:$0xff]
    %v912 = vld [vmem:[#allocation2 + $0xe0] sm:$0xff]
    %v913 = vld [vmem:[#allocation2 + $0xe8] sm:$0xff]
    %v914 = vld [vmem:[#allocation2 + $0xf0] sm:$0xff]
    %v915 = vld [vmem:[#allocation2 + $0xf8] sm:$0xff]
    %v916 = vld [vmem:[#allocation2 + $0x100] sm:$0xff]
    %v917 = vld [vmem:[#allocation2 + $0x108] sm:$0xff]
    %v918 = vld [vmem:[#allocation2 + $0x110] sm:$0xff]
    %v919 = vld [vmem:[#allocation2 + $0x118] sm:$0xff]
    %v920 = vld [vmem:[#allocation2 + $0x120] sm:$0xff]
    %v921 = vld [vmem:[#allocation2 + $0x128] sm:$0xff]
    %v922 = vld [vmem:[#allocation2 + $0x130] sm:$0xff]
    %v923 = vld [vmem:[#allocation2 + $0x138] sm:$0xff]
    %v924 = vld [vmem:[#allocation2 + $0x140] sm:$0xff]
    %v925 = vld [vmem:[#allocation2 + $0x148] sm:$0xff]
    %v926 = vld [vmem:[#allocation2 + $0x150] sm:$0xff]
    %v927 = vld [vmem:[#allocation2 + $0x158] sm:$0xff]
    %v928 = vld [vmem:[#allocation2 + $0x160] sm:$0xff]
    %v929 = vld [vmem:[#allocation2 + $0x168] sm:$0xff]
    %v930 = vld [vmem:[#allocation2 + $0x170] sm:$0xff]
    %v931 = vld [vmem:[#allocation2 + $0x178] sm:$0xff]
    %v932 = vld [vmem:[#allocation2 + $0x180] sm:$0xff]
    %v933 = vld [vmem:[#allocation2 + $0x188] sm:$0xff]
    %v934 = vld [vmem:[#allocation2 + $0x190] sm:$0xff]
    %v935 = vld [vmem:[#allocation2 + $0x198] sm:$0xff]
    %v936 = vld [vmem:[#allocation2 + $0x1a0] sm:$0xff]
    %v937 = vld [vmem:[#allocation2 + $0x1a8] sm:$0xff]
    %v938 = vld [vmem:[#allocation2 + $0x1b0] sm:$0xff]
    %v939 = vld [vmem:[#allocation2 + $0x1b8] sm:$0xff]
    %v940 = vld [vmem:[#allocation2 + $0x1c0] sm:$0xff]
    %v941 = vld [vmem:[#allocation2 + $0x1c8] sm:$0xff]
    %v942 = vld [vmem:[#allocation2 + $0x1d0] sm:$0xff]
    %v943 = vld [vmem:[#allocation2 + $0x1d8] sm:$0xff]
    %v944 = vld [vmem:[#allocation2 + $0x1e0] sm:$0xff]
    %v945 = vld [vmem:[#allocation2 + $0x1e8] sm:$0xff]
    %v946 = vld [vmem:[#allocation2 + $0x1f0] sm:$0xff]
    %v947 = vld [vmem:[#allocation2 + $0x1f8] sm:$0xff]
    %v948 = vadd.f32 %v884, %v885
    %v949 = vadd.f32 %v948, %v886
    %v950 = vadd.f32 %v949, %v887
    %v951 = vadd.f32 %v950, %v888
    %v952 = vadd.f32 %v951, %v889
    %v953 = vadd.f32 %v952, %v890
    %v954 = vadd.f32 %v953, %v891
    %v955 = vadd.f32 %v954, %v892
    %v956 = vadd.f32 %v955, %v893
    %v957 = vadd.f32 %v956, %v894
    %v958 = vadd.f32 %v957, %v895
    %v959 = vadd.f32 %v958, %v896
    %v960 = vadd.f32 %v959, %v897
    %v961 = vadd.f32 %v960, %v898
    %v962 = vadd.f32 %v961, %v899
    %v963 = vadd.f32 %v962, %v900
    %v964 = vadd.f32 %v963, %v901
    %v965 = vadd.f32 %v964, %v902
    %v966 = vadd.f32 %v965, %v903
    %v967 = vadd.f32 %v966, %v904
    %v968 = vadd.f32 %v967, %v905
    %v969 = vadd.f32 %v968, %v906
    %v970 = vadd.f32 %v969, %v907
    %v971 = vadd.f32 %v970, %v908
    %v972 = vadd.f32 %v971, %v909
    %v973 = vadd.f32 %v972, %v910
    %v974 = vadd.f32 %v973, %v911
    %v975 = vadd.f32 %v974, %v912
    %v976 = vadd.f32 %v975, %v913
    %v977 = vadd.f32 %v976, %v914
    %v978 = vadd.f32 %v977, %v915
    %v979 = vadd.f32 %v978, %v916
    %v980 = vadd.f32 %v979, %v917
    %v981 = vadd.f32 %v980, %v918
    %v982 = vadd.f32 %v981, %v919
    %v983 = vadd.f32 %v982, %v920
    %v984 = vadd.f32 %v983, %v921
    %v985 = vadd.f32 %v984, %v922
    %v986 = vadd.f32 %v985, %v923
    %v987 = vadd.f32 %v986, %v924
    %v988 = vadd.f32 %v987, %v925
    %v989 = vadd.f32 %v988, %v926
    %v990 = vadd.f32 %v989, %v927
    %v991 = vadd.f32 %v990, %v928
    %v992 = vadd.f32 %v991, %v929
    %v993 = vadd.f32 %v992, %v930
    %v994 = vadd.f32 %v993, %v931
    %v995 = vadd.f32 %v994, %v932
    %v996 = vadd.f32 %v995, %v933
    %v997 = vadd.f32 %v996, %v934
    %v998 = vadd.f32 %v997, %v935
    %v999 = vadd.f32 %v998, %v936
    %v1000 = vadd.f32 %v999, %v937
    %v1001 = vadd.f32 %v1000, %v938
    %v1002 = vadd.f32 %v1001, %v939
    %v1003 = vadd.f32 %v1002, %v940
    %v1004 = vadd.f32 %v1003, %v941
    %v1005 = vadd.f32 %v1004, %v942
    %v1006 = vadd.f32 %v1005, %v943
    %v1007 = vadd.f32 %v1006, %v944
    %v1008 = vadd.f32 %v1007, %v945
    %v1009 = vadd.f32 %v1008, %v946
    %v1010 = vadd.f32 %v1009, %v947
    %v1011 = vrot.slane %v1010, 4
    %v1012 = vadd.f32 %v1010, %v1011
    %v1013 = vrot.slane %v1012, 2
    %v1014 = vadd.f32 %v1012, %v1013
    %v1015 = vrot.slane %v1014, 1
    %v1016 = vadd.f32 %v1014, %v1015
    %v1017 = vmul.f32 %v1016, 0.001953125
    %v1018 = vsub.f32 %v884, %v1017
    %v1019 = vsub.f32 %v885, %v1017
    %v1020 = vsub.f32 %v886, %v1017
    %v1021 = vsub.f32 %v887, %v1017
    %v1022 = vsub.f32 %v888, %v1017
    %v1023 = vsub.f32 %v889, %v1017
    %v1024 = vsub.f32 %v890, %v1017
    %v1025 = vsub.f32 %v891, %v1017
    %v1026 = vsub.f32 %v892, %v1017
    %v1027 = vsub.f32 %v893, %v1017
    %v1028 = vsub.f32 %v894, %v1017
    %v1029 = vsub.f32 %v895, %v1017
    %v1030 = vsub.f32 %v896, %v1017
    %v1031 = vsub.f32 %v897, %v1017
    %v1032 = vsub.f32 %v898, %v1017
    %v1033 = vsub.f32 %v899, %v1017
    %v1034 = vsub.f32 %v900, %v1017
    %v1035 = vsub.f32 %v901, %v1017
    %v1036 = vsub.f32 %v902, %v1017
    %v1037 = vsub.f32 %v903, %v1017
    %v1038 = vsub.f32 %v904, %v1017
    %v1039 = vsub.f32 %v905, %v1017
    %v1040 = vsub.f32 %v906, %v1017
    %v1041 = vsub.f32 %v907, %v1017
    %v1042 = vsub.f32 %v908, %v1017
    %v1043 = vsub.f32 %v909, %v1017
    %v1044 = vsub.f32 %v910, %v1017
    %v1045 = vsub.f32 %v911, %v1017
    %v1046 = vsub.f32 %v912, %v1017
    %v1047 = vsub.f32 %v913, %v1017
    %v1048 = vsub.f32 %v914, %v1017
    %v1049 = vsub.f32 %v915, %v1017
    %v1050 = vsub.f32 %v916, %v1017
    %v1051 = vsub.f32 %v917, %v1017
    %v1052 = vsub.f32 %v918, %v1017
    %v1053 = vsub.f32 %v919, %v1017
    %v1054 = vsub.f32 %v920, %v1017
    %v1055 = vsub.f32 %v921, %v1017
    %v1056 = vsub.f32 %v922, %v1017
    %v1057 = vsub.f32 %v923, %v1017
    %v1058 = vsub.f32 %v924, %v1017
    %v1059 = vsub.f32 %v925, %v1017
    %v1060 = vsub.f32 %v926, %v1017
    %v1061 = vsub.f32 %v927, %v1017
    %v1062 = vsub.f32 %v928, %v1017
    %v1063 = vsub.f32 %v929, %v1017
    %v1064 = vsub.f32 %v930, %v1017
    %v1065 = vsub.f32 %v931, %v1017
    %v1066 = vsub.f32 %v932, %v1017
    %v1067 = vsub.f32 %v933, %v1017
    %v1068 = vsub.f32 %v934, %v1017
    %v1069 = vsub.f32 %v935, %v1017
    %v1070 = vsub.f32 %v936, %v1017
    %v1071 = vsub.f32 %v937, %v1017
    %v1072 = vsub.f32 %v938, %v1017
    %v1073 = vsub.f32 %v939, %v1017
    %v1074 = vsub.f32 %v940, %v1017
    %v1075 = vsub.f32 %v941, %v1017
    %v1076 = vsub.f32 %v942, %v1017
    %v1077 = vsub.f32 %v943, %v1017
    %v1078 = vsub.f32 %v944, %v1017
    %v1079 = vsub.f32 %v945, %v1017
    %v1080 = vsub.f32 %v946, %v1017
    %v1081 = vsub.f32 %v947, %v1017
    %v1082 = vmul.f32 %v1018, %v1018
    %v1083 = vmul.f32 %v1019, %v1019
    %v1084 = vmul.f32 %v1020, %v1020
    %v1085 = vmul.f32 %v1021, %v1021
    %v1086 = vmul.f32 %v1022, %v1022
    %v1087 = vmul.f32 %v1023, %v1023
    %v1088 = vmul.f32 %v1024, %v1024
    %v1089 = vmul.f32 %v1025, %v1025
    %v1090 = vmul.f32 %v1026, %v1026
    %v1091 = vmul.f32 %v1027, %v1027
    %v1092 = vmul.f32 %v1028, %v1028
    %v1093 = vmul.f32 %v1029, %v1029
    %v1094 = vmul.f32 %v1030, %v1030
    %v1095 = vmul.f32 %v1031, %v1031
    %v1096 = vmul.f32 %v1032, %v1032
    %v1097 = vmul.f32 %v1033, %v1033
    %v1098 = vmul.f32 %v1034, %v1034
    %v1099 = vmul.f32 %v1035, %v1035
    %v1100 = vmul.f32 %v1036, %v1036
    %v1101 = vmul.f32 %v1037, %v1037
    %v1102 = vmul.f32 %v1038, %v1038
    %v1103 = vmul.f32 %v1039, %v1039
    %v1104 = vmul.f32 %v1040, %v1040
    %v1105 = vmul.f32 %v1041, %v1041
    %v1106 = vmul.f32 %v1042, %v1042
    %v1107 = vmul.f32 %v1043, %v1043
    %v1108 = vmul.f32 %v1044, %v1044
    %v1109 = vmul.f32 %v1045, %v1045
    %v1110 = vmul.f32 %v1046, %v1046
    %v1111 = vmul.f32 %v1047, %v1047
    %v1112 = vmul.f32 %v1048, %v1048
    %v1113 = vmul.f32 %v1049, %v1049
    %v1114 = vmul.f32 %v1050, %v1050
    %v1115 = vmul.f32 %v1051, %v1051
    %v1116 = vmul.f32 %v1052, %v1052
    %v1117 = vmul.f32 %v1053, %v1053
    %v1118 = vmul.f32 %v1054, %v1054
    %v1119 = vmul.f32 %v1055, %v1055
    %v1120 = vmul.f32 %v1056, %v1056
    %v1121 = vmul.f32 %v1057, %v1057
    %v1122 = vmul.f32 %v1058, %v1058
    %v1123 = vmul.f32 %v1059, %v1059
    %v1124 = vmul.f32 %v1060, %v1060
    %v1125 = vmul.f32 %v1061, %v1061
    %v1126 = vmul.f32 %v1062, %v1062
    %v1127 = vmul.f32 %v1063, %v1063
    %v1128 = vmul.f32 %v1064, %v1064
    %v1129 = vmul.f32 %v1065, %v1065
    %v1130 = vmul.f32 %v1066, %v1066
    %v1131 = vmul.f32 %v1067, %v1067
    %v1132 = vmul.f32 %v1068, %v1068
    %v1133 = vmul.f32 %v1069, %v1069
    %v1134 = vmul.f32 %v1070, %v1070
    %v1135 = vmul.f32 %v1071, %v1071
    %v1136 = vmul.f32 %v1072, %v1072
    %v1137 = vmul.f32 %v1073, %v1073
    %v1138 = vmul.f32 %v1074, %v1074
    %v1139 = vmul.f32 %v1075, %v1075
    %v1140 = vmul.f32 %v1076, %v1076
    %v1141 = vmul.f32 %v1077, %v1077
    %v1142 = vmul.f32 %v1078, %v1078
    %v1143 = vmul.f32 %v1079, %v1079
    %v1144 = vmul.f32 %v1080, %v1080
    %v1145 = vmul.f32 %v1081, %v1081
    %v1146 = vadd.f32 %v1082, %v1083
    %v1147 = vadd.f32 %v1146, %v1084
    %v1148 = vadd.f32 %v1147, %v1085
    %v1149 = vadd.f32 %v1148, %v1086
    %v1150 = vadd.f32 %v1149, %v1087
    %v1151 = vadd.f32 %v1150, %v1088
    %v1152 = vadd.f32 %v1151, %v1089
    %v1153 = vadd.f32 %v1152, %v1090
    %v1154 = vadd.f32 %v1153, %v1091
    %v1155 = vadd.f32 %v1154, %v1092
    %v1156 = vadd.f32 %v1155, %v1093
    %v1157 = vadd.f32 %v1156, %v1094
    %v1158 = vadd.f32 %v1157, %v1095
    %v1159 = vadd.f32 %v1158, %v1096
    %v1160 = vadd.f32 %v1159, %v1097
    %v1161 = vadd.f32 %v1160, %v1098
    %v1162 = vadd.f32 %v1161, %v1099
    %v1163 = vadd.f32 %v1162, %v1100
    %v1164 = vadd.f32 %v1163, %v1101
    %v1165 = vadd.f32 %v1164, %v1102
    %v1166 = vadd.f32 %v1165, %v1103
    %v1167 = vadd.f32 %v1166, %v1104
    %v1168 = vadd.f32 %v1167, %v1105
    %v1169 = vadd.f32 %v1168, %v1106
    %v1170 = vadd.f32 %v1169, %v1107
    %v1171 = vadd.f32 %v1170, %v1108
    %v1172 = vadd.f32 %v1171, %v1109
    %v1173 = vadd.f32 %v1172, %v1110
    %v1174 = vadd.f32 %v1173, %v1111
    %v1175 = vadd.f32 %v1174, %v1112
    %v1176 = vadd.f32 %v1175, %v1113
    %v1177 = vadd.f32 %v1176, %v1114
    %v1178 = vadd.f32 %v1177, %v1115
    %v1179 = vadd.f32 %v1178, %v1116
    %v1180 = vadd.f32 %v1179, %v1117
    %v1181 = vadd.f32 %v1180, %v1118
    %v1182 = vadd.f32 %v1181, %v1119
    %v1183 = vadd.f32 %v1182, %v1120
    %v1184 = vadd.f32 %v1183, %v1121
    %v1185 = vadd.f32 %v1184, %v1122
    %v1186 = vadd.f32 %v1185, %v1123
    %v1187 = vadd.f32 %v1186, %v1124
    %v1188 = vadd.f32 %v1187, %v1125
    %v1189 = vadd.f32 %v1188, %v1126
    %v1190 = vadd.f32 %v1189, %v1127
    %v1191 = vadd.f32 %v1190, %v1128
    %v1192 = vadd.f32 %v1191, %v1129
    %v1193 = vadd.f32 %v1192, %v1130
    %v1194 = vadd.f32 %v1193, %v1131
    %v1195 = vadd.f32 %v1194, %v1132
    %v1196 = vadd.f32 %v1195, %v1133
    %v1197 = vadd.f32 %v1196, %v1134
    %v1198 = vadd.f32 %v1197, %v1135
    %v1199 = vadd.f32 %v1198, %v1136
    %v1200 = vadd.f32 %v1199, %v1137
    %v1201 = vadd.f32 %v1200, %v1138
    %v1202 = vadd.f32 %v1201, %v1139
    %v1203 = vadd.f32 %v1202, %v1140
    %v1204 = vadd.f32 %v1203, %v1141
    %v1205 = vadd.f32 %v1204, %v1142
    %v1206 = vadd.f32 %v1205, %v1143
    %v1207 = vadd.f32 %v1206, %v1144
    %v1208 = vadd.f32 %v1207, %v1145
    %v1209 = vrot.slane %v1208, 4
    %v1210 = vadd.f32 %v1208, %v1209
    %v1211 = vrot.slane %v1210, 2
    %v1212 = vadd.f32 %v1210, %v1211
    %v1213 = vrot.slane %v1212, 1
    %v1214 = vadd.f32 %v1212, %v1213
    %v1215 = vmul.f32 %v1017, 0.0
    %v1216 = vmul.f32 %v1215, %v1017
    %v1217 = vsub.f32 %v1214, %v1216
    %v1218 = vmul.f32 %v1217, 0.001953125
    %v1219 = vmax.f32 %v1218, 0.0
    %v1220 = vld [vmem:[%s2] sm:$0x1]
    %v1221 = vadd.f32 %v1219, 1e-05
    %v1222 = vrsqrt.pop %v1221
    %v1223 = vmul.f32 %v1220, %v1222
    %v1224 = vld [vmem:[%s2 + $0x1] sm:$0x1]
    %v1225 = vmul.f32 %v1017, %v1223
    %v1226 = vsub.f32 %v1224, %v1225
    %v1227 = vlaneseq
    %v1228 = vshrl.u32 %v1227, 7
    %v1229 = vsub.s32 0, %v1228
    %v1230 = vrot.slane %v1223, %v1229
    %v1231 = vmul.f32 %v884, %v1230
    %v1232 = vmul.f32 %v885, %v1230
    %v1233 = vmul.f32 %v886, %v1230
    %v1234 = vmul.f32 %v887, %v1230
    %v1235 = vmul.f32 %v888, %v1230
    %v1236 = vmul.f32 %v889, %v1230
    %v1237 = vmul.f32 %v890, %v1230
    %v1238 = vmul.f32 %v891, %v1230
    %v1239 = vmul.f32 %v892, %v1230
    %v1240 = vmul.f32 %v893, %v1230
    %v1241 = vmul.f32 %v894, %v1230
    %v1242 = vmul.f32 %v895, %v1230
    %v1243 = vmul.f32 %v896, %v1230
    %v1244 = vmul.f32 %v897, %v1230
    %v1245 = vmul.f32 %v898, %v1230
    %v1246 = vmul.f32 %v899, %v1230
    %v1247 = vmul.f32 %v900, %v1230
    %v1248 = vmul.f32 %v901, %v1230
    %v1249 = vmul.f32 %v902, %v1230
    %v1250 = vmul.f32 %v903, %v1230
    %v1251 = vmul.f32 %v904, %v1230
    %v1252 = vmul.f32 %v905, %v1230
    %v1253 = vmul.f32 %v906, %v1230
    %v1254 = vmul.f32 %v907, %v1230
    %v1255 = vmul.f32 %v908, %v1230
    %v1256 = vmul.f32 %v909, %v1230
    %v1257 = vmul.f32 %v910, %v1230
    %v1258 = vmul.f32 %v911, %v1230
    %v1259 = vmul.f32 %v912, %v1230
    %v1260 = vmul.f32 %v913, %v1230
    %v1261 = vmul.f32 %v914, %v1230
    %v1262 = vmul.f32 %v915, %v1230
    %v1263 = vmul.f32 %v916, %v1230
    %v1264 = vmul.f32 %v917, %v1230
    %v1265 = vmul.f32 %v918, %v1230
    %v1266 = vmul.f32 %v919, %v1230
    %v1267 = vmul.f32 %v920, %v1230
    %v1268 = vmul.f32 %v921, %v1230
    %v1269 = vmul.f32 %v922, %v1230
    %v1270 = vmul.f32 %v923, %v1230
    %v1271 = vmul.f32 %v924, %v1230
    %v1272 = vmul.f32 %v925, %v1230
    %v1273 = vmul.f32 %v926, %v1230
    %v1274 = vmul.f32 %v927, %v1230
    %v1275 = vmul.f32 %v928, %v1230
    %v1276 = vmul.f32 %v929, %v1230
    %v1277 = vmul.f32 %v930, %v1230
    %v1278 = vmul.f32 %v931, %v1230
    %v1279 = vmul.f32 %v932, %v1230
    %v1280 = vmul.f32 %v933, %v1230
    %v1281 = vmul.f32 %v934, %v1230
    %v1282 = vmul.f32 %v935, %v1230
    %v1283 = vmul.f32 %v936, %v1230
    %v1284 = vmul.f32 %v937, %v1230
    %v1285 = vmul.f32 %v938, %v1230
    %v1286 = vmul.f32 %v939, %v1230
    %v1287 = vmul.f32 %v940, %v1230
    %v1288 = vmul.f32 %v941, %v1230
    %v1289 = vmul.f32 %v942, %v1230
    %v1290 = vmul.f32 %v943, %v1230
    %v1291 = vmul.f32 %v944, %v1230
    %v1292 = vmul.f32 %v945, %v1230
    %v1293 = vmul.f32 %v946, %v1230
    %v1294 = vmul.f32 %v947, %v1230
    %v1295 = vlaneseq
    %v1296 = vshrl.u32 %v1295, 7
    %v1297 = vsub.s32 0, %v1296
    %v1298 = vrot.slane %v1226, %v1297
    %v1299 = vadd.f32 %v1231, %v1298
    %v1300 = vadd.f32 %v1232, %v1298
    %v1301 = vadd.f32 %v1233, %v1298
    %v1302 = vadd.f32 %v1234, %v1298
    %v1303 = vadd.f32 %v1235, %v1298
    %v1304 = vadd.f32 %v1236, %v1298
    %v1305 = vadd.f32 %v1237, %v1298
    %v1306 = vadd.f32 %v1238, %v1298
    %v1307 = vadd.f32 %v1239, %v1298
    %v1308 = vadd.f32 %v1240, %v1298
    %v1309 = vadd.f32 %v1241, %v1298
    %v1310 = vadd.f32 %v1242, %v1298
    %v1311 = vadd.f32 %v1243, %v1298
    %v1312 = vadd.f32 %v1244, %v1298
    %v1313 = vadd.f32 %v1245, %v1298
    %v1314 = vadd.f32 %v1246, %v1298
    %v1315 = vadd.f32 %v1247, %v1298
    %v1316 = vadd.f32 %v1248, %v1298
    %v1317 = vadd.f32 %v1249, %v1298
    %v1318 = vadd.f32 %v1250, %v1298
    %v1319 = vadd.f32 %v1251, %v1298
    %v1320 = vadd.f32 %v1252, %v1298
    %v1321 = vadd.f32 %v1253, %v1298
    %v1322 = vadd.f32 %v1254, %v1298
    %v1323 = vadd.f32 %v1255, %v1298
    %v1324 = vadd.f32 %v1256, %v1298
    %v1325 = vadd.f32 %v1257, %v1298
    %v1326 = vadd.f32 %v1258, %v1298
    %v1327 = vadd.f32 %v1259, %v1298
    %v1328 = vadd.f32 %v1260, %v1298
    %v1329 = vadd.f32 %v1261, %v1298
    %v1330 = vadd.f32 %v1262, %v1298
    %v1331 = vadd.f32 %v1263, %v1298
    %v1332 = vadd.f32 %v1264, %v1298
    %v1333 = vadd.f32 %v1265, %v1298
    %v1334 = vadd.f32 %v1266, %v1298
    %v1335 = vadd.f32 %v1267, %v1298
    %v1336 = vadd.f32 %v1268, %v1298
    %v1337 = vadd.f32 %v1269, %v1298
    %v1338 = vadd.f32 %v1270, %v1298
    %v1339 = vadd.f32 %v1271, %v1298
    %v1340 = vadd.f32 %v1272, %v1298
    %v1341 = vadd.f32 %v1273, %v1298
    %v1342 = vadd.f32 %v1274, %v1298
    %v1343 = vadd.f32 %v1275, %v1298
    %v1344 = vadd.f32 %v1276, %v1298
    %v1345 = vadd.f32 %v1277, %v1298
    %v1346 = vadd.f32 %v1278, %v1298
    %v1347 = vadd.f32 %v1279, %v1298
    %v1348 = vadd.f32 %v1280, %v1298
    %v1349 = vadd.f32 %v1281, %v1298
    %v1350 = vadd.f32 %v1282, %v1298
    %v1351 = vadd.f32 %v1283, %v1298
    %v1352 = vadd.f32 %v1284, %v1298
    %v1353 = vadd.f32 %v1285, %v1298
    %v1354 = vadd.f32 %v1286, %v1298
    %v1355 = vadd.f32 %v1287, %v1298
    %v1356 = vadd.f32 %v1288, %v1298
    %v1357 = vadd.f32 %v1289, %v1298
    %v1358 = vadd.f32 %v1290, %v1298
    %v1359 = vadd.f32 %v1291, %v1298
    %v1360 = vadd.f32 %v1292, %v1298
    %v1361 = vadd.f32 %v1293, %v1298
    %v1362 = vadd.f32 %v1294, %v1298
    %v1363 = vmax.f32 %v1299, 0.0
    %v1364 = vmax.f32 %v1300, 0.0
    %v1365 = vmax.f32 %v1301, 0.0
    %v1366 = vmax.f32 %v1302, 0.0
    %v1367 = vmax.f32 %v1303, 0.0
    %v1368 = vmax.f32 %v1304, 0.0
    %v1369 = vmax.f32 %v1305, 0.0
    %v1370 = vmax.f32 %v1306, 0.0
    %v1371 = vmax.f32 %v1307, 0.0
    %v1372 = vmax.f32 %v1308, 0.0
    %v1373 = vmax.f32 %v1309, 0.0
    %v1374 = vmax.f32 %v1310, 0.0
    %v1375 = vmax.f32 %v1311, 0.0
    %v1376 = vmax.f32 %v1312, 0.0
    %v1377 = vmax.f32 %v1313, 0.0
    %v1378 = vmax.f32 %v1314, 0.0
    %v1379 = vmax.f32 %v1315, 0.0
    %v1380 = vmax.f32 %v1316, 0.0
    %v1381 = vmax.f32 %v1317, 0.0
    %v1382 = vmax.f32 %v1318, 0.0
    %v1383 = vmax.f32 %v1319, 0.0
    %v1384 = vmax.f32 %v1320, 0.0
    %v1385 = vmax.f32 %v1321, 0.0
    %v1386 = vmax.f32 %v1322, 0.0
    %v1387 = vmax.f32 %v1323, 0.0
    %v1388 = vmax.f32 %v1324, 0.0
    %v1389 = vmax.f32 %v1325, 0.0
    %v1390 = vmax.f32 %v1326, 0.0
    %v1391 = vmax.f32 %v1327, 0.0
    %v1392 = vmax.f32 %v1328, 0.0
    %v1393 = vmax.f32 %v1329, 0.0
    %v1394 = vmax.f32 %v1330, 0.0
    %v1395 = vmax.f32 %v1331, 0.0
    %v1396 = vmax.f32 %v1332, 0.0
    %v1397 = vmax.f32 %v1333, 0.0
    %v1398 = vmax.f32 %v1334, 0.0
    %v1399 = vmax.f32 %v1335, 0.0
    %v1400 = vmax.f32 %v1336, 0.0
    %v1401 = vmax.f32 %v1337, 0.0
    %v1402 = vmax.f32 %v1338, 0.0
    %v1403 = vmax.f32 %v1339, 0.0
    %v1404 = vmax.f32 %v1340, 0.0
    %v1405 = vmax.f32 %v1341, 0.0
    %v1406 = vmax.f32 %v1342, 0.0
    %v1407 = vmax.f32 %v1343, 0.0
    %v1408 = vmax.f32 %v1344, 0.0
    %v1409 = vmax.f32 %v1345, 0.0
    %v1410 = vmax.f32 %v1346, 0.0
    %v1411 = vmax.f32 %v1347, 0.0
    %v1412 = vmax.f32 %v1348, 0.0
    %v1413 = vmax.f32 %v1349, 0.0
    %v1414 = vmax.f32 %v1350, 0.0
    %v1415 = vmax.f32 %v1351, 0.0
    %v1416 = vmax.f32 %v1352, 0.0
    %v1417 = vmax.f32 %v1353, 0.0
    %v1418 = vmax.f32 %v1354, 0.0
    %v1419 = vmax.f32 %v1355, 0.0
    %v1420 = vmax.f32 %v1356, 0.0
    %v1421 = vmax.f32 %v1357, 0.0
    %v1422 = vmax.f32 %v1358, 0.0
    %v1423 = vmax.f32 %v1359, 0.0
    %v1424 = vmax.f32 %v1360, 0.0
    %v1425 = vmax.f32 %v1361, 0.0
    %v1426 = vmax.f32 %v1362, 0.0
    %v1427 = vpack.c.bf16 %v1364, %v1363
    %v1428 = vpack.c.bf16 %v1366, %v1365
    %v1429 = vpack.c.bf16 %v1368, %v1367
    %v1430 = vpack.c.bf16 %v1370, %v1369
    %v1431 = vpack.c.bf16 %v1372, %v1371
    %v1432 = vpack.c.bf16 %v1374, %v1373
    %v1433 = vpack.c.bf16 %v1376, %v1375
    %v1434 = vpack.c.bf16 %v1378, %v1377
    %v1435 = vpack.c.bf16 %v1380, %v1379
    %v1436 = vpack.c.bf16 %v1382, %v1381
    %v1437 = vpack.c.bf16 %v1384, %v1383
    %v1438 = vpack.c.bf16 %v1386, %v1385
    %v1439 = vpack.c.bf16 %v1388, %v1387
    %v1440 = vpack.c.bf16 %v1390, %v1389
    %v1441 = vpack.c.bf16 %v1392, %v1391
    %v1442 = vpack.c.bf16 %v1394, %v1393
    %v1443 = vpack.c.bf16 %v1396, %v1395
    %v1444 = vpack.c.bf16 %v1398, %v1397
    %v1445 = vpack.c.bf16 %v1400, %v1399
    %v1446 = vpack.c.bf16 %v1402, %v1401
    %v1447 = vpack.c.bf16 %v1404, %v1403
    %v1448 = vpack.c.bf16 %v1406, %v1405
    %v1449 = vpack.c.bf16 %v1408, %v1407
    %v1450 = vpack.c.bf16 %v1410, %v1409
    %v1451 = vpack.c.bf16 %v1412, %v1411
    %v1452 = vpack.c.bf16 %v1414, %v1413
    %v1453 = vpack.c.bf16 %v1416, %v1415
    %v1454 = vpack.c.bf16 %v1418, %v1417
    %v1455 = vpack.c.bf16 %v1420, %v1419
    %v1456 = vpack.c.bf16 %v1422, %v1421
    %v1457 = vpack.c.bf16 %v1424, %v1423
    %v1458 = vpack.c.bf16 %v1426, %v1425
    %v1491 = vunpack.c.l.b16 %v1427
    %v1492 = vunpack.c.h.b16 %v1427
    %v1493 = vunpack.c.l.b16 %v1428
    %v1494 = vunpack.c.h.b16 %v1428
    %v1495 = vunpack.c.l.b16 %v1429
    %v1496 = vunpack.c.h.b16 %v1429
    %v1497 = vunpack.c.l.b16 %v1430
    %v1498 = vunpack.c.h.b16 %v1430
    %v1499 = vunpack.c.l.b16 %v1431
    %v1500 = vunpack.c.h.b16 %v1431
    %v1501 = vunpack.c.l.b16 %v1432
    %v1502 = vunpack.c.h.b16 %v1432
    %v1503 = vunpack.c.l.b16 %v1433
    %v1504 = vunpack.c.h.b16 %v1433
    %v1505 = vunpack.c.l.b16 %v1434
    %v1506 = vunpack.c.h.b16 %v1434
    %v1507 = vunpack.c.l.b16 %v1435
    %v1508 = vunpack.c.h.b16 %v1435
    %v1509 = vunpack.c.l.b16 %v1436
    %v1510 = vunpack.c.h.b16 %v1436
    %v1511 = vunpack.c.l.b16 %v1437
    %v1512 = vunpack.c.h.b16 %v1437
    %v1513 = vunpack.c.l.b16 %v1438
    %v1514 = vunpack.c.h.b16 %v1438
    %v1515 = vunpack.c.l.b16 %v1439
    %v1516 = vunpack.c.h.b16 %v1439
    %v1517 = vunpack.c.l.b16 %v1440
    %v1518 = vunpack.c.h.b16 %v1440
    %v1519 = vunpack.c.l.b16 %v1441
    %v1520 = vunpack.c.h.b16 %v1441
    %v1521 = vunpack.c.l.b16 %v1442
    %v1522 = vunpack.c.h.b16 %v1442
    %v1523 = vunpack.c.l.b16 %v1443
    %v1524 = vunpack.c.h.b16 %v1443
    %v1525 = vunpack.c.l.b16 %v1444
    %v1526 = vunpack.c.h.b16 %v1444
    %v1527 = vunpack.c.l.b16 %v1445
    %v1528 = vunpack.c.h.b16 %v1445
    %v1529 = vunpack.c.l.b16 %v1446
    %v1530 = vunpack.c.h.b16 %v1446
    %v1531 = vunpack.c.l.b16 %v1447
    %v1532 = vunpack.c.h.b16 %v1447
    %v1533 = vunpack.c.l.b16 %v1448
    %v1534 = vunpack.c.h.b16 %v1448
    %v1535 = vunpack.c.l.b16 %v1449
    %v1536 = vunpack.c.h.b16 %v1449
    %v1537 = vunpack.c.l.b16 %v1450
    %v1538 = vunpack.c.h.b16 %v1450
    %v1539 = vunpack.c.l.b16 %v1451
    %v1540 = vunpack.c.h.b16 %v1451
    %v1541 = vunpack.c.l.b16 %v1452
    %v1542 = vunpack.c.h.b16 %v1452
    %v1543 = vunpack.c.l.b16 %v1453
    %v1544 = vunpack.c.h.b16 %v1453
    %v1545 = vunpack.c.l.b16 %v1454
    %v1546 = vunpack.c.h.b16 %v1454
    %v1547 = vunpack.c.l.b16 %v1455
    %v1548 = vunpack.c.h.b16 %v1455
    %v1549 = vunpack.c.l.b16 %v1456
    %v1550 = vunpack.c.h.b16 %v1456
    %v1551 = vunpack.c.l.b16 %v1457
    %v1552 = vunpack.c.h.b16 %v1457
    %v1553 = vunpack.c.l.b16 %v1458
    %v1554 = vunpack.c.h.b16 %v1458
    %v1555 = vpack.c.b16 %v1491, %v1491
    %v1556 = vpack.c.b16 %v1492, %v1492
    %v1557 = vpack.c.b16 %v1493, %v1493
    %v1558 = vpack.c.b16 %v1494, %v1494
    %v1559 = vpack.c.b16 %v1495, %v1495
    %v1560 = vpack.c.b16 %v1496, %v1496
    %v1561 = vpack.c.b16 %v1497, %v1497
    %v1562 = vpack.c.b16 %v1498, %v1498
    %v1563 = vpack.c.b16 %v1499, %v1499
    %v1564 = vpack.c.b16 %v1500, %v1500
    %v1565 = vpack.c.b16 %v1501, %v1501
    %v1566 = vpack.c.b16 %v1502, %v1502
    %v1567 = vpack.c.b16 %v1503, %v1503
    %v1568 = vpack.c.b16 %v1504, %v1504
    %v1569 = vpack.c.b16 %v1505, %v1505
    %v1570 = vpack.c.b16 %v1506, %v1506
    %v1571 = vpack.c.b16 %v1507, %v1507
    %v1572 = vpack.c.b16 %v1508, %v1508
    %v1573 = vpack.c.b16 %v1509, %v1509
    %v1574 = vpack.c.b16 %v1510, %v1510
    %v1575 = vpack.c.b16 %v1511, %v1511
    %v1576 = vpack.c.b16 %v1512, %v1512
    %v1577 = vpack.c.b16 %v1513, %v1513
    %v1578 = vpack.c.b16 %v1514, %v1514
    %v1579 = vpack.c.b16 %v1515, %v1515
    %v1580 = vpack.c.b16 %v1516, %v1516
    %v1581 = vpack.c.b16 %v1517, %v1517
    %v1582 = vpack.c.b16 %v1518, %v1518
    %v1583 = vpack.c.b16 %v1519, %v1519
    %v1584 = vpack.c.b16 %v1520, %v1520
    %v1585 = vpack.c.b16 %v1521, %v1521
    %v1586 = vpack.c.b16 %v1522, %v1522
    %v1587 = vpack.c.b16 %v1523, %v1523
    %v1588 = vpack.c.b16 %v1524, %v1524
    %v1589 = vpack.c.b16 %v1525, %v1525
    %v1590 = vpack.c.b16 %v1526, %v1526
    %v1591 = vpack.c.b16 %v1527, %v1527
    %v1592 = vpack.c.b16 %v1528, %v1528
    %v1593 = vpack.c.b16 %v1529, %v1529
    %v1594 = vpack.c.b16 %v1530, %v1530
    %v1595 = vpack.c.b16 %v1531, %v1531
    %v1596 = vpack.c.b16 %v1532, %v1532
    %v1597 = vpack.c.b16 %v1533, %v1533
    %v1598 = vpack.c.b16 %v1534, %v1534
    %v1599 = vpack.c.b16 %v1535, %v1535
    %v1600 = vpack.c.b16 %v1536, %v1536
    %v1601 = vpack.c.b16 %v1537, %v1537
    %v1602 = vpack.c.b16 %v1538, %v1538
    %v1603 = vpack.c.b16 %v1539, %v1539
    %v1604 = vpack.c.b16 %v1540, %v1540
    %v1605 = vpack.c.b16 %v1541, %v1541
    %v1606 = vpack.c.b16 %v1542, %v1542
    %v1607 = vpack.c.b16 %v1543, %v1543
    %v1608 = vpack.c.b16 %v1544, %v1544
    %v1609 = vpack.c.b16 %v1545, %v1545
    %v1610 = vpack.c.b16 %v1546, %v1546
    %v1611 = vpack.c.b16 %v1547, %v1547
    %v1612 = vpack.c.b16 %v1548, %v1548
    %v1613 = vpack.c.b16 %v1549, %v1549
    %v1614 = vpack.c.b16 %v1550, %v1550
    %v1615 = vpack.c.b16 %v1551, %v1551
    %v1616 = vpack.c.b16 %v1552, %v1552
    %v1617 = vpack.c.b16 %v1553, %v1553
    %v1618 = vpack.c.b16 %v1554, %v1554
    %1683 = vst [vmem:[%s3] sm:$0xf] %v1555
    %1684 = vst [vmem:[%s3 + $0x4] sm:$0xf] %v1556
    %1685 = vst [vmem:[%s3 + $0x8] sm:$0xf] %v1557
    %1686 = vst [vmem:[%s3 + $0xc] sm:$0xf] %v1558
    %1687 = vst [vmem:[%s3 + $0x10] sm:$0xf] %v1559
    %1688 = vst [vmem:[%s3 + $0x14] sm:$0xf] %v1560
    %1689 = vst [vmem:[%s3 + $0x18] sm:$0xf] %v1561
    %1690 = vst [vmem:[%s3 + $0x1c] sm:$0xf] %v1562
    %1691 = vst [vmem:[%s3 + $0x20] sm:$0xf] %v1563
    %1692 = vst [vmem:[%s3 + $0x24] sm:$0xf] %v1564
    %1693 = vst [vmem:[%s3 + $0x28] sm:$0xf] %v1565
    %1694 = vst [vmem:[%s3 + $0x2c] sm:$0xf] %v1566
    %1695 = vst [vmem:[%s3 + $0x30] sm:$0xf] %v1567
    %1696 = vst [vmem:[%s3 + $0x34] sm:$0xf] %v1568
    %1697 = vst [vmem:[%s3 + $0x38] sm:$0xf] %v1569
    %1698 = vst [vmem:[%s3 + $0x3c] sm:$0xf] %v1570
    %1699 = vst [vmem:[%s3 + $0x40] sm:$0xf] %v1571
    %1700 = vst [vmem:[%s3 + $0x44] sm:$0xf] %v1572
    %1701 = vst [vmem:[%s3 + $0x48] sm:$0xf] %v1573
    %1702 = vst [vmem:[%s3 + $0x4c] sm:$0xf] %v1574
    %1703 = vst [vmem:[%s3 + $0x50] sm:$0xf] %v1575
    %1704 = vst [vmem:[%s3 + $0x54] sm:$0xf] %v1576
    %1705 = vst [vmem:[%s3 + $0x58] sm:$0xf] %v1577
    %1706 = vst [vmem:[%s3 + $0x5c] sm:$0xf] %v1578
    %1707 = vst [vmem:[%s3 + $0x60] sm:$0xf] %v1579
    %1708 = vst [vmem:[%s3 + $0x64] sm:$0xf] %v1580
    %1709 = vst [vmem:[%s3 + $0x68] sm:$0xf] %v1581
    %1710 = vst [vmem:[%s3 + $0x6c] sm:$0xf] %v1582
    %1711 = vst [vmem:[%s3 + $0x70] sm:$0xf] %v1583
    %1712 = vst [vmem:[%s3 + $0x74] sm:$0xf] %v1584
    %1713 = vst [vmem:[%s3 + $0x78] sm:$0xf] %v1585
    %1714 = vst [vmem:[%s3 + $0x7c] sm:$0xf] %v1586
    %1715 = vst [vmem:[%s3 + $0x80] sm:$0xf] %v1587
    %1716 = vst [vmem:[%s3 + $0x84] sm:$0xf] %v1588
    %1717 = vst [vmem:[%s3 + $0x88] sm:$0xf] %v1589
    %1718 = vst [vmem:[%s3 + $0x8c] sm:$0xf] %v1590
    %1719 = vst [vmem:[%s3 + $0x90] sm:$0xf] %v1591
    %1720 = vst [vmem:[%s3 + $0x94] sm:$0xf] %v1592
    %1721 = vst [vmem:[%s3 + $0x98] sm:$0xf] %v1593
    %1722 = vst [vmem:[%s3 + $0x9c] sm:$0xf] %v1594
    %1723 = vst [vmem:[%s3 + $0xa0] sm:$0xf] %v1595
    %1724 = vst [vmem:[%s3 + $0xa4] sm:$0xf] %v1596
    %1725 = vst [vmem:[%s3 + $0xa8] sm:$0xf] %v1597
    %1726 = vst [vmem:[%s3 + $0xac] sm:$0xf] %v1598
    %1727 = vst [vmem:[%s3 + $0xb0] sm:$0xf] %v1599
    %1728 = vst [vmem:[%s3 + $0xb4] sm:$0xf] %v1600
    %1729 = vst [vmem:[%s3 + $0xb8] sm:$0xf] %v1601
    %1730 = vst [vmem:[%s3 + $0xbc] sm:$0xf] %v1602
    %1731 = vst [vmem:[%s3 + $0xc0] sm:$0xf] %v1603
    %1732 = vst [vmem:[%s3 + $0xc4] sm:$0xf] %v1604
    %1733 = vst [vmem:[%s3 + $0xc8] sm:$0xf] %v1605
    %1734 = vst [vmem:[%s3 + $0xcc] sm:$0xf] %v1606
    %1735 = vst [vmem:[%s3 + $0xd0] sm:$0xf] %v1607
    %1736 = vst [vmem:[%s3 + $0xd4] sm:$0xf] %v1608
    %1737 = vst [vmem:[%s3 + $0xd8] sm:$0xf] %v1609
    %1738 = vst [vmem:[%s3 + $0xdc] sm:$0xf] %v1610
    %1739 = vst [vmem:[%s3 + $0xe0] sm:$0xf] %v1611
    %1740 = vst [vmem:[%s3 + $0xe4] sm:$0xf] %v1612
    %1741 = vst [vmem:[%s3 + $0xe8] sm:$0xf] %v1613
    %1742 = vst [vmem:[%s3 + $0xec] sm:$0xf] %v1614
    %1743 = vst [vmem:[%s3 + $0xf0] sm:$0xf] %v1615
    %1744 = vst [vmem:[%s3 + $0xf4] sm:$0xf] %v1616
    %1745 = vst [vmem:[%s3 + $0xf8] sm:$0xf] %v1617
    %1746 = vst [vmem:[%s3 + $0xfc] sm:$0xf] %v1618
  $region17: #{resnet_forward.10} parent=0 // pred_fallthru
    _
  // Predicated region
  $region18: #{resnet_forward.10} parent=0 // pred_check
    _
  $region19: #{resnet_forward.10} parent=0 // pred_check_branch
    %1748 = sbr.rel (0) target = $region21
  $region20: #{resnet_forward.10} parent=0 // pred_region
    _
  $region21: #{resnet_forward.10} parent=0 // pred_fallthru
    _
  // Predicated region
  $region22: #{resnet_forward.10} parent=0 // pred_check
    _
  $region23: #{resnet_forward.10} parent=0 // pred_check_branch
    %1750 = sbr.rel (0) target = $region25
  $region24: #{resnet_forward.10} parent=0 // pred_region
    _
  $region25: #{resnet_forward.10} parent=0 // pred_fallthru
    _

// kernel: resnet_forward.11
$region0: #{resnet_forward.11}
  #allocation0 [shape = 'u32[]', space=smem, size = 0x4, offset = 0x4, fixed_abs, tag = 'smem constant byte address 0x4 - core index']
  #allocation1 [shape = 'u32[144,128]{1,0:T(1,128)}', space=vmem, size = 0x12000, scoped, tag = 'internal scratch']
  #allocation2 [shape = 'f32[512,128]{1,0:T(8,128)}', space=vmem, size = 0x40000, scoped, tag = 'scratch operand']
  %s0 = inlined_call_operand.vmem [shape: bf16[512,256], index: 0, kind: input, shape index: {}]
  %s1 = inlined_call_operand.vmem [shape: bf16[256,128], index: 1, kind: input, shape index: {}]
  %s2 = inlined_call_operand.vmem [shape: f32[2,128], index: 2, kind: input, shape index: {}]
  %s3 = inlined_call_operand.vmem [shape: bf16[512,128], index: 3, kind: input, shape index: {}]
  %s4 = inlined_call_operand.vmem [shape: bf16[512,128], index: 4, kind: output, shape index: {}]
  %s5 = sld [smem:[#allocation0]]
  $region30: #{resnet_forward.11} parent=0
    _
  %s7 = ssub.s32 1, %s5
  %s8 = scalar_select 0, %s7, %s5
  // Predicated region
  $region2: #{resnet_forward.11} parent=0 // pred_check
    _
  $region3: #{resnet_forward.11} parent=0 // pred_check_branch
    %10 = sbr.rel (0) target = $region5
  $region4: #{resnet_forward.11} parent=0 // pred_region
    _
  $region5: #{resnet_forward.11} parent=0 // pred_fallthru
    _
  // Predicated region
  $region6: #{resnet_forward.11} parent=0 // pred_check
    _
  $region7: #{resnet_forward.11} parent=0 // pred_check_branch
    %12 = sbr.rel (0) target = $region9
  $region8: #{resnet_forward.11} parent=0 // pred_region
    _
  $region9: #{resnet_forward.11} parent=0 // pred_fallthru
    _
  // Predicated region
  $region10: #{resnet_forward.11} parent=0 // pred_check
    _
  $region11: #{resnet_forward.11} parent=0 // pred_check_branch
    %14 = sbr.rel (0) target = $region13
  $region12: #{resnet_forward.11} parent=0 // pred_region
    _
  $region13: #{resnet_forward.11} parent=0 // pred_fallthru
    _
  // Predicated region
  $region14: #{resnet_forward.11} parent=0 // pred_check
    _
  $region15: #{resnet_forward.11} parent=0 // pred_check_branch
    %16 = sbr.rel (0) target = $region17
  $region16: #{resnet_forward.11} parent=0 // pred_region
    _
  $region17: #{resnet_forward.11} parent=0 // pred_fallthru
    _
  %v18 = vld [vmem:[%s0] sm:$0xff]
  %v19 = vld [vmem:[%s0 + $0x8] sm:$0xff]
  %v20 = vld [vmem:[%s0 + $0x10] sm:$0xff]
  %v21 = vld [vmem:[%s0 + $0x18] sm:$0xff]
  %v22 = vld [vmem:[%s0 + $0x20] sm:$0xff]
  %v23 = vld [vmem:[%s0 + $0x28] sm:$0xff]
  %v24 = vld [vmem:[%s0 + $0x30] sm:$0xff]
  %v25 = vld [vmem:[%s0 + $0x38] sm:$0xff]
  %v26 = vld [vmem:[%s0 + $0x40] sm:$0xff]
  %v27 = vld [vmem:[%s0 + $0x48] sm:$0xff]
  %v28 = vld [vmem:[%s0 + $0x50] sm:$0xff]
  %v29 = vld [vmem:[%s0 + $0x58] sm:$0xff]
  %v30 = vld [vmem:[%s0 + $0x60] sm:$0xff]
  %v31 = vld [vmem:[%s0 + $0x68] sm:$0xff]
  %v32 = vld [vmem:[%s0 + $0x70] sm:$0xff]
  %v33 = vld [vmem:[%s0 + $0x78] sm:$0xff]
  %v34 = vld [vmem:[%s0 + $0x80] sm:$0xff]
  %v35 = vld [vmem:[%s0 + $0x88] sm:$0xff]
  %v36 = vld [vmem:[%s0 + $0x90] sm:$0xff]
  %v37 = vld [vmem:[%s0 + $0x98] sm:$0xff]
  %v38 = vld [vmem:[%s0 + $0xa0] sm:$0xff]
  %v39 = vld [vmem:[%s0 + $0xa8] sm:$0xff]
  %v40 = vld [vmem:[%s0 + $0xb0] sm:$0xff]
  %v41 = vld [vmem:[%s0 + $0xb8] sm:$0xff]
  %v42 = vld [vmem:[%s0 + $0xc0] sm:$0xff]
  %v43 = vld [vmem:[%s0 + $0xc8] sm:$0xff]
  %v44 = vld [vmem:[%s0 + $0xd0] sm:$0xff]
  %v45 = vld [vmem:[%s0 + $0xd8] sm:$0xff]
  %v46 = vld [vmem:[%s0 + $0xe0] sm:$0xff]
  %v47 = vld [vmem:[%s0 + $0xe8] sm:$0xff]
  %v48 = vld [vmem:[%s0 + $0xf0] sm:$0xff]
  %v49 = vld [vmem:[%s0 + $0xf8] sm:$0xff]
  %v50 = vld [vmem:[%s0 + $0x100] sm:$0xff]
  %v51 = vld [vmem:[%s0 + $0x108] sm:$0xff]
  %v52 = vld [vmem:[%s0 + $0x110] sm:$0xff]
  %v53 = vld [vmem:[%s0 + $0x118] sm:$0xff]
  %v54 = vld [vmem:[%s0 + $0x120] sm:$0xff]
  %v55 = vld [vmem:[%s0 + $0x128] sm:$0xff]
  %v56 = vld [vmem:[%s0 + $0x130] sm:$0xff]
  %v57 = vld [vmem:[%s0 + $0x138] sm:$0xff]
  %v58 = vld [vmem:[%s0 + $0x140] sm:$0xff]
  %v59 = vld [vmem:[%s0 + $0x148] sm:$0xff]
  %v60 = vld [vmem:[%s0 + $0x150] sm:$0xff]
  %v61 = vld [vmem:[%s0 + $0x158] sm:$0xff]
  %v62 = vld [vmem:[%s0 + $0x160] sm:$0xff]
  %v63 = vld [vmem:[%s0 + $0x168] sm:$0xff]
  %v64 = vld [vmem:[%s0 + $0x170] sm:$0xff]
  %v65 = vld [vmem:[%s0 + $0x178] sm:$0xff]
  %v66 = vld [vmem:[%s0 + $0x180] sm:$0xff]
  %v67 = vld [vmem:[%s0 + $0x188] sm:$0xff]
  %v68 = vld [vmem:[%s0 + $0x190] sm:$0xff]
  %v69 = vld [vmem:[%s0 + $0x198] sm:$0xff]
  %v70 = vld [vmem:[%s0 + $0x1a0] sm:$0xff]
  %v71 = vld [vmem:[%s0 + $0x1a8] sm:$0xff]
  %v72 = vld [vmem:[%s0 + $0x1b0] sm:$0xff]
  %v73 = vld [vmem:[%s0 + $0x1b8] sm:$0xff]
  %v74 = vld [vmem:[%s0 + $0x1c0] sm:$0xff]
  %v75 = vld [vmem:[%s0 + $0x1c8] sm:$0xff]
  %v76 = vld [vmem:[%s0 + $0x1d0] sm:$0xff]
  %v77 = vld [vmem:[%s0 + $0x1d8] sm:$0xff]
  %v78 = vld [vmem:[%s0 + $0x1e0] sm:$0xff]
  %v79 = vld [vmem:[%s0 + $0x1e8] sm:$0xff]
  %v80 = vld [vmem:[%s0 + $0x1f0] sm:$0xff]
  %v81 = vld [vmem:[%s0 + $0x1f8] sm:$0xff]
  %v82 = vld [vmem:[%s1] sm:$0xf]
  %v83 = vld [vmem:[%s1 + $0x4] sm:$0xf]
  %v84 = vld [vmem:[%s1 + $0x8] sm:$0xf]
  %v85 = vld [vmem:[%s1 + $0xc] sm:$0xf]
  %v86 = vld [vmem:[%s1 + $0x10] sm:$0xf]
  %v87 = vld [vmem:[%s1 + $0x14] sm:$0xf]
  %v88 = vld [vmem:[%s1 + $0x18] sm:$0xf]
  %v89 = vld [vmem:[%s1 + $0x1c] sm:$0xf]
  %v90 = vld [vmem:[%s1 + $0x20] sm:$0xf]
  %v91 = vld [vmem:[%s1 + $0x24] sm:$0xf]
  %v92 = vld [vmem:[%s1 + $0x28] sm:$0xf]
  %v93 = vld [vmem:[%s1 + $0x2c] sm:$0xf]
  %v94 = vld [vmem:[%s1 + $0x30] sm:$0xf]
  %v95 = vld [vmem:[%s1 + $0x34] sm:$0xf]
  %v96 = vld [vmem:[%s1 + $0x38] sm:$0xf]
  %v97 = vld [vmem:[%s1 + $0x3c] sm:$0xf]
  %v98 = vld [vmem:[%s1 + $0x40] sm:$0xf]
  %v99 = vld [vmem:[%s1 + $0x44] sm:$0xf]
  %v100 = vld [vmem:[%s1 + $0x48] sm:$0xf]
  %v101 = vld [vmem:[%s1 + $0x4c] sm:$0xf]
  %v102 = vld [vmem:[%s1 + $0x50] sm:$0xf]
  %v103 = vld [vmem:[%s1 + $0x54] sm:$0xf]
  %v104 = vld [vmem:[%s1 + $0x58] sm:$0xf]
  %v105 = vld [vmem:[%s1 + $0x5c] sm:$0xf]
  %v106 = vld [vmem:[%s1 + $0x60] sm:$0xf]
  %v107 = vld [vmem:[%s1 + $0x64] sm:$0xf]
  %v108 = vld [vmem:[%s1 + $0x68] sm:$0xf]
  %v109 = vld [vmem:[%s1 + $0x6c] sm:$0xf]
  %v110 = vld [vmem:[%s1 + $0x70] sm:$0xf]
  %v111 = vld [vmem:[%s1 + $0x74] sm:$0xf]
  %v112 = vld [vmem:[%s1 + $0x78] sm:$0xf]
  %v113 = vld [vmem:[%s1 + $0x7c] sm:$0xf]
  %v178 = vunpack.c.l.b16 %v18
  %v179 = vunpack.c.h.b16 %v18
  %v180 = vunpack.c.l.b16 %v19
  %v181 = vunpack.c.h.b16 %v19
  %v182 = vunpack.c.l.b16 %v20
  %v183 = vunpack.c.h.b16 %v20
  %v184 = vunpack.c.l.b16 %v21
  %v185 = vunpack.c.h.b16 %v21
  %v186 = vunpack.c.l.b16 %v22
  %v187 = vunpack.c.h.b16 %v22
  %v188 = vunpack.c.l.b16 %v23
  %v189 = vunpack.c.h.b16 %v23
  %v190 = vunpack.c.l.b16 %v24
  %v191 = vunpack.c.h.b16 %v24
  %v192 = vunpack.c.l.b16 %v25
  %v193 = vunpack.c.h.b16 %v25
  %v194 = vunpack.c.l.b16 %v26
  %v195 = vunpack.c.h.b16 %v26
  %v196 = vunpack.c.l.b16 %v27
  %v197 = vunpack.c.h.b16 %v27
  %v198 = vunpack.c.l.b16 %v28
  %v199 = vunpack.c.h.b16 %v28
  %v200 = vunpack.c.l.b16 %v29
  %v201 = vunpack.c.h.b16 %v29
  %v202 = vunpack.c.l.b16 %v30
  %v203 = vunpack.c.h.b16 %v30
  %v204 = vunpack.c.l.b16 %v31
  %v205 = vunpack.c.h.b16 %v31
  %v206 = vunpack.c.l.b16 %v32
  %v207 = vunpack.c.h.b16 %v32
  %v208 = vunpack.c.l.b16 %v33
  %v209 = vunpack.c.h.b16 %v33
  %v210 = vunpack.c.l.b16 %v34
  %v211 = vunpack.c.h.b16 %v34
  %v212 = vunpack.c.l.b16 %v35
  %v213 = vunpack.c.h.b16 %v35
  %v214 = vunpack.c.l.b16 %v36
  %v215 = vunpack.c.h.b16 %v36
  %v216 = vunpack.c.l.b16 %v37
  %v217 = vunpack.c.h.b16 %v37
  %v218 = vunpack.c.l.b16 %v38
  %v219 = vunpack.c.h.b16 %v38
  %v220 = vunpack.c.l.b16 %v39
  %v221 = vunpack.c.h.b16 %v39
  %v222 = vunpack.c.l.b16 %v40
  %v223 = vunpack.c.h.b16 %v40
  %v224 = vunpack.c.l.b16 %v41
  %v225 = vunpack.c.h.b16 %v41
  %v226 = vunpack.c.l.b16 %v42
  %v227 = vunpack.c.h.b16 %v42
  %v228 = vunpack.c.l.b16 %v43
  %v229 = vunpack.c.h.b16 %v43
  %v230 = vunpack.c.l.b16 %v44
  %v231 = vunpack.c.h.b16 %v44
  %v232 = vunpack.c.l.b16 %v45
  %v233 = vunpack.c.h.b16 %v45
  %v234 = vunpack.c.l.b16 %v46
  %v235 = vunpack.c.h.b16 %v46
  %v236 = vunpack.c.l.b16 %v47
  %v237 = vunpack.c.h.b16 %v47
  %v238 = vunpack.c.l.b16 %v48
  %v239 = vunpack.c.h.b16 %v48
  %v240 = vunpack.c.l.b16 %v49
  %v241 = vunpack.c.h.b16 %v49
  %v242 = vunpack.c.l.b16 %v50
  %v243 = vunpack.c.h.b16 %v50
  %v244 = vunpack.c.l.b16 %v51
  %v245 = vunpack.c.h.b16 %v51
  %v246 = vunpack.c.l.b16 %v52
  %v247 = vunpack.c.h.b16 %v52
  %v248 = vunpack.c.l.b16 %v53
  %v249 = vunpack.c.h.b16 %v53
  %v250 = vunpack.c.l.b16 %v54
  %v251 = vunpack.c.h.b16 %v54
  %v252 = vunpack.c.l.b16 %v55
  %v253 = vunpack.c.h.b16 %v55
  %v254 = vunpack.c.l.b16 %v56
  %v255 = vunpack.c.h.b16 %v56
  %v256 = vunpack.c.l.b16 %v57
  %v257 = vunpack.c.h.b16 %v57
  %v258 = vunpack.c.l.b16 %v58
  %v259 = vunpack.c.h.b16 %v58
  %v260 = vunpack.c.l.b16 %v59
  %v261 = vunpack.c.h.b16 %v59
  %v262 = vunpack.c.l.b16 %v60
  %v263 = vunpack.c.h.b16 %v60
  %v264 = vunpack.c.l.b16 %v61
  %v265 = vunpack.c.h.b16 %v61
  %v266 = vunpack.c.l.b16 %v62
  %v267 = vunpack.c.h.b16 %v62
  %v268 = vunpack.c.l.b16 %v63
  %v269 = vunpack.c.h.b16 %v63
  %v270 = vunpack.c.l.b16 %v64
  %v271 = vunpack.c.h.b16 %v64
  %v272 = vunpack.c.l.b16 %v65
  %v273 = vunpack.c.h.b16 %v65
  %v274 = vunpack.c.l.b16 %v66
  %v275 = vunpack.c.h.b16 %v66
  %v276 = vunpack.c.l.b16 %v67
  %v277 = vunpack.c.h.b16 %v67
  %v278 = vunpack.c.l.b16 %v68
  %v279 = vunpack.c.h.b16 %v68
  %v280 = vunpack.c.l.b16 %v69
  %v281 = vunpack.c.h.b16 %v69
  %v282 = vunpack.c.l.b16 %v70
  %v283 = vunpack.c.h.b16 %v70
  %v284 = vunpack.c.l.b16 %v71
  %v285 = vunpack.c.h.b16 %v71
  %v286 = vunpack.c.l.b16 %v72
  %v287 = vunpack.c.h.b16 %v72
  %v288 = vunpack.c.l.b16 %v73
  %v289 = vunpack.c.h.b16 %v73
  %v290 = vunpack.c.l.b16 %v74
  %v291 = vunpack.c.h.b16 %v74
  %v292 = vunpack.c.l.b16 %v75
  %v293 = vunpack.c.h.b16 %v75
  %v294 = vunpack.c.l.b16 %v76
  %v295 = vunpack.c.h.b16 %v76
  %v296 = vunpack.c.l.b16 %v77
  %v297 = vunpack.c.h.b16 %v77
  %v298 = vunpack.c.l.b16 %v78
  %v299 = vunpack.c.h.b16 %v78
  %v300 = vunpack.c.l.b16 %v79
  %v301 = vunpack.c.h.b16 %v79
  %v302 = vunpack.c.l.b16 %v80
  %v303 = vunpack.c.h.b16 %v80
  %v304 = vunpack.c.l.b16 %v81
  %v305 = vunpack.c.h.b16 %v81
  %v306 = vpack.c.b16 %v180, %v178
  %v307 = vpack.c.b16 %v181, %v179
  %v308 = vpack.c.b16 %v184, %v182
  %v309 = vpack.c.b16 %v185, %v183
  %v310 = vpack.c.b16 %v188, %v186
  %v311 = vpack.c.b16 %v189, %v187
  %v312 = vpack.c.b16 %v192, %v190
  %v313 = vpack.c.b16 %v193, %v191
  %v314 = vpack.c.b16 %v196, %v194
  %v315 = vpack.c.b16 %v197, %v195
  %v316 = vpack.c.b16 %v200, %v198
  %v317 = vpack.c.b16 %v201, %v199
  %v318 = vpack.c.b16 %v204, %v202
  %v319 = vpack.c.b16 %v205, %v203
  %v320 = vpack.c.b16 %v208, %v206
  %v321 = vpack.c.b16 %v209, %v207
  %v322 = vpack.c.b16 %v212, %v210
  %v323 = vpack.c.b16 %v213, %v211
  %v324 = vpack.c.b16 %v216, %v214
  %v325 = vpack.c.b16 %v217, %v215
  %v326 = vpack.c.b16 %v220, %v218
  %v327 = vpack.c.b16 %v221, %v219
  %v328 = vpack.c.b16 %v224, %v222
  %v329 = vpack.c.b16 %v225, %v223
  %v330 = vpack.c.b16 %v228, %v226
  %v331 = vpack.c.b16 %v229, %v227
  %v332 = vpack.c.b16 %v232, %v230
  %v333 = vpack.c.b16 %v233, %v231
  %v334 = vpack.c.b16 %v236, %v234
  %v335 = vpack.c.b16 %v237, %v235
  %v336 = vpack.c.b16 %v240, %v238
  %v337 = vpack.c.b16 %v241, %v239
  %v338 = vpack.c.b16 %v244, %v242
  %v339 = vpack.c.b16 %v245, %v243
  %v340 = vpack.c.b16 %v248, %v246
  %v341 = vpack.c.b16 %v249, %v247
  %v342 = vpack.c.b16 %v252, %v250
  %v343 = vpack.c.b16 %v253, %v251
  %v344 = vpack.c.b16 %v256, %v254
  %v345 = vpack.c.b16 %v257, %v255
  %v346 = vpack.c.b16 %v260, %v258
  %v347 = vpack.c.b16 %v261, %v259
  %v348 = vpack.c.b16 %v264, %v262
  %v349 = vpack.c.b16 %v265, %v263
  %v350 = vpack.c.b16 %v268, %v266
  %v351 = vpack.c.b16 %v269, %v267
  %v352 = vpack.c.b16 %v272, %v270
  %v353 = vpack.c.b16 %v273, %v271
  %v354 = vpack.c.b16 %v276, %v274
  %v355 = vpack.c.b16 %v277, %v275
  %v356 = vpack.c.b16 %v280, %v278
  %v357 = vpack.c.b16 %v281, %v279
  %v358 = vpack.c.b16 %v284, %v282
  %v359 = vpack.c.b16 %v285, %v283
  %v360 = vpack.c.b16 %v288, %v286
  %v361 = vpack.c.b16 %v289, %v287
  %v362 = vpack.c.b16 %v292, %v290
  %v363 = vpack.c.b16 %v293, %v291
  %v364 = vpack.c.b16 %v296, %v294
  %v365 = vpack.c.b16 %v297, %v295
  %v366 = vpack.c.b16 %v300, %v298
  %v367 = vpack.c.b16 %v301, %v299
  %v368 = vpack.c.b16 %v304, %v302
  %v369 = vpack.c.b16 %v305, %v303
  %v466 = vunpack.c.l.b16 %v82
  %v467 = vunpack.c.l.b16 %v83
  %v468 = vunpack.c.l.b16 %v84
  %v469 = vunpack.c.l.b16 %v85
  %v470 = vunpack.c.l.b16 %v86
  %v471 = vunpack.c.l.b16 %v87
  %v472 = vunpack.c.l.b16 %v88
  %v473 = vunpack.c.l.b16 %v89
  %v474 = vunpack.c.l.b16 %v90
  %v475 = vunpack.c.l.b16 %v91
  %v476 = vunpack.c.l.b16 %v92
  %v477 = vunpack.c.l.b16 %v93
  %v478 = vunpack.c.l.b16 %v94
  %v479 = vunpack.c.l.b16 %v95
  %v480 = vunpack.c.l.b16 %v96
  %v481 = vunpack.c.l.b16 %v97
  %v482 = vunpack.c.l.b16 %v98
  %v483 = vunpack.c.l.b16 %v99
  %v484 = vunpack.c.l.b16 %v100
  %v485 = vunpack.c.l.b16 %v101
  %v486 = vunpack.c.l.b16 %v102
  %v487 = vunpack.c.l.b16 %v103
  %v488 = vunpack.c.l.b16 %v104
  %v489 = vunpack.c.l.b16 %v105
  %v490 = vunpack.c.l.b16 %v106
  %v491 = vunpack.c.l.b16 %v107
  %v492 = vunpack.c.l.b16 %v108
  %v493 = vunpack.c.l.b16 %v109
  %v494 = vunpack.c.l.b16 %v110
  %v495 = vunpack.c.l.b16 %v111
  %v496 = vunpack.c.l.b16 %v112
  %v497 = vunpack.c.l.b16 %v113
  %v498 = vpack.c.b16 %v467, %v466
  %v499 = vpack.c.b16 %v469, %v468
  %v500 = vpack.c.b16 %v471, %v470
  %v501 = vpack.c.b16 %v473, %v472
  %v502 = vpack.c.b16 %v475, %v474
  %v503 = vpack.c.b16 %v477, %v476
  %v504 = vpack.c.b16 %v479, %v478
  %v505 = vpack.c.b16 %v481, %v480
  %v506 = vpack.c.b16 %v483, %v482
  %v507 = vpack.c.b16 %v485, %v484
  %v508 = vpack.c.b16 %v487, %v486
  %v509 = vpack.c.b16 %v489, %v488
  %v510 = vpack.c.b16 %v491, %v490
  %v511 = vpack.c.b16 %v493, %v492
  %v512 = vpack.c.b16 %v495, %v494
  %v513 = vpack.c.b16 %v497, %v496
  %530 = vmatprep.subr.bf16.mxu0 0
  %531 = vmatpush1.bf16.msra.mxu0 %v498
  %532 = vmatprep.subr.bf16.mxu0 0
  %533 = vmatpush1.bf16.msra.mxu0 %v499
  %534 = vmatprep.subr.bf16.mxu0 0
  %535 = vmatpush1.bf16.msra.mxu0 %v500
  %536 = vmatprep.subr.bf16.mxu0 0
  %537 = vmatpush1.bf16.msra.mxu0 %v501
  %538 = vmatprep.subr.bf16.mxu0 0
  %539 = vmatpush1.bf16.msra.mxu0 %v502
  %540 = vmatprep.subr.bf16.mxu0 0
  %541 = vmatpush1.bf16.msra.mxu0 %v503
  %542 = vmatprep.subr.bf16.mxu0 0
  %543 = vmatpush1.bf16.msra.mxu0 %v504
  %544 = vmatprep.subr.bf16.mxu0 0
  %545 = vmatpush1.bf16.msra.mxu0 %v505
  %546 = vmatprep.subr.bf16.mxu0 0
  %547 = vmatpush1.bf16.msra.mxu0 %v506
  %548 = vmatprep.subr.bf16.mxu0 0
  %549 = vmatpush1.bf16.msra.mxu0 %v507
  %550 = vmatprep.subr.bf16.mxu0 0
  %551 = vmatpush1.bf16.msra.mxu0 %v508
  %552 = vmatprep.subr.bf16.mxu0 0
  %553 = vmatpush1.bf16.msra.mxu0 %v509
  %554 = vmatprep.subr.bf16.mxu0 0
  %555 = vmatpush1.bf16.msra.mxu0 %v510
  %556 = vmatprep.subr.bf16.mxu0 0
  %557 = vmatpush1.bf16.msra.mxu0 %v511
  %558 = vmatprep.subr.bf16.mxu0 0
  %559 = vmatpush1.bf16.msra.mxu0 %v512
  %560 = vmatprep.subr.bf16.mxu0 0
  %561 = vmatpush1.bf16.msra.mxu0 %v513
  %562 = vmatprep.mubr.bf16.mxu0 %v307
  %563 = vmatmul.mubr.bf16.gmra.mrb[0].mxu0 %v306
  %v564 = vpop.f32.mrb[0].mxu0
  %v565 = vadd.f32 0.0, %v564
  %v566 = vpop.f32.mrb[0].mxu0
  %v567 = vpop.f32.mrb[0].mxu0
  %v568 = vadd.f32 0.0, %v567
  %v569 = vpop.f32.mrb[0].mxu0
  %570 = vmatprep.mubr.bf16.mxu0 %v309
  %571 = vmatmul.mubr.bf16.gmra.mrb[0].mxu0 %v308
  %v572 = vpop.f32.mrb[0].mxu0
  %v573 = vadd.f32 0.0, %v572
  %v574 = vpop.f32.mrb[0].mxu0
  %v575 = vpop.f32.mrb[0].mxu0
  %v576 = vadd.f32 0.0, %v575
  %v577 = vpop.f32.mrb[0].mxu0
  %578 = vmatprep.mubr.bf16.mxu0 %v311
  %579 = vmatmul.mubr.bf16.gmra.mrb[0].mxu0 %v310
  %v580 = vpop.f32.mrb[0].mxu0
  %v581 = vadd.f32 0.0, %v580
  %v582 = vpop.f32.mrb[0].mxu0
  %v583 = vpop.f32.mrb[0].mxu0
  %v584 = vadd.f32 0.0, %v583
  %v585 = vpop.f32.mrb[0].mxu0
  %586 = vmatprep.mubr.bf16.mxu0 %v313
  %587 = vmatmul.mubr.bf16.gmra.mrb[0].mxu0 %v312
  %v588 = vpop.f32.mrb[0].mxu0
  %v589 = vadd.f32 0.0, %v588
  %v590 = vpop.f32.mrb[0].mxu0
  %v591 = vpop.f32.mrb[0].mxu0
  %v592 = vadd.f32 0.0, %v591
  %v593 = vpop.f32.mrb[0].mxu0
  %594 = vmatprep.mubr.bf16.mxu0 %v315
  %595 = vmatmul.mubr.bf16.gmra.mrb[0].mxu0 %v314
  %v596 = vpop.f32.mrb[0].mxu0
  %v597 = vadd.f32 0.0, %v596
  %v598 = vpop.f32.mrb[0].mxu0
  %v599 = vpop.f32.mrb[0].mxu0
  %v600 = vadd.f32 0.0, %v599
  %v601 = vpop.f32.mrb[0].mxu0
  %602 = vmatprep.mubr.bf16.mxu0 %v317
  %603 = vmatmul.mubr.bf16.gmra.mrb[0].mxu0 %v316
  %v604 = vpop.f32.mrb[0].mxu0
  %v605 = vadd.f32 0.0, %v604
  %v606 = vpop.f32.mrb[0].mxu0
  %v607 = vpop.f32.mrb[0].mxu0
  %v608 = vadd.f32 0.0, %v607
  %v609 = vpop.f32.mrb[0].mxu0
  %610 = vmatprep.mubr.bf16.mxu0 %v319
  %611 = vmatmul.mubr.bf16.gmra.mrb[0].mxu0 %v318
  %v612 = vpop.f32.mrb[0].mxu0
  %v613 = vadd.f32 0.0, %v612
  %v614 = vpop.f32.mrb[0].mxu0
  %v615 = vpop.f32.mrb[0].mxu0
  %v616 = vadd.f32 0.0, %v615
  %v617 = vpop.f32.mrb[0].mxu0
  %618 = vmatprep.mubr.bf16.mxu0 %v321
  %619 = vmatmul.mubr.bf16.gmra.mrb[0].mxu0 %v320
  %v620 = vpop.f32.mrb[0].mxu0
  %v621 = vadd.f32 0.0, %v620
  %v622 = vpop.f32.mrb[0].mxu0
  %v623 = vpop.f32.mrb[0].mxu0
  %v624 = vadd.f32 0.0, %v623
  %v625 = vpop.f32.mrb[0].mxu0
  %626 = vmatprep.mubr.bf16.mxu0 %v323
  %627 = vmatmul.mubr.bf16.gmra.mrb[0].mxu0 %v322
  %v628 = vpop.f32.mrb[0].mxu0
  %v629 = vadd.f32 0.0, %v628
  %v630 = vpop.f32.mrb[0].mxu0
  %v631 = vpop.f32.mrb[0].mxu0
  %v632 = vadd.f32 0.0, %v631
  %v633 = vpop.f32.mrb[0].mxu0
  %634 = vmatprep.mubr.bf16.mxu0 %v325
  %635 = vmatmul.mubr.bf16.gmra.mrb[0].mxu0 %v324
  %v636 = vpop.f32.mrb[0].mxu0
  %v637 = vadd.f32 0.0, %v636
  %v638 = vpop.f32.mrb[0].mxu0
  %v639 = vpop.f32.mrb[0].mxu0
  %v640 = vadd.f32 0.0, %v639
  %v641 = vpop.f32.mrb[0].mxu0
  %642 = vmatprep.mubr.bf16.mxu0 %v327
  %643 = vmatmul.mubr.bf16.gmra.mrb[0].mxu0 %v326
  %v644 = vpop.f32.mrb[0].mxu0
  %v645 = vadd.f32 0.0, %v644
  %v646 = vpop.f32.mrb[0].mxu0
  %v647 = vpop.f32.mrb[0].mxu0
  %v648 = vadd.f32 0.0, %v647
  %v649 = vpop.f32.mrb[0].mxu0
  %650 = vmatprep.mubr.bf16.mxu0 %v329
  %651 = vmatmul.mubr.bf16.gmra.mrb[0].mxu0 %v328
  %v652 = vpop.f32.mrb[0].mxu0
  %v653 = vadd.f32 0.0, %v652
  %v654 = vpop.f32.mrb[0].mxu0
  %v655 = vpop.f32.mrb[0].mxu0
  %v656 = vadd.f32 0.0, %v655
  %v657 = vpop.f32.mrb[0].mxu0
  %658 = vmatprep.mubr.bf16.mxu0 %v331
  %659 = vmatmul.mubr.bf16.gmra.mrb[0].mxu0 %v330
  %v660 = vpop.f32.mrb[0].mxu0
  %v661 = vadd.f32 0.0, %v660
  %v662 = vpop.f32.mrb[0].mxu0
  %v663 = vpop.f32.mrb[0].mxu0
  %v664 = vadd.f32 0.0, %v663
  %v665 = vpop.f32.mrb[0].mxu0
  %666 = vmatprep.mubr.bf16.mxu0 %v333
  %667 = vmatmul.mubr.bf16.gmra.mrb[0].mxu0 %v332
  %v668 = vpop.f32.mrb[0].mxu0
  %v669 = vadd.f32 0.0, %v668
  %v670 = vpop.f32.mrb[0].mxu0
  %v671 = vpop.f32.mrb[0].mxu0
  %v672 = vadd.f32 0.0, %v671
  %v673 = vpop.f32.mrb[0].mxu0
  %674 = vmatprep.mubr.bf16.mxu0 %v335
  %675 = vmatmul.mubr.bf16.gmra.mrb[0].mxu0 %v334
  %v676 = vpop.f32.mrb[0].mxu0
  %v677 = vadd.f32 0.0, %v676
  %v678 = vpop.f32.mrb[0].mxu0
  %v679 = vpop.f32.mrb[0].mxu0
  %v680 = vadd.f32 0.0, %v679
  %v681 = vpop.f32.mrb[0].mxu0
  %682 = vmatprep.mubr.bf16.mxu0 %v337
  %683 = vmatmul.mubr.bf16.gmra.mrb[0].mxu0 %v336
  %v684 = vpop.f32.mrb[0].mxu0
  %v685 = vadd.f32 0.0, %v684
  %v686 = vpop.f32.mrb[0].mxu0
  %v687 = vpop.f32.mrb[0].mxu0
  %v688 = vadd.f32 0.0, %v687
  %v689 = vpop.f32.mrb[0].mxu0
  %690 = vmatprep.mubr.bf16.mxu0 %v339
  %691 = vmatmul.mubr.bf16.gmra.mrb[0].mxu0 %v338
  %v692 = vpop.f32.mrb[0].mxu0
  %v693 = vadd.f32 0.0, %v692
  %v694 = vpop.f32.mrb[0].mxu0
  %v695 = vpop.f32.mrb[0].mxu0
  %v696 = vadd.f32 0.0, %v695
  %v697 = vpop.f32.mrb[0].mxu0
  %698 = vmatprep.mubr.bf16.mxu0 %v341
  %699 = vmatmul.mubr.bf16.gmra.mrb[0].mxu0 %v340
  %v700 = vpop.f32.mrb[0].mxu0
  %v701 = vadd.f32 0.0, %v700
  %v702 = vpop.f32.mrb[0].mxu0
  %v703 = vpop.f32.mrb[0].mxu0
  %v704 = vadd.f32 0.0, %v703
  %v705 = vpop.f32.mrb[0].mxu0
  %706 = vmatprep.mubr.bf16.mxu0 %v343
  %707 = vmatmul.mubr.bf16.gmra.mrb[0].mxu0 %v342
  %v708 = vpop.f32.mrb[0].mxu0
  %v709 = vadd.f32 0.0, %v708
  %v710 = vpop.f32.mrb[0].mxu0
  %v711 = vpop.f32.mrb[0].mxu0
  %v712 = vadd.f32 0.0, %v711
  %v713 = vpop.f32.mrb[0].mxu0
  %714 = vmatprep.mubr.bf16.mxu0 %v345
  %715 = vmatmul.mubr.bf16.gmra.mrb[0].mxu0 %v344
  %v716 = vpop.f32.mrb[0].mxu0
  %v717 = vadd.f32 0.0, %v716
  %v718 = vpop.f32.mrb[0].mxu0
  %v719 = vpop.f32.mrb[0].mxu0
  %v720 = vadd.f32 0.0, %v719
  %v721 = vpop.f32.mrb[0].mxu0
  %722 = vmatprep.mubr.bf16.mxu0 %v347
  %723 = vmatmul.mubr.bf16.gmra.mrb[0].mxu0 %v346
  %v724 = vpop.f32.mrb[0].mxu0
  %v725 = vadd.f32 0.0, %v724
  %v726 = vpop.f32.mrb[0].mxu0
  %v727 = vpop.f32.mrb[0].mxu0
  %v728 = vadd.f32 0.0, %v727
  %v729 = vpop.f32.mrb[0].mxu0
  %730 = vmatprep.mubr.bf16.mxu0 %v349
  %731 = vmatmul.mubr.bf16.gmra.mrb[0].mxu0 %v348
  %v732 = vpop.f32.mrb[0].mxu0
  %v733 = vadd.f32 0.0, %v732
  %v734 = vpop.f32.mrb[0].mxu0
  %v735 = vpop.f32.mrb[0].mxu0
  %v736 = vadd.f32 0.0, %v735
  %v737 = vpop.f32.mrb[0].mxu0
  %738 = vmatprep.mubr.bf16.mxu0 %v351
  %739 = vmatmul.mubr.bf16.gmra.mrb[0].mxu0 %v350
  %v740 = vpop.f32.mrb[0].mxu0
  %v741 = vadd.f32 0.0, %v740
  %v742 = vpop.f32.mrb[0].mxu0
  %v743 = vpop.f32.mrb[0].mxu0
  %v744 = vadd.f32 0.0, %v743
  %v745 = vpop.f32.mrb[0].mxu0
  %746 = vmatprep.mubr.bf16.mxu0 %v353
  %747 = vmatmul.mubr.bf16.gmra.mrb[0].mxu0 %v352
  %v748 = vpop.f32.mrb[0].mxu0
  %v749 = vadd.f32 0.0, %v748
  %v750 = vpop.f32.mrb[0].mxu0
  %v751 = vpop.f32.mrb[0].mxu0
  %v752 = vadd.f32 0.0, %v751
  %v753 = vpop.f32.mrb[0].mxu0
  %754 = vmatprep.mubr.bf16.mxu0 %v355
  %755 = vmatmul.mubr.bf16.gmra.mrb[0].mxu0 %v354
  %v756 = vpop.f32.mrb[0].mxu0
  %v757 = vadd.f32 0.0, %v756
  %v758 = vpop.f32.mrb[0].mxu0
  %v759 = vpop.f32.mrb[0].mxu0
  %v760 = vadd.f32 0.0, %v759
  %v761 = vpop.f32.mrb[0].mxu0
  %762 = vmatprep.mubr.bf16.mxu0 %v357
  %763 = vmatmul.mubr.bf16.gmra.mrb[0].mxu0 %v356
  %v764 = vpop.f32.mrb[0].mxu0
  %v765 = vadd.f32 0.0, %v764
  %v766 = vpop.f32.mrb[0].mxu0
  %v767 = vpop.f32.mrb[0].mxu0
  %v768 = vadd.f32 0.0, %v767
  %v769 = vpop.f32.mrb[0].mxu0
  %770 = vmatprep.mubr.bf16.mxu0 %v359
  %771 = vmatmul.mubr.bf16.gmra.mrb[0].mxu0 %v358
  %v772 = vpop.f32.mrb[0].mxu0
  %v773 = vadd.f32 0.0, %v772
  %v774 = vpop.f32.mrb[0].mxu0
  %v775 = vpop.f32.mrb[0].mxu0
  %v776 = vadd.f32 0.0, %v775
  %v777 = vpop.f32.mrb[0].mxu0
  %778 = vmatprep.mubr.bf16.mxu0 %v361
  %779 = vmatmul.mubr.bf16.gmra.mrb[0].mxu0 %v360
  %v780 = vpop.f32.mrb[0].mxu0
  %v781 = vadd.f32 0.0, %v780
  %v782 = vpop.f32.mrb[0].mxu0
  %v783 = vpop.f32.mrb[0].mxu0
  %v784 = vadd.f32 0.0, %v783
  %v785 = vpop.f32.mrb[0].mxu0
  %786 = vmatprep.mubr.bf16.mxu0 %v363
  %787 = vmatmul.mubr.bf16.gmra.mrb[0].mxu0 %v362
  %v788 = vpop.f32.mrb[0].mxu0
  %v789 = vadd.f32 0.0, %v788
  %v790 = vpop.f32.mrb[0].mxu0
  %v791 = vpop.f32.mrb[0].mxu0
  %v792 = vadd.f32 0.0, %v791
  %v793 = vpop.f32.mrb[0].mxu0
  %794 = vmatprep.mubr.bf16.mxu0 %v365
  %795 = vmatmul.mubr.bf16.gmra.mrb[0].mxu0 %v364
  %v796 = vpop.f32.mrb[0].mxu0
  %v797 = vadd.f32 0.0, %v796
  %v798 = vpop.f32.mrb[0].mxu0
  %v799 = vpop.f32.mrb[0].mxu0
  %v800 = vadd.f32 0.0, %v799
  %v801 = vpop.f32.mrb[0].mxu0
  %802 = vmatprep.mubr.bf16.mxu0 %v367
  %803 = vmatmul.mubr.bf16.gmra.mrb[0].mxu0 %v366
  %v804 = vpop.f32.mrb[0].mxu0
  %v805 = vadd.f32 0.0, %v804
  %v806 = vpop.f32.mrb[0].mxu0
  %v807 = vpop.f32.mrb[0].mxu0
  %v808 = vadd.f32 0.0, %v807
  %v809 = vpop.f32.mrb[0].mxu0
  %810 = vmatprep.mubr.bf16.mxu0 %v369
  %811 = vmatmul.mubr.bf16.gmra.mrb[0].mxu0 %v368
  %v812 = vpop.f32.mrb[0].mxu0
  %v813 = vadd.f32 0.0, %v812
  %v814 = vpop.f32.mrb[0].mxu0
  %v815 = vpop.f32.mrb[0].mxu0
  %v816 = vadd.f32 0.0, %v815
  %v817 = vpop.f32.mrb[0].mxu0
  %818 = vdwg.mxu0
  %819 = vst [vmem:[#allocation2] sm:$0xff] %v565
  %820 = vst [vmem:[#allocation2 + $0x8] sm:$0xff] %v568
  %821 = vst [vmem:[#allocation2 + $0x10] sm:$0xff] %v573
  %822 = vst [vmem:[#allocation2 + $0x18] sm:$0xff] %v576
  %823 = vst [vmem:[#allocation2 + $0x20] sm:$0xff] %v581
  %824 = vst [vmem:[#allocation2 + $0x28] sm:$0xff] %v584
  %825 = vst [vmem:[#allocation2 + $0x30] sm:$0xff] %v589
  %826 = vst [vmem:[#allocation2 + $0x38] sm:$0xff] %v592
  %827 = vst [vmem:[#allocation2 + $0x40] sm:$0xff] %v597
  %828 = vst [vmem:[#allocation2 + $0x48] sm:$0xff] %v600
  %829 = vst [vmem:[#allocation2 + $0x50] sm:$0xff] %v605
  %830 = vst [vmem:[#allocation2 + $0x58] sm:$0xff] %v608
  %831 = vst [vmem:[#allocation2 + $0x60] sm:$0xff] %v613
  %832 = vst [vmem:[#allocation2 + $0x68] sm:$0xff] %v616
  %833 = vst [vmem:[#allocation2 + $0x70] sm:$0xff] %v621
  %834 = vst [vmem:[#allocation2 + $0x78] sm:$0xff] %v624
  %835 = vst [vmem:[#allocation2 + $0x80] sm:$0xff] %v629
  %836 = vst [vmem:[#allocation2 + $0x88] sm:$0xff] %v632
  %837 = vst [vmem:[#allocation2 + $0x90] sm:$0xff] %v637
  %838 = vst [vmem:[#allocation2 + $0x98] sm:$0xff] %v640
  %839 = vst [vmem:[#allocation2 + $0xa0] sm:$0xff] %v645
  %840 = vst [vmem:[#allocation2 + $0xa8] sm:$0xff] %v648
  %841 = vst [vmem:[#allocation2 + $0xb0] sm:$0xff] %v653
  %842 = vst [vmem:[#allocation2 + $0xb8] sm:$0xff] %v656
  %843 = vst [vmem:[#allocation2 + $0xc0] sm:$0xff] %v661
  %844 = vst [vmem:[#allocation2 + $0xc8] sm:$0xff] %v664
  %845 = vst [vmem:[#allocation2 + $0xd0] sm:$0xff] %v669
  %846 = vst [vmem:[#allocation2 + $0xd8] sm:$0xff] %v672
  %847 = vst [vmem:[#allocation2 + $0xe0] sm:$0xff] %v677
  %848 = vst [vmem:[#allocation2 + $0xe8] sm:$0xff] %v680
  %849 = vst [vmem:[#allocation2 + $0xf0] sm:$0xff] %v685
  %850 = vst [vmem:[#allocation2 + $0xf8] sm:$0xff] %v688
  %851 = vst [vmem:[#allocation2 + $0x100] sm:$0xff] %v693
  %852 = vst [vmem:[#allocation2 + $0x108] sm:$0xff] %v696
  %853 = vst [vmem:[#allocation2 + $0x110] sm:$0xff] %v701
  %854 = vst [vmem:[#allocation2 + $0x118] sm:$0xff] %v704
  %855 = vst [vmem:[#allocation2 + $0x120] sm:$0xff] %v709
  %856 = vst [vmem:[#allocation2 + $0x128] sm:$0xff] %v712
  %857 = vst [vmem:[#allocation2 + $0x130] sm:$0xff] %v717
  %858 = vst [vmem:[#allocation2 + $0x138] sm:$0xff] %v720
  %859 = vst [vmem:[#allocation2 + $0x140] sm:$0xff] %v725
  %860 = vst [vmem:[#allocation2 + $0x148] sm:$0xff] %v728
  %861 = vst [vmem:[#allocation2 + $0x150] sm:$0xff] %v733
  %862 = vst [vmem:[#allocation2 + $0x158] sm:$0xff] %v736
  %863 = vst [vmem:[#allocation2 + $0x160] sm:$0xff] %v741
  %864 = vst [vmem:[#allocation2 + $0x168] sm:$0xff] %v744
  %865 = vst [vmem:[#allocation2 + $0x170] sm:$0xff] %v749
  %866 = vst [vmem:[#allocation2 + $0x178] sm:$0xff] %v752
  %867 = vst [vmem:[#allocation2 + $0x180] sm:$0xff] %v757
  %868 = vst [vmem:[#allocation2 + $0x188] sm:$0xff] %v760
  %869 = vst [vmem:[#allocation2 + $0x190] sm:$0xff] %v765
  %870 = vst [vmem:[#allocation2 + $0x198] sm:$0xff] %v768
  %871 = vst [vmem:[#allocation2 + $0x1a0] sm:$0xff] %v773
  %872 = vst [vmem:[#allocation2 + $0x1a8] sm:$0xff] %v776
  %873 = vst [vmem:[#allocation2 + $0x1b0] sm:$0xff] %v781
  %874 = vst [vmem:[#allocation2 + $0x1b8] sm:$0xff] %v784
  %875 = vst [vmem:[#allocation2 + $0x1c0] sm:$0xff] %v789
  %876 = vst [vmem:[#allocation2 + $0x1c8] sm:$0xff] %v792
  %877 = vst [vmem:[#allocation2 + $0x1d0] sm:$0xff] %v797
  %878 = vst [vmem:[#allocation2 + $0x1d8] sm:$0xff] %v800
  %879 = vst [vmem:[#allocation2 + $0x1e0] sm:$0xff] %v805
  %880 = vst [vmem:[#allocation2 + $0x1e8] sm:$0xff] %v808
  %881 = vst [vmem:[#allocation2 + $0x1f0] sm:$0xff] %v813
  %882 = vst [vmem:[#allocation2 + $0x1f8] sm:$0xff] %v816
  %p883 = scmp.eq.s32.totalorder 0, 0
  // Predicated region
  $region18: #{resnet_forward.11} parent=0 // pred_check
    %p884 = pneg %p883
  $region19: #{resnet_forward.11} parent=0 // pred_check_branch
    %886 = sbr.rel (%p884) target = $region21
  $region20: #{resnet_forward.11} parent=0 // pred_region
    %v887 = vld [vmem:[#allocation2] sm:$0xff]
    %v888 = vld [vmem:[#allocation2 + $0x8] sm:$0xff]
    %v889 = vld [vmem:[#allocation2 + $0x10] sm:$0xff]
    %v890 = vld [vmem:[#allocation2 + $0x18] sm:$0xff]
    %v891 = vld [vmem:[#allocation2 + $0x20] sm:$0xff]
    %v892 = vld [vmem:[#allocation2 + $0x28] sm:$0xff]
    %v893 = vld [vmem:[#allocation2 + $0x30] sm:$0xff]
    %v894 = vld [vmem:[#allocation2 + $0x38] sm:$0xff]
    %v895 = vld [vmem:[#allocation2 + $0x40] sm:$0xff]
    %v896 = vld [vmem:[#allocation2 + $0x48] sm:$0xff]
    %v897 = vld [vmem:[#allocation2 + $0x50] sm:$0xff]
    %v898 = vld [vmem:[#allocation2 + $0x58] sm:$0xff]
    %v899 = vld [vmem:[#allocation2 + $0x60] sm:$0xff]
    %v900 = vld [vmem:[#allocation2 + $0x68] sm:$0xff]
    %v901 = vld [vmem:[#allocation2 + $0x70] sm:$0xff]
    %v902 = vld [vmem:[#allocation2 + $0x78] sm:$0xff]
    %v903 = vld [vmem:[#allocation2 + $0x80] sm:$0xff]
    %v904 = vld [vmem:[#allocation2 + $0x88] sm:$0xff]
    %v905 = vld [vmem:[#allocation2 + $0x90] sm:$0xff]
    %v906 = vld [vmem:[#allocation2 + $0x98] sm:$0xff]
    %v907 = vld [vmem:[#allocation2 + $0xa0] sm:$0xff]
    %v908 = vld [vmem:[#allocation2 + $0xa8] sm:$0xff]
    %v909 = vld [vmem:[#allocation2 + $0xb0] sm:$0xff]
    %v910 = vld [vmem:[#allocation2 + $0xb8] sm:$0xff]
    %v911 = vld [vmem:[#allocation2 + $0xc0] sm:$0xff]
    %v912 = vld [vmem:[#allocation2 + $0xc8] sm:$0xff]
    %v913 = vld [vmem:[#allocation2 + $0xd0] sm:$0xff]
    %v914 = vld [vmem:[#allocation2 + $0xd8] sm:$0xff]
    %v915 = vld [vmem:[#allocation2 + $0xe0] sm:$0xff]
    %v916 = vld [vmem:[#allocation2 + $0xe8] sm:$0xff]
    %v917 = vld [vmem:[#allocation2 + $0xf0] sm:$0xff]
    %v918 = vld [vmem:[#allocation2 + $0xf8] sm:$0xff]
    %v919 = vld [vmem:[#allocation2 + $0x100] sm:$0xff]
    %v920 = vld [vmem:[#allocation2 + $0x108] sm:$0xff]
    %v921 = vld [vmem:[#allocation2 + $0x110] sm:$0xff]
    %v922 = vld [vmem:[#allocation2 + $0x118] sm:$0xff]
    %v923 = vld [vmem:[#allocation2 + $0x120] sm:$0xff]
    %v924 = vld [vmem:[#allocation2 + $0x128] sm:$0xff]
    %v925 = vld [vmem:[#allocation2 + $0x130] sm:$0xff]
    %v926 = vld [vmem:[#allocation2 + $0x138] sm:$0xff]
    %v927 = vld [vmem:[#allocation2 + $0x140] sm:$0xff]
    %v928 = vld [vmem:[#allocation2 + $0x148] sm:$0xff]
    %v929 = vld [vmem:[#allocation2 + $0x150] sm:$0xff]
    %v930 = vld [vmem:[#allocation2 + $0x158] sm:$0xff]
    %v931 = vld [vmem:[#allocation2 + $0x160] sm:$0xff]
    %v932 = vld [vmem:[#allocation2 + $0x168] sm:$0xff]
    %v933 = vld [vmem:[#allocation2 + $0x170] sm:$0xff]
    %v934 = vld [vmem:[#allocation2 + $0x178] sm:$0xff]
    %v935 = vld [vmem:[#allocation2 + $0x180] sm:$0xff]
    %v936 = vld [vmem:[#allocation2 + $0x188] sm:$0xff]
    %v937 = vld [vmem:[#allocation2 + $0x190] sm:$0xff]
    %v938 = vld [vmem:[#allocation2 + $0x198] sm:$0xff]
    %v939 = vld [vmem:[#allocation2 + $0x1a0] sm:$0xff]
    %v940 = vld [vmem:[#allocation2 + $0x1a8] sm:$0xff]
    %v941 = vld [vmem:[#allocation2 + $0x1b0] sm:$0xff]
    %v942 = vld [vmem:[#allocation2 + $0x1b8] sm:$0xff]
    %v943 = vld [vmem:[#allocation2 + $0x1c0] sm:$0xff]
    %v944 = vld [vmem:[#allocation2 + $0x1c8] sm:$0xff]
    %v945 = vld [vmem:[#allocation2 + $0x1d0] sm:$0xff]
    %v946 = vld [vmem:[#allocation2 + $0x1d8] sm:$0xff]
    %v947 = vld [vmem:[#allocation2 + $0x1e0] sm:$0xff]
    %v948 = vld [vmem:[#allocation2 + $0x1e8] sm:$0xff]
    %v949 = vld [vmem:[#allocation2 + $0x1f0] sm:$0xff]
    %v950 = vld [vmem:[#allocation2 + $0x1f8] sm:$0xff]
    %v951 = vadd.f32 %v887, %v888
    %v952 = vadd.f32 %v951, %v889
    %v953 = vadd.f32 %v952, %v890
    %v954 = vadd.f32 %v953, %v891
    %v955 = vadd.f32 %v954, %v892
    %v956 = vadd.f32 %v955, %v893
    %v957 = vadd.f32 %v956, %v894
    %v958 = vadd.f32 %v957, %v895
    %v959 = vadd.f32 %v958, %v896
    %v960 = vadd.f32 %v959, %v897
    %v961 = vadd.f32 %v960, %v898
    %v962 = vadd.f32 %v961, %v899
    %v963 = vadd.f32 %v962, %v900
    %v964 = vadd.f32 %v963, %v901
    %v965 = vadd.f32 %v964, %v902
    %v966 = vadd.f32 %v965, %v903
    %v967 = vadd.f32 %v966, %v904
    %v968 = vadd.f32 %v967, %v905
    %v969 = vadd.f32 %v968, %v906
    %v970 = vadd.f32 %v969, %v907
    %v971 = vadd.f32 %v970, %v908
    %v972 = vadd.f32 %v971, %v909
    %v973 = vadd.f32 %v972, %v910
    %v974 = vadd.f32 %v973, %v911
    %v975 = vadd.f32 %v974, %v912
    %v976 = vadd.f32 %v975, %v913
    %v977 = vadd.f32 %v976, %v914
    %v978 = vadd.f32 %v977, %v915
    %v979 = vadd.f32 %v978, %v916
    %v980 = vadd.f32 %v979, %v917
    %v981 = vadd.f32 %v980, %v918
    %v982 = vadd.f32 %v981, %v919
    %v983 = vadd.f32 %v982, %v920
    %v984 = vadd.f32 %v983, %v921
    %v985 = vadd.f32 %v984, %v922
    %v986 = vadd.f32 %v985, %v923
    %v987 = vadd.f32 %v986, %v924
    %v988 = vadd.f32 %v987, %v925
    %v989 = vadd.f32 %v988, %v926
    %v990 = vadd.f32 %v989, %v927
    %v991 = vadd.f32 %v990, %v928
    %v992 = vadd.f32 %v991, %v929
    %v993 = vadd.f32 %v992, %v930
    %v994 = vadd.f32 %v993, %v931
    %v995 = vadd.f32 %v994, %v932
    %v996 = vadd.f32 %v995, %v933
    %v997 = vadd.f32 %v996, %v934
    %v998 = vadd.f32 %v997, %v935
    %v999 = vadd.f32 %v998, %v936
    %v1000 = vadd.f32 %v999, %v937
    %v1001 = vadd.f32 %v1000, %v938
    %v1002 = vadd.f32 %v1001, %v939
    %v1003 = vadd.f32 %v1002, %v940
    %v1004 = vadd.f32 %v1003, %v941
    %v1005 = vadd.f32 %v1004, %v942
    %v1006 = vadd.f32 %v1005, %v943
    %v1007 = vadd.f32 %v1006, %v944
    %v1008 = vadd.f32 %v1007, %v945
    %v1009 = vadd.f32 %v1008, %v946
    %v1010 = vadd.f32 %v1009, %v947
    %v1011 = vadd.f32 %v1010, %v948
    %v1012 = vadd.f32 %v1011, %v949
    %v1013 = vadd.f32 %v1012, %v950
    %v1014 = vrot.slane %v1013, 4
    %v1015 = vadd.f32 %v1013, %v1014
    %v1016 = vrot.slane %v1015, 2
    %v1017 = vadd.f32 %v1015, %v1016
    %v1018 = vrot.slane %v1017, 1
    %v1019 = vadd.f32 %v1017, %v1018
    %v1020 = vmul.f32 %v1019, 0.001953125
    %v1021 = vsub.f32 %v887, %v1020
    %v1022 = vsub.f32 %v888, %v1020
    %v1023 = vsub.f32 %v889, %v1020
    %v1024 = vsub.f32 %v890, %v1020
    %v1025 = vsub.f32 %v891, %v1020
    %v1026 = vsub.f32 %v892, %v1020
    %v1027 = vsub.f32 %v893, %v1020
    %v1028 = vsub.f32 %v894, %v1020
    %v1029 = vsub.f32 %v895, %v1020
    %v1030 = vsub.f32 %v896, %v1020
    %v1031 = vsub.f32 %v897, %v1020
    %v1032 = vsub.f32 %v898, %v1020
    %v1033 = vsub.f32 %v899, %v1020
    %v1034 = vsub.f32 %v900, %v1020
    %v1035 = vsub.f32 %v901, %v1020
    %v1036 = vsub.f32 %v902, %v1020
    %v1037 = vsub.f32 %v903, %v1020
    %v1038 = vsub.f32 %v904, %v1020
    %v1039 = vsub.f32 %v905, %v1020
    %v1040 = vsub.f32 %v906, %v1020
    %v1041 = vsub.f32 %v907, %v1020
    %v1042 = vsub.f32 %v908, %v1020
    %v1043 = vsub.f32 %v909, %v1020
    %v1044 = vsub.f32 %v910, %v1020
    %v1045 = vsub.f32 %v911, %v1020
    %v1046 = vsub.f32 %v912, %v1020
    %v1047 = vsub.f32 %v913, %v1020
    %v1048 = vsub.f32 %v914, %v1020
    %v1049 = vsub.f32 %v915, %v1020
    %v1050 = vsub.f32 %v916, %v1020
    %v1051 = vsub.f32 %v917, %v1020
    %v1052 = vsub.f32 %v918, %v1020
    %v1053 = vsub.f32 %v919, %v1020
    %v1054 = vsub.f32 %v920, %v1020
    %v1055 = vsub.f32 %v921, %v1020
    %v1056 = vsub.f32 %v922, %v1020
    %v1057 = vsub.f32 %v923, %v1020
    %v1058 = vsub.f32 %v924, %v1020
    %v1059 = vsub.f32 %v925, %v1020
    %v1060 = vsub.f32 %v926, %v1020
    %v1061 = vsub.f32 %v927, %v1020
    %v1062 = vsub.f32 %v928, %v1020
    %v1063 = vsub.f32 %v929, %v1020
    %v1064 = vsub.f32 %v930, %v1020
    %v1065 = vsub.f32 %v931, %v1020
    %v1066 = vsub.f32 %v932, %v1020
    %v1067 = vsub.f32 %v933, %v1020
    %v1068 = vsub.f32 %v934, %v1020
    %v1069 = vsub.f32 %v935, %v1020
    %v1070 = vsub.f32 %v936, %v1020
    %v1071 = vsub.f32 %v937, %v1020
    %v1072 = vsub.f32 %v938, %v1020
    %v1073 = vsub.f32 %v939, %v1020
    %v1074 = vsub.f32 %v940, %v1020
    %v1075 = vsub.f32 %v941, %v1020
    %v1076 = vsub.f32 %v942, %v1020
    %v1077 = vsub.f32 %v943, %v1020
    %v1078 = vsub.f32 %v944, %v1020
    %v1079 = vsub.f32 %v945, %v1020
    %v1080 = vsub.f32 %v946, %v1020
    %v1081 = vsub.f32 %v947, %v1020
    %v1082 = vsub.f32 %v948, %v1020
    %v1083 = vsub.f32 %v949, %v1020
    %v1084 = vsub.f32 %v950, %v1020
    %v1085 = vmul.f32 %v1021, %v1021
    %v1086 = vmul.f32 %v1022, %v1022
    %v1087 = vmul.f32 %v1023, %v1023
    %v1088 = vmul.f32 %v1024, %v1024
    %v1089 = vmul.f32 %v1025, %v1025
    %v1090 = vmul.f32 %v1026, %v1026
    %v1091 = vmul.f32 %v1027, %v1027
    %v1092 = vmul.f32 %v1028, %v1028
    %v1093 = vmul.f32 %v1029, %v1029
    %v1094 = vmul.f32 %v1030, %v1030
    %v1095 = vmul.f32 %v1031, %v1031
    %v1096 = vmul.f32 %v1032, %v1032
    %v1097 = vmul.f32 %v1033, %v1033
    %v1098 = vmul.f32 %v1034, %v1034
    %v1099 = vmul.f32 %v1035, %v1035
    %v1100 = vmul.f32 %v1036, %v1036
    %v1101 = vmul.f32 %v1037, %v1037
    %v1102 = vmul.f32 %v1038, %v1038
    %v1103 = vmul.f32 %v1039, %v1039
    %v1104 = vmul.f32 %v1040, %v1040
    %v1105 = vmul.f32 %v1041, %v1041
    %v1106 = vmul.f32 %v1042, %v1042
    %v1107 = vmul.f32 %v1043, %v1043
    %v1108 = vmul.f32 %v1044, %v1044
    %v1109 = vmul.f32 %v1045, %v1045
    %v1110 = vmul.f32 %v1046, %v1046
    %v1111 = vmul.f32 %v1047, %v1047
    %v1112 = vmul.f32 %v1048, %v1048
    %v1113 = vmul.f32 %v1049, %v1049
    %v1114 = vmul.f32 %v1050, %v1050
    %v1115 = vmul.f32 %v1051, %v1051
    %v1116 = vmul.f32 %v1052, %v1052
    %v1117 = vmul.f32 %v1053, %v1053
    %v1118 = vmul.f32 %v1054, %v1054
    %v1119 = vmul.f32 %v1055, %v1055
    %v1120 = vmul.f32 %v1056, %v1056
    %v1121 = vmul.f32 %v1057, %v1057
    %v1122 = vmul.f32 %v1058, %v1058
    %v1123 = vmul.f32 %v1059, %v1059
    %v1124 = vmul.f32 %v1060, %v1060
    %v1125 = vmul.f32 %v1061, %v1061
    %v1126 = vmul.f32 %v1062, %v1062
    %v1127 = vmul.f32 %v1063, %v1063
    %v1128 = vmul.f32 %v1064, %v1064
    %v1129 = vmul.f32 %v1065, %v1065
    %v1130 = vmul.f32 %v1066, %v1066
    %v1131 = vmul.f32 %v1067, %v1067
    %v1132 = vmul.f32 %v1068, %v1068
    %v1133 = vmul.f32 %v1069, %v1069
    %v1134 = vmul.f32 %v1070, %v1070
    %v1135 = vmul.f32 %v1071, %v1071
    %v1136 = vmul.f32 %v1072, %v1072
    %v1137 = vmul.f32 %v1073, %v1073
    %v1138 = vmul.f32 %v1074, %v1074
    %v1139 = vmul.f32 %v1075, %v1075
    %v1140 = vmul.f32 %v1076, %v1076
    %v1141 = vmul.f32 %v1077, %v1077
    %v1142 = vmul.f32 %v1078, %v1078
    %v1143 = vmul.f32 %v1079, %v1079
    %v1144 = vmul.f32 %v1080, %v1080
    %v1145 = vmul.f32 %v1081, %v1081
    %v1146 = vmul.f32 %v1082, %v1082
    %v1147 = vmul.f32 %v1083, %v1083
    %v1148 = vmul.f32 %v1084, %v1084
    %v1149 = vadd.f32 %v1085, %v1086
    %v1150 = vadd.f32 %v1149, %v1087
    %v1151 = vadd.f32 %v1150, %v1088
    %v1152 = vadd.f32 %v1151, %v1089
    %v1153 = vadd.f32 %v1152, %v1090
    %v1154 = vadd.f32 %v1153, %v1091
    %v1155 = vadd.f32 %v1154, %v1092
    %v1156 = vadd.f32 %v1155, %v1093
    %v1157 = vadd.f32 %v1156, %v1094
    %v1158 = vadd.f32 %v1157, %v1095
    %v1159 = vadd.f32 %v1158, %v1096
    %v1160 = vadd.f32 %v1159, %v1097
    %v1161 = vadd.f32 %v1160, %v1098
    %v1162 = vadd.f32 %v1161, %v1099
    %v1163 = vadd.f32 %v1162, %v1100
    %v1164 = vadd.f32 %v1163, %v1101
    %v1165 = vadd.f32 %v1164, %v1102
    %v1166 = vadd.f32 %v1165, %v1103
    %v1167 = vadd.f32 %v1166, %v1104
    %v1168 = vadd.f32 %v1167, %v1105
    %v1169 = vadd.f32 %v1168, %v1106
    %v1170 = vadd.f32 %v1169, %v1107
    %v1171 = vadd.f32 %v1170, %v1108
    %v1172 = vadd.f32 %v1171, %v1109
    %v1173 = vadd.f32 %v1172, %v1110
    %v1174 = vadd.f32 %v1173, %v1111
    %v1175 = vadd.f32 %v1174, %v1112
    %v1176 = vadd.f32 %v1175, %v1113
    %v1177 = vadd.f32 %v1176, %v1114
    %v1178 = vadd.f32 %v1177, %v1115
    %v1179 = vadd.f32 %v1178, %v1116
    %v1180 = vadd.f32 %v1179, %v1117
    %v1181 = vadd.f32 %v1180, %v1118
    %v1182 = vadd.f32 %v1181, %v1119
    %v1183 = vadd.f32 %v1182, %v1120
    %v1184 = vadd.f32 %v1183, %v1121
    %v1185 = vadd.f32 %v1184, %v1122
    %v1186 = vadd.f32 %v1185, %v1123
    %v1187 = vadd.f32 %v1186, %v1124
    %v1188 = vadd.f32 %v1187, %v1125
    %v1189 = vadd.f32 %v1188, %v1126
    %v1190 = vadd.f32 %v1189, %v1127
    %v1191 = vadd.f32 %v1190, %v1128
    %v1192 = vadd.f32 %v1191, %v1129
    %v1193 = vadd.f32 %v1192, %v1130
    %v1194 = vadd.f32 %v1193, %v1131
    %v1195 = vadd.f32 %v1194, %v1132
    %v1196 = vadd.f32 %v1195, %v1133
    %v1197 = vadd.f32 %v1196, %v1134
    %v1198 = vadd.f32 %v1197, %v1135
    %v1199 = vadd.f32 %v1198, %v1136
    %v1200 = vadd.f32 %v1199, %v1137
    %v1201 = vadd.f32 %v1200, %v1138
    %v1202 = vadd.f32 %v1201, %v1139
    %v1203 = vadd.f32 %v1202, %v1140
    %v1204 = vadd.f32 %v1203, %v1141
    %v1205 = vadd.f32 %v1204, %v1142
    %v1206 = vadd.f32 %v1205, %v1143
    %v1207 = vadd.f32 %v1206, %v1144
    %v1208 = vadd.f32 %v1207, %v1145
    %v1209 = vadd.f32 %v1208, %v1146
    %v1210 = vadd.f32 %v1209, %v1147
    %v1211 = vadd.f32 %v1210, %v1148
    %v1212 = vrot.slane %v1211, 4
    %v1213 = vadd.f32 %v1211, %v1212
    %v1214 = vrot.slane %v1213, 2
    %v1215 = vadd.f32 %v1213, %v1214
    %v1216 = vrot.slane %v1215, 1
    %v1217 = vadd.f32 %v1215, %v1216
    %v1218 = vmul.f32 %v1020, 0.0
    %v1219 = vmul.f32 %v1218, %v1020
    %v1220 = vsub.f32 %v1217, %v1219
    %v1221 = vmul.f32 %v1220, 0.001953125
    %v1222 = vmax.f32 %v1221, 0.0
    %v1223 = vld [vmem:[%s2] sm:$0x1]
    %v1224 = vadd.f32 %v1222, 1e-05
    %v1225 = vrsqrt.pop %v1224
    %v1226 = vmul.f32 %v1223, %v1225
    %v1227 = vld [vmem:[%s2 + $0x1] sm:$0x1]
    %v1228 = vmul.f32 %v1020, %v1226
    %v1229 = vsub.f32 %v1227, %v1228
    %v1230 = vlaneseq
    %v1231 = vshrl.u32 %v1230, 7
    %v1232 = vsub.s32 0, %v1231
    %v1233 = vrot.slane %v1226, %v1232
    %v1234 = vmul.f32 %v887, %v1233
    %v1235 = vmul.f32 %v888, %v1233
    %v1236 = vmul.f32 %v889, %v1233
    %v1237 = vmul.f32 %v890, %v1233
    %v1238 = vmul.f32 %v891, %v1233
    %v1239 = vmul.f32 %v892, %v1233
    %v1240 = vmul.f32 %v893, %v1233
    %v1241 = vmul.f32 %v894, %v1233
    %v1242 = vmul.f32 %v895, %v1233
    %v1243 = vmul.f32 %v896, %v1233
    %v1244 = vmul.f32 %v897, %v1233
    %v1245 = vmul.f32 %v898, %v1233
    %v1246 = vmul.f32 %v899, %v1233
    %v1247 = vmul.f32 %v900, %v1233
    %v1248 = vmul.f32 %v901, %v1233
    %v1249 = vmul.f32 %v902, %v1233
    %v1250 = vmul.f32 %v903, %v1233
    %v1251 = vmul.f32 %v904, %v1233
    %v1252 = vmul.f32 %v905, %v1233
    %v1253 = vmul.f32 %v906, %v1233
    %v1254 = vmul.f32 %v907, %v1233
    %v1255 = vmul.f32 %v908, %v1233
    %v1256 = vmul.f32 %v909, %v1233
    %v1257 = vmul.f32 %v910, %v1233
    %v1258 = vmul.f32 %v911, %v1233
    %v1259 = vmul.f32 %v912, %v1233
    %v1260 = vmul.f32 %v913, %v1233
    %v1261 = vmul.f32 %v914, %v1233
    %v1262 = vmul.f32 %v915, %v1233
    %v1263 = vmul.f32 %v916, %v1233
    %v1264 = vmul.f32 %v917, %v1233
    %v1265 = vmul.f32 %v918, %v1233
    %v1266 = vmul.f32 %v919, %v1233
    %v1267 = vmul.f32 %v920, %v1233
    %v1268 = vmul.f32 %v921, %v1233
    %v1269 = vmul.f32 %v922, %v1233
    %v1270 = vmul.f32 %v923, %v1233
    %v1271 = vmul.f32 %v924, %v1233
    %v1272 = vmul.f32 %v925, %v1233
    %v1273 = vmul.f32 %v926, %v1233
    %v1274 = vmul.f32 %v927, %v1233
    %v1275 = vmul.f32 %v928, %v1233
    %v1276 = vmul.f32 %v929, %v1233
    %v1277 = vmul.f32 %v930, %v1233
    %v1278 = vmul.f32 %v931, %v1233
    %v1279 = vmul.f32 %v932, %v1233
    %v1280 = vmul.f32 %v933, %v1233
    %v1281 = vmul.f32 %v934, %v1233
    %v1282 = vmul.f32 %v935, %v1233
    %v1283 = vmul.f32 %v936, %v1233
    %v1284 = vmul.f32 %v937, %v1233
    %v1285 = vmul.f32 %v938, %v1233
    %v1286 = vmul.f32 %v939, %v1233
    %v1287 = vmul.f32 %v940, %v1233
    %v1288 = vmul.f32 %v941, %v1233
    %v1289 = vmul.f32 %v942, %v1233
    %v1290 = vmul.f32 %v943, %v1233
    %v1291 = vmul.f32 %v944, %v1233
    %v1292 = vmul.f32 %v945, %v1233
    %v1293 = vmul.f32 %v946, %v1233
    %v1294 = vmul.f32 %v947, %v1233
    %v1295 = vmul.f32 %v948, %v1233
    %v1296 = vmul.f32 %v949, %v1233
    %v1297 = vmul.f32 %v950, %v1233
    %v1298 = vlaneseq
    %v1299 = vshrl.u32 %v1298, 7
    %v1300 = vsub.s32 0, %v1299
    %v1301 = vrot.slane %v1229, %v1300
    %v1302 = vadd.f32 %v1234, %v1301
    %v1303 = vadd.f32 %v1235, %v1301
    %v1304 = vadd.f32 %v1236, %v1301
    %v1305 = vadd.f32 %v1237, %v1301
    %v1306 = vadd.f32 %v1238, %v1301
    %v1307 = vadd.f32 %v1239, %v1301
    %v1308 = vadd.f32 %v1240, %v1301
    %v1309 = vadd.f32 %v1241, %v1301
    %v1310 = vadd.f32 %v1242, %v1301
    %v1311 = vadd.f32 %v1243, %v1301
    %v1312 = vadd.f32 %v1244, %v1301
    %v1313 = vadd.f32 %v1245, %v1301
    %v1314 = vadd.f32 %v1246, %v1301
    %v1315 = vadd.f32 %v1247, %v1301
    %v1316 = vadd.f32 %v1248, %v1301
    %v1317 = vadd.f32 %v1249, %v1301
    %v1318 = vadd.f32 %v1250, %v1301
    %v1319 = vadd.f32 %v1251, %v1301
    %v1320 = vadd.f32 %v1252, %v1301
    %v1321 = vadd.f32 %v1253, %v1301
    %v1322 = vadd.f32 %v1254, %v1301
    %v1323 = vadd.f32 %v1255, %v1301
    %v1324 = vadd.f32 %v1256, %v1301
    %v1325 = vadd.f32 %v1257, %v1301
    %v1326 = vadd.f32 %v1258, %v1301
    %v1327 = vadd.f32 %v1259, %v1301
    %v1328 = vadd.f32 %v1260, %v1301
    %v1329 = vadd.f32 %v1261, %v1301
    %v1330 = vadd.f32 %v1262, %v1301
    %v1331 = vadd.f32 %v1263, %v1301
    %v1332 = vadd.f32 %v1264, %v1301
    %v1333 = vadd.f32 %v1265, %v1301
    %v1334 = vadd.f32 %v1266, %v1301
    %v1335 = vadd.f32 %v1267, %v1301
    %v1336 = vadd.f32 %v1268, %v1301
    %v1337 = vadd.f32 %v1269, %v1301
    %v1338 = vadd.f32 %v1270, %v1301
    %v1339 = vadd.f32 %v1271, %v1301
    %v1340 = vadd.f32 %v1272, %v1301
    %v1341 = vadd.f32 %v1273, %v1301
    %v1342 = vadd.f32 %v1274, %v1301
    %v1343 = vadd.f32 %v1275, %v1301
    %v1344 = vadd.f32 %v1276, %v1301
    %v1345 = vadd.f32 %v1277, %v1301
    %v1346 = vadd.f32 %v1278, %v1301
    %v1347 = vadd.f32 %v1279, %v1301
    %v1348 = vadd.f32 %v1280, %v1301
    %v1349 = vadd.f32 %v1281, %v1301
    %v1350 = vadd.f32 %v1282, %v1301
    %v1351 = vadd.f32 %v1283, %v1301
    %v1352 = vadd.f32 %v1284, %v1301
    %v1353 = vadd.f32 %v1285, %v1301
    %v1354 = vadd.f32 %v1286, %v1301
    %v1355 = vadd.f32 %v1287, %v1301
    %v1356 = vadd.f32 %v1288, %v1301
    %v1357 = vadd.f32 %v1289, %v1301
    %v1358 = vadd.f32 %v1290, %v1301
    %v1359 = vadd.f32 %v1291, %v1301
    %v1360 = vadd.f32 %v1292, %v1301
    %v1361 = vadd.f32 %v1293, %v1301
    %v1362 = vadd.f32 %v1294, %v1301
    %v1363 = vadd.f32 %v1295, %v1301
    %v1364 = vadd.f32 %v1296, %v1301
    %v1365 = vadd.f32 %v1297, %v1301
    %v1366 = vld [vmem:[%s3] sm:$0xf]
    %v1367 = vld [vmem:[%s3 + $0x4] sm:$0xf]
    %v1368 = vld [vmem:[%s3 + $0x8] sm:$0xf]
    %v1369 = vld [vmem:[%s3 + $0xc] sm:$0xf]
    %v1370 = vld [vmem:[%s3 + $0x10] sm:$0xf]
    %v1371 = vld [vmem:[%s3 + $0x14] sm:$0xf]
    %v1372 = vld [vmem:[%s3 + $0x18] sm:$0xf]
    %v1373 = vld [vmem:[%s3 + $0x1c] sm:$0xf]
    %v1374 = vld [vmem:[%s3 + $0x20] sm:$0xf]
    %v1375 = vld [vmem:[%s3 + $0x24] sm:$0xf]
    %v1376 = vld [vmem:[%s3 + $0x28] sm:$0xf]
    %v1377 = vld [vmem:[%s3 + $0x2c] sm:$0xf]
    %v1378 = vld [vmem:[%s3 + $0x30] sm:$0xf]
    %v1379 = vld [vmem:[%s3 + $0x34] sm:$0xf]
    %v1380 = vld [vmem:[%s3 + $0x38] sm:$0xf]
    %v1381 = vld [vmem:[%s3 + $0x3c] sm:$0xf]
    %v1382 = vld [vmem:[%s3 + $0x40] sm:$0xf]
    %v1383 = vld [vmem:[%s3 + $0x44] sm:$0xf]
    %v1384 = vld [vmem:[%s3 + $0x48] sm:$0xf]
    %v1385 = vld [vmem:[%s3 + $0x4c] sm:$0xf]
    %v1386 = vld [vmem:[%s3 + $0x50] sm:$0xf]
    %v1387 = vld [vmem:[%s3 + $0x54] sm:$0xf]
    %v1388 = vld [vmem:[%s3 + $0x58] sm:$0xf]
    %v1389 = vld [vmem:[%s3 + $0x5c] sm:$0xf]
    %v1390 = vld [vmem:[%s3 + $0x60] sm:$0xf]
    %v1391 = vld [vmem:[%s3 + $0x64] sm:$0xf]
    %v1392 = vld [vmem:[%s3 + $0x68] sm:$0xf]
    %v1393 = vld [vmem:[%s3 + $0x6c] sm:$0xf]
    %v1394 = vld [vmem:[%s3 + $0x70] sm:$0xf]
    %v1395 = vld [vmem:[%s3 + $0x74] sm:$0xf]
    %v1396 = vld [vmem:[%s3 + $0x78] sm:$0xf]
    %v1397 = vld [vmem:[%s3 + $0x7c] sm:$0xf]
    %v1398 = vld [vmem:[%s3 + $0x80] sm:$0xf]
    %v1399 = vld [vmem:[%s3 + $0x84] sm:$0xf]
    %v1400 = vld [vmem:[%s3 + $0x88] sm:$0xf]
    %v1401 = vld [vmem:[%s3 + $0x8c] sm:$0xf]
    %v1402 = vld [vmem:[%s3 + $0x90] sm:$0xf]
    %v1403 = vld [vmem:[%s3 + $0x94] sm:$0xf]
    %v1404 = vld [vmem:[%s3 + $0x98] sm:$0xf]
    %v1405 = vld [vmem:[%s3 + $0x9c] sm:$0xf]
    %v1406 = vld [vmem:[%s3 + $0xa0] sm:$0xf]
    %v1407 = vld [vmem:[%s3 + $0xa4] sm:$0xf]
    %v1408 = vld [vmem:[%s3 + $0xa8] sm:$0xf]
    %v1409 = vld [vmem:[%s3 + $0xac] sm:$0xf]
    %v1410 = vld [vmem:[%s3 + $0xb0] sm:$0xf]
    %v1411 = vld [vmem:[%s3 + $0xb4] sm:$0xf]
    %v1412 = vld [vmem:[%s3 + $0xb8] sm:$0xf]
    %v1413 = vld [vmem:[%s3 + $0xbc] sm:$0xf]
    %v1414 = vld [vmem:[%s3 + $0xc0] sm:$0xf]
    %v1415 = vld [vmem:[%s3 + $0xc4] sm:$0xf]
    %v1416 = vld [vmem:[%s3 + $0xc8] sm:$0xf]
    %v1417 = vld [vmem:[%s3 + $0xcc] sm:$0xf]
    %v1418 = vld [vmem:[%s3 + $0xd0] sm:$0xf]
    %v1419 = vld [vmem:[%s3 + $0xd4] sm:$0xf]
    %v1420 = vld [vmem:[%s3 + $0xd8] sm:$0xf]
    %v1421 = vld [vmem:[%s3 + $0xdc] sm:$0xf]
    %v1422 = vld [vmem:[%s3 + $0xe0] sm:$0xf]
    %v1423 = vld [vmem:[%s3 + $0xe4] sm:$0xf]
    %v1424 = vld [vmem:[%s3 + $0xe8] sm:$0xf]
    %v1425 = vld [vmem:[%s3 + $0xec] sm:$0xf]
    %v1426 = vld [vmem:[%s3 + $0xf0] sm:$0xf]
    %v1427 = vld [vmem:[%s3 + $0xf4] sm:$0xf]
    %v1428 = vld [vmem:[%s3 + $0xf8] sm:$0xf]
    %v1429 = vld [vmem:[%s3 + $0xfc] sm:$0xf]
    %v1430 = vunpack.c.l.bf16 %v1366
    %v1431 = vunpack.c.l.bf16 %v1367
    %v1432 = vunpack.c.l.bf16 %v1368
    %v1433 = vunpack.c.l.bf16 %v1369
    %v1434 = vunpack.c.l.bf16 %v1370
    %v1435 = vunpack.c.l.bf16 %v1371
    %v1436 = vunpack.c.l.bf16 %v1372
    %v1437 = vunpack.c.l.bf16 %v1373
    %v1438 = vunpack.c.l.bf16 %v1374
    %v1439 = vunpack.c.l.bf16 %v1375
    %v1440 = vunpack.c.l.bf16 %v1376
    %v1441 = vunpack.c.l.bf16 %v1377
    %v1442 = vunpack.c.l.bf16 %v1378
    %v1443 = vunpack.c.l.bf16 %v1379
    %v1444 = vunpack.c.l.bf16 %v1380
    %v1445 = vunpack.c.l.bf16 %v1381
    %v1446 = vunpack.c.l.bf16 %v1382
    %v1447 = vunpack.c.l.bf16 %v1383
    %v1448 = vunpack.c.l.bf16 %v1384
    %v1449 = vunpack.c.l.bf16 %v1385
    %v1450 = vunpack.c.l.bf16 %v1386
    %v1451 = vunpack.c.l.bf16 %v1387
    %v1452 = vunpack.c.l.bf16 %v1388
    %v1453 = vunpack.c.l.bf16 %v1389
    %v1454 = vunpack.c.l.bf16 %v1390
    %v1455 = vunpack.c.l.bf16 %v1391
    %v1456 = vunpack.c.l.bf16 %v1392
    %v1457 = vunpack.c.l.bf16 %v1393
    %v1458 = vunpack.c.l.bf16 %v1394
    %v1459 = vunpack.c.l.bf16 %v1395
    %v1460 = vunpack.c.l.bf16 %v1396
    %v1461 = vunpack.c.l.bf16 %v1397
    %v1462 = vunpack.c.l.bf16 %v1398
    %v1463 = vunpack.c.l.bf16 %v1399
    %v1464 = vunpack.c.l.bf16 %v1400
    %v1465 = vunpack.c.l.bf16 %v1401
    %v1466 = vunpack.c.l.bf16 %v1402
    %v1467 = vunpack.c.l.bf16 %v1403
    %v1468 = vunpack.c.l.bf16 %v1404
    %v1469 = vunpack.c.l.bf16 %v1405
    %v1470 = vunpack.c.l.bf16 %v1406
    %v1471 = vunpack.c.l.bf16 %v1407
    %v1472 = vunpack.c.l.bf16 %v1408
    %v1473 = vunpack.c.l.bf16 %v1409
    %v1474 = vunpack.c.l.bf16 %v1410
    %v1475 = vunpack.c.l.bf16 %v1411
    %v1476 = vunpack.c.l.bf16 %v1412
    %v1477 = vunpack.c.l.bf16 %v1413
    %v1478 = vunpack.c.l.bf16 %v1414
    %v1479 = vunpack.c.l.bf16 %v1415
    %v1480 = vunpack.c.l.bf16 %v1416
    %v1481 = vunpack.c.l.bf16 %v1417
    %v1482 = vunpack.c.l.bf16 %v1418
    %v1483 = vunpack.c.l.bf16 %v1419
    %v1484 = vunpack.c.l.bf16 %v1420
    %v1485 = vunpack.c.l.bf16 %v1421
    %v1486 = vunpack.c.l.bf16 %v1422
    %v1487 = vunpack.c.l.bf16 %v1423
    %v1488 = vunpack.c.l.bf16 %v1424
    %v1489 = vunpack.c.l.bf16 %v1425
    %v1490 = vunpack.c.l.bf16 %v1426
    %v1491 = vunpack.c.l.bf16 %v1427
    %v1492 = vunpack.c.l.bf16 %v1428
    %v1493 = vunpack.c.l.bf16 %v1429
    %v1494 = vadd.f32 %v1302, %v1430
    %v1495 = vadd.f32 %v1303, %v1431
    %v1496 = vadd.f32 %v1304, %v1432
    %v1497 = vadd.f32 %v1305, %v1433
    %v1498 = vadd.f32 %v1306, %v1434
    %v1499 = vadd.f32 %v1307, %v1435
    %v1500 = vadd.f32 %v1308, %v1436
    %v1501 = vadd.f32 %v1309, %v1437
    %v1502 = vadd.f32 %v1310, %v1438
    %v1503 = vadd.f32 %v1311, %v1439
    %v1504 = vadd.f32 %v1312, %v1440
    %v1505 = vadd.f32 %v1313, %v1441
    %v1506 = vadd.f32 %v1314, %v1442
    %v1507 = vadd.f32 %v1315, %v1443
    %v1508 = vadd.f32 %v1316, %v1444
    %v1509 = vadd.f32 %v1317, %v1445
    %v1510 = vadd.f32 %v1318, %v1446
    %v1511 = vadd.f32 %v1319, %v1447
    %v1512 = vadd.f32 %v1320, %v1448
    %v1513 = vadd.f32 %v1321, %v1449
    %v1514 = vadd.f32 %v1322, %v1450
    %v1515 = vadd.f32 %v1323, %v1451
    %v1516 = vadd.f32 %v1324, %v1452
    %v1517 = vadd.f32 %v1325, %v1453
    %v1518 = vadd.f32 %v1326, %v1454
    %v1519 = vadd.f32 %v1327, %v1455
    %v1520 = vadd.f32 %v1328, %v1456
    %v1521 = vadd.f32 %v1329, %v1457
    %v1522 = vadd.f32 %v1330, %v1458
    %v1523 = vadd.f32 %v1331, %v1459
    %v1524 = vadd.f32 %v1332, %v1460
    %v1525 = vadd.f32 %v1333, %v1461
    %v1526 = vadd.f32 %v1334, %v1462
    %v1527 = vadd.f32 %v1335, %v1463
    %v1528 = vadd.f32 %v1336, %v1464
    %v1529 = vadd.f32 %v1337, %v1465
    %v1530 = vadd.f32 %v1338, %v1466
    %v1531 = vadd.f32 %v1339, %v1467
    %v1532 = vadd.f32 %v1340, %v1468
    %v1533 = vadd.f32 %v1341, %v1469
    %v1534 = vadd.f32 %v1342, %v1470
    %v1535 = vadd.f32 %v1343, %v1471
    %v1536 = vadd.f32 %v1344, %v1472
    %v1537 = vadd.f32 %v1345, %v1473
    %v1538 = vadd.f32 %v1346, %v1474
    %v1539 = vadd.f32 %v1347, %v1475
    %v1540 = vadd.f32 %v1348, %v1476
    %v1541 = vadd.f32 %v1349, %v1477
    %v1542 = vadd.f32 %v1350, %v1478
    %v1543 = vadd.f32 %v1351, %v1479
    %v1544 = vadd.f32 %v1352, %v1480
    %v1545 = vadd.f32 %v1353, %v1481
    %v1546 = vadd.f32 %v1354, %v1482
    %v1547 = vadd.f32 %v1355, %v1483
    %v1548 = vadd.f32 %v1356, %v1484
    %v1549 = vadd.f32 %v1357, %v1485
    %v1550 = vadd.f32 %v1358, %v1486
    %v1551 = vadd.f32 %v1359, %v1487
    %v1552 = vadd.f32 %v1360, %v1488
    %v1553 = vadd.f32 %v1361, %v1489
    %v1554 = vadd.f32 %v1362, %v1490
    %v1555 = vadd.f32 %v1363, %v1491
    %v1556 = vadd.f32 %v1364, %v1492
    %v1557 = vadd.f32 %v1365, %v1493
    %v1558 = vmax.f32 %v1494, 0.0
    %v1559 = vmax.f32 %v1495, 0.0
    %v1560 = vmax.f32 %v1496, 0.0
    %v1561 = vmax.f32 %v1497, 0.0
    %v1562 = vmax.f32 %v1498, 0.0
    %v1563 = vmax.f32 %v1499, 0.0
    %v1564 = vmax.f32 %v1500, 0.0
    %v1565 = vmax.f32 %v1501, 0.0
    %v1566 = vmax.f32 %v1502, 0.0
    %v1567 = vmax.f32 %v1503, 0.0
    %v1568 = vmax.f32 %v1504, 0.0
    %v1569 = vmax.f32 %v1505, 0.0
    %v1570 = vmax.f32 %v1506, 0.0
    %v1571 = vmax.f32 %v1507, 0.0
    %v1572 = vmax.f32 %v1508, 0.0
    %v1573 = vmax.f32 %v1509, 0.0
    %v1574 = vmax.f32 %v1510, 0.0
    %v1575 = vmax.f32 %v1511, 0.0
    %v1576 = vmax.f32 %v1512, 0.0
    %v1577 = vmax.f32 %v1513, 0.0
    %v1578 = vmax.f32 %v1514, 0.0
    %v1579 = vmax.f32 %v1515, 0.0
    %v1580 = vmax.f32 %v1516, 0.0
    %v1581 = vmax.f32 %v1517, 0.0
    %v1582 = vmax.f32 %v1518, 0.0
    %v1583 = vmax.f32 %v1519, 0.0
    %v1584 = vmax.f32 %v1520, 0.0
    %v1585 = vmax.f32 %v1521, 0.0
    %v1586 = vmax.f32 %v1522, 0.0
    %v1587 = vmax.f32 %v1523, 0.0
    %v1588 = vmax.f32 %v1524, 0.0
    %v1589 = vmax.f32 %v1525, 0.0
    %v1590 = vmax.f32 %v1526, 0.0
    %v1591 = vmax.f32 %v1527, 0.0
    %v1592 = vmax.f32 %v1528, 0.0
    %v1593 = vmax.f32 %v1529, 0.0
    %v1594 = vmax.f32 %v1530, 0.0
    %v1595 = vmax.f32 %v1531, 0.0
    %v1596 = vmax.f32 %v1532, 0.0
    %v1597 = vmax.f32 %v1533, 0.0
    %v1598 = vmax.f32 %v1534, 0.0
    %v1599 = vmax.f32 %v1535, 0.0
    %v1600 = vmax.f32 %v1536, 0.0
    %v1601 = vmax.f32 %v1537, 0.0
    %v1602 = vmax.f32 %v1538, 0.0
    %v1603 = vmax.f32 %v1539, 0.0
    %v1604 = vmax.f32 %v1540, 0.0
    %v1605 = vmax.f32 %v1541, 0.0
    %v1606 = vmax.f32 %v1542, 0.0
    %v1607 = vmax.f32 %v1543, 0.0
    %v1608 = vmax.f32 %v1544, 0.0
    %v1609 = vmax.f32 %v1545, 0.0
    %v1610 = vmax.f32 %v1546, 0.0
    %v1611 = vmax.f32 %v1547, 0.0
    %v1612 = vmax.f32 %v1548, 0.0
    %v1613 = vmax.f32 %v1549, 0.0
    %v1614 = vmax.f32 %v1550, 0.0
    %v1615 = vmax.f32 %v1551, 0.0
    %v1616 = vmax.f32 %v1552, 0.0
    %v1617 = vmax.f32 %v1553, 0.0
    %v1618 = vmax.f32 %v1554, 0.0
    %v1619 = vmax.f32 %v1555, 0.0
    %v1620 = vmax.f32 %v1556, 0.0
    %v1621 = vmax.f32 %v1557, 0.0
    %v1622 = vpack.c.bf16 %v1559, %v1558
    %v1623 = vpack.c.bf16 %v1561, %v1560
    %v1624 = vpack.c.bf16 %v1563, %v1562
    %v1625 = vpack.c.bf16 %v1565, %v1564
    %v1626 = vpack.c.bf16 %v1567, %v1566
    %v1627 = vpack.c.bf16 %v1569, %v1568
    %v1628 = vpack.c.bf16 %v1571, %v1570
    %v1629 = vpack.c.bf16 %v1573, %v1572
    %v1630 = vpack.c.bf16 %v1575, %v1574
    %v1631 = vpack.c.bf16 %v1577, %v1576
    %v1632 = vpack.c.bf16 %v1579, %v1578
    %v1633 = vpack.c.bf16 %v1581, %v1580
    %v1634 = vpack.c.bf16 %v1583, %v1582
    %v1635 = vpack.c.bf16 %v1585, %v1584
    %v1636 = vpack.c.bf16 %v1587, %v1586
    %v1637 = vpack.c.bf16 %v1589, %v1588
    %v1638 = vpack.c.bf16 %v1591, %v1590
    %v1639 = vpack.c.bf16 %v1593, %v1592
    %v1640 = vpack.c.bf16 %v1595, %v1594
    %v1641 = vpack.c.bf16 %v1597, %v1596
    %v1642 = vpack.c.bf16 %v1599, %v1598
    %v1643 = vpack.c.bf16 %v1601, %v1600
    %v1644 = vpack.c.bf16 %v1603, %v1602
    %v1645 = vpack.c.bf16 %v1605, %v1604
    %v1646 = vpack.c.bf16 %v1607, %v1606
    %v1647 = vpack.c.bf16 %v1609, %v1608
    %v1648 = vpack.c.bf16 %v1611, %v1610
    %v1649 = vpack.c.bf16 %v1613, %v1612
    %v1650 = vpack.c.bf16 %v1615, %v1614
    %v1651 = vpack.c.bf16 %v1617, %v1616
    %v1652 = vpack.c.bf16 %v1619, %v1618
    %v1653 = vpack.c.bf16 %v1621, %v1620
    %v1686 = vunpack.c.l.b16 %v1622
    %v1687 = vunpack.c.h.b16 %v1622
    %v1688 = vunpack.c.l.b16 %v1623
    %v1689 = vunpack.c.h.b16 %v1623
    %v1690 = vunpack.c.l.b16 %v1624
    %v1691 = vunpack.c.h.b16 %v1624
    %v1692 = vunpack.c.l.b16 %v1625
    %v1693 = vunpack.c.h.b16 %v1625
    %v1694 = vunpack.c.l.b16 %v1626
    %v1695 = vunpack.c.h.b16 %v1626
    %v1696 = vunpack.c.l.b16 %v1627
    %v1697 = vunpack.c.h.b16 %v1627
    %v1698 = vunpack.c.l.b16 %v1628
    %v1699 = vunpack.c.h.b16 %v1628
    %v1700 = vunpack.c.l.b16 %v1629
    %v1701 = vunpack.c.h.b16 %v1629
    %v1702 = vunpack.c.l.b16 %v1630
    %v1703 = vunpack.c.h.b16 %v1630
    %v1704 = vunpack.c.l.b16 %v1631
    %v1705 = vunpack.c.h.b16 %v1631
    %v1706 = vunpack.c.l.b16 %v1632
    %v1707 = vunpack.c.h.b16 %v1632
    %v1708 = vunpack.c.l.b16 %v1633
    %v1709 = vunpack.c.h.b16 %v1633
    %v1710 = vunpack.c.l.b16 %v1634
    %v1711 = vunpack.c.h.b16 %v1634
    %v1712 = vunpack.c.l.b16 %v1635
    %v1713 = vunpack.c.h.b16 %v1635
    %v1714 = vunpack.c.l.b16 %v1636
    %v1715 = vunpack.c.h.b16 %v1636
    %v1716 = vunpack.c.l.b16 %v1637
    %v1717 = vunpack.c.h.b16 %v1637
    %v1718 = vunpack.c.l.b16 %v1638
    %v1719 = vunpack.c.h.b16 %v1638
    %v1720 = vunpack.c.l.b16 %v1639
    %v1721 = vunpack.c.h.b16 %v1639
    %v1722 = vunpack.c.l.b16 %v1640
    %v1723 = vunpack.c.h.b16 %v1640
    %v1724 = vunpack.c.l.b16 %v1641
    %v1725 = vunpack.c.h.b16 %v1641
    %v1726 = vunpack.c.l.b16 %v1642
    %v1727 = vunpack.c.h.b16 %v1642
    %v1728 = vunpack.c.l.b16 %v1643
    %v1729 = vunpack.c.h.b16 %v1643
    %v1730 = vunpack.c.l.b16 %v1644
    %v1731 = vunpack.c.h.b16 %v1644
    %v1732 = vunpack.c.l.b16 %v1645
    %v1733 = vunpack.c.h.b16 %v1645
    %v1734 = vunpack.c.l.b16 %v1646
    %v1735 = vunpack.c.h.b16 %v1646
    %v1736 = vunpack.c.l.b16 %v1647
    %v1737 = vunpack.c.h.b16 %v1647
    %v1738 = vunpack.c.l.b16 %v1648
    %v1739 = vunpack.c.h.b16 %v1648
    %v1740 = vunpack.c.l.b16 %v1649
    %v1741 = vunpack.c.h.b16 %v1649
    %v1742 = vunpack.c.l.b16 %v1650
    %v1743 = vunpack.c.h.b16 %v1650
    %v1744 = vunpack.c.l.b16 %v1651
    %v1745 = vunpack.c.h.b16 %v1651
    %v1746 = vunpack.c.l.b16 %v1652
    %v1747 = vunpack.c.h.b16 %v1652
    %v1748 = vunpack.c.l.b16 %v1653
    %v1749 = vunpack.c.h.b16 %v1653
    %v1750 = vpack.c.b16 %v1686, %v1686
    %v1751 = vpack.c.b16 %v1687, %v1687
    %v1752 = vpack.c.b16 %v1688, %v1688
    %v1753 = vpack.c.b16 %v1689, %v1689
    %v1754 = vpack.c.b16 %v1690, %v1690
    %v1755 = vpack.c.b16 %v1691, %v1691
    %v1756 = vpack.c.b16 %v1692, %v1692
    %v1757 = vpack.c.b16 %v1693, %v1693
    %v1758 = vpack.c.b16 %v1694, %v1694
    %v1759 = vpack.c.b16 %v1695, %v1695
    %v1760 = vpack.c.b16 %v1696, %v1696
    %v1761 = vpack.c.b16 %v1697, %v1697
    %v1762 = vpack.c.b16 %v1698, %v1698
    %v1763 = vpack.c.b16 %v1699, %v1699
    %v1764 = vpack.c.b16 %v1700, %v1700
    %v1765 = vpack.c.b16 %v1701, %v1701
    %v1766 = vpack.c.b16 %v1702, %v1702
    %v1767 = vpack.c.b16 %v1703, %v1703
    %v1768 = vpack.c.b16 %v1704, %v1704
    %v1769 = vpack.c.b16 %v1705, %v1705
    %v1770 = vpack.c.b16 %v1706, %v1706
    %v1771 = vpack.c.b16 %v1707, %v1707
    %v1772 = vpack.c.b16 %v1708, %v1708
    %v1773 = vpack.c.b16 %v1709, %v1709
    %v1774 = vpack.c.b16 %v1710, %v1710
    %v1775 = vpack.c.b16 %v1711, %v1711
    %v1776 = vpack.c.b16 %v1712, %v1712
    %v1777 = vpack.c.b16 %v1713, %v1713
    %v1778 = vpack.c.b16 %v1714, %v1714
    %v1779 = vpack.c.b16 %v1715, %v1715
    %v1780 = vpack.c.b16 %v1716, %v1716
    %v1781 = vpack.c.b16 %v1717, %v1717
    %v1782 = vpack.c.b16 %v1718, %v1718
    %v1783 = vpack.c.b16 %v1719, %v1719
    %v1784 = vpack.c.b16 %v1720, %v1720
    %v1785 = vpack.c.b16 %v1721, %v1721
    %v1786 = vpack.c.b16 %v1722, %v1722
    %v1787 = vpack.c.b16 %v1723, %v1723
    %v1788 = vpack.c.b16 %v1724, %v1724
    %v1789 = vpack.c.b16 %v1725, %v1725
    %v1790 = vpack.c.b16 %v1726, %v1726
    %v1791 = vpack.c.b16 %v1727, %v1727
    %v1792 = vpack.c.b16 %v1728, %v1728
    %v1793 = vpack.c.b16 %v1729, %v1729
    %v1794 = vpack.c.b16 %v1730, %v1730
    %v1795 = vpack.c.b16 %v1731, %v1731
    %v1796 = vpack.c.b16 %v1732, %v1732
    %v1797 = vpack.c.b16 %v1733, %v1733
    %v1798 = vpack.c.b16 %v1734, %v1734
    %v1799 = vpack.c.b16 %v1735, %v1735
    %v1800 = vpack.c.b16 %v1736, %v1736
    %v1801 = vpack.c.b16 %v1737, %v1737
    %v1802 = vpack.c.b16 %v1738, %v1738
    %v1803 = vpack.c.b16 %v1739, %v1739
    %v1804 = vpack.c.b16 %v1740, %v1740
    %v1805 = vpack.c.b16 %v1741, %v1741
    %v1806 = vpack.c.b16 %v1742, %v1742
    %v1807 = vpack.c.b16 %v1743, %v1743
    %v1808 = vpack.c.b16 %v1744, %v1744
    %v1809 = vpack.c.b16 %v1745, %v1745
    %v1810 = vpack.c.b16 %v1746, %v1746
    %v1811 = vpack.c.b16 %v1747, %v1747
    %v1812 = vpack.c.b16 %v1748, %v1748
    %v1813 = vpack.c.b16 %v1749, %v1749
    %1878 = vst [vmem:[%s4] sm:$0xf] %v1750
    %1879 = vst [vmem:[%s4 + $0x4] sm:$0xf] %v1751
    %1880 = vst [vmem:[%s4 + $0x8] sm:$0xf] %v1752
    %1881 = vst [vmem:[%s4 + $0xc] sm:$0xf] %v1753
    %1882 = vst [vmem:[%s4 + $0x10] sm:$0xf] %v1754
    %1883 = vst [vmem:[%s4 + $0x14] sm:$0xf] %v1755
    %1884 = vst [vmem:[%s4 + $0x18] sm:$0xf] %v1756
    %1885 = vst [vmem:[%s4 + $0x1c] sm:$0xf] %v1757
    %1886 = vst [vmem:[%s4 + $0x20] sm:$0xf] %v1758
    %1887 = vst [vmem:[%s4 + $0x24] sm:$0xf] %v1759
    %1888 = vst [vmem:[%s4 + $0x28] sm:$0xf] %v1760
    %1889 = vst [vmem:[%s4 + $0x2c] sm:$0xf] %v1761
    %1890 = vst [vmem:[%s4 + $0x30] sm:$0xf] %v1762
    %1891 = vst [vmem:[%s4 + $0x34] sm:$0xf] %v1763
    %1892 = vst [vmem:[%s4 + $0x38] sm:$0xf] %v1764
    %1893 = vst [vmem:[%s4 + $0x3c] sm:$0xf] %v1765
    %1894 = vst [vmem:[%s4 + $0x40] sm:$0xf] %v1766
    %1895 = vst [vmem:[%s4 + $0x44] sm:$0xf] %v1767
    %1896 = vst [vmem:[%s4 + $0x48] sm:$0xf] %v1768
    %1897 = vst [vmem:[%s4 + $0x4c] sm:$0xf] %v1769
    %1898 = vst [vmem:[%s4 + $0x50] sm:$0xf] %v1770
    %1899 = vst [vmem:[%s4 + $0x54] sm:$0xf] %v1771
    %1900 = vst [vmem:[%s4 + $0x58] sm:$0xf] %v1772
    %1901 = vst [vmem:[%s4 + $0x5c] sm:$0xf] %v1773
    %1902 = vst [vmem:[%s4 + $0x60] sm:$0xf] %v1774
    %1903 = vst [vmem:[%s4 + $0x64] sm:$0xf] %v1775
    %1904 = vst [vmem:[%s4 + $0x68] sm:$0xf] %v1776
    %1905 = vst [vmem:[%s4 + $0x6c] sm:$0xf] %v1777
    %1906 = vst [vmem:[%s4 + $0x70] sm:$0xf] %v1778
    %1907 = vst [vmem:[%s4 + $0x74] sm:$0xf] %v1779
    %1908 = vst [vmem:[%s4 + $0x78] sm:$0xf] %v1780
    %1909 = vst [vmem:[%s4 + $0x7c] sm:$0xf] %v1781
    %1910 = vst [vmem:[%s4 + $0x80] sm:$0xf] %v1782
    %1911 = vst [vmem:[%s4 + $0x84] sm:$0xf] %v1783
    %1912 = vst [vmem:[%s4 + $0x88] sm:$0xf] %v1784
    %1913 = vst [vmem:[%s4 + $0x8c] sm:$0xf] %v1785
    %1914 = vst [vmem:[%s4 + $0x90] sm:$0xf] %v1786
    %1915 = vst [vmem:[%s4 + $0x94] sm:$0xf] %v1787
    %1916 = vst [vmem:[%s4 + $0x98] sm:$0xf] %v1788
    %1917 = vst [vmem:[%s4 + $0x9c] sm:$0xf] %v1789
    %1918 = vst [vmem:[%s4 + $0xa0] sm:$0xf] %v1790
    %1919 = vst [vmem:[%s4 + $0xa4] sm:$0xf] %v1791
    %1920 = vst [vmem:[%s4 + $0xa8] sm:$0xf] %v1792
    %1921 = vst [vmem:[%s4 + $0xac] sm:$0xf] %v1793
    %1922 = vst [vmem:[%s4 + $0xb0] sm:$0xf] %v1794
    %1923 = vst [vmem:[%s4 + $0xb4] sm:$0xf] %v1795
    %1924 = vst [vmem:[%s4 + $0xb8] sm:$0xf] %v1796
    %1925 = vst [vmem:[%s4 + $0xbc] sm:$0xf] %v1797
    %1926 = vst [vmem:[%s4 + $0xc0] sm:$0xf] %v1798
    %1927 = vst [vmem:[%s4 + $0xc4] sm:$0xf] %v1799
    %1928 = vst [vmem:[%s4 + $0xc8] sm:$0xf] %v1800
    %1929 = vst [vmem:[%s4 + $0xcc] sm:$0xf] %v1801
    %1930 = vst [vmem:[%s4 + $0xd0] sm:$0xf] %v1802
    %1931 = vst [vmem:[%s4 + $0xd4] sm:$0xf] %v1803
    %1932 = vst [vmem:[%s4 + $0xd8] sm:$0xf] %v1804
    %1933 = vst [vmem:[%s4 + $0xdc] sm:$0xf] %v1805
    %1934 = vst [vmem:[%s4 + $0xe0] sm:$0xf] %v1806
    %1935 = vst [vmem:[%s4 + $0xe4] sm:$0xf] %v1807
    %1936 = vst [vmem:[%s4 + $0xe8] sm:$0xf] %v1808
    %1937 = vst [vmem:[%s4 + $0xec] sm:$0xf] %v1809
    %1938 = vst [vmem:[%s4 + $0xf0] sm:$0xf] %v1810
    %1939 = vst [vmem:[%s4 + $0xf4] sm:$0xf] %v1811
    %1940 = vst [vmem:[%s4 + $0xf8] sm:$0xf] %v1812
    %1941 = vst [vmem:[%s4 + $0xfc] sm:$0xf] %v1813
  $region21: #{resnet_forward.11} parent=0 // pred_fallthru
    _
  // Predicated region
  $region22: #{resnet_forward.11} parent=0 // pred_check
    _
  $region23: #{resnet_forward.11} parent=0 // pred_check_branch
    %1943 = sbr.rel (0) target = $region25
  $region24: #{resnet_forward.11} parent=0 // pred_region
    _
  $region25: #{resnet_forward.11} parent=0 // pred_fallthru
    _
  // Predicated region
  $region26: #{resnet_forward.11} parent=0 // pred_check
    _
  $region27: #{resnet_forward.11} parent=0 // pred_check_branch
    %1945 = sbr.rel (0) target = $region29
  $region28: #{resnet_forward.11} parent=0 // pred_region
    _
  $region29: #{resnet_forward.11} parent=0 // pred_fallthru
    _

// kernel: resnet_forward.12
$region0: #{resnet_forward.12}
  #allocation0 [shape = 'u32[]', space=smem, size = 0x4, offset = 0x4, fixed_abs, tag = 'smem constant byte address 0x4 - core index']
  #allocation1 [shape = 'u32[144,128]{1,0:T(1,128)}', space=vmem, size = 0x12000, scoped, tag = 'internal scratch']
  #allocation2 [shape = 'f32[128,256]{1,0:T(8,128)}', space=vmem, size = 0x20000, scoped, tag = 'scratch operand']
  %s0 = inlined_call_operand.vmem [shape: bf16[128,256], index: 0, kind: input, shape index: {}]
  %s1 = inlined_call_operand.vmem [shape: bf16[256,256], index: 1, kind: input, shape index: {}]
  %s2 = inlined_call_operand.vmem [shape: f32[2,256], index: 2, kind: input, shape index: {}]
  %s3 = inlined_call_operand.vmem [shape: bf16[128,128], index: 3, kind: output, shape index: {0}]
  %s4 = inlined_call_operand.vmem [shape: f32[128,128], index: 4, kind: output, shape index: {1}]
  %5 = xla_tuple %s3, %s4
  %s6 = sld [smem:[#allocation0]]
  $region34: #{resnet_forward.12} parent=0
    _
  %s8 = ssub.s32 1, %s6
  %s9 = scalar_select 0, %s8, %s6
  // Predicated region
  $region2: #{resnet_forward.12} parent=0 // pred_check
    _
  $region3: #{resnet_forward.12} parent=0 // pred_check_branch
    %11 = sbr.rel (0) target = $region5
  $region4: #{resnet_forward.12} parent=0 // pred_region
    _
  $region5: #{resnet_forward.12} parent=0 // pred_fallthru
    _
  // Predicated region
  $region6: #{resnet_forward.12} parent=0 // pred_check
    _
  $region7: #{resnet_forward.12} parent=0 // pred_check_branch
    %13 = sbr.rel (0) target = $region9
  $region8: #{resnet_forward.12} parent=0 // pred_region
    _
  $region9: #{resnet_forward.12} parent=0 // pred_fallthru
    _
  // Predicated region
  $region10: #{resnet_forward.12} parent=0 // pred_check
    _
  $region11: #{resnet_forward.12} parent=0 // pred_check_branch
    %15 = sbr.rel (0) target = $region13
  $region12: #{resnet_forward.12} parent=0 // pred_region
    _
  $region13: #{resnet_forward.12} parent=0 // pred_fallthru
    _
  %v16 = vld [vmem:[%s0] sm:$0xff]
  %v17 = vld [vmem:[%s0 + $0x8] sm:$0xff]
  %v18 = vld [vmem:[%s0 + $0x10] sm:$0xff]
  %v19 = vld [vmem:[%s0 + $0x18] sm:$0xff]
  %v20 = vld [vmem:[%s0 + $0x20] sm:$0xff]
  %v21 = vld [vmem:[%s0 + $0x28] sm:$0xff]
  %v22 = vld [vmem:[%s0 + $0x30] sm:$0xff]
  %v23 = vld [vmem:[%s0 + $0x38] sm:$0xff]
  %v24 = vld [vmem:[%s0 + $0x40] sm:$0xff]
  %v25 = vld [vmem:[%s0 + $0x48] sm:$0xff]
  %v26 = vld [vmem:[%s0 + $0x50] sm:$0xff]
  %v27 = vld [vmem:[%s0 + $0x58] sm:$0xff]
  %v28 = vld [vmem:[%s0 + $0x60] sm:$0xff]
  %v29 = vld [vmem:[%s0 + $0x68] sm:$0xff]
  %v30 = vld [vmem:[%s0 + $0x70] sm:$0xff]
  %v31 = vld [vmem:[%s0 + $0x78] sm:$0xff]
  %v32 = vld [vmem:[%s1] sm:$0xff]
  %v33 = vld [vmem:[%s1 + $0x8] sm:$0xff]
  %v34 = vld [vmem:[%s1 + $0x10] sm:$0xff]
  %v35 = vld [vmem:[%s1 + $0x18] sm:$0xff]
  %v36 = vld [vmem:[%s1 + $0x20] sm:$0xff]
  %v37 = vld [vmem:[%s1 + $0x28] sm:$0xff]
  %v38 = vld [vmem:[%s1 + $0x30] sm:$0xff]
  %v39 = vld [vmem:[%s1 + $0x38] sm:$0xff]
  %v40 = vld [vmem:[%s1 + $0x40] sm:$0xff]
  %v41 = vld [vmem:[%s1 + $0x48] sm:$0xff]
  %v42 = vld [vmem:[%s1 + $0x50] sm:$0xff]
  %v43 = vld [vmem:[%s1 + $0x58] sm:$0xff]
  %v44 = vld [vmem:[%s1 + $0x60] sm:$0xff]
  %v45 = vld [vmem:[%s1 + $0x68] sm:$0xff]
  %v46 = vld [vmem:[%s1 + $0x70] sm:$0xff]
  %v47 = vld [vmem:[%s1 + $0x78] sm:$0xff]
  %v48 = vld [vmem:[%s1 + $0x80] sm:$0xff]
  %v49 = vld [vmem:[%s1 + $0x88] sm:$0xff]
  %v50 = vld [vmem:[%s1 + $0x90] sm:$0xff]
  %v51 = vld [vmem:[%s1 + $0x98] sm:$0xff]
  %v52 = vld [vmem:[%s1 + $0xa0] sm:$0xff]
  %v53 = vld [vmem:[%s1 + $0xa8] sm:$0xff]
  %v54 = vld [vmem:[%s1 + $0xb0] sm:$0xff]
  %v55 = vld [vmem:[%s1 + $0xb8] sm:$0xff]
  %v56 = vld [vmem:[%s1 + $0xc0] sm:$0xff]
  %v57 = vld [vmem:[%s1 + $0xc8] sm:$0xff]
  %v58 = vld [vmem:[%s1 + $0xd0] sm:$0xff]
  %v59 = vld [vmem:[%s1 + $0xd8] sm:$0xff]
  %v60 = vld [vmem:[%s1 + $0xe0] sm:$0xff]
  %v61 = vld [vmem:[%s1 + $0xe8] sm:$0xff]
  %v62 = vld [vmem:[%s1 + $0xf0] sm:$0xff]
  %v63 = vld [vmem:[%s1 + $0xf8] sm:$0xff]
  %v80 = vunpack.c.l.b16 %v16
  %v81 = vunpack.c.h.b16 %v16
  %v82 = vunpack.c.l.b16 %v17
  %v83 = vunpack.c.h.b16 %v17
  %v84 = vunpack.c.l.b16 %v18
  %v85 = vunpack.c.h.b16 %v18
  %v86 = vunpack.c.l.b16 %v19
  %v87 = vunpack.c.h.b16 %v19
  %v88 = vunpack.c.l.b16 %v20
  %v89 = vunpack.c.h.b16 %v20
  %v90 = vunpack.c.l.b16 %v21
  %v91 = vunpack.c.h.b16 %v21
  %v92 = vunpack.c.l.b16 %v22
  %v93 = vunpack.c.h.b16 %v22
  %v94 = vunpack.c.l.b16 %v23
  %v95 = vunpack.c.h.b16 %v23
  %v96 = vunpack.c.l.b16 %v24
  %v97 = vunpack.c.h.b16 %v24
  %v98 = vunpack.c.l.b16 %v25
  %v99 = vunpack.c.h.b16 %v25
  %v100 = vunpack.c.l.b16 %v26
  %v101 = vunpack.c.h.b16 %v26
  %v102 = vunpack.c.l.b16 %v27
  %v103 = vunpack.c.h.b16 %v27
  %v104 = vunpack.c.l.b16 %v28
  %v105 = vunpack.c.h.b16 %v28
  %v106 = vunpack.c.l.b16 %v29
  %v107 = vunpack.c.h.b16 %v29
  %v108 = vunpack.c.l.b16 %v30
  %v109 = vunpack.c.h.b16 %v30
  %v110 = vunpack.c.l.b16 %v31
  %v111 = vunpack.c.h.b16 %v31
  %v112 = vpack.c.b16 %v82, %v80
  %v113 = vpack.c.b16 %v83, %v81
  %v114 = vpack.c.b16 %v86, %v84
  %v115 = vpack.c.b16 %v87, %v85
  %v116 = vpack.c.b16 %v90, %v88
  %v117 = vpack.c.b16 %v91, %v89
  %v118 = vpack.c.b16 %v94, %v92
  %v119 = vpack.c.b16 %v95, %v93
  %v120 = vpack.c.b16 %v98, %v96
  %v121 = vpack.c.b16 %v99, %v97
  %v122 = vpack.c.b16 %v102, %v100
  %v123 = vpack.c.b16 %v103, %v101
  %v124 = vpack.c.b16 %v106, %v104
  %v125 = vpack.c.b16 %v107, %v105
  %v126 = vpack.c.b16 %v110, %v108
  %v127 = vpack.c.b16 %v111, %v109
  %v176 = vunpack.c.l.b16 %v32
  %v177 = vunpack.c.h.b16 %v32
  %v178 = vunpack.c.l.b16 %v33
  %v179 = vunpack.c.h.b16 %v33
  %v180 = vunpack.c.l.b16 %v34
  %v181 = vunpack.c.h.b16 %v34
  %v182 = vunpack.c.l.b16 %v35
  %v183 = vunpack.c.h.b16 %v35
  %v184 = vunpack.c.l.b16 %v36
  %v185 = vunpack.c.h.b16 %v36
  %v186 = vunpack.c.l.b16 %v37
  %v187 = vunpack.c.h.b16 %v37
  %v188 = vunpack.c.l.b16 %v38
  %v189 = vunpack.c.h.b16 %v38
  %v190 = vunpack.c.l.b16 %v39
  %v191 = vunpack.c.h.b16 %v39
  %v192 = vunpack.c.l.b16 %v40
  %v193 = vunpack.c.h.b16 %v40
  %v194 = vunpack.c.l.b16 %v41
  %v195 = vunpack.c.h.b16 %v41
  %v196 = vunpack.c.l.b16 %v42
  %v197 = vunpack.c.h.b16 %v42
  %v198 = vunpack.c.l.b16 %v43
  %v199 = vunpack.c.h.b16 %v43
  %v200 = vunpack.c.l.b16 %v44
  %v201 = vunpack.c.h.b16 %v44
  %v202 = vunpack.c.l.b16 %v45
  %v203 = vunpack.c.h.b16 %v45
  %v204 = vunpack.c.l.b16 %v46
  %v205 = vunpack.c.h.b16 %v46
  %v206 = vunpack.c.l.b16 %v47
  %v207 = vunpack.c.h.b16 %v47
  %v208 = vunpack.c.l.b16 %v48
  %v209 = vunpack.c.h.b16 %v48
  %v210 = vunpack.c.l.b16 %v49
  %v211 = vunpack.c.h.b16 %v49
  %v212 = vunpack.c.l.b16 %v50
  %v213 = vunpack.c.h.b16 %v50
  %v214 = vunpack.c.l.b16 %v51
  %v215 = vunpack.c.h.b16 %v51
  %v216 = vunpack.c.l.b16 %v52
  %v217 = vunpack.c.h.b16 %v52
  %v218 = vunpack.c.l.b16 %v53
  %v219 = vunpack.c.h.b16 %v53
  %v220 = vunpack.c.l.b16 %v54
  %v221 = vunpack.c.h.b16 %v54
  %v222 = vunpack.c.l.b16 %v55
  %v223 = vunpack.c.h.b16 %v55
  %v224 = vunpack.c.l.b16 %v56
  %v225 = vunpack.c.h.b16 %v56
  %v226 = vunpack.c.l.b16 %v57
  %v227 = vunpack.c.h.b16 %v57
  %v228 = vunpack.c.l.b16 %v58
  %v229 = vunpack.c.h.b16 %v58
  %v230 = vunpack.c.l.b16 %v59
  %v231 = vunpack.c.h.b16 %v59
  %v232 = vunpack.c.l.b16 %v60
  %v233 = vunpack.c.h.b16 %v60
  %v234 = vunpack.c.l.b16 %v61
  %v235 = vunpack.c.h.b16 %v61
  %v236 = vunpack.c.l.b16 %v62
  %v237 = vunpack.c.h.b16 %v62
  %v238 = vunpack.c.l.b16 %v63
  %v239 = vunpack.c.h.b16 %v63
  %v240 = vpack.c.b16 %v178, %v176
  %v241 = vpack.c.b16 %v179, %v177
  %v242 = vpack.c.b16 %v182, %v180
  %v243 = vpack.c.b16 %v183, %v181
  %v244 = vpack.c.b16 %v186, %v184
  %v245 = vpack.c.b16 %v187, %v185
  %v246 = vpack.c.b16 %v190, %v188
  %v247 = vpack.c.b16 %v191, %v189
  %v248 = vpack.c.b16 %v194, %v192
  %v249 = vpack.c.b16 %v195, %v193
  %v250 = vpack.c.b16 %v198, %v196
  %v251 = vpack.c.b16 %v199, %v197
  %v252 = vpack.c.b16 %v202, %v200
  %v253 = vpack.c.b16 %v203, %v201
  %v254 = vpack.c.b16 %v206, %v204
  %v255 = vpack.c.b16 %v207, %v205
  %v256 = vpack.c.b16 %v210, %v208
  %v257 = vpack.c.b16 %v211, %v209
  %v258 = vpack.c.b16 %v214, %v212
  %v259 = vpack.c.b16 %v215, %v213
  %v260 = vpack.c.b16 %v218, %v216
  %v261 = vpack.c.b16 %v219, %v217
  %v262 = vpack.c.b16 %v222, %v220
  %v263 = vpack.c.b16 %v223, %v221
  %v264 = vpack.c.b16 %v226, %v224
  %v265 = vpack.c.b16 %v227, %v225
  %v266 = vpack.c.b16 %v230, %v228
  %v267 = vpack.c.b16 %v231, %v229
  %v268 = vpack.c.b16 %v234, %v232
  %v269 = vpack.c.b16 %v235, %v233
  %v270 = vpack.c.b16 %v238, %v236
  %v271 = vpack.c.b16 %v239, %v237
  %304 = vmatprep.subr.bf16.mxu0 %v241
  %305 = vmatpush1.bf16.msra.mxu0 %v240
  %306 = vmatprep.subr.bf16.mxu0 %v243
  %307 = vmatpush1.bf16.msra.mxu0 %v242
  %308 = vmatprep.subr.bf16.mxu0 %v245
  %309 = vmatpush1.bf16.msra.mxu0 %v244
  %310 = vmatprep.subr.bf16.mxu0 %v247
  %311 = vmatpush1.bf16.msra.mxu0 %v246
  %312 = vmatprep.subr.bf16.mxu0 %v249
  %313 = vmatpush1.bf16.msra.mxu0 %v248
  %314 = vmatprep.subr.bf16.mxu0 %v251
  %315 = vmatpush1.bf16.msra.mxu0 %v250
  %316 = vmatprep.subr.bf16.mxu0 %v253
  %317 = vmatpush1.bf16.msra.mxu0 %v252
  %318 = vmatprep.subr.bf16.mxu0 %v255
  %319 = vmatpush1.bf16.msra.mxu0 %v254
  %320 = vmatprep.subr.bf16.mxu0 %v257
  %321 = vmatpush1.bf16.msra.mxu0 %v256
  %322 = vmatprep.subr.bf16.mxu0 %v259
  %323 = vmatpush1.bf16.msra.mxu0 %v258
  %324 = vmatprep.subr.bf16.mxu0 %v261
  %325 = vmatpush1.bf16.msra.mxu0 %v260
  %326 = vmatprep.subr.bf16.mxu0 %v263
  %327 = vmatpush1.bf16.msra.mxu0 %v262
  %328 = vmatprep.subr.bf16.mxu0 %v265
  %329 = vmatpush1.bf16.msra.mxu0 %v264
  %330 = vmatprep.subr.bf16.mxu0 %v267
  %331 = vmatpush1.bf16.msra.mxu0 %v266
  %332 = vmatprep.subr.bf16.mxu0 %v269
  %333 = vmatpush1.bf16.msra.mxu0 %v268
  %334 = vmatprep.subr.bf16.mxu0 %v271
  %335 = vmatpush1.bf16.msra.mxu0 %v270
  %336 = vmatprep.mubr.bf16.mxu0 %v113
  %337 = vmatmul.mubr.bf16.gmra.mrb[0].mxu0 %v112
  %v338 = vpop.f32.mrb[0].mxu0
  %v339 = vadd.f32 0.0, %v338
  %v340 = vpop.f32.mrb[0].mxu0
  %v341 = vadd.f32 0.0, %v340
  %v342 = vpop.f32.mrb[0].mxu0
  %v343 = vadd.f32 0.0, %v342
  %v344 = vpop.f32.mrb[0].mxu0
  %v345 = vadd.f32 0.0, %v344
  %346 = vmatprep.mubr.bf16.mxu0 %v115
  %347 = vmatmul.mubr.bf16.gmra.mrb[0].mxu0 %v114
  %v348 = vpop.f32.mrb[0].mxu0
  %v349 = vadd.f32 0.0, %v348
  %v350 = vpop.f32.mrb[0].mxu0
  %v351 = vadd.f32 0.0, %v350
  %v352 = vpop.f32.mrb[0].mxu0
  %v353 = vadd.f32 0.0, %v352
  %v354 = vpop.f32.mrb[0].mxu0
  %v355 = vadd.f32 0.0, %v354
  %356 = vmatprep.mubr.bf16.mxu0 %v117
  %357 = vmatmul.mubr.bf16.gmra.mrb[0].mxu0 %v116
  %v358 = vpop.f32.mrb[0].mxu0
  %v359 = vadd.f32 0.0, %v358
  %v360 = vpop.f32.mrb[0].mxu0
  %v361 = vadd.f32 0.0, %v360
  %v362 = vpop.f32.mrb[0].mxu0
  %v363 = vadd.f32 0.0, %v362
  %v364 = vpop.f32.mrb[0].mxu0
  %v365 = vadd.f32 0.0, %v364
  %366 = vmatprep.mubr.bf16.mxu0 %v119
  %367 = vmatmul.mubr.bf16.gmra.mrb[0].mxu0 %v118
  %v368 = vpop.f32.mrb[0].mxu0
  %v369 = vadd.f32 0.0, %v368
  %v370 = vpop.f32.mrb[0].mxu0
  %v371 = vadd.f32 0.0, %v370
  %v372 = vpop.f32.mrb[0].mxu0
  %v373 = vadd.f32 0.0, %v372
  %v374 = vpop.f32.mrb[0].mxu0
  %v375 = vadd.f32 0.0, %v374
  %376 = vmatprep.mubr.bf16.mxu0 %v121
  %377 = vmatmul.mubr.bf16.gmra.mrb[0].mxu0 %v120
  %v378 = vpop.f32.mrb[0].mxu0
  %v379 = vadd.f32 0.0, %v378
  %v380 = vpop.f32.mrb[0].mxu0
  %v381 = vadd.f32 0.0, %v380
  %v382 = vpop.f32.mrb[0].mxu0
  %v383 = vadd.f32 0.0, %v382
  %v384 = vpop.f32.mrb[0].mxu0
  %v385 = vadd.f32 0.0, %v384
  %386 = vmatprep.mubr.bf16.mxu0 %v123
  %387 = vmatmul.mubr.bf16.gmra.mrb[0].mxu0 %v122
  %v388 = vpop.f32.mrb[0].mxu0
  %v389 = vadd.f32 0.0, %v388
  %v390 = vpop.f32.mrb[0].mxu0
  %v391 = vadd.f32 0.0, %v390
  %v392 = vpop.f32.mrb[0].mxu0
  %v393 = vadd.f32 0.0, %v392
  %v394 = vpop.f32.mrb[0].mxu0
  %v395 = vadd.f32 0.0, %v394
  %396 = vmatprep.mubr.bf16.mxu0 %v125
  %397 = vmatmul.mubr.bf16.gmra.mrb[0].mxu0 %v124
  %v398 = vpop.f32.mrb[0].mxu0
  %v399 = vadd.f32 0.0, %v398
  %v400 = vpop.f32.mrb[0].mxu0
  %v401 = vadd.f32 0.0, %v400
  %v402 = vpop.f32.mrb[0].mxu0
  %v403 = vadd.f32 0.0, %v402
  %v404 = vpop.f32.mrb[0].mxu0
  %v405 = vadd.f32 0.0, %v404
  %406 = vmatprep.mubr.bf16.mxu0 %v127
  %407 = vmatmul.mubr.bf16.gmra.mrb[0].mxu0 %v126
  %v408 = vpop.f32.mrb[0].mxu0
  %v409 = vadd.f32 0.0, %v408
  %v410 = vpop.f32.mrb[0].mxu0
  %v411 = vadd.f32 0.0, %v410
  %v412 = vpop.f32.mrb[0].mxu0
  %v413 = vadd.f32 0.0, %v412
  %v414 = vpop.f32.mrb[0].mxu0
  %v415 = vadd.f32 0.0, %v414
  %416 = vdwg.mxu0
  %417 = vst [vmem:[#allocation2] sm:$0xff] %v339
  %418 = vst [vmem:[#allocation2 + $0x8] sm:$0xff] %v341
  %419 = vst [vmem:[#allocation2 + $0x10] sm:$0xff] %v343
  %420 = vst [vmem:[#allocation2 + $0x18] sm:$0xff] %v345
  %421 = vst [vmem:[#allocation2 + $0x20] sm:$0xff] %v349
  %422 = vst [vmem:[#allocation2 + $0x28] sm:$0xff] %v351
  %423 = vst [vmem:[#allocation2 + $0x30] sm:$0xff] %v353
  %424 = vst [vmem:[#allocation2 + $0x38] sm:$0xff] %v355
  %425 = vst [vmem:[#allocation2 + $0x40] sm:$0xff] %v359
  %426 = vst [vmem:[#allocation2 + $0x48] sm:$0xff] %v361
  %427 = vst [vmem:[#allocation2 + $0x50] sm:$0xff] %v363
  %428 = vst [vmem:[#allocation2 + $0x58] sm:$0xff] %v365
  %429 = vst [vmem:[#allocation2 + $0x60] sm:$0xff] %v369
  %430 = vst [vmem:[#allocation2 + $0x68] sm:$0xff] %v371
  %431 = vst [vmem:[#allocation2 + $0x70] sm:$0xff] %v373
  %432 = vst [vmem:[#allocation2 + $0x78] sm:$0xff] %v375
  %433 = vst [vmem:[#allocation2 + $0x80] sm:$0xff] %v379
  %434 = vst [vmem:[#allocation2 + $0x88] sm:$0xff] %v381
  %435 = vst [vmem:[#allocation2 + $0x90] sm:$0xff] %v383
  %436 = vst [vmem:[#allocation2 + $0x98] sm:$0xff] %v385
  %437 = vst [vmem:[#allocation2 + $0xa0] sm:$0xff] %v389
  %438 = vst [vmem:[#allocation2 + $0xa8] sm:$0xff] %v391
  %439 = vst [vmem:[#allocation2 + $0xb0] sm:$0xff] %v393
  %440 = vst [vmem:[#allocation2 + $0xb8] sm:$0xff] %v395
  %441 = vst [vmem:[#allocation2 + $0xc0] sm:$0xff] %v399
  %442 = vst [vmem:[#allocation2 + $0xc8] sm:$0xff] %v401
  %443 = vst [vmem:[#allocation2 + $0xd0] sm:$0xff] %v403
  %444 = vst [vmem:[#allocation2 + $0xd8] sm:$0xff] %v405
  %445 = vst [vmem:[#allocation2 + $0xe0] sm:$0xff] %v409
  %446 = vst [vmem:[#allocation2 + $0xe8] sm:$0xff] %v411
  %447 = vst [vmem:[#allocation2 + $0xf0] sm:$0xff] %v413
  %448 = vst [vmem:[#allocation2 + $0xf8] sm:$0xff] %v415
  %p449 = scmp.eq.s32.totalorder 0, 0
  // Predicated region
  $region14: #{resnet_forward.12} parent=0 // pred_check
    %p450 = pneg %p449
  $region15: #{resnet_forward.12} parent=0 // pred_check_branch
    %452 = sbr.rel (%p450) target = $region17
  $region16: #{resnet_forward.12} parent=0 // pred_region
    %v453 = vld [vmem:[#allocation2] sm:$0xff]
    %v454 = vld [vmem:[#allocation2 + $0x8] sm:$0xff]
    %v455 = vld [vmem:[#allocation2 + $0x10] sm:$0xff]
    %v456 = vld [vmem:[#allocation2 + $0x18] sm:$0xff]
    %v457 = vld [vmem:[#allocation2 + $0x20] sm:$0xff]
    %v458 = vld [vmem:[#allocation2 + $0x28] sm:$0xff]
    %v459 = vld [vmem:[#allocation2 + $0x30] sm:$0xff]
    %v460 = vld [vmem:[#allocation2 + $0x38] sm:$0xff]
    %v461 = vld [vmem:[#allocation2 + $0x40] sm:$0xff]
    %v462 = vld [vmem:[#allocation2 + $0x48] sm:$0xff]
    %v463 = vld [vmem:[#allocation2 + $0x50] sm:$0xff]
    %v464 = vld [vmem:[#allocation2 + $0x58] sm:$0xff]
    %v465 = vld [vmem:[#allocation2 + $0x60] sm:$0xff]
    %v466 = vld [vmem:[#allocation2 + $0x68] sm:$0xff]
    %v467 = vld [vmem:[#allocation2 + $0x70] sm:$0xff]
    %v468 = vld [vmem:[#allocation2 + $0x78] sm:$0xff]
    %v469 = vld [vmem:[#allocation2 + $0x80] sm:$0xff]
    %v470 = vld [vmem:[#allocation2 + $0x88] sm:$0xff]
    %v471 = vld [vmem:[#allocation2 + $0x90] sm:$0xff]
    %v472 = vld [vmem:[#allocation2 + $0x98] sm:$0xff]
    %v473 = vld [vmem:[#allocation2 + $0xa0] sm:$0xff]
    %v474 = vld [vmem:[#allocation2 + $0xa8] sm:$0xff]
    %v475 = vld [vmem:[#allocation2 + $0xb0] sm:$0xff]
    %v476 = vld [vmem:[#allocation2 + $0xb8] sm:$0xff]
    %v477 = vld [vmem:[#allocation2 + $0xc0] sm:$0xff]
    %v478 = vld [vmem:[#allocation2 + $0xc8] sm:$0xff]
    %v479 = vld [vmem:[#allocation2 + $0xd0] sm:$0xff]
    %v480 = vld [vmem:[#allocation2 + $0xd8] sm:$0xff]
    %v481 = vld [vmem:[#allocation2 + $0xe0] sm:$0xff]
    %v482 = vld [vmem:[#allocation2 + $0xe8] sm:$0xff]
    %v483 = vld [vmem:[#allocation2 + $0xf0] sm:$0xff]
    %v484 = vld [vmem:[#allocation2 + $0xf8] sm:$0xff]
    %v485 = vadd.f32 %v453, %v455
    %v486 = vadd.f32 %v485, %v457
    %v487 = vadd.f32 %v486, %v459
    %v488 = vadd.f32 %v487, %v461
    %v489 = vadd.f32 %v488, %v463
    %v490 = vadd.f32 %v489, %v465
    %v491 = vadd.f32 %v490, %v467
    %v492 = vadd.f32 %v491, %v469
    %v493 = vadd.f32 %v492, %v471
    %v494 = vadd.f32 %v493, %v473
    %v495 = vadd.f32 %v494, %v475
    %v496 = vadd.f32 %v495, %v477
    %v497 = vadd.f32 %v496, %v479
    %v498 = vadd.f32 %v497, %v481
    %v499 = vadd.f32 %v498, %v483
    %v500 = vrot.slane %v499, 4
    %v501 = vadd.f32 %v499, %v500
    %v502 = vrot.slane %v501, 2
    %v503 = vadd.f32 %v501, %v502
    %v504 = vrot.slane %v503, 1
    %v505 = vadd.f32 %v503, %v504
    %v506 = vadd.f32 %v454, %v456
    %v507 = vadd.f32 %v506, %v458
    %v508 = vadd.f32 %v507, %v460
    %v509 = vadd.f32 %v508, %v462
    %v510 = vadd.f32 %v509, %v464
    %v511 = vadd.f32 %v510, %v466
    %v512 = vadd.f32 %v511, %v468
    %v513 = vadd.f32 %v512, %v470
    %v514 = vadd.f32 %v513, %v472
    %v515 = vadd.f32 %v514, %v474
    %v516 = vadd.f32 %v515, %v476
    %v517 = vadd.f32 %v516, %v478
    %v518 = vadd.f32 %v517, %v480
    %v519 = vadd.f32 %v518, %v482
    %v520 = vadd.f32 %v519, %v484
    %v521 = vrot.slane %v520, 4
    %v522 = vadd.f32 %v520, %v521
    %v523 = vrot.slane %v522, 2
    %v524 = vadd.f32 %v522, %v523
    %v525 = vrot.slane %v524, 1
    %v526 = vadd.f32 %v524, %v525
    %v527 = vmul.f32 %v505, 0.0078125
    %v528 = vmul.f32 %v526, 0.0078125
    %v529 = vsub.f32 %v453, %v527
    %v530 = vsub.f32 %v454, %v528
    %v531 = vsub.f32 %v455, %v527
    %v532 = vsub.f32 %v456, %v528
    %v533 = vsub.f32 %v457, %v527
    %v534 = vsub.f32 %v458, %v528
    %v535 = vsub.f32 %v459, %v527
    %v536 = vsub.f32 %v460, %v528
    %v537 = vsub.f32 %v461, %v527
    %v538 = vsub.f32 %v462, %v528
    %v539 = vsub.f32 %v463, %v527
    %v540 = vsub.f32 %v464, %v528
    %v541 = vsub.f32 %v465, %v527
    %v542 = vsub.f32 %v466, %v528
    %v543 = vsub.f32 %v467, %v527
    %v544 = vsub.f32 %v468, %v528
    %v545 = vsub.f32 %v469, %v527
    %v546 = vsub.f32 %v470, %v528
    %v547 = vsub.f32 %v471, %v527
    %v548 = vsub.f32 %v472, %v528
    %v549 = vsub.f32 %v473, %v527
    %v550 = vsub.f32 %v474, %v528
    %v551 = vsub.f32 %v475, %v527
    %v552 = vsub.f32 %v476, %v528
    %v553 = vsub.f32 %v477, %v527
    %v554 = vsub.f32 %v478, %v528
    %v555 = vsub.f32 %v479, %v527
    %v556 = vsub.f32 %v480, %v528
    %v557 = vsub.f32 %v481, %v527
    %v558 = vsub.f32 %v482, %v528
    %v559 = vsub.f32 %v483, %v527
    %v560 = vsub.f32 %v484, %v528
    %v561 = vmul.f32 %v529, %v529
    %v562 = vmul.f32 %v530, %v530
    %v563 = vmul.f32 %v531, %v531
    %v564 = vmul.f32 %v532, %v532
    %v565 = vmul.f32 %v533, %v533
    %v566 = vmul.f32 %v534, %v534
    %v567 = vmul.f32 %v535, %v535
    %v568 = vmul.f32 %v536, %v536
    %v569 = vmul.f32 %v537, %v537
    %v570 = vmul.f32 %v538, %v538
    %v571 = vmul.f32 %v539, %v539
    %v572 = vmul.f32 %v540, %v540
    %v573 = vmul.f32 %v541, %v541
    %v574 = vmul.f32 %v542, %v542
    %v575 = vmul.f32 %v543, %v543
    %v576 = vmul.f32 %v544, %v544
    %v577 = vmul.f32 %v545, %v545
    %v578 = vmul.f32 %v546, %v546
    %v579 = vmul.f32 %v547, %v547
    %v580 = vmul.f32 %v548, %v548
    %v581 = vmul.f32 %v549, %v549
    %v582 = vmul.f32 %v550, %v550
    %v583 = vmul.f32 %v551, %v551
    %v584 = vmul.f32 %v552, %v552
    %v585 = vmul.f32 %v553, %v553
    %v586 = vmul.f32 %v554, %v554
    %v587 = vmul.f32 %v555, %v555
    %v588 = vmul.f32 %v556, %v556
    %v589 = vmul.f32 %v557, %v557
    %v590 = vmul.f32 %v558, %v558
    %v591 = vmul.f32 %v559, %v559
    %v592 = vmul.f32 %v560, %v560
    %v593 = vadd.f32 %v561, %v563
    %v594 = vadd.f32 %v593, %v565
    %v595 = vadd.f32 %v594, %v567
    %v596 = vadd.f32 %v595, %v569
    %v597 = vadd.f32 %v596, %v571
    %v598 = vadd.f32 %v597, %v573
    %v599 = vadd.f32 %v598, %v575
    %v600 = vadd.f32 %v599, %v577
    %v601 = vadd.f32 %v600, %v579
    %v602 = vadd.f32 %v601, %v581
    %v603 = vadd.f32 %v602, %v583
    %v604 = vadd.f32 %v603, %v585
    %v605 = vadd.f32 %v604, %v587
    %v606 = vadd.f32 %v605, %v589
    %v607 = vadd.f32 %v606, %v591
    %v608 = vrot.slane %v607, 4
    %v609 = vadd.f32 %v607, %v608
    %v610 = vrot.slane %v609, 2
    %v611 = vadd.f32 %v609, %v610
    %v612 = vrot.slane %v611, 1
    %v613 = vadd.f32 %v611, %v612
    %v614 = vadd.f32 %v562, %v564
    %v615 = vadd.f32 %v614, %v566
    %v616 = vadd.f32 %v615, %v568
    %v617 = vadd.f32 %v616, %v570
    %v618 = vadd.f32 %v617, %v572
    %v619 = vadd.f32 %v618, %v574
    %v620 = vadd.f32 %v619, %v576
    %v621 = vadd.f32 %v620, %v578
    %v622 = vadd.f32 %v621, %v580
    %v623 = vadd.f32 %v622, %v582
    %v624 = vadd.f32 %v623, %v584
    %v625 = vadd.f32 %v624, %v586
    %v626 = vadd.f32 %v625, %v588
    %v627 = vadd.f32 %v626, %v590
    %v628 = vadd.f32 %v627, %v592
    %v629 = vrot.slane %v628, 4
    %v630 = vadd.f32 %v628, %v629
    %v631 = vrot.slane %v630, 2
    %v632 = vadd.f32 %v630, %v631
    %v633 = vrot.slane %v632, 1
    %v634 = vadd.f32 %v632, %v633
    %v635 = vmul.f32 %v527, 0.0
    %v636 = vmul.f32 %v528, 0.0
    %v637 = vmul.f32 %v635, %v527
    %v638 = vmul.f32 %v636, %v528
    %v639 = vsub.f32 %v613, %v637
    %v640 = vsub.f32 %v634, %v638
    %v641 = vmul.f32 %v639, 0.0078125
    %v642 = vmul.f32 %v640, 0.0078125
    %v643 = vmax.f32 %v641, 0.0
    %v644 = vmax.f32 %v642, 0.0
    %v645 = vld [vmem:[%s2] ss:$2 sm:$0x3]
    %v646 = vadd.f32 %v643, 1e-05
    %v647 = vadd.f32 %v644, 1e-05
    %v648 = vrsqrt.pop %v646
    %v649 = vrsqrt.pop %v647
    %v652 = vcombine.low %v648, %v649
    %v654 = vunpack.c.l.s4 1966171168
    %v655 = vunpack.c.0.s8 %v654
    %v656 = vlaneseq
    %v657 = vshrl.u32 %v656, 7
    %v658 = vsub.s32 %v655, %v657
    %v659 = vrot.slane %v652, %v658
    %v661 = vunpack.c.l.s4 1966171168
    %v662 = vunpack.c.0.s8 %v661
    %v663 = vlaneseq
    %v664 = vshrl.u32 %v663, 7
    %v665 = vsub.s32 %v662, %v664
    %v666 = vrot.slane %v659, %v665
    %v668 = vmul.f32 %v645, %v666
    %s669 = scalar_lea.vmem %s2, 1
    %v670 = vld [vmem:[%s669] ss:$2 sm:$0x3]
    %v672 = vlaneseq
    %v673 = vshrl.u32 %v672, 7
    %v674 = vsub.s32 0, %v673
    %v675 = vrot.slane %v668, %v674
    %v676 = vlaneseq
    %v677 = vshrl.u32 %v676, 7
    %v678 = vsub.s32 1, %v677
    %v679 = vrot.slane %v668, %v678
    %v682 = vmul.f32 %v527, %v675
    %v683 = vmul.f32 %v528, %v679
    %v686 = vcombine.low %v682, %v683
    %v688 = vunpack.c.l.s4 1966171168
    %v689 = vunpack.c.0.s8 %v688
    %v690 = vlaneseq
    %v691 = vshrl.u32 %v690, 7
    %v692 = vsub.s32 %v689, %v691
    %v693 = vrot.slane %v686, %v692
    %v695 = vunpack.c.l.s4 1966171168
    %v696 = vunpack.c.0.s8 %v695
    %v697 = vlaneseq
    %v698 = vshrl.u32 %v697, 7
    %v699 = vsub.s32 %v696, %v698
    %v700 = vrot.slane %v693, %v699
    %v702 = vsub.f32 %v670, %v700
    %v703 = vmul.f32 %v453, %v675
    %v704 = vmul.f32 %v454, %v679
    %v705 = vmul.f32 %v455, %v675
    %v706 = vmul.f32 %v456, %v679
    %v707 = vmul.f32 %v457, %v675
    %v708 = vmul.f32 %v458, %v679
    %v709 = vmul.f32 %v459, %v675
    %v710 = vmul.f32 %v460, %v679
    %v711 = vmul.f32 %v461, %v675
    %v712 = vmul.f32 %v462, %v679
    %v713 = vmul.f32 %v463, %v675
    %v714 = vmul.f32 %v464, %v679
    %v715 = vmul.f32 %v465, %v675
    %v716 = vmul.f32 %v466, %v679
    %v717 = vmul.f32 %v467, %v675
    %v718 = vmul.f32 %v468, %v679
    %v719 = vmul.f32 %v469, %v675
    %v720 = vmul.f32 %v470, %v679
    %v721 = vmul.f32 %v471, %v675
    %v722 = vmul.f32 %v472, %v679
    %v723 = vmul.f32 %v473, %v675
    %v724 = vmul.f32 %v474, %v679
    %v725 = vmul.f32 %v475, %v675
    %v726 = vmul.f32 %v476, %v679
    %v727 = vmul.f32 %v477, %v675
    %v728 = vmul.f32 %v478, %v679
    %v729 = vmul.f32 %v479, %v675
    %v730 = vmul.f32 %v480, %v679
    %v731 = vmul.f32 %v481, %v675
    %v732 = vmul.f32 %v482, %v679
    %v733 = vmul.f32 %v483, %v675
    %v734 = vmul.f32 %v484, %v679
    %v736 = vlaneseq
    %v737 = vshrl.u32 %v736, 7
    %v738 = vsub.s32 0, %v737
    %v739 = vrot.slane %v702, %v738
    %v740 = vlaneseq
    %v741 = vshrl.u32 %v740, 7
    %v742 = vsub.s32 1, %v741
    %v743 = vrot.slane %v702, %v742
    %v746 = vadd.f32 %v703, %v739
    %v747 = vadd.f32 %v704, %v743
    %v748 = vadd.f32 %v705, %v739
    %v749 = vadd.f32 %v706, %v743
    %v750 = vadd.f32 %v707, %v739
    %v751 = vadd.f32 %v708, %v743
    %v752 = vadd.f32 %v709, %v739
    %v753 = vadd.f32 %v710, %v743
    %v754 = vadd.f32 %v711, %v739
    %v755 = vadd.f32 %v712, %v743
    %v756 = vadd.f32 %v713, %v739
    %v757 = vadd.f32 %v714, %v743
    %v758 = vadd.f32 %v715, %v739
    %v759 = vadd.f32 %v716, %v743
    %v760 = vadd.f32 %v717, %v739
    %v761 = vadd.f32 %v718, %v743
    %v762 = vadd.f32 %v719, %v739
    %v763 = vadd.f32 %v720, %v743
    %v764 = vadd.f32 %v721, %v739
    %v765 = vadd.f32 %v722, %v743
    %v766 = vadd.f32 %v723, %v739
    %v767 = vadd.f32 %v724, %v743
    %v768 = vadd.f32 %v725, %v739
    %v769 = vadd.f32 %v726, %v743
    %v770 = vadd.f32 %v727, %v739
    %v771 = vadd.f32 %v728, %v743
    %v772 = vadd.f32 %v729, %v739
    %v773 = vadd.f32 %v730, %v743
    %v774 = vadd.f32 %v731, %v739
    %v775 = vadd.f32 %v732, %v743
    %v776 = vadd.f32 %v733, %v739
    %v777 = vadd.f32 %v734, %v743
    %v778 = vmax.f32 %v746, 0.0
    %v779 = vmax.f32 %v748, 0.0
    %v780 = vmax.f32 %v750, 0.0
    %v781 = vmax.f32 %v752, 0.0
    %v782 = vmax.f32 %v754, 0.0
    %v783 = vmax.f32 %v756, 0.0
    %v784 = vmax.f32 %v758, 0.0
    %v785 = vmax.f32 %v760, 0.0
    %v786 = vmax.f32 %v762, 0.0
    %v787 = vmax.f32 %v764, 0.0
    %v788 = vmax.f32 %v766, 0.0
    %v789 = vmax.f32 %v768, 0.0
    %v790 = vmax.f32 %v770, 0.0
    %v791 = vmax.f32 %v772, 0.0
    %v792 = vmax.f32 %v774, 0.0
    %v793 = vmax.f32 %v776, 0.0
    %v794 = vpack.c.bf16 %v779, %v778
    %v795 = vpack.c.bf16 %v781, %v780
    %v796 = vpack.c.bf16 %v783, %v782
    %v797 = vpack.c.bf16 %v785, %v784
    %v798 = vpack.c.bf16 %v787, %v786
    %v799 = vpack.c.bf16 %v789, %v788
    %v800 = vpack.c.bf16 %v791, %v790
    %v801 = vpack.c.bf16 %v793, %v792
    %v810 = vunpack.c.l.b16 %v794
    %v811 = vunpack.c.h.b16 %v794
    %v812 = vunpack.c.l.b16 %v795
    %v813 = vunpack.c.h.b16 %v795
    %v814 = vunpack.c.l.b16 %v796
    %v815 = vunpack.c.h.b16 %v796
    %v816 = vunpack.c.l.b16 %v797
    %v817 = vunpack.c.h.b16 %v797
    %v818 = vunpack.c.l.b16 %v798
    %v819 = vunpack.c.h.b16 %v798
    %v820 = vunpack.c.l.b16 %v799
    %v821 = vunpack.c.h.b16 %v799
    %v822 = vunpack.c.l.b16 %v800
    %v823 = vunpack.c.h.b16 %v800
    %v824 = vunpack.c.l.b16 %v801
    %v825 = vunpack.c.h.b16 %v801
    %v826 = vpack.c.b16 %v810, %v810
    %v827 = vpack.c.b16 %v811, %v811
    %v828 = vpack.c.b16 %v812, %v812
    %v829 = vpack.c.b16 %v813, %v813
    %v830 = vpack.c.b16 %v814, %v814
    %v831 = vpack.c.b16 %v815, %v815
    %v832 = vpack.c.b16 %v816, %v816
    %v833 = vpack.c.b16 %v817, %v817
    %v834 = vpack.c.b16 %v818, %v818
    %v835 = vpack.c.b16 %v819, %v819
    %v836 = vpack.c.b16 %v820, %v820
    %v837 = vpack.c.b16 %v821, %v821
    %v838 = vpack.c.b16 %v822, %v822
    %v839 = vpack.c.b16 %v823, %v823
    %v840 = vpack.c.b16 %v824, %v824
    %v841 = vpack.c.b16 %v825, %v825
    %858 = vst [vmem:[%s3] sm:$0xf] %v826
    %859 = vst [vmem:[%s3 + $0x4] sm:$0xf] %v827
    %860 = vst [vmem:[%s3 + $0x8] sm:$0xf] %v828
    %861 = vst [vmem:[%s3 + $0xc] sm:$0xf] %v829
    %862 = vst [vmem:[%s3 + $0x10] sm:$0xf] %v830
    %863 = vst [vmem:[%s3 + $0x14] sm:$0xf] %v831
    %864 = vst [vmem:[%s3 + $0x18] sm:$0xf] %v832
    %865 = vst [vmem:[%s3 + $0x1c] sm:$0xf] %v833
    %866 = vst [vmem:[%s3 + $0x20] sm:$0xf] %v834
    %867 = vst [vmem:[%s3 + $0x24] sm:$0xf] %v835
    %868 = vst [vmem:[%s3 + $0x28] sm:$0xf] %v836
    %869 = vst [vmem:[%s3 + $0x2c] sm:$0xf] %v837
    %870 = vst [vmem:[%s3 + $0x30] sm:$0xf] %v838
    %871 = vst [vmem:[%s3 + $0x34] sm:$0xf] %v839
    %872 = vst [vmem:[%s3 + $0x38] sm:$0xf] %v840
    %873 = vst [vmem:[%s3 + $0x3c] sm:$0xf] %v841
    %874 = vst [vmem:[%s4] sm:$0xff] %v747
    %875 = vst [vmem:[%s4 + $0x8] sm:$0xff] %v749
    %876 = vst [vmem:[%s4 + $0x10] sm:$0xff] %v751
    %877 = vst [vmem:[%s4 + $0x18] sm:$0xff] %v753
    %878 = vst [vmem:[%s4 + $0x20] sm:$0xff] %v755
    %879 = vst [vmem:[%s4 + $0x28] sm:$0xff] %v757
    %880 = vst [vmem:[%s4 + $0x30] sm:$0xff] %v759
    %881 = vst [vmem:[%s4 + $0x38] sm:$0xff] %v761
    %882 = vst [vmem:[%s4 + $0x40] sm:$0xff] %v763
    %883 = vst [vmem:[%s4 + $0x48] sm:$0xff] %v765
    %884 = vst [vmem:[%s4 + $0x50] sm:$0xff] %v767
    %885 = vst [vmem:[%s4 + $0x58] sm:$0xff] %v769
    %886 = vst [vmem:[%s4 + $0x60] sm:$0xff] %v771
    %887 = vst [vmem:[%s4 + $0x68] sm:$0xff] %v773
    %888 = vst [vmem:[%s4 + $0x70] sm:$0xff] %v775
    %889 = vst [vmem:[%s4 + $0x78] sm:$0xff] %v777
  $region17: #{resnet_forward.12} parent=0 // pred_fallthru
    _
  // Predicated region
  $region18: #{resnet_forward.12} parent=0 // pred_check
    _
  $region19: #{resnet_forward.12} parent=0 // pred_check_branch
    %891 = sbr.rel (0) target = $region21
  $region20: #{resnet_forward.12} parent=0 // pred_region
    _
  $region21: #{resnet_forward.12} parent=0 // pred_fallthru
    _
  // Predicated region
  $region22: #{resnet_forward.12} parent=0 // pred_check
    _
  $region23: #{resnet_forward.12} parent=0 // pred_check_branch
    %893 = sbr.rel (0) target = $region25
  $region24: #{resnet_forward.12} parent=0 // pred_region
    _
  $region25: #{resnet_forward.12} parent=0 // pred_fallthru
    _
  // Predicated region
  $region26: #{resnet_forward.12} parent=0 // pred_check
    _
  $region27: #{resnet_forward.12} parent=0 // pred_check_branch
    %895 = sbr.rel (0) target = $region29
  $region28: #{resnet_forward.12} parent=0 // pred_region
    _
  $region29: #{resnet_forward.12} parent=0 // pred_fallthru
    _
  // Predicated region
  $region30: #{resnet_forward.12} parent=0 // pred_check
    _
  $region31: #{resnet_forward.12} parent=0 // pred_check_branch
    %897 = sbr.rel (0) target = $region33
  $region32: #{resnet_forward.12} parent=0 // pred_region
    _
  $region33: #{resnet_forward.12} parent=0 // pred_fallthru
    _

// kernel: resnet_forward.13
$region0: #{resnet_forward.13}
  #allocation0 [shape = 'u32[]', space=smem, size = 0x4, offset = 0x4, fixed_abs, tag = 'smem constant byte address 0x4 - core index']
  #allocation1 [shape = 'u32[144,128]{1,0:T(1,128)}', space=vmem, size = 0x12000, scoped, tag = 'internal scratch']
  #allocation2 [shape = 'f32[128,128]{1,0:T(8,128)}', space=vmem, size = 0x10000, scoped, tag = 'scratch operand']
  %s0 = inlined_call_operand.vmem [shape: bf16[128,384], index: 0, kind: input, shape index: {}]
  %s1 = inlined_call_operand.vmem [shape: bf16[384,128], index: 1, kind: input, shape index: {}]
  %s2 = inlined_call_operand.vmem [shape: f32[2,128], index: 2, kind: input, shape index: {}]
  %s3 = inlined_call_operand.vmem [shape: f32[128,128], index: 3, kind: input, shape index: {}]
  %s4 = inlined_call_operand.vmem [shape: bf16[128,128], index: 4, kind: output, shape index: {}]
  %s5 = sld [smem:[#allocation0]]
  $region30: #{resnet_forward.13} parent=0
    _
  %s7 = ssub.s32 1, %s5
  %s8 = scalar_select 0, %s7, %s5
  // Predicated region
  $region2: #{resnet_forward.13} parent=0 // pred_check
    _
  $region3: #{resnet_forward.13} parent=0 // pred_check_branch
    %10 = sbr.rel (0) target = $region5
  $region4: #{resnet_forward.13} parent=0 // pred_region
    _
  $region5: #{resnet_forward.13} parent=0 // pred_fallthru
    _
  // Predicated region
  $region6: #{resnet_forward.13} parent=0 // pred_check
    _
  $region7: #{resnet_forward.13} parent=0 // pred_check_branch
    %12 = sbr.rel (0) target = $region9
  $region8: #{resnet_forward.13} parent=0 // pred_region
    _
  $region9: #{resnet_forward.13} parent=0 // pred_fallthru
    _
  // Predicated region
  $region10: #{resnet_forward.13} parent=0 // pred_check
    _
  $region11: #{resnet_forward.13} parent=0 // pred_check_branch
    %14 = sbr.rel (0) target = $region13
  $region12: #{resnet_forward.13} parent=0 // pred_region
    _
  $region13: #{resnet_forward.13} parent=0 // pred_fallthru
    _
  // Predicated region
  $region14: #{resnet_forward.13} parent=0 // pred_check
    _
  $region15: #{resnet_forward.13} parent=0 // pred_check_branch
    %16 = sbr.rel (0) target = $region17
  $region16: #{resnet_forward.13} parent=0 // pred_region
    _
  $region17: #{resnet_forward.13} parent=0 // pred_fallthru
    _
  %v18 = vld [vmem:[%s0] sm:$0xff]
  %v19 = vld [vmem:[%s0 + $0x8] sm:$0xf]
  %v20 = vld [vmem:[%s0 + $0xc] sm:$0xff]
  %v21 = vld [vmem:[%s0 + $0x14] sm:$0xf]
  %v22 = vld [vmem:[%s0 + $0x18] sm:$0xff]
  %v23 = vld [vmem:[%s0 + $0x20] sm:$0xf]
  %v24 = vld [vmem:[%s0 + $0x24] sm:$0xff]
  %v25 = vld [vmem:[%s0 + $0x2c] sm:$0xf]
  %v26 = vld [vmem:[%s0 + $0x30] sm:$0xff]
  %v27 = vld [vmem:[%s0 + $0x38] sm:$0xf]
  %v28 = vld [vmem:[%s0 + $0x3c] sm:$0xff]
  %v29 = vld [vmem:[%s0 + $0x44] sm:$0xf]
  %v30 = vld [vmem:[%s0 + $0x48] sm:$0xff]
  %v31 = vld [vmem:[%s0 + $0x50] sm:$0xf]
  %v32 = vld [vmem:[%s0 + $0x54] sm:$0xff]
  %v33 = vld [vmem:[%s0 + $0x5c] sm:$0xf]
  %v34 = vld [vmem:[%s0 + $0x60] sm:$0xff]
  %v35 = vld [vmem:[%s0 + $0x68] sm:$0xf]
  %v36 = vld [vmem:[%s0 + $0x6c] sm:$0xff]
  %v37 = vld [vmem:[%s0 + $0x74] sm:$0xf]
  %v38 = vld [vmem:[%s0 + $0x78] sm:$0xff]
  %v39 = vld [vmem:[%s0 + $0x80] sm:$0xf]
  %v40 = vld [vmem:[%s0 + $0x84] sm:$0xff]
  %v41 = vld [vmem:[%s0 + $0x8c] sm:$0xf]
  %v42 = vld [vmem:[%s0 + $0x90] sm:$0xff]
  %v43 = vld [vmem:[%s0 + $0x98] sm:$0xf]
  %v44 = vld [vmem:[%s0 + $0x9c] sm:$0xff]
  %v45 = vld [vmem:[%s0 + $0xa4] sm:$0xf]
  %v46 = vld [vmem:[%s0 + $0xa8] sm:$0xff]
  %v47 = vld [vmem:[%s0 + $0xb0] sm:$0xf]
  %v48 = vld [vmem:[%s0 + $0xb4] sm:$0xff]
  %v49 = vld [vmem:[%s0 + $0xbc] sm:$0xf]
  %v50 = vld [vmem:[%s1] sm:$0xf]
  %v51 = vld [vmem:[%s1 + $0x4] sm:$0xf]
  %v52 = vld [vmem:[%s1 + $0x8] sm:$0xf]
  %v53 = vld [vmem:[%s1 + $0xc] sm:$0xf]
  %v54 = vld [vmem:[%s1 + $0x10] sm:$0xf]
  %v55 = vld [vmem:[%s1 + $0x14] sm:$0xf]
  %v56 = vld [vmem:[%s1 + $0x18] sm:$0xf]
  %v57 = vld [vmem:[%s1 + $0x1c] sm:$0xf]
  %v58 = vld [vmem:[%s1 + $0x20] sm:$0xf]
  %v59 = vld [vmem:[%s1 + $0x24] sm:$0xf]
  %v60 = vld [vmem:[%s1 + $0x28] sm:$0xf]
  %v61 = vld [vmem:[%s1 + $0x2c] sm:$0xf]
  %v62 = vld [vmem:[%s1 + $0x30] sm:$0xf]
  %v63 = vld [vmem:[%s1 + $0x34] sm:$0xf]
  %v64 = vld [vmem:[%s1 + $0x38] sm:$0xf]
  %v65 = vld [vmem:[%s1 + $0x3c] sm:$0xf]
  %v66 = vld [vmem:[%s1 + $0x40] sm:$0xf]
  %v67 = vld [vmem:[%s1 + $0x44] sm:$0xf]
  %v68 = vld [vmem:[%s1 + $0x48] sm:$0xf]
  %v69 = vld [vmem:[%s1 + $0x4c] sm:$0xf]
  %v70 = vld [vmem:[%s1 + $0x50] sm:$0xf]
  %v71 = vld [vmem:[%s1 + $0x54] sm:$0xf]
  %v72 = vld [vmem:[%s1 + $0x58] sm:$0xf]
  %v73 = vld [vmem:[%s1 + $0x5c] sm:$0xf]
  %v74 = vld [vmem:[%s1 + $0x60] sm:$0xf]
  %v75 = vld [vmem:[%s1 + $0x64] sm:$0xf]
  %v76 = vld [vmem:[%s1 + $0x68] sm:$0xf]
  %v77 = vld [vmem:[%s1 + $0x6c] sm:$0xf]
  %v78 = vld [vmem:[%s1 + $0x70] sm:$0xf]
  %v79 = vld [vmem:[%s1 + $0x74] sm:$0xf]
  %v80 = vld [vmem:[%s1 + $0x78] sm:$0xf]
  %v81 = vld [vmem:[%s1 + $0x7c] sm:$0xf]
  %v82 = vld [vmem:[%s1 + $0x80] sm:$0xf]
  %v83 = vld [vmem:[%s1 + $0x84] sm:$0xf]
  %v84 = vld [vmem:[%s1 + $0x88] sm:$0xf]
  %v85 = vld [vmem:[%s1 + $0x8c] sm:$0xf]
  %v86 = vld [vmem:[%s1 + $0x90] sm:$0xf]
  %v87 = vld [vmem:[%s1 + $0x94] sm:$0xf]
  %v88 = vld [vmem:[%s1 + $0x98] sm:$0xf]
  %v89 = vld [vmem:[%s1 + $0x9c] sm:$0xf]
  %v90 = vld [vmem:[%s1 + $0xa0] sm:$0xf]
  %v91 = vld [vmem:[%s1 + $0xa4] sm:$0xf]
  %v92 = vld [vmem:[%s1 + $0xa8] sm:$0xf]
  %v93 = vld [vmem:[%s1 + $0xac] sm:$0xf]
  %v94 = vld [vmem:[%s1 + $0xb0] sm:$0xf]
  %v95 = vld [vmem:[%s1 + $0xb4] sm:$0xf]
  %v96 = vld [vmem:[%s1 + $0xb8] sm:$0xf]
  %v97 = vld [vmem:[%s1 + $0xbc] sm:$0xf]
  %v130 = vunpack.c.l.b16 %v18
  %v131 = vunpack.c.h.b16 %v18
  %v132 = vunpack.c.l.b16 %v19
  %v133 = vunpack.c.l.b16 %v20
  %v134 = vunpack.c.h.b16 %v20
  %v135 = vunpack.c.l.b16 %v21
  %v136 = vunpack.c.l.b16 %v22
  %v137 = vunpack.c.h.b16 %v22
  %v138 = vunpack.c.l.b16 %v23
  %v139 = vunpack.c.l.b16 %v24
  %v140 = vunpack.c.h.b16 %v24
  %v141 = vunpack.c.l.b16 %v25
  %v142 = vunpack.c.l.b16 %v26
  %v143 = vunpack.c.h.b16 %v26
  %v144 = vunpack.c.l.b16 %v27
  %v145 = vunpack.c.l.b16 %v28
  %v146 = vunpack.c.h.b16 %v28
  %v147 = vunpack.c.l.b16 %v29
  %v148 = vunpack.c.l.b16 %v30
  %v149 = vunpack.c.h.b16 %v30
  %v150 = vunpack.c.l.b16 %v31
  %v151 = vunpack.c.l.b16 %v32
  %v152 = vunpack.c.h.b16 %v32
  %v153 = vunpack.c.l.b16 %v33
  %v154 = vunpack.c.l.b16 %v34
  %v155 = vunpack.c.h.b16 %v34
  %v156 = vunpack.c.l.b16 %v35
  %v157 = vunpack.c.l.b16 %v36
  %v158 = vunpack.c.h.b16 %v36
  %v159 = vunpack.c.l.b16 %v37
  %v160 = vunpack.c.l.b16 %v38
  %v161 = vunpack.c.h.b16 %v38
  %v162 = vunpack.c.l.b16 %v39
  %v163 = vunpack.c.l.b16 %v40
  %v164 = vunpack.c.h.b16 %v40
  %v165 = vunpack.c.l.b16 %v41
  %v166 = vunpack.c.l.b16 %v42
  %v167 = vunpack.c.h.b16 %v42
  %v168 = vunpack.c.l.b16 %v43
  %v169 = vunpack.c.l.b16 %v44
  %v170 = vunpack.c.h.b16 %v44
  %v171 = vunpack.c.l.b16 %v45
  %v172 = vunpack.c.l.b16 %v46
  %v173 = vunpack.c.h.b16 %v46
  %v174 = vunpack.c.l.b16 %v47
  %v175 = vunpack.c.l.b16 %v48
  %v176 = vunpack.c.h.b16 %v48
  %v177 = vunpack.c.l.b16 %v49
  %v178 = vpack.c.b16 %v133, %v130
  %v179 = vpack.c.b16 %v134, %v131
  %v180 = vpack.c.b16 %v135, %v132
  %v181 = vpack.c.b16 %v139, %v136
  %v182 = vpack.c.b16 %v140, %v137
  %v183 = vpack.c.b16 %v141, %v138
  %v184 = vpack.c.b16 %v145, %v142
  %v185 = vpack.c.b16 %v146, %v143
  %v186 = vpack.c.b16 %v147, %v144
  %v187 = vpack.c.b16 %v151, %v148
  %v188 = vpack.c.b16 %v152, %v149
  %v189 = vpack.c.b16 %v153, %v150
  %v190 = vpack.c.b16 %v157, %v154
  %v191 = vpack.c.b16 %v158, %v155
  %v192 = vpack.c.b16 %v159, %v156
  %v193 = vpack.c.b16 %v163, %v160
  %v194 = vpack.c.b16 %v164, %v161
  %v195 = vpack.c.b16 %v165, %v162
  %v196 = vpack.c.b16 %v169, %v166
  %v197 = vpack.c.b16 %v170, %v167
  %v198 = vpack.c.b16 %v171, %v168
  %v199 = vpack.c.b16 %v175, %v172
  %v200 = vpack.c.b16 %v176, %v173
  %v201 = vpack.c.b16 %v177, %v174
  %v274 = vunpack.c.l.b16 %v50
  %v275 = vunpack.c.l.b16 %v51
  %v276 = vunpack.c.l.b16 %v52
  %v277 = vunpack.c.l.b16 %v53
  %v278 = vunpack.c.l.b16 %v54
  %v279 = vunpack.c.l.b16 %v55
  %v280 = vunpack.c.l.b16 %v56
  %v281 = vunpack.c.l.b16 %v57
  %v282 = vunpack.c.l.b16 %v58
  %v283 = vunpack.c.l.b16 %v59
  %v284 = vunpack.c.l.b16 %v60
  %v285 = vunpack.c.l.b16 %v61
  %v286 = vunpack.c.l.b16 %v62
  %v287 = vunpack.c.l.b16 %v63
  %v288 = vunpack.c.l.b16 %v64
  %v289 = vunpack.c.l.b16 %v65
  %v290 = vunpack.c.l.b16 %v66
  %v291 = vunpack.c.l.b16 %v67
  %v292 = vunpack.c.l.b16 %v68
  %v293 = vunpack.c.l.b16 %v69
  %v294 = vunpack.c.l.b16 %v70
  %v295 = vunpack.c.l.b16 %v71
  %v296 = vunpack.c.l.b16 %v72
  %v297 = vunpack.c.l.b16 %v73
  %v298 = vunpack.c.l.b16 %v74
  %v299 = vunpack.c.l.b16 %v75
  %v300 = vunpack.c.l.b16 %v76
  %v301 = vunpack.c.l.b16 %v77
  %v302 = vunpack.c.l.b16 %v78
  %v303 = vunpack.c.l.b16 %v79
  %v304 = vunpack.c.l.b16 %v80
  %v305 = vunpack.c.l.b16 %v81
  %v306 = vunpack.c.l.b16 %v82
  %v307 = vunpack.c.l.b16 %v83
  %v308 = vunpack.c.l.b16 %v84
  %v309 = vunpack.c.l.b16 %v85
  %v310 = vunpack.c.l.b16 %v86
  %v311 = vunpack.c.l.b16 %v87
  %v312 = vunpack.c.l.b16 %v88
  %v313 = vunpack.c.l.b16 %v89
  %v314 = vunpack.c.l.b16 %v90
  %v315 = vunpack.c.l.b16 %v91
  %v316 = vunpack.c.l.b16 %v92
  %v317 = vunpack.c.l.b16 %v93
  %v318 = vunpack.c.l.b16 %v94
  %v319 = vunpack.c.l.b16 %v95
  %v320 = vunpack.c.l.b16 %v96
  %v321 = vunpack.c.l.b16 %v97
  %v322 = vpack.c.b16 %v275, %v274
  %v323 = vpack.c.b16 %v277, %v276
  %v324 = vpack.c.b16 %v279, %v278
  %v325 = vpack.c.b16 %v281, %v280
  %v326 = vpack.c.b16 %v283, %v282
  %v327 = vpack.c.b16 %v285, %v284
  %v328 = vpack.c.b16 %v287, %v286
  %v329 = vpack.c.b16 %v289, %v288
  %v330 = vpack.c.b16 %v291, %v290
  %v331 = vpack.c.b16 %v293, %v292
  %v332 = vpack.c.b16 %v295, %v294
  %v333 = vpack.c.b16 %v297, %v296
  %v334 = vpack.c.b16 %v299, %v298
  %v335 = vpack.c.b16 %v301, %v300
  %v336 = vpack.c.b16 %v303, %v302
  %v337 = vpack.c.b16 %v305, %v304
  %v338 = vpack.c.b16 %v307, %v306
  %v339 = vpack.c.b16 %v309, %v308
  %v340 = vpack.c.b16 %v311, %v310
  %v341 = vpack.c.b16 %v313, %v312
  %v342 = vpack.c.b16 %v315, %v314
  %v343 = vpack.c.b16 %v317, %v316
  %v344 = vpack.c.b16 %v319, %v318
  %v345 = vpack.c.b16 %v321, %v320
  %370 = vmatprep.subr.bf16.mxu0 0
  %371 = vmatpush1.bf16.msra.mxu0 %v322
  %372 = vmatprep.subr.bf16.mxu0 0
  %373 = vmatpush1.bf16.msra.mxu0 %v323
  %374 = vmatprep.subr.bf16.mxu0 0
  %375 = vmatpush1.bf16.msra.mxu0 %v324
  %376 = vmatprep.subr.bf16.mxu0 0
  %377 = vmatpush1.bf16.msra.mxu0 %v325
  %378 = vmatprep.subr.bf16.mxu0 0
  %379 = vmatpush1.bf16.msra.mxu0 %v326
  %380 = vmatprep.subr.bf16.mxu0 0
  %381 = vmatpush1.bf16.msra.mxu0 %v327
  %382 = vmatprep.subr.bf16.mxu0 0
  %383 = vmatpush1.bf16.msra.mxu0 %v328
  %384 = vmatprep.subr.bf16.mxu0 0
  %385 = vmatpush1.bf16.msra.mxu0 %v329
  %386 = vmatprep.subr.bf16.mxu0 0
  %387 = vmatpush1.bf16.msra.mxu0 %v330
  %388 = vmatprep.subr.bf16.mxu0 0
  %389 = vmatpush1.bf16.msra.mxu0 %v331
  %390 = vmatprep.subr.bf16.mxu0 0
  %391 = vmatpush1.bf16.msra.mxu0 %v332
  %392 = vmatprep.subr.bf16.mxu0 0
  %393 = vmatpush1.bf16.msra.mxu0 %v333
  %394 = vmatprep.subr.bf16.mxu0 0
  %395 = vmatpush1.bf16.msra.mxu0 %v334
  %396 = vmatprep.subr.bf16.mxu0 0
  %397 = vmatpush1.bf16.msra.mxu0 %v335
  %398 = vmatprep.subr.bf16.mxu0 0
  %399 = vmatpush1.bf16.msra.mxu0 %v336
  %400 = vmatprep.subr.bf16.mxu0 0
  %401 = vmatpush1.bf16.msra.mxu0 %v337
  %402 = vmatprep.mubr.bf16.mxu0 %v179
  %403 = vmatmul.mubr.bf16.gmra.mrb[0].mxu0 %v178
  %v404 = vpop.f32.mrb[0].mxu0
  %v405 = vadd.f32 0.0, %v404
  %v406 = vpop.f32.mrb[0].mxu0
  %v407 = vpop.f32.mrb[0].mxu0
  %v408 = vadd.f32 0.0, %v407
  %v409 = vpop.f32.mrb[0].mxu0
  %410 = vmatprep.mubr.bf16.mxu0 %v182
  %411 = vmatmul.mubr.bf16.gmra.mrb[0].mxu0 %v181
  %v412 = vpop.f32.mrb[0].mxu0
  %v413 = vadd.f32 0.0, %v412
  %v414 = vpop.f32.mrb[0].mxu0
  %v415 = vpop.f32.mrb[0].mxu0
  %v416 = vadd.f32 0.0, %v415
  %v417 = vpop.f32.mrb[0].mxu0
  %418 = vmatprep.mubr.bf16.mxu0 %v185
  %419 = vmatmul.mubr.bf16.gmra.mrb[0].mxu0 %v184
  %v420 = vpop.f32.mrb[0].mxu0
  %v421 = vadd.f32 0.0, %v420
  %v422 = vpop.f32.mrb[0].mxu0
  %v423 = vpop.f32.mrb[0].mxu0
  %v424 = vadd.f32 0.0, %v423
  %v425 = vpop.f32.mrb[0].mxu0
  %426 = vmatprep.mubr.bf16.mxu0 %v188
  %427 = vmatmul.mubr.bf16.gmra.mrb[0].mxu0 %v187
  %v428 = vpop.f32.mrb[0].mxu0
  %v429 = vadd.f32 0.0, %v428
  %v430 = vpop.f32.mrb[0].mxu0
  %v431 = vpop.f32.mrb[0].mxu0
  %v432 = vadd.f32 0.0, %v431
  %v433 = vpop.f32.mrb[0].mxu0
  %434 = vmatprep.mubr.bf16.mxu0 %v191
  %435 = vmatmul.mubr.bf16.gmra.mrb[0].mxu0 %v190
  %v436 = vpop.f32.mrb[0].mxu0
  %v437 = vadd.f32 0.0, %v436
  %v438 = vpop.f32.mrb[0].mxu0
  %v439 = vpop.f32.mrb[0].mxu0
  %v440 = vadd.f32 0.0, %v439
  %v441 = vpop.f32.mrb[0].mxu0
  %442 = vmatprep.mubr.bf16.mxu0 %v194
  %443 = vmatmul.mubr.bf16.gmra.mrb[0].mxu0 %v193
  %v444 = vpop.f32.mrb[0].mxu0
  %v445 = vadd.f32 0.0, %v444
  %v446 = vpop.f32.mrb[0].mxu0
  %v447 = vpop.f32.mrb[0].mxu0
  %v448 = vadd.f32 0.0, %v447
  %v449 = vpop.f32.mrb[0].mxu0
  %450 = vmatprep.mubr.bf16.mxu0 %v197
  %451 = vmatmul.mubr.bf16.gmra.mrb[0].mxu0 %v196
  %v452 = vpop.f32.mrb[0].mxu0
  %v453 = vadd.f32 0.0, %v452
  %v454 = vpop.f32.mrb[0].mxu0
  %v455 = vpop.f32.mrb[0].mxu0
  %v456 = vadd.f32 0.0, %v455
  %v457 = vpop.f32.mrb[0].mxu0
  %458 = vmatprep.mubr.bf16.mxu0 %v200
  %459 = vmatmul.mubr.bf16.gmra.mrb[0].mxu0 %v199
  %v460 = vpop.f32.mrb[0].mxu0
  %v461 = vadd.f32 0.0, %v460
  %v462 = vpop.f32.mrb[0].mxu0
  %v463 = vpop.f32.mrb[0].mxu0
  %v464 = vadd.f32 0.0, %v463
  %v465 = vpop.f32.mrb[0].mxu0
  %466 = vdwg.mxu0
  %467 = vmatprep.subr.bf16.mxu0 0
  %468 = vmatpush1.bf16.msra.mxu0 %v338
  %469 = vmatprep.subr.bf16.mxu0 0
  %470 = vmatpush1.bf16.msra.mxu0 %v339
  %471 = vmatprep.subr.bf16.mxu0 0
  %472 = vmatpush1.bf16.msra.mxu0 %v340
  %473 = vmatprep.subr.bf16.mxu0 0
  %474 = vmatpush1.bf16.msra.mxu0 %v341
  %475 = vmatprep.subr.bf16.mxu0 0
  %476 = vmatpush1.bf16.msra.mxu0 %v342
  %477 = vmatprep.subr.bf16.mxu0 0
  %478 = vmatpush1.bf16.msra.mxu0 %v343
  %479 = vmatprep.subr.bf16.mxu0 0
  %480 = vmatpush1.bf16.msra.mxu0 %v344
  %481 = vmatprep.subr.bf16.mxu0 0
  %482 = vmatpush1.bf16.msra.mxu0 %v345
  %483 = vmatprep.subr.bf16.mxu0 0
  %484 = vmatpush1.bf16.msra.mxu0 0
  %485 = vmatprep.subr.bf16.mxu0 0
  %486 = vmatpush1.bf16.msra.mxu0 0
  %487 = vmatprep.subr.bf16.mxu0 0
  %488 = vmatpush1.bf16.msra.mxu0 0
  %489 = vmatprep.subr.bf16.mxu0 0
  %490 = vmatpush1.bf16.msra.mxu0 0
  %491 = vmatprep.subr.bf16.mxu0 0
  %492 = vmatpush1.bf16.msra.mxu0 0
  %493 = vmatprep.subr.bf16.mxu0 0
  %494 = vmatpush1.bf16.msra.mxu0 0
  %495 = vmatprep.subr.bf16.mxu0 0
  %496 = vmatpush1.bf16.msra.mxu0 0
  %497 = vmatprep.subr.bf16.mxu0 0
  %498 = vmatpush1.bf16.msra.mxu0 0
  %499 = vmatprep.mubr.bf16.mxu0 0
  %500 = vmatmul.mubr.bf16.gmra.mrb[0].mxu0 %v180
  %v501 = vpop.f32.mrb[0].mxu0
  %v502 = vadd.f32 %v405, %v501
  %v503 = vpop.f32.mrb[0].mxu0
  %v504 = vpop.f32.mrb[0].mxu0
  %v505 = vadd.f32 %v408, %v504
  %v506 = vpop.f32.mrb[0].mxu0
  %507 = vmatprep.mubr.bf16.mxu0 0
  %508 = vmatmul.mubr.bf16.gmra.mrb[0].mxu0 %v183
  %v509 = vpop.f32.mrb[0].mxu0
  %v510 = vadd.f32 %v413, %v509
  %v511 = vpop.f32.mrb[0].mxu0
  %v512 = vpop.f32.mrb[0].mxu0
  %v513 = vadd.f32 %v416, %v512
  %v514 = vpop.f32.mrb[0].mxu0
  %515 = vmatprep.mubr.bf16.mxu0 0
  %516 = vmatmul.mubr.bf16.gmra.mrb[0].mxu0 %v186
  %v517 = vpop.f32.mrb[0].mxu0
  %v518 = vadd.f32 %v421, %v517
  %v519 = vpop.f32.mrb[0].mxu0
  %v520 = vpop.f32.mrb[0].mxu0
  %v521 = vadd.f32 %v424, %v520
  %v522 = vpop.f32.mrb[0].mxu0
  %523 = vmatprep.mubr.bf16.mxu0 0
  %524 = vmatmul.mubr.bf16.gmra.mrb[0].mxu0 %v189
  %v525 = vpop.f32.mrb[0].mxu0
  %v526 = vadd.f32 %v429, %v525
  %v527 = vpop.f32.mrb[0].mxu0
  %v528 = vpop.f32.mrb[0].mxu0
  %v529 = vadd.f32 %v432, %v528
  %v530 = vpop.f32.mrb[0].mxu0
  %531 = vmatprep.mubr.bf16.mxu0 0
  %532 = vmatmul.mubr.bf16.gmra.mrb[0].mxu0 %v192
  %v533 = vpop.f32.mrb[0].mxu0
  %v534 = vadd.f32 %v437, %v533
  %v535 = vpop.f32.mrb[0].mxu0
  %v536 = vpop.f32.mrb[0].mxu0
  %v537 = vadd.f32 %v440, %v536
  %v538 = vpop.f32.mrb[0].mxu0
  %539 = vmatprep.mubr.bf16.mxu0 0
  %540 = vmatmul.mubr.bf16.gmra.mrb[0].mxu0 %v195
  %v541 = vpop.f32.mrb[0].mxu0
  %v542 = vadd.f32 %v445, %v541
  %v543 = vpop.f32.mrb[0].mxu0
  %v544 = vpop.f32.mrb[0].mxu0
  %v545 = vadd.f32 %v448, %v544
  %v546 = vpop.f32.mrb[0].mxu0
  %547 = vmatprep.mubr.bf16.mxu0 0
  %548 = vmatmul.mubr.bf16.gmra.mrb[0].mxu0 %v198
  %v549 = vpop.f32.mrb[0].mxu0
  %v550 = vadd.f32 %v453, %v549
  %v551 = vpop.f32.mrb[0].mxu0
  %v552 = vpop.f32.mrb[0].mxu0
  %v553 = vadd.f32 %v456, %v552
  %v554 = vpop.f32.mrb[0].mxu0
  %555 = vmatprep.mubr.bf16.mxu0 0
  %556 = vmatmul.mubr.bf16.gmra.mrb[0].mxu0 %v201
  %v557 = vpop.f32.mrb[0].mxu0
  %v558 = vadd.f32 %v461, %v557
  %v559 = vpop.f32.mrb[0].mxu0
  %v560 = vpop.f32.mrb[0].mxu0
  %v561 = vadd.f32 %v464, %v560
  %v562 = vpop.f32.mrb[0].mxu0
  %563 = vdwg.mxu0
  %564 = vst [vmem:[#allocation2] sm:$0xff] %v502
  %565 = vst [vmem:[#allocation2 + $0x8] sm:$0xff] %v505
  %566 = vst [vmem:[#allocation2 + $0x10] sm:$0xff] %v510
  %567 = vst [vmem:[#allocation2 + $0x18] sm:$0xff] %v513
  %568 = vst [vmem:[#allocation2 + $0x20] sm:$0xff] %v518
  %569 = vst [vmem:[#allocation2 + $0x28] sm:$0xff] %v521
  %570 = vst [vmem:[#allocation2 + $0x30] sm:$0xff] %v526
  %571 = vst [vmem:[#allocation2 + $0x38] sm:$0xff] %v529
  %572 = vst [vmem:[#allocation2 + $0x40] sm:$0xff] %v534
  %573 = vst [vmem:[#allocation2 + $0x48] sm:$0xff] %v537
  %574 = vst [vmem:[#allocation2 + $0x50] sm:$0xff] %v542
  %575 = vst [vmem:[#allocation2 + $0x58] sm:$0xff] %v545
  %576 = vst [vmem:[#allocation2 + $0x60] sm:$0xff] %v550
  %577 = vst [vmem:[#allocation2 + $0x68] sm:$0xff] %v553
  %578 = vst [vmem:[#allocation2 + $0x70] sm:$0xff] %v558
  %579 = vst [vmem:[#allocation2 + $0x78] sm:$0xff] %v561
  %p580 = scmp.eq.s32.totalorder 0, 0
  // Predicated region
  $region18: #{resnet_forward.13} parent=0 // pred_check
    %p581 = pneg %p580
  $region19: #{resnet_forward.13} parent=0 // pred_check_branch
    %583 = sbr.rel (%p581) target = $region21
  $region20: #{resnet_forward.13} parent=0 // pred_region
    %v584 = vld [vmem:[#allocation2] sm:$0xff]
    %v585 = vld [vmem:[#allocation2 + $0x8] sm:$0xff]
    %v586 = vld [vmem:[#allocation2 + $0x10] sm:$0xff]
    %v587 = vld [vmem:[#allocation2 + $0x18] sm:$0xff]
    %v588 = vld [vmem:[#allocation2 + $0x20] sm:$0xff]
    %v589 = vld [vmem:[#allocation2 + $0x28] sm:$0xff]
    %v590 = vld [vmem:[#allocation2 + $0x30] sm:$0xff]
    %v591 = vld [vmem:[#allocation2 + $0x38] sm:$0xff]
    %v592 = vld [vmem:[#allocation2 + $0x40] sm:$0xff]
    %v593 = vld [vmem:[#allocation2 + $0x48] sm:$0xff]
    %v594 = vld [vmem:[#allocation2 + $0x50] sm:$0xff]
    %v595 = vld [vmem:[#allocation2 + $0x58] sm:$0xff]
    %v596 = vld [vmem:[#allocation2 + $0x60] sm:$0xff]
    %v597 = vld [vmem:[#allocation2 + $0x68] sm:$0xff]
    %v598 = vld [vmem:[#allocation2 + $0x70] sm:$0xff]
    %v599 = vld [vmem:[#allocation2 + $0x78] sm:$0xff]
    %v600 = vadd.f32 %v584, %v585
    %v601 = vadd.f32 %v600, %v586
    %v602 = vadd.f32 %v601, %v587
    %v603 = vadd.f32 %v602, %v588
    %v604 = vadd.f32 %v603, %v589
    %v605 = vadd.f32 %v604, %v590
    %v606 = vadd.f32 %v605, %v591
    %v607 = vadd.f32 %v606, %v592
    %v608 = vadd.f32 %v607, %v593
    %v609 = vadd.f32 %v608, %v594
    %v610 = vadd.f32 %v609, %v595
    %v611 = vadd.f32 %v610, %v596
    %v612 = vadd.f32 %v611, %v597
    %v613 = vadd.f32 %v612, %v598
    %v614 = vadd.f32 %v613, %v599
    %v615 = vrot.slane %v614, 4
    %v616 = vadd.f32 %v614, %v615
    %v617 = vrot.slane %v616, 2
    %v618 = vadd.f32 %v616, %v617
    %v619 = vrot.slane %v618, 1
    %v620 = vadd.f32 %v618, %v619
    %v621 = vmul.f32 %v620, 0.0078125
    %v622 = vsub.f32 %v584, %v621
    %v623 = vsub.f32 %v585, %v621
    %v624 = vsub.f32 %v586, %v621
    %v625 = vsub.f32 %v587, %v621
    %v626 = vsub.f32 %v588, %v621
    %v627 = vsub.f32 %v589, %v621
    %v628 = vsub.f32 %v590, %v621
    %v629 = vsub.f32 %v591, %v621
    %v630 = vsub.f32 %v592, %v621
    %v631 = vsub.f32 %v593, %v621
    %v632 = vsub.f32 %v594, %v621
    %v633 = vsub.f32 %v595, %v621
    %v634 = vsub.f32 %v596, %v621
    %v635 = vsub.f32 %v597, %v621
    %v636 = vsub.f32 %v598, %v621
    %v637 = vsub.f32 %v599, %v621
    %v638 = vmul.f32 %v622, %v622
    %v639 = vmul.f32 %v623, %v623
    %v640 = vmul.f32 %v624, %v624
    %v641 = vmul.f32 %v625, %v625
    %v642 = vmul.f32 %v626, %v626
    %v643 = vmul.f32 %v627, %v627
    %v644 = vmul.f32 %v628, %v628
    %v645 = vmul.f32 %v629, %v629
    %v646 = vmul.f32 %v630, %v630
    %v647 = vmul.f32 %v631, %v631
    %v648 = vmul.f32 %v632, %v632
    %v649 = vmul.f32 %v633, %v633
    %v650 = vmul.f32 %v634, %v634
    %v651 = vmul.f32 %v635, %v635
    %v652 = vmul.f32 %v636, %v636
    %v653 = vmul.f32 %v637, %v637
    %v654 = vadd.f32 %v638, %v639
    %v655 = vadd.f32 %v654, %v640
    %v656 = vadd.f32 %v655, %v641
    %v657 = vadd.f32 %v656, %v642
    %v658 = vadd.f32 %v657, %v643
    %v659 = vadd.f32 %v658, %v644
    %v660 = vadd.f32 %v659, %v645
    %v661 = vadd.f32 %v660, %v646
    %v662 = vadd.f32 %v661, %v647
    %v663 = vadd.f32 %v662, %v648
    %v664 = vadd.f32 %v663, %v649
    %v665 = vadd.f32 %v664, %v650
    %v666 = vadd.f32 %v665, %v651
    %v667 = vadd.f32 %v666, %v652
    %v668 = vadd.f32 %v667, %v653
    %v669 = vrot.slane %v668, 4
    %v670 = vadd.f32 %v668, %v669
    %v671 = vrot.slane %v670, 2
    %v672 = vadd.f32 %v670, %v671
    %v673 = vrot.slane %v672, 1
    %v674 = vadd.f32 %v672, %v673
    %v675 = vmul.f32 %v621, 0.0
    %v676 = vmul.f32 %v675, %v621
    %v677 = vsub.f32 %v674, %v676
    %v678 = vmul.f32 %v677, 0.0078125
    %v679 = vmax.f32 %v678, 0.0
    %v680 = vld [vmem:[%s2] sm:$0x1]
    %v681 = vadd.f32 %v679, 1e-05
    %v682 = vrsqrt.pop %v681
    %v683 = vmul.f32 %v680, %v682
    %v684 = vld [vmem:[%s2 + $0x1] sm:$0x1]
    %v685 = vmul.f32 %v621, %v683
    %v686 = vsub.f32 %v684, %v685
    %v687 = vlaneseq
    %v688 = vshrl.u32 %v687, 7
    %v689 = vsub.s32 0, %v688
    %v690 = vrot.slane %v683, %v689
    %v691 = vmul.f32 %v584, %v690
    %v692 = vmul.f32 %v585, %v690
    %v693 = vmul.f32 %v586, %v690
    %v694 = vmul.f32 %v587, %v690
    %v695 = vmul.f32 %v588, %v690
    %v696 = vmul.f32 %v589, %v690
    %v697 = vmul.f32 %v590, %v690
    %v698 = vmul.f32 %v591, %v690
    %v699 = vmul.f32 %v592, %v690
    %v700 = vmul.f32 %v593, %v690
    %v701 = vmul.f32 %v594, %v690
    %v702 = vmul.f32 %v595, %v690
    %v703 = vmul.f32 %v596, %v690
    %v704 = vmul.f32 %v597, %v690
    %v705 = vmul.f32 %v598, %v690
    %v706 = vmul.f32 %v599, %v690
    %v707 = vlaneseq
    %v708 = vshrl.u32 %v707, 7
    %v709 = vsub.s32 0, %v708
    %v710 = vrot.slane %v686, %v709
    %v711 = vadd.f32 %v691, %v710
    %v712 = vadd.f32 %v692, %v710
    %v713 = vadd.f32 %v693, %v710
    %v714 = vadd.f32 %v694, %v710
    %v715 = vadd.f32 %v695, %v710
    %v716 = vadd.f32 %v696, %v710
    %v717 = vadd.f32 %v697, %v710
    %v718 = vadd.f32 %v698, %v710
    %v719 = vadd.f32 %v699, %v710
    %v720 = vadd.f32 %v700, %v710
    %v721 = vadd.f32 %v701, %v710
    %v722 = vadd.f32 %v702, %v710
    %v723 = vadd.f32 %v703, %v710
    %v724 = vadd.f32 %v704, %v710
    %v725 = vadd.f32 %v705, %v710
    %v726 = vadd.f32 %v706, %v710
    %v727 = vld [vmem:[%s3] sm:$0xff]
    %v728 = vld [vmem:[%s3 + $0x8] sm:$0xff]
    %v729 = vld [vmem:[%s3 + $0x10] sm:$0xff]
    %v730 = vld [vmem:[%s3 + $0x18] sm:$0xff]
    %v731 = vld [vmem:[%s3 + $0x20] sm:$0xff]
    %v732 = vld [vmem:[%s3 + $0x28] sm:$0xff]
    %v733 = vld [vmem:[%s3 + $0x30] sm:$0xff]
    %v734 = vld [vmem:[%s3 + $0x38] sm:$0xff]
    %v735 = vld [vmem:[%s3 + $0x40] sm:$0xff]
    %v736 = vld [vmem:[%s3 + $0x48] sm:$0xff]
    %v737 = vld [vmem:[%s3 + $0x50] sm:$0xff]
    %v738 = vld [vmem:[%s3 + $0x58] sm:$0xff]
    %v739 = vld [vmem:[%s3 + $0x60] sm:$0xff]
    %v740 = vld [vmem:[%s3 + $0x68] sm:$0xff]
    %v741 = vld [vmem:[%s3 + $0x70] sm:$0xff]
    %v742 = vld [vmem:[%s3 + $0x78] sm:$0xff]
    %v743 = vadd.f32 %v711, %v727
    %v744 = vadd.f32 %v712, %v728
    %v745 = vadd.f32 %v713, %v729
    %v746 = vadd.f32 %v714, %v730
    %v747 = vadd.f32 %v715, %v731
    %v748 = vadd.f32 %v716, %v732
    %v749 = vadd.f32 %v717, %v733
    %v750 = vadd.f32 %v718, %v734
    %v751 = vadd.f32 %v719, %v735
    %v752 = vadd.f32 %v720, %v736
    %v753 = vadd.f32 %v721, %v737
    %v754 = vadd.f32 %v722, %v738
    %v755 = vadd.f32 %v723, %v739
    %v756 = vadd.f32 %v724, %v740
    %v757 = vadd.f32 %v725, %v741
    %v758 = vadd.f32 %v726, %v742
    %v759 = vmax.f32 %v743, 0.0
    %v760 = vmax.f32 %v744, 0.0
    %v761 = vmax.f32 %v745, 0.0
    %v762 = vmax.f32 %v746, 0.0
    %v763 = vmax.f32 %v747, 0.0
    %v764 = vmax.f32 %v748, 0.0
    %v765 = vmax.f32 %v749, 0.0
    %v766 = vmax.f32 %v750, 0.0
    %v767 = vmax.f32 %v751, 0.0
    %v768 = vmax.f32 %v752, 0.0
    %v769 = vmax.f32 %v753, 0.0
    %v770 = vmax.f32 %v754, 0.0
    %v771 = vmax.f32 %v755, 0.0
    %v772 = vmax.f32 %v756, 0.0
    %v773 = vmax.f32 %v757, 0.0
    %v774 = vmax.f32 %v758, 0.0
    %v775 = vpack.c.bf16 %v760, %v759
    %v776 = vpack.c.bf16 %v762, %v761
    %v777 = vpack.c.bf16 %v764, %v763
    %v778 = vpack.c.bf16 %v766, %v765
    %v779 = vpack.c.bf16 %v768, %v767
    %v780 = vpack.c.bf16 %v770, %v769
    %v781 = vpack.c.bf16 %v772, %v771
    %v782 = vpack.c.bf16 %v774, %v773
    %v791 = vunpack.c.l.b16 %v775
    %v792 = vunpack.c.h.b16 %v775
    %v793 = vunpack.c.l.b16 %v776
    %v794 = vunpack.c.h.b16 %v776
    %v795 = vunpack.c.l.b16 %v777
    %v796 = vunpack.c.h.b16 %v777
    %v797 = vunpack.c.l.b16 %v778
    %v798 = vunpack.c.h.b16 %v778
    %v799 = vunpack.c.l.b16 %v779
    %v800 = vunpack.c.h.b16 %v779
    %v801 = vunpack.c.l.b16 %v780
    %v802 = vunpack.c.h.b16 %v780
    %v803 = vunpack.c.l.b16 %v781
    %v804 = vunpack.c.h.b16 %v781
    %v805 = vunpack.c.l.b16 %v782
    %v806 = vunpack.c.h.b16 %v782
    %v807 = vpack.c.b16 %v791, %v791
    %v808 = vpack.c.b16 %v792, %v792
    %v809 = vpack.c.b16 %v793, %v793
    %v810 = vpack.c.b16 %v794, %v794
    %v811 = vpack.c.b16 %v795, %v795
    %v812 = vpack.c.b16 %v796, %v796
    %v813 = vpack.c.b16 %v797, %v797
    %v814 = vpack.c.b16 %v798, %v798
    %v815 = vpack.c.b16 %v799, %v799
    %v816 = vpack.c.b16 %v800, %v800
    %v817 = vpack.c.b16 %v801, %v801
    %v818 = vpack.c.b16 %v802, %v802
    %v819 = vpack.c.b16 %v803, %v803
    %v820 = vpack.c.b16 %v804, %v804
    %v821 = vpack.c.b16 %v805, %v805
    %v822 = vpack.c.b16 %v806, %v806
    %839 = vst [vmem:[%s4] sm:$0xf] %v807
    %840 = vst [vmem:[%s4 + $0x4] sm:$0xf] %v808
    %841 = vst [vmem:[%s4 + $0x8] sm:$0xf] %v809
    %842 = vst [vmem:[%s4 + $0xc] sm:$0xf] %v810
    %843 = vst [vmem:[%s4 + $0x10] sm:$0xf] %v811
    %844 = vst [vmem:[%s4 + $0x14] sm:$0xf] %v812
    %845 = vst [vmem:[%s4 + $0x18] sm:$0xf] %v813
    %846 = vst [vmem:[%s4 + $0x1c] sm:$0xf] %v814
    %847 = vst [vmem:[%s4 + $0x20] sm:$0xf] %v815
    %848 = vst [vmem:[%s4 + $0x24] sm:$0xf] %v816
    %849 = vst [vmem:[%s4 + $0x28] sm:$0xf] %v817
    %850 = vst [vmem:[%s4 + $0x2c] sm:$0xf] %v818
    %851 = vst [vmem:[%s4 + $0x30] sm:$0xf] %v819
    %852 = vst [vmem:[%s4 + $0x34] sm:$0xf] %v820
    %853 = vst [vmem:[%s4 + $0x38] sm:$0xf] %v821
    %854 = vst [vmem:[%s4 + $0x3c] sm:$0xf] %v822
  $region21: #{resnet_forward.13} parent=0 // pred_fallthru
    _
  // Predicated region
  $region22: #{resnet_forward.13} parent=0 // pred_check
    _
  $region23: #{resnet_forward.13} parent=0 // pred_check_branch
    %856 = sbr.rel (0) target = $region25
  $region24: #{resnet_forward.13} parent=0 // pred_region
    _
  $region25: #{resnet_forward.13} parent=0 // pred_fallthru
    _
  // Predicated region
  $region26: #{resnet_forward.13} parent=0 // pred_check
    _
  $region27: #{resnet_forward.13} parent=0 // pred_check_branch
    %858 = sbr.rel (0) target = $region29
  $region28: #{resnet_forward.13} parent=0 // pred_region
    _
  $region29: #{resnet_forward.13} parent=0 // pred_fallthru
    _

// kernel: resnet_forward.14
$region0: #{resnet_forward.14}
  #allocation0 [shape = 'u32[]', space=smem, size = 0x4, offset = 0x4, fixed_abs, tag = 'smem constant byte address 0x4 - core index']
  #allocation1 [shape = 'u32[144,128]{1,0:T(1,128)}', space=vmem, size = 0x12000, scoped, tag = 'internal scratch']
  #allocation2 [shape = 'f32[32,256]{1,0:T(8,128)}', space=vmem, size = 0x8000, scoped, tag = 'scratch operand']
  %s0 = inlined_call_operand.vmem [shape: bf16[32,384], index: 0, kind: input, shape index: {}]
  %s1 = inlined_call_operand.vmem [shape: bf16[384,256], index: 1, kind: input, shape index: {}]
  %s2 = inlined_call_operand.vmem [shape: f32[2,256], index: 2, kind: input, shape index: {}]
  %s3 = inlined_call_operand.vmem [shape: bf16[32,128], index: 3, kind: output, shape index: {0}]
  %s4 = inlined_call_operand.vmem [shape: f32[32,128], index: 4, kind: output, shape index: {1}]
  %5 = xla_tuple %s3, %s4
  %s6 = sld [smem:[#allocation0]]
  $region34: #{resnet_forward.14} parent=0
    _
  %s8 = ssub.s32 1, %s6
  %s9 = scalar_select 0, %s8, %s6
  // Predicated region
  $region2: #{resnet_forward.14} parent=0 // pred_check
    _
  $region3: #{resnet_forward.14} parent=0 // pred_check_branch
    %11 = sbr.rel (0) target = $region5
  $region4: #{resnet_forward.14} parent=0 // pred_region
    _
  $region5: #{resnet_forward.14} parent=0 // pred_fallthru
    _
  // Predicated region
  $region6: #{resnet_forward.14} parent=0 // pred_check
    _
  $region7: #{resnet_forward.14} parent=0 // pred_check_branch
    %13 = sbr.rel (0) target = $region9
  $region8: #{resnet_forward.14} parent=0 // pred_region
    _
  $region9: #{resnet_forward.14} parent=0 // pred_fallthru
    _
  // Predicated region
  $region10: #{resnet_forward.14} parent=0 // pred_check
    _
  $region11: #{resnet_forward.14} parent=0 // pred_check_branch
    %15 = sbr.rel (0) target = $region13
  $region12: #{resnet_forward.14} parent=0 // pred_region
    _
  $region13: #{resnet_forward.14} parent=0 // pred_fallthru
    _
  %v17 = vld [vmem:[%s0] sm:$0xff]
  %v18 = vld [vmem:[%s0 + $0x8] sm:$0xf]
  %v19 = vld [vmem:[%s0 + $0xc] sm:$0xff]
  %v20 = vld [vmem:[%s0 + $0x14] sm:$0xf]
  %v21 = vld [vmem:[%s0 + $0x18] sm:$0xff]
  %v22 = vld [vmem:[%s0 + $0x20] sm:$0xf]
  %v23 = vld [vmem:[%s0 + $0x24] sm:$0xff]
  %v24 = vld [vmem:[%s0 + $0x2c] sm:$0xf]
  %v25 = vld [vmem:[%s1] sm:$0xff]
  %v26 = vld [vmem:[%s1 + $0x8] sm:$0xff]
  %v27 = vld [vmem:[%s1 + $0x10] sm:$0xff]
  %v28 = vld [vmem:[%s1 + $0x18] sm:$0xff]
  %v29 = vld [vmem:[%s1 + $0x20] sm:$0xff]
  %v30 = vld [vmem:[%s1 + $0x28] sm:$0xff]
  %v31 = vld [vmem:[%s1 + $0x30] sm:$0xff]
  %v32 = vld [vmem:[%s1 + $0x38] sm:$0xff]
  %v33 = vld [vmem:[%s1 + $0x40] sm:$0xff]
  %v34 = vld [vmem:[%s1 + $0x48] sm:$0xff]
  %v35 = vld [vmem:[%s1 + $0x50] sm:$0xff]
  %v36 = vld [vmem:[%s1 + $0x58] sm:$0xff]
  %v37 = vld [vmem:[%s1 + $0x60] sm:$0xff]
  %v38 = vld [vmem:[%s1 + $0x68] sm:$0xff]
  %v39 = vld [vmem:[%s1 + $0x70] sm:$0xff]
  %v40 = vld [vmem:[%s1 + $0x78] sm:$0xff]
  %v41 = vld [vmem:[%s1 + $0x80] sm:$0xff]
  %v42 = vld [vmem:[%s1 + $0x88] sm:$0xff]
  %v43 = vld [vmem:[%s1 + $0x90] sm:$0xff]
  %v44 = vld [vmem:[%s1 + $0x98] sm:$0xff]
  %v45 = vld [vmem:[%s1 + $0xa0] sm:$0xff]
  %v46 = vld [vmem:[%s1 + $0xa8] sm:$0xff]
  %v47 = vld [vmem:[%s1 + $0xb0] sm:$0xff]
  %v48 = vld [vmem:[%s1 + $0xb8] sm:$0xff]
  %v49 = vld [vmem:[%s1 + $0xc0] sm:$0xff]
  %v50 = vld [vmem:[%s1 + $0xc8] sm:$0xff]
  %v51 = vld [vmem:[%s1 + $0xd0] sm:$0xff]
  %v52 = vld [vmem:[%s1 + $0xd8] sm:$0xff]
  %v53 = vld [vmem:[%s1 + $0xe0] sm:$0xff]
  %v54 = vld [vmem:[%s1 + $0xe8] sm:$0xff]
  %v55 = vld [vmem:[%s1 + $0xf0] sm:$0xff]
  %v56 = vld [vmem:[%s1 + $0xf8] sm:$0xff]
  %v57 = vld [vmem:[%s1 + $0x100] sm:$0xff]
  %v58 = vld [vmem:[%s1 + $0x108] sm:$0xff]
  %v59 = vld [vmem:[%s1 + $0x110] sm:$0xff]
  %v60 = vld [vmem:[%s1 + $0x118] sm:$0xff]
  %v61 = vld [vmem:[%s1 + $0x120] sm:$0xff]
  %v62 = vld [vmem:[%s1 + $0x128] sm:$0xff]
  %v63 = vld [vmem:[%s1 + $0x130] sm:$0xff]
  %v64 = vld [vmem:[%s1 + $0x138] sm:$0xff]
  %v65 = vld [vmem:[%s1 + $0x140] sm:$0xff]
  %v66 = vld [vmem:[%s1 + $0x148] sm:$0xff]
  %v67 = vld [vmem:[%s1 + $0x150] sm:$0xff]
  %v68 = vld [vmem:[%s1 + $0x158] sm:$0xff]
  %v69 = vld [vmem:[%s1 + $0x160] sm:$0xff]
  %v70 = vld [vmem:[%s1 + $0x168] sm:$0xff]
  %v71 = vld [vmem:[%s1 + $0x170] sm:$0xff]
  %v72 = vld [vmem:[%s1 + $0x178] sm:$0xff]
  %v81 = vunpack.c.l.b16 %v17
  %v82 = vunpack.c.h.b16 %v17
  %v83 = vunpack.c.l.b16 %v18
  %v84 = vunpack.c.l.b16 %v19
  %v85 = vunpack.c.h.b16 %v19
  %v86 = vunpack.c.l.b16 %v20
  %v87 = vunpack.c.l.b16 %v21
  %v88 = vunpack.c.h.b16 %v21
  %v89 = vunpack.c.l.b16 %v22
  %v90 = vunpack.c.l.b16 %v23
  %v91 = vunpack.c.h.b16 %v23
  %v92 = vunpack.c.l.b16 %v24
  %v93 = vpack.c.b16 %v84, %v81
  %v94 = vpack.c.b16 %v85, %v82
  %v95 = vpack.c.b16 %v86, %v83
  %v96 = vpack.c.b16 %v90, %v87
  %v97 = vpack.c.b16 %v91, %v88
  %v98 = vpack.c.b16 %v92, %v89
  %v153 = vunpack.c.l.b16 %v25
  %v154 = vunpack.c.h.b16 %v25
  %v155 = vunpack.c.l.b16 %v26
  %v156 = vunpack.c.h.b16 %v26
  %v157 = vunpack.c.l.b16 %v27
  %v158 = vunpack.c.h.b16 %v27
  %v159 = vunpack.c.l.b16 %v28
  %v160 = vunpack.c.h.b16 %v28
  %v161 = vunpack.c.l.b16 %v29
  %v162 = vunpack.c.h.b16 %v29
  %v163 = vunpack.c.l.b16 %v30
  %v164 = vunpack.c.h.b16 %v30
  %v165 = vunpack.c.l.b16 %v31
  %v166 = vunpack.c.h.b16 %v31
  %v167 = vunpack.c.l.b16 %v32
  %v168 = vunpack.c.h.b16 %v32
  %v169 = vunpack.c.l.b16 %v33
  %v170 = vunpack.c.h.b16 %v33
  %v171 = vunpack.c.l.b16 %v34
  %v172 = vunpack.c.h.b16 %v34
  %v173 = vunpack.c.l.b16 %v35
  %v174 = vunpack.c.h.b16 %v35
  %v175 = vunpack.c.l.b16 %v36
  %v176 = vunpack.c.h.b16 %v36
  %v177 = vunpack.c.l.b16 %v37
  %v178 = vunpack.c.h.b16 %v37
  %v179 = vunpack.c.l.b16 %v38
  %v180 = vunpack.c.h.b16 %v38
  %v181 = vunpack.c.l.b16 %v39
  %v182 = vunpack.c.h.b16 %v39
  %v183 = vunpack.c.l.b16 %v40
  %v184 = vunpack.c.h.b16 %v40
  %v185 = vunpack.c.l.b16 %v41
  %v186 = vunpack.c.h.b16 %v41
  %v187 = vunpack.c.l.b16 %v42
  %v188 = vunpack.c.h.b16 %v42
  %v189 = vunpack.c.l.b16 %v43
  %v190 = vunpack.c.h.b16 %v43
  %v191 = vunpack.c.l.b16 %v44
  %v192 = vunpack.c.h.b16 %v44
  %v193 = vunpack.c.l.b16 %v45
  %v194 = vunpack.c.h.b16 %v45
  %v195 = vunpack.c.l.b16 %v46
  %v196 = vunpack.c.h.b16 %v46
  %v197 = vunpack.c.l.b16 %v47
  %v198 = vunpack.c.h.b16 %v47
  %v199 = vunpack.c.l.b16 %v48
  %v200 = vunpack.c.h.b16 %v48
  %v201 = vunpack.c.l.b16 %v49
  %v202 = vunpack.c.h.b16 %v49
  %v203 = vunpack.c.l.b16 %v50
  %v204 = vunpack.c.h.b16 %v50
  %v205 = vunpack.c.l.b16 %v51
  %v206 = vunpack.c.h.b16 %v51
  %v207 = vunpack.c.l.b16 %v52
  %v208 = vunpack.c.h.b16 %v52
  %v209 = vunpack.c.l.b16 %v53
  %v210 = vunpack.c.h.b16 %v53
  %v211 = vunpack.c.l.b16 %v54
  %v212 = vunpack.c.h.b16 %v54
  %v213 = vunpack.c.l.b16 %v55
  %v214 = vunpack.c.h.b16 %v55
  %v215 = vunpack.c.l.b16 %v56
  %v216 = vunpack.c.h.b16 %v56
  %v217 = vunpack.c.l.b16 %v57
  %v218 = vunpack.c.h.b16 %v57
  %v219 = vunpack.c.l.b16 %v58
  %v220 = vunpack.c.h.b16 %v58
  %v221 = vunpack.c.l.b16 %v59
  %v222 = vunpack.c.h.b16 %v59
  %v223 = vunpack.c.l.b16 %v60
  %v224 = vunpack.c.h.b16 %v60
  %v225 = vunpack.c.l.b16 %v61
  %v226 = vunpack.c.h.b16 %v61
  %v227 = vunpack.c.l.b16 %v62
  %v228 = vunpack.c.h.b16 %v62
  %v229 = vunpack.c.l.b16 %v63
  %v230 = vunpack.c.h.b16 %v63
  %v231 = vunpack.c.l.b16 %v64
  %v232 = vunpack.c.h.b16 %v64
  %v233 = vunpack.c.l.b16 %v65
  %v234 = vunpack.c.h.b16 %v65
  %v235 = vunpack.c.l.b16 %v66
  %v236 = vunpack.c.h.b16 %v66
  %v237 = vunpack.c.l.b16 %v67
  %v238 = vunpack.c.h.b16 %v67
  %v239 = vunpack.c.l.b16 %v68
  %v240 = vunpack.c.h.b16 %v68
  %v241 = vunpack.c.l.b16 %v69
  %v242 = vunpack.c.h.b16 %v69
  %v243 = vunpack.c.l.b16 %v70
  %v244 = vunpack.c.h.b16 %v70
  %v245 = vunpack.c.l.b16 %v71
  %v246 = vunpack.c.h.b16 %v71
  %v247 = vunpack.c.l.b16 %v72
  %v248 = vunpack.c.h.b16 %v72
  %v249 = vpack.c.b16 %v155, %v153
  %v250 = vpack.c.b16 %v156, %v154
  %v251 = vpack.c.b16 %v159, %v157
  %v252 = vpack.c.b16 %v160, %v158
  %v253 = vpack.c.b16 %v163, %v161
  %v254 = vpack.c.b16 %v164, %v162
  %v255 = vpack.c.b16 %v167, %v165
  %v256 = vpack.c.b16 %v168, %v166
  %v257 = vpack.c.b16 %v171, %v169
  %v258 = vpack.c.b16 %v172, %v170
  %v259 = vpack.c.b16 %v175, %v173
  %v260 = vpack.c.b16 %v176, %v174
  %v261 = vpack.c.b16 %v179, %v177
  %v262 = vpack.c.b16 %v180, %v178
  %v263 = vpack.c.b16 %v183, %v181
  %v264 = vpack.c.b16 %v184, %v182
  %v265 = vpack.c.b16 %v187, %v185
  %v266 = vpack.c.b16 %v188, %v186
  %v267 = vpack.c.b16 %v191, %v189
  %v268 = vpack.c.b16 %v192, %v190
  %v269 = vpack.c.b16 %v195, %v193
  %v270 = vpack.c.b16 %v196, %v194
  %v271 = vpack.c.b16 %v199, %v197
  %v272 = vpack.c.b16 %v200, %v198
  %v273 = vpack.c.b16 %v203, %v201
  %v274 = vpack.c.b16 %v204, %v202
  %v275 = vpack.c.b16 %v207, %v205
  %v276 = vpack.c.b16 %v208, %v206
  %v277 = vpack.c.b16 %v211, %v209
  %v278 = vpack.c.b16 %v212, %v210
  %v279 = vpack.c.b16 %v215, %v213
  %v280 = vpack.c.b16 %v216, %v214
  %v281 = vpack.c.b16 %v219, %v217
  %v282 = vpack.c.b16 %v220, %v218
  %v283 = vpack.c.b16 %v223, %v221
  %v284 = vpack.c.b16 %v224, %v222
  %v285 = vpack.c.b16 %v227, %v225
  %v286 = vpack.c.b16 %v228, %v226
  %v287 = vpack.c.b16 %v231, %v229
  %v288 = vpack.c.b16 %v232, %v230
  %v289 = vpack.c.b16 %v235, %v233
  %v290 = vpack.c.b16 %v236, %v234
  %v291 = vpack.c.b16 %v239, %v237
  %v292 = vpack.c.b16 %v240, %v238
  %v293 = vpack.c.b16 %v243, %v241
  %v294 = vpack.c.b16 %v244, %v242
  %v295 = vpack.c.b16 %v247, %v245
  %v296 = vpack.c.b16 %v248, %v246
  %345 = vmatprep.subr.bf16.mxu0 %v250
  %346 = vmatpush1.bf16.msra.mxu0 %v249
  %347 = vmatprep.subr.bf16.mxu0 %v252
  %348 = vmatpush1.bf16.msra.mxu0 %v251
  %349 = vmatprep.subr.bf16.mxu0 %v254
  %350 = vmatpush1.bf16.msra.mxu0 %v253
  %351 = vmatprep.subr.bf16.mxu0 %v256
  %352 = vmatpush1.bf16.msra.mxu0 %v255
  %353 = vmatprep.subr.bf16.mxu0 %v258
  %354 = vmatpush1.bf16.msra.mxu0 %v257
  %355 = vmatprep.subr.bf16.mxu0 %v260
  %356 = vmatpush1.bf16.msra.mxu0 %v259
  %357 = vmatprep.subr.bf16.mxu0 %v262
  %358 = vmatpush1.bf16.msra.mxu0 %v261
  %359 = vmatprep.subr.bf16.mxu0 %v264
  %360 = vmatpush1.bf16.msra.mxu0 %v263
  %361 = vmatprep.subr.bf16.mxu0 %v266
  %362 = vmatpush1.bf16.msra.mxu0 %v265
  %363 = vmatprep.subr.bf16.mxu0 %v268
  %364 = vmatpush1.bf16.msra.mxu0 %v267
  %365 = vmatprep.subr.bf16.mxu0 %v270
  %366 = vmatpush1.bf16.msra.mxu0 %v269
  %367 = vmatprep.subr.bf16.mxu0 %v272
  %368 = vmatpush1.bf16.msra.mxu0 %v271
  %369 = vmatprep.subr.bf16.mxu0 %v274
  %370 = vmatpush1.bf16.msra.mxu0 %v273
  %371 = vmatprep.subr.bf16.mxu0 %v276
  %372 = vmatpush1.bf16.msra.mxu0 %v275
  %373 = vmatprep.subr.bf16.mxu0 %v278
  %374 = vmatpush1.bf16.msra.mxu0 %v277
  %375 = vmatprep.subr.bf16.mxu0 %v280
  %376 = vmatpush1.bf16.msra.mxu0 %v279
  %377 = vmatprep.mubr.bf16.mxu0 %v94
  %378 = vmatmul.mubr.bf16.gmra.mrb[0].mxu0 %v93
  %v379 = vpop.f32.mrb[0].mxu0
  %v380 = vadd.f32 0.0, %v379
  %v381 = vpop.f32.mrb[0].mxu0
  %v382 = vadd.f32 0.0, %v381
  %v383 = vpop.f32.mrb[0].mxu0
  %v384 = vadd.f32 0.0, %v383
  %v385 = vpop.f32.mrb[0].mxu0
  %v386 = vadd.f32 0.0, %v385
  %387 = vmatprep.mubr.bf16.mxu0 %v97
  %388 = vmatmul.mubr.bf16.gmra.mrb[0].mxu0 %v96
  %v389 = vpop.f32.mrb[0].mxu0
  %v390 = vadd.f32 0.0, %v389
  %v391 = vpop.f32.mrb[0].mxu0
  %v392 = vadd.f32 0.0, %v391
  %v393 = vpop.f32.mrb[0].mxu0
  %v394 = vadd.f32 0.0, %v393
  %v395 = vpop.f32.mrb[0].mxu0
  %v396 = vadd.f32 0.0, %v395
  %397 = vdwg.mxu0
  %398 = vmatprep.subr.bf16.mxu0 %v282
  %399 = vmatpush1.bf16.msra.mxu0 %v281
  %400 = vmatprep.subr.bf16.mxu0 %v284
  %401 = vmatpush1.bf16.msra.mxu0 %v283
  %402 = vmatprep.subr.bf16.mxu0 %v286
  %403 = vmatpush1.bf16.msra.mxu0 %v285
  %404 = vmatprep.subr.bf16.mxu0 %v288
  %405 = vmatpush1.bf16.msra.mxu0 %v287
  %406 = vmatprep.subr.bf16.mxu0 %v290
  %407 = vmatpush1.bf16.msra.mxu0 %v289
  %408 = vmatprep.subr.bf16.mxu0 %v292
  %409 = vmatpush1.bf16.msra.mxu0 %v291
  %410 = vmatprep.subr.bf16.mxu0 %v294
  %411 = vmatpush1.bf16.msra.mxu0 %v293
  %412 = vmatprep.subr.bf16.mxu0 %v296
  %413 = vmatpush1.bf16.msra.mxu0 %v295
  %414 = vmatprep.subr.bf16.mxu0 0
  %415 = vmatpush1.bf16.msra.mxu0 0
  %416 = vmatprep.subr.bf16.mxu0 0
  %417 = vmatpush1.bf16.msra.mxu0 0
  %418 = vmatprep.subr.bf16.mxu0 0
  %419 = vmatpush1.bf16.msra.mxu0 0
  %420 = vmatprep.subr.bf16.mxu0 0
  %421 = vmatpush1.bf16.msra.mxu0 0
  %422 = vmatprep.subr.bf16.mxu0 0
  %423 = vmatpush1.bf16.msra.mxu0 0
  %424 = vmatprep.subr.bf16.mxu0 0
  %425 = vmatpush1.bf16.msra.mxu0 0
  %426 = vmatprep.subr.bf16.mxu0 0
  %427 = vmatpush1.bf16.msra.mxu0 0
  %428 = vmatprep.subr.bf16.mxu0 0
  %429 = vmatpush1.bf16.msra.mxu0 0
  %430 = vmatprep.mubr.bf16.mxu0 0
  %431 = vmatmul.mubr.bf16.gmra.mrb[0].mxu0 %v95
  %v432 = vpop.f32.mrb[0].mxu0
  %v433 = vadd.f32 %v380, %v432
  %v434 = vpop.f32.mrb[0].mxu0
  %v435 = vadd.f32 %v382, %v434
  %v436 = vpop.f32.mrb[0].mxu0
  %v437 = vadd.f32 %v384, %v436
  %v438 = vpop.f32.mrb[0].mxu0
  %v439 = vadd.f32 %v386, %v438
  %440 = vmatprep.mubr.bf16.mxu0 0
  %441 = vmatmul.mubr.bf16.gmra.mrb[0].mxu0 %v98
  %v442 = vpop.f32.mrb[0].mxu0
  %v443 = vadd.f32 %v390, %v442
  %v444 = vpop.f32.mrb[0].mxu0
  %v445 = vadd.f32 %v392, %v444
  %v446 = vpop.f32.mrb[0].mxu0
  %v447 = vadd.f32 %v394, %v446
  %v448 = vpop.f32.mrb[0].mxu0
  %v449 = vadd.f32 %v396, %v448
  %450 = vdwg.mxu0
  %451 = vst [vmem:[#allocation2] sm:$0xff] %v433
  %452 = vst [vmem:[#allocation2 + $0x8] sm:$0xff] %v435
  %453 = vst [vmem:[#allocation2 + $0x10] sm:$0xff] %v437
  %454 = vst [vmem:[#allocation2 + $0x18] sm:$0xff] %v439
  %455 = vst [vmem:[#allocation2 + $0x20] sm:$0xff] %v443
  %456 = vst [vmem:[#allocation2 + $0x28] sm:$0xff] %v445
  %457 = vst [vmem:[#allocation2 + $0x30] sm:$0xff] %v447
  %458 = vst [vmem:[#allocation2 + $0x38] sm:$0xff] %v449
  %p459 = scmp.eq.s32.totalorder 0, 0
  // Predicated region
  $region14: #{resnet_forward.14} parent=0 // pred_check
    %p460 = pneg %p459
  $region15: #{resnet_forward.14} parent=0 // pred_check_branch
    %462 = sbr.rel (%p460) target = $region17
  $region16: #{resnet_forward.14} parent=0 // pred_region
    %v463 = vld [vmem:[#allocation2] sm:$0xff]
    %v464 = vld [vmem:[#allocation2 + $0x8] sm:$0xff]
    %v465 = vld [vmem:[#allocation2 + $0x10] sm:$0xff]
    %v466 = vld [vmem:[#allocation2 + $0x18] sm:$0xff]
    %v467 = vld [vmem:[#allocation2 + $0x20] sm:$0xff]
    %v468 = vld [vmem:[#allocation2 + $0x28] sm:$0xff]
    %v469 = vld [vmem:[#allocation2 + $0x30] sm:$0xff]
    %v470 = vld [vmem:[#allocation2 + $0x38] sm:$0xff]
    %v471 = vadd.f32 %v463, %v465
    %v472 = vadd.f32 %v471, %v467
    %v473 = vadd.f32 %v472, %v469
    %v474 = vrot.slane %v473, 4
    %v475 = vadd.f32 %v473, %v474
    %v476 = vrot.slane %v475, 2
    %v477 = vadd.f32 %v475, %v476
    %v478 = vrot.slane %v477, 1
    %v479 = vadd.f32 %v477, %v478
    %v480 = vadd.f32 %v464, %v466
    %v481 = vadd.f32 %v480, %v468
    %v482 = vadd.f32 %v481, %v470
    %v483 = vrot.slane %v482, 4
    %v484 = vadd.f32 %v482, %v483
    %v485 = vrot.slane %v484, 2
    %v486 = vadd.f32 %v484, %v485
    %v487 = vrot.slane %v486, 1
    %v488 = vadd.f32 %v486, %v487
    %v489 = vmul.f32 %v479, 0.03125
    %v490 = vmul.f32 %v488, 0.03125
    %v491 = vsub.f32 %v463, %v489
    %v492 = vsub.f32 %v464, %v490
    %v493 = vsub.f32 %v465, %v489
    %v494 = vsub.f32 %v466, %v490
    %v495 = vsub.f32 %v467, %v489
    %v496 = vsub.f32 %v468, %v490
    %v497 = vsub.f32 %v469, %v489
    %v498 = vsub.f32 %v470, %v490
    %v499 = vmul.f32 %v491, %v491
    %v500 = vmul.f32 %v492, %v492
    %v501 = vmul.f32 %v493, %v493
    %v502 = vmul.f32 %v494, %v494
    %v503 = vmul.f32 %v495, %v495
    %v504 = vmul.f32 %v496, %v496
    %v505 = vmul.f32 %v497, %v497
    %v506 = vmul.f32 %v498, %v498
    %v507 = vadd.f32 %v499, %v501
    %v508 = vadd.f32 %v507, %v503
    %v509 = vadd.f32 %v508, %v505
    %v510 = vrot.slane %v509, 4
    %v511 = vadd.f32 %v509, %v510
    %v512 = vrot.slane %v511, 2
    %v513 = vadd.f32 %v511, %v512
    %v514 = vrot.slane %v513, 1
    %v515 = vadd.f32 %v513, %v514
    %v516 = vadd.f32 %v500, %v502
    %v517 = vadd.f32 %v516, %v504
    %v518 = vadd.f32 %v517, %v506
    %v519 = vrot.slane %v518, 4
    %v520 = vadd.f32 %v518, %v519
    %v521 = vrot.slane %v520, 2
    %v522 = vadd.f32 %v520, %v521
    %v523 = vrot.slane %v522, 1
    %v524 = vadd.f32 %v522, %v523
    %v525 = vmul.f32 %v489, 0.0
    %v526 = vmul.f32 %v490, 0.0
    %v527 = vmul.f32 %v525, %v489
    %v528 = vmul.f32 %v526, %v490
    %v529 = vsub.f32 %v515, %v527
    %v530 = vsub.f32 %v524, %v528
    %v531 = vmul.f32 %v529, 0.03125
    %v532 = vmul.f32 %v530, 0.03125
    %v533 = vmax.f32 %v531, 0.0
    %v534 = vmax.f32 %v532, 0.0
    %v535 = vld [vmem:[%s2] ss:$2 sm:$0x3]
    %v536 = vadd.f32 %v533, 1e-05
    %v537 = vadd.f32 %v534, 1e-05
    %v538 = vrsqrt.pop %v536
    %v539 = vrsqrt.pop %v537
    %v542 = vcombine.low %v538, %v539
    %v544 = vunpack.c.l.s4 1966171168
    %v545 = vunpack.c.0.s8 %v544
    %v546 = vlaneseq
    %v547 = vshrl.u32 %v546, 7
    %v548 = vsub.s32 %v545, %v547
    %v549 = vrot.slane %v542, %v548
    %v551 = vunpack.c.l.s4 1966171168
    %v552 = vunpack.c.0.s8 %v551
    %v553 = vlaneseq
    %v554 = vshrl.u32 %v553, 7
    %v555 = vsub.s32 %v552, %v554
    %v556 = vrot.slane %v549, %v555
    %v558 = vmul.f32 %v535, %v556
    %s559 = scalar_lea.vmem %s2, 1
    %v560 = vld [vmem:[%s559] ss:$2 sm:$0x3]
    %v562 = vlaneseq
    %v563 = vshrl.u32 %v562, 7
    %v564 = vsub.s32 0, %v563
    %v565 = vrot.slane %v558, %v564
    %v566 = vlaneseq
    %v567 = vshrl.u32 %v566, 7
    %v568 = vsub.s32 1, %v567
    %v569 = vrot.slane %v558, %v568
    %v572 = vmul.f32 %v489, %v565
    %v573 = vmul.f32 %v490, %v569
    %v576 = vcombine.low %v572, %v573
    %v578 = vunpack.c.l.s4 1966171168
    %v579 = vunpack.c.0.s8 %v578
    %v580 = vlaneseq
    %v581 = vshrl.u32 %v580, 7
    %v582 = vsub.s32 %v579, %v581
    %v583 = vrot.slane %v576, %v582
    %v585 = vunpack.c.l.s4 1966171168
    %v586 = vunpack.c.0.s8 %v585
    %v587 = vlaneseq
    %v588 = vshrl.u32 %v587, 7
    %v589 = vsub.s32 %v586, %v588
    %v590 = vrot.slane %v583, %v589
    %v592 = vsub.f32 %v560, %v590
    %v593 = vmul.f32 %v463, %v565
    %v594 = vmul.f32 %v464, %v569
    %v595 = vmul.f32 %v465, %v565
    %v596 = vmul.f32 %v466, %v569
    %v597 = vmul.f32 %v467, %v565
    %v598 = vmul.f32 %v468, %v569
    %v599 = vmul.f32 %v469, %v565
    %v600 = vmul.f32 %v470, %v569
    %v602 = vlaneseq
    %v603 = vshrl.u32 %v602, 7
    %v604 = vsub.s32 0, %v603
    %v605 = vrot.slane %v592, %v604
    %v606 = vlaneseq
    %v607 = vshrl.u32 %v606, 7
    %v608 = vsub.s32 1, %v607
    %v609 = vrot.slane %v592, %v608
    %v612 = vadd.f32 %v593, %v605
    %v613 = vadd.f32 %v594, %v609
    %v614 = vadd.f32 %v595, %v605
    %v615 = vadd.f32 %v596, %v609
    %v616 = vadd.f32 %v597, %v605
    %v617 = vadd.f32 %v598, %v609
    %v618 = vadd.f32 %v599, %v605
    %v619 = vadd.f32 %v600, %v609
    %v620 = vmax.f32 %v612, 0.0
    %v621 = vmax.f32 %v614, 0.0
    %v622 = vmax.f32 %v616, 0.0
    %v623 = vmax.f32 %v618, 0.0
    %v624 = vpack.c.bf16 %v621, %v620
    %v625 = vpack.c.bf16 %v623, %v622
    %v628 = vunpack.c.l.b16 %v624
    %v629 = vunpack.c.h.b16 %v624
    %v630 = vunpack.c.l.b16 %v625
    %v631 = vunpack.c.h.b16 %v625
    %v632 = vpack.c.b16 %v628, %v628
    %v633 = vpack.c.b16 %v629, %v629
    %v634 = vpack.c.b16 %v630, %v630
    %v635 = vpack.c.b16 %v631, %v631
    %640 = vst [vmem:[%s3] sm:$0xf] %v632
    %641 = vst [vmem:[%s3 + $0x4] sm:$0xf] %v633
    %642 = vst [vmem:[%s3 + $0x8] sm:$0xf] %v634
    %643 = vst [vmem:[%s3 + $0xc] sm:$0xf] %v635
    %644 = vst [vmem:[%s4] sm:$0xff] %v613
    %645 = vst [vmem:[%s4 + $0x8] sm:$0xff] %v615
    %646 = vst [vmem:[%s4 + $0x10] sm:$0xff] %v617
    %647 = vst [vmem:[%s4 + $0x18] sm:$0xff] %v619
  $region17: #{resnet_forward.14} parent=0 // pred_fallthru
    _
  // Predicated region
  $region18: #{resnet_forward.14} parent=0 // pred_check
    _
  $region19: #{resnet_forward.14} parent=0 // pred_check_branch
    %649 = sbr.rel (0) target = $region21
  $region20: #{resnet_forward.14} parent=0 // pred_region
    _
  $region21: #{resnet_forward.14} parent=0 // pred_fallthru
    _
  // Predicated region
  $region22: #{resnet_forward.14} parent=0 // pred_check
    _
  $region23: #{resnet_forward.14} parent=0 // pred_check_branch
    %651 = sbr.rel (0) target = $region25
  $region24: #{resnet_forward.14} parent=0 // pred_region
    _
  $region25: #{resnet_forward.14} parent=0 // pred_fallthru
    _
  // Predicated region
  $region26: #{resnet_forward.14} parent=0 // pred_check
    _
  $region27: #{resnet_forward.14} parent=0 // pred_check_branch
    %653 = sbr.rel (0) target = $region29
  $region28: #{resnet_forward.14} parent=0 // pred_region
    _
  $region29: #{resnet_forward.14} parent=0 // pred_fallthru
    _
  // Predicated region
  $region30: #{resnet_forward.14} parent=0 // pred_check
    _
  $region31: #{resnet_forward.14} parent=0 // pred_check_branch
    %655 = sbr.rel (0) target = $region33
  $region32: #{resnet_forward.14} parent=0 // pred_region
    _
  $region33: #{resnet_forward.14} parent=0 // pred_fallthru
    _

// kernel: resnet_forward.15
$region0: #{resnet_forward.15}
  #allocation0 [shape = 'u32[]', space=smem, size = 0x4, offset = 0x4, fixed_abs, tag = 'smem constant byte address 0x4 - core index']
  #allocation1 [shape = 'u32[144,128]{1,0:T(1,128)}', space=vmem, size = 0x12000, scoped, tag = 'internal scratch']
  #allocation2 [shape = 'f32[32,128]{1,0:T(8,128)}', space=vmem, size = 0x4000, scoped, tag = 'scratch operand']
  %s0 = inlined_call_operand.vmem [shape: bf16[32,640], index: 0, kind: input, shape index: {}]
  %s1 = inlined_call_operand.vmem [shape: bf16[640,128], index: 1, kind: input, shape index: {}]
  %s2 = inlined_call_operand.vmem [shape: f32[2,128], index: 2, kind: input, shape index: {}]
  %s3 = inlined_call_operand.vmem [shape: f32[32,128], index: 3, kind: input, shape index: {}]
  %s4 = inlined_call_operand.vmem [shape: bf16[32,128], index: 4, kind: output, shape index: {}]
  %s5 = sld [smem:[#allocation0]]
  $region30: #{resnet_forward.15} parent=0
    _
  %s7 = ssub.s32 1, %s5
  %s8 = scalar_select 0, %s7, %s5
  // Predicated region
  $region2: #{resnet_forward.15} parent=0 // pred_check
    _
  $region3: #{resnet_forward.15} parent=0 // pred_check_branch
    %10 = sbr.rel (0) target = $region5
  $region4: #{resnet_forward.15} parent=0 // pred_region
    _
  $region5: #{resnet_forward.15} parent=0 // pred_fallthru
    _
  // Predicated region
  $region6: #{resnet_forward.15} parent=0 // pred_check
    _
  $region7: #{resnet_forward.15} parent=0 // pred_check_branch
    %12 = sbr.rel (0) target = $region9
  $region8: #{resnet_forward.15} parent=0 // pred_region
    _
  $region9: #{resnet_forward.15} parent=0 // pred_fallthru
    _
  // Predicated region
  $region10: #{resnet_forward.15} parent=0 // pred_check
    _
  $region11: #{resnet_forward.15} parent=0 // pred_check_branch
    %14 = sbr.rel (0) target = $region13
  $region12: #{resnet_forward.15} parent=0 // pred_region
    _
  $region13: #{resnet_forward.15} parent=0 // pred_fallthru
    _
  // Predicated region
  $region14: #{resnet_forward.15} parent=0 // pred_check
    _
  $region15: #{resnet_forward.15} parent=0 // pred_check_branch
    %16 = sbr.rel (0) target = $region17
  $region16: #{resnet_forward.15} parent=0 // pred_region
    _
  $region17: #{resnet_forward.15} parent=0 // pred_fallthru
    _
  %v18 = vld [vmem:[%s0] sm:$0xff]
  %v19 = vld [vmem:[%s0 + $0x8] sm:$0xff]
  %v20 = vld [vmem:[%s0 + $0x10] sm:$0xf]
  %v21 = vld [vmem:[%s0 + $0x14] sm:$0xff]
  %v22 = vld [vmem:[%s0 + $0x1c] sm:$0xff]
  %v23 = vld [vmem:[%s0 + $0x24] sm:$0xf]
  %v24 = vld [vmem:[%s0 + $0x28] sm:$0xff]
  %v25 = vld [vmem:[%s0 + $0x30] sm:$0xff]
  %v26 = vld [vmem:[%s0 + $0x38] sm:$0xf]
  %v27 = vld [vmem:[%s0 + $0x3c] sm:$0xff]
  %v28 = vld [vmem:[%s0 + $0x44] sm:$0xff]
  %v29 = vld [vmem:[%s0 + $0x4c] sm:$0xf]
  %v30 = vld [vmem:[%s1] sm:$0xf]
  %v31 = vld [vmem:[%s1 + $0x4] sm:$0xf]
  %v32 = vld [vmem:[%s1 + $0x8] sm:$0xf]
  %v33 = vld [vmem:[%s1 + $0xc] sm:$0xf]
  %v34 = vld [vmem:[%s1 + $0x10] sm:$0xf]
  %v35 = vld [vmem:[%s1 + $0x14] sm:$0xf]
  %v36 = vld [vmem:[%s1 + $0x18] sm:$0xf]
  %v37 = vld [vmem:[%s1 + $0x1c] sm:$0xf]
  %v38 = vld [vmem:[%s1 + $0x20] sm:$0xf]
  %v39 = vld [vmem:[%s1 + $0x24] sm:$0xf]
  %v40 = vld [vmem:[%s1 + $0x28] sm:$0xf]
  %v41 = vld [vmem:[%s1 + $0x2c] sm:$0xf]
  %v42 = vld [vmem:[%s1 + $0x30] sm:$0xf]
  %v43 = vld [vmem:[%s1 + $0x34] sm:$0xf]
  %v44 = vld [vmem:[%s1 + $0x38] sm:$0xf]
  %v45 = vld [vmem:[%s1 + $0x3c] sm:$0xf]
  %v46 = vld [vmem:[%s1 + $0x40] sm:$0xf]
  %v47 = vld [vmem:[%s1 + $0x44] sm:$0xf]
  %v48 = vld [vmem:[%s1 + $0x48] sm:$0xf]
  %v49 = vld [vmem:[%s1 + $0x4c] sm:$0xf]
  %v50 = vld [vmem:[%s1 + $0x50] sm:$0xf]
  %v51 = vld [vmem:[%s1 + $0x54] sm:$0xf]
  %v52 = vld [vmem:[%s1 + $0x58] sm:$0xf]
  %v53 = vld [vmem:[%s1 + $0x5c] sm:$0xf]
  %v54 = vld [vmem:[%s1 + $0x60] sm:$0xf]
  %v55 = vld [vmem:[%s1 + $0x64] sm:$0xf]
  %v56 = vld [vmem:[%s1 + $0x68] sm:$0xf]
  %v57 = vld [vmem:[%s1 + $0x6c] sm:$0xf]
  %v58 = vld [vmem:[%s1 + $0x70] sm:$0xf]
  %v59 = vld [vmem:[%s1 + $0x74] sm:$0xf]
  %v60 = vld [vmem:[%s1 + $0x78] sm:$0xf]
  %v61 = vld [vmem:[%s1 + $0x7c] sm:$0xf]
  %v62 = vld [vmem:[%s1 + $0x80] sm:$0xf]
  %v63 = vld [vmem:[%s1 + $0x84] sm:$0xf]
  %v64 = vld [vmem:[%s1 + $0x88] sm:$0xf]
  %v65 = vld [vmem:[%s1 + $0x8c] sm:$0xf]
  %v66 = vld [vmem:[%s1 + $0x90] sm:$0xf]
  %v67 = vld [vmem:[%s1 + $0x94] sm:$0xf]
  %v68 = vld [vmem:[%s1 + $0x98] sm:$0xf]
  %v69 = vld [vmem:[%s1 + $0x9c] sm:$0xf]
  %v70 = vld [vmem:[%s1 + $0xa0] sm:$0xf]
  %v71 = vld [vmem:[%s1 + $0xa4] sm:$0xf]
  %v72 = vld [vmem:[%s1 + $0xa8] sm:$0xf]
  %v73 = vld [vmem:[%s1 + $0xac] sm:$0xf]
  %v74 = vld [vmem:[%s1 + $0xb0] sm:$0xf]
  %v75 = vld [vmem:[%s1 + $0xb4] sm:$0xf]
  %v76 = vld [vmem:[%s1 + $0xb8] sm:$0xf]
  %v77 = vld [vmem:[%s1 + $0xbc] sm:$0xf]
  %v78 = vld [vmem:[%s1 + $0xc0] sm:$0xf]
  %v79 = vld [vmem:[%s1 + $0xc4] sm:$0xf]
  %v80 = vld [vmem:[%s1 + $0xc8] sm:$0xf]
  %v81 = vld [vmem:[%s1 + $0xcc] sm:$0xf]
  %v82 = vld [vmem:[%s1 + $0xd0] sm:$0xf]
  %v83 = vld [vmem:[%s1 + $0xd4] sm:$0xf]
  %v84 = vld [vmem:[%s1 + $0xd8] sm:$0xf]
  %v85 = vld [vmem:[%s1 + $0xdc] sm:$0xf]
  %v86 = vld [vmem:[%s1 + $0xe0] sm:$0xf]
  %v87 = vld [vmem:[%s1 + $0xe4] sm:$0xf]
  %v88 = vld [vmem:[%s1 + $0xe8] sm:$0xf]
  %v89 = vld [vmem:[%s1 + $0xec] sm:$0xf]
  %v90 = vld [vmem:[%s1 + $0xf0] sm:$0xf]
  %v91 = vld [vmem:[%s1 + $0xf4] sm:$0xf]
  %v92 = vld [vmem:[%s1 + $0xf8] sm:$0xf]
  %v93 = vld [vmem:[%s1 + $0xfc] sm:$0xf]
  %v94 = vld [vmem:[%s1 + $0x100] sm:$0xf]
  %v95 = vld [vmem:[%s1 + $0x104] sm:$0xf]
  %v96 = vld [vmem:[%s1 + $0x108] sm:$0xf]
  %v97 = vld [vmem:[%s1 + $0x10c] sm:$0xf]
  %v98 = vld [vmem:[%s1 + $0x110] sm:$0xf]
  %v99 = vld [vmem:[%s1 + $0x114] sm:$0xf]
  %v100 = vld [vmem:[%s1 + $0x118] sm:$0xf]
  %v101 = vld [vmem:[%s1 + $0x11c] sm:$0xf]
  %v102 = vld [vmem:[%s1 + $0x120] sm:$0xf]
  %v103 = vld [vmem:[%s1 + $0x124] sm:$0xf]
  %v104 = vld [vmem:[%s1 + $0x128] sm:$0xf]
  %v105 = vld [vmem:[%s1 + $0x12c] sm:$0xf]
  %v106 = vld [vmem:[%s1 + $0x130] sm:$0xf]
  %v107 = vld [vmem:[%s1 + $0x134] sm:$0xf]
  %v108 = vld [vmem:[%s1 + $0x138] sm:$0xf]
  %v109 = vld [vmem:[%s1 + $0x13c] sm:$0xf]
  %v122 = vunpack.c.l.b16 %v18
  %v123 = vunpack.c.h.b16 %v18
  %v124 = vunpack.c.l.b16 %v19
  %v125 = vunpack.c.h.b16 %v19
  %v126 = vunpack.c.l.b16 %v20
  %v127 = vunpack.c.l.b16 %v21
  %v128 = vunpack.c.h.b16 %v21
  %v129 = vunpack.c.l.b16 %v22
  %v130 = vunpack.c.h.b16 %v22
  %v131 = vunpack.c.l.b16 %v23
  %v132 = vunpack.c.l.b16 %v24
  %v133 = vunpack.c.h.b16 %v24
  %v134 = vunpack.c.l.b16 %v25
  %v135 = vunpack.c.h.b16 %v25
  %v136 = vunpack.c.l.b16 %v26
  %v137 = vunpack.c.l.b16 %v27
  %v138 = vunpack.c.h.b16 %v27
  %v139 = vunpack.c.l.b16 %v28
  %v140 = vunpack.c.h.b16 %v28
  %v141 = vunpack.c.l.b16 %v29
  %v142 = vpack.c.b16 %v127, %v122
  %v143 = vpack.c.b16 %v128, %v123
  %v144 = vpack.c.b16 %v129, %v124
  %v145 = vpack.c.b16 %v130, %v125
  %v146 = vpack.c.b16 %v131, %v126
  %v147 = vpack.c.b16 %v137, %v132
  %v148 = vpack.c.b16 %v138, %v133
  %v149 = vpack.c.b16 %v139, %v134
  %v150 = vpack.c.b16 %v140, %v135
  %v151 = vpack.c.b16 %v141, %v136
  %v242 = vunpack.c.l.b16 %v30
  %v243 = vunpack.c.l.b16 %v31
  %v244 = vunpack.c.l.b16 %v32
  %v245 = vunpack.c.l.b16 %v33
  %v246 = vunpack.c.l.b16 %v34
  %v247 = vunpack.c.l.b16 %v35
  %v248 = vunpack.c.l.b16 %v36
  %v249 = vunpack.c.l.b16 %v37
  %v250 = vunpack.c.l.b16 %v38
  %v251 = vunpack.c.l.b16 %v39
  %v252 = vunpack.c.l.b16 %v40
  %v253 = vunpack.c.l.b16 %v41
  %v254 = vunpack.c.l.b16 %v42
  %v255 = vunpack.c.l.b16 %v43
  %v256 = vunpack.c.l.b16 %v44
  %v257 = vunpack.c.l.b16 %v45
  %v258 = vunpack.c.l.b16 %v46
  %v259 = vunpack.c.l.b16 %v47
  %v260 = vunpack.c.l.b16 %v48
  %v261 = vunpack.c.l.b16 %v49
  %v262 = vunpack.c.l.b16 %v50
  %v263 = vunpack.c.l.b16 %v51
  %v264 = vunpack.c.l.b16 %v52
  %v265 = vunpack.c.l.b16 %v53
  %v266 = vunpack.c.l.b16 %v54
  %v267 = vunpack.c.l.b16 %v55
  %v268 = vunpack.c.l.b16 %v56
  %v269 = vunpack.c.l.b16 %v57
  %v270 = vunpack.c.l.b16 %v58
  %v271 = vunpack.c.l.b16 %v59
  %v272 = vunpack.c.l.b16 %v60
  %v273 = vunpack.c.l.b16 %v61
  %v274 = vunpack.c.l.b16 %v62
  %v275 = vunpack.c.l.b16 %v63
  %v276 = vunpack.c.l.b16 %v64
  %v277 = vunpack.c.l.b16 %v65
  %v278 = vunpack.c.l.b16 %v66
  %v279 = vunpack.c.l.b16 %v67
  %v280 = vunpack.c.l.b16 %v68
  %v281 = vunpack.c.l.b16 %v69
  %v282 = vunpack.c.l.b16 %v70
  %v283 = vunpack.c.l.b16 %v71
  %v284 = vunpack.c.l.b16 %v72
  %v285 = vunpack.c.l.b16 %v73
  %v286 = vunpack.c.l.b16 %v74
  %v287 = vunpack.c.l.b16 %v75
  %v288 = vunpack.c.l.b16 %v76
  %v289 = vunpack.c.l.b16 %v77
  %v290 = vunpack.c.l.b16 %v78
  %v291 = vunpack.c.l.b16 %v79
  %v292 = vunpack.c.l.b16 %v80
  %v293 = vunpack.c.l.b16 %v81
  %v294 = vunpack.c.l.b16 %v82
  %v295 = vunpack.c.l.b16 %v83
  %v296 = vunpack.c.l.b16 %v84
  %v297 = vunpack.c.l.b16 %v85
  %v298 = vunpack.c.l.b16 %v86
  %v299 = vunpack.c.l.b16 %v87
  %v300 = vunpack.c.l.b16 %v88
  %v301 = vunpack.c.l.b16 %v89
  %v302 = vunpack.c.l.b16 %v90
  %v303 = vunpack.c.l.b16 %v91
  %v304 = vunpack.c.l.b16 %v92
  %v305 = vunpack.c.l.b16 %v93
  %v306 = vunpack.c.l.b16 %v94
  %v307 = vunpack.c.l.b16 %v95
  %v308 = vunpack.c.l.b16 %v96
  %v309 = vunpack.c.l.b16 %v97
  %v310 = vunpack.c.l.b16 %v98
  %v311 = vunpack.c.l.b16 %v99
  %v312 = vunpack.c.l.b16 %v100
  %v313 = vunpack.c.l.b16 %v101
  %v314 = vunpack.c.l.b16 %v102
  %v315 = vunpack.c.l.b16 %v103
  %v316 = vunpack.c.l.b16 %v104
  %v317 = vunpack.c.l.b16 %v105
  %v318 = vunpack.c.l.b16 %v106
  %v319 = vunpack.c.l.b16 %v107
  %v320 = vunpack.c.l.b16 %v108
  %v321 = vunpack.c.l.b16 %v109
  %v322 = vpack.c.b16 %v243, %v242
  %v323 = vpack.c.b16 %v245, %v244
  %v324 = vpack.c.b16 %v247, %v246
  %v325 = vpack.c.b16 %v249, %v248
  %v326 = vpack.c.b16 %v251, %v250
  %v327 = vpack.c.b16 %v253, %v252
  %v328 = vpack.c.b16 %v255, %v254
  %v329 = vpack.c.b16 %v257, %v256
  %v330 = vpack.c.b16 %v259, %v258
  %v331 = vpack.c.b16 %v261, %v260
  %v332 = vpack.c.b16 %v263, %v262
  %v333 = vpack.c.b16 %v265, %v264
  %v334 = vpack.c.b16 %v267, %v266
  %v335 = vpack.c.b16 %v269, %v268
  %v336 = vpack.c.b16 %v271, %v270
  %v337 = vpack.c.b16 %v273, %v272
  %v338 = vpack.c.b16 %v275, %v274
  %v339 = vpack.c.b16 %v277, %v276
  %v340 = vpack.c.b16 %v279, %v278
  %v341 = vpack.c.b16 %v281, %v280
  %v342 = vpack.c.b16 %v283, %v282
  %v343 = vpack.c.b16 %v285, %v284
  %v344 = vpack.c.b16 %v287, %v286
  %v345 = vpack.c.b16 %v289, %v288
  %v346 = vpack.c.b16 %v291, %v290
  %v347 = vpack.c.b16 %v293, %v292
  %v348 = vpack.c.b16 %v295, %v294
  %v349 = vpack.c.b16 %v297, %v296
  %v350 = vpack.c.b16 %v299, %v298
  %v351 = vpack.c.b16 %v301, %v300
  %v352 = vpack.c.b16 %v303, %v302
  %v353 = vpack.c.b16 %v305, %v304
  %v354 = vpack.c.b16 %v307, %v306
  %v355 = vpack.c.b16 %v309, %v308
  %v356 = vpack.c.b16 %v311, %v310
  %v357 = vpack.c.b16 %v313, %v312
  %v358 = vpack.c.b16 %v315, %v314
  %v359 = vpack.c.b16 %v317, %v316
  %v360 = vpack.c.b16 %v319, %v318
  %v361 = vpack.c.b16 %v321, %v320
  %402 = vmatprep.subr.bf16.mxu0 0
  %403 = vmatpush1.bf16.msra.mxu0 %v322
  %404 = vmatprep.subr.bf16.mxu0 0
  %405 = vmatpush1.bf16.msra.mxu0 %v323
  %406 = vmatprep.subr.bf16.mxu0 0
  %407 = vmatpush1.bf16.msra.mxu0 %v324
  %408 = vmatprep.subr.bf16.mxu0 0
  %409 = vmatpush1.bf16.msra.mxu0 %v325
  %410 = vmatprep.subr.bf16.mxu0 0
  %411 = vmatpush1.bf16.msra.mxu0 %v326
  %412 = vmatprep.subr.bf16.mxu0 0
  %413 = vmatpush1.bf16.msra.mxu0 %v327
  %414 = vmatprep.subr.bf16.mxu0 0
  %415 = vmatpush1.bf16.msra.mxu0 %v328
  %416 = vmatprep.subr.bf16.mxu0 0
  %417 = vmatpush1.bf16.msra.mxu0 %v329
  %418 = vmatprep.subr.bf16.mxu0 0
  %419 = vmatpush1.bf16.msra.mxu0 %v330
  %420 = vmatprep.subr.bf16.mxu0 0
  %421 = vmatpush1.bf16.msra.mxu0 %v331
  %422 = vmatprep.subr.bf16.mxu0 0
  %423 = vmatpush1.bf16.msra.mxu0 %v332
  %424 = vmatprep.subr.bf16.mxu0 0
  %425 = vmatpush1.bf16.msra.mxu0 %v333
  %426 = vmatprep.subr.bf16.mxu0 0
  %427 = vmatpush1.bf16.msra.mxu0 %v334
  %428 = vmatprep.subr.bf16.mxu0 0
  %429 = vmatpush1.bf16.msra.mxu0 %v335
  %430 = vmatprep.subr.bf16.mxu0 0
  %431 = vmatpush1.bf16.msra.mxu0 %v336
  %432 = vmatprep.subr.bf16.mxu0 0
  %433 = vmatpush1.bf16.msra.mxu0 %v337
  %434 = vmatprep.mubr.bf16.mxu0 %v143
  %435 = vmatmul.mubr.bf16.gmra.mrb[0].mxu0 %v142
  %v436 = vpop.f32.mrb[0].mxu0
  %v437 = vadd.f32 0.0, %v436
  %v438 = vpop.f32.mrb[0].mxu0
  %v439 = vpop.f32.mrb[0].mxu0
  %v440 = vadd.f32 0.0, %v439
  %v441 = vpop.f32.mrb[0].mxu0
  %442 = vmatprep.mubr.bf16.mxu0 %v148
  %443 = vmatmul.mubr.bf16.gmra.mrb[0].mxu0 %v147
  %v444 = vpop.f32.mrb[0].mxu0
  %v445 = vadd.f32 0.0, %v444
  %v446 = vpop.f32.mrb[0].mxu0
  %v447 = vpop.f32.mrb[0].mxu0
  %v448 = vadd.f32 0.0, %v447
  %v449 = vpop.f32.mrb[0].mxu0
  %450 = vdwg.mxu0
  %451 = vmatprep.subr.bf16.mxu0 0
  %452 = vmatpush1.bf16.msra.mxu0 %v338
  %453 = vmatprep.subr.bf16.mxu0 0
  %454 = vmatpush1.bf16.msra.mxu0 %v339
  %455 = vmatprep.subr.bf16.mxu0 0
  %456 = vmatpush1.bf16.msra.mxu0 %v340
  %457 = vmatprep.subr.bf16.mxu0 0
  %458 = vmatpush1.bf16.msra.mxu0 %v341
  %459 = vmatprep.subr.bf16.mxu0 0
  %460 = vmatpush1.bf16.msra.mxu0 %v342
  %461 = vmatprep.subr.bf16.mxu0 0
  %462 = vmatpush1.bf16.msra.mxu0 %v343
  %463 = vmatprep.subr.bf16.mxu0 0
  %464 = vmatpush1.bf16.msra.mxu0 %v344
  %465 = vmatprep.subr.bf16.mxu0 0
  %466 = vmatpush1.bf16.msra.mxu0 %v345
  %467 = vmatprep.subr.bf16.mxu0 0
  %468 = vmatpush1.bf16.msra.mxu0 %v346
  %469 = vmatprep.subr.bf16.mxu0 0
  %470 = vmatpush1.bf16.msra.mxu0 %v347
  %471 = vmatprep.subr.bf16.mxu0 0
  %472 = vmatpush1.bf16.msra.mxu0 %v348
  %473 = vmatprep.subr.bf16.mxu0 0
  %474 = vmatpush1.bf16.msra.mxu0 %v349
  %475 = vmatprep.subr.bf16.mxu0 0
  %476 = vmatpush1.bf16.msra.mxu0 %v350
  %477 = vmatprep.subr.bf16.mxu0 0
  %478 = vmatpush1.bf16.msra.mxu0 %v351
  %479 = vmatprep.subr.bf16.mxu0 0
  %480 = vmatpush1.bf16.msra.mxu0 %v352
  %481 = vmatprep.subr.bf16.mxu0 0
  %482 = vmatpush1.bf16.msra.mxu0 %v353
  %483 = vmatprep.mubr.bf16.mxu0 %v145
  %484 = vmatmul.mubr.bf16.gmra.mrb[0].mxu0 %v144
  %v485 = vpop.f32.mrb[0].mxu0
  %v486 = vadd.f32 %v437, %v485
  %v487 = vpop.f32.mrb[0].mxu0
  %v488 = vpop.f32.mrb[0].mxu0
  %v489 = vadd.f32 %v440, %v488
  %v490 = vpop.f32.mrb[0].mxu0
  %491 = vmatprep.mubr.bf16.mxu0 %v150
  %492 = vmatmul.mubr.bf16.gmra.mrb[0].mxu0 %v149
  %v493 = vpop.f32.mrb[0].mxu0
  %v494 = vadd.f32 %v445, %v493
  %v495 = vpop.f32.mrb[0].mxu0
  %v496 = vpop.f32.mrb[0].mxu0
  %v497 = vadd.f32 %v448, %v496
  %v498 = vpop.f32.mrb[0].mxu0
  %499 = vdwg.mxu0
  %500 = vmatprep.subr.bf16.mxu0 0
  %501 = vmatpush1.bf16.msra.mxu0 %v354
  %502 = vmatprep.subr.bf16.mxu0 0
  %503 = vmatpush1.bf16.msra.mxu0 %v355
  %504 = vmatprep.subr.bf16.mxu0 0
  %505 = vmatpush1.bf16.msra.mxu0 %v356
  %506 = vmatprep.subr.bf16.mxu0 0
  %507 = vmatpush1.bf16.msra.mxu0 %v357
  %508 = vmatprep.subr.bf16.mxu0 0
  %509 = vmatpush1.bf16.msra.mxu0 %v358
  %510 = vmatprep.subr.bf16.mxu0 0
  %511 = vmatpush1.bf16.msra.mxu0 %v359
  %512 = vmatprep.subr.bf16.mxu0 0
  %513 = vmatpush1.bf16.msra.mxu0 %v360
  %514 = vmatprep.subr.bf16.mxu0 0
  %515 = vmatpush1.bf16.msra.mxu0 %v361
  %516 = vmatprep.subr.bf16.mxu0 0
  %517 = vmatpush1.bf16.msra.mxu0 0
  %518 = vmatprep.subr.bf16.mxu0 0
  %519 = vmatpush1.bf16.msra.mxu0 0
  %520 = vmatprep.subr.bf16.mxu0 0
  %521 = vmatpush1.bf16.msra.mxu0 0
  %522 = vmatprep.subr.bf16.mxu0 0
  %523 = vmatpush1.bf16.msra.mxu0 0
  %524 = vmatprep.subr.bf16.mxu0 0
  %525 = vmatpush1.bf16.msra.mxu0 0
  %526 = vmatprep.subr.bf16.mxu0 0
  %527 = vmatpush1.bf16.msra.mxu0 0
  %528 = vmatprep.subr.bf16.mxu0 0
  %529 = vmatpush1.bf16.msra.mxu0 0
  %530 = vmatprep.subr.bf16.mxu0 0
  %531 = vmatpush1.bf16.msra.mxu0 0
  %532 = vmatprep.mubr.bf16.mxu0 0
  %533 = vmatmul.mubr.bf16.gmra.mrb[0].mxu0 %v146
  %v534 = vpop.f32.mrb[0].mxu0
  %v535 = vadd.f32 %v486, %v534
  %v536 = vpop.f32.mrb[0].mxu0
  %v537 = vpop.f32.mrb[0].mxu0
  %v538 = vadd.f32 %v489, %v537
  %v539 = vpop.f32.mrb[0].mxu0
  %540 = vmatprep.mubr.bf16.mxu0 0
  %541 = vmatmul.mubr.bf16.gmra.mrb[0].mxu0 %v151
  %v542 = vpop.f32.mrb[0].mxu0
  %v543 = vadd.f32 %v494, %v542
  %v544 = vpop.f32.mrb[0].mxu0
  %v545 = vpop.f32.mrb[0].mxu0
  %v546 = vadd.f32 %v497, %v545
  %v547 = vpop.f32.mrb[0].mxu0
  %548 = vdwg.mxu0
  %549 = vst [vmem:[#allocation2] sm:$0xff] %v535
  %550 = vst [vmem:[#allocation2 + $0x8] sm:$0xff] %v538
  %551 = vst [vmem:[#allocation2 + $0x10] sm:$0xff] %v543
  %552 = vst [vmem:[#allocation2 + $0x18] sm:$0xff] %v546
  %p553 = scmp.eq.s32.totalorder 0, 0
  // Predicated region
  $region18: #{resnet_forward.15} parent=0 // pred_check
    %p554 = pneg %p553
  $region19: #{resnet_forward.15} parent=0 // pred_check_branch
    %556 = sbr.rel (%p554) target = $region21
  $region20: #{resnet_forward.15} parent=0 // pred_region
    %v557 = vld [vmem:[#allocation2] sm:$0xff]
    %v558 = vld [vmem:[#allocation2 + $0x8] sm:$0xff]
    %v559 = vld [vmem:[#allocation2 + $0x10] sm:$0xff]
    %v560 = vld [vmem:[#allocation2 + $0x18] sm:$0xff]
    %v561 = vadd.f32 %v557, %v558
    %v562 = vadd.f32 %v561, %v559
    %v563 = vadd.f32 %v562, %v560
    %v564 = vrot.slane %v563, 4
    %v565 = vadd.f32 %v563, %v564
    %v566 = vrot.slane %v565, 2
    %v567 = vadd.f32 %v565, %v566
    %v568 = vrot.slane %v567, 1
    %v569 = vadd.f32 %v567, %v568
    %v570 = vmul.f32 %v569, 0.03125
    %v571 = vsub.f32 %v557, %v570
    %v572 = vsub.f32 %v558, %v570
    %v573 = vsub.f32 %v559, %v570
    %v574 = vsub.f32 %v560, %v570
    %v575 = vmul.f32 %v571, %v571
    %v576 = vmul.f32 %v572, %v572
    %v577 = vmul.f32 %v573, %v573
    %v578 = vmul.f32 %v574, %v574
    %v579 = vadd.f32 %v575, %v576
    %v580 = vadd.f32 %v579, %v577
    %v581 = vadd.f32 %v580, %v578
    %v582 = vrot.slane %v581, 4
    %v583 = vadd.f32 %v581, %v582
    %v584 = vrot.slane %v583, 2
    %v585 = vadd.f32 %v583, %v584
    %v586 = vrot.slane %v585, 1
    %v587 = vadd.f32 %v585, %v586
    %v588 = vmul.f32 %v570, 0.0
    %v589 = vmul.f32 %v588, %v570
    %v590 = vsub.f32 %v587, %v589
    %v591 = vmul.f32 %v590, 0.03125
    %v592 = vmax.f32 %v591, 0.0
    %v593 = vld [vmem:[%s2] sm:$0x1]
    %v594 = vadd.f32 %v592, 1e-05
    %v595 = vrsqrt.pop %v594
    %v596 = vmul.f32 %v593, %v595
    %v597 = vld [vmem:[%s2 + $0x1] sm:$0x1]
    %v598 = vmul.f32 %v570, %v596
    %v599 = vsub.f32 %v597, %v598
    %v600 = vlaneseq
    %v601 = vshrl.u32 %v600, 7
    %v602 = vsub.s32 0, %v601
    %v603 = vrot.slane %v596, %v602
    %v604 = vmul.f32 %v557, %v603
    %v605 = vmul.f32 %v558, %v603
    %v606 = vmul.f32 %v559, %v603
    %v607 = vmul.f32 %v560, %v603
    %v608 = vlaneseq
    %v609 = vshrl.u32 %v608, 7
    %v610 = vsub.s32 0, %v609
    %v611 = vrot.slane %v599, %v610
    %v612 = vadd.f32 %v604, %v611
    %v613 = vadd.f32 %v605, %v611
    %v614 = vadd.f32 %v606, %v611
    %v615 = vadd.f32 %v607, %v611
    %v616 = vld [vmem:[%s3] sm:$0xff]
    %v617 = vld [vmem:[%s3 + $0x8] sm:$0xff]
    %v618 = vld [vmem:[%s3 + $0x10] sm:$0xff]
    %v619 = vld [vmem:[%s3 + $0x18] sm:$0xff]
    %v620 = vadd.f32 %v612, %v616
    %v621 = vadd.f32 %v613, %v617
    %v622 = vadd.f32 %v614, %v618
    %v623 = vadd.f32 %v615, %v619
    %v624 = vmax.f32 %v620, 0.0
    %v625 = vmax.f32 %v621, 0.0
    %v626 = vmax.f32 %v622, 0.0
    %v627 = vmax.f32 %v623, 0.0
    %v628 = vpack.c.bf16 %v625, %v624
    %v629 = vpack.c.bf16 %v627, %v626
    %v632 = vunpack.c.l.b16 %v628
    %v633 = vunpack.c.h.b16 %v628
    %v634 = vunpack.c.l.b16 %v629
    %v635 = vunpack.c.h.b16 %v629
    %v636 = vpack.c.b16 %v632, %v632
    %v637 = vpack.c.b16 %v633, %v633
    %v638 = vpack.c.b16 %v634, %v634
    %v639 = vpack.c.b16 %v635, %v635
    %644 = vst [vmem:[%s4] sm:$0xf] %v636
    %645 = vst [vmem:[%s4 + $0x4] sm:$0xf] %v637
    %646 = vst [vmem:[%s4 + $0x8] sm:$0xf] %v638
    %647 = vst [vmem:[%s4 + $0xc] sm:$0xf] %v639
  $region21: #{resnet_forward.15} parent=0 // pred_fallthru
    _
  // Predicated region
  $region22: #{resnet_forward.15} parent=0 // pred_check
    _
  $region23: #{resnet_forward.15} parent=0 // pred_check_branch
    %649 = sbr.rel (0) target = $region25
  $region24: #{resnet_forward.15} parent=0 // pred_region
    _
  $region25: #{resnet_forward.15} parent=0 // pred_fallthru
    _
  // Predicated region
  $region26: #{resnet_forward.15} parent=0 // pred_check
    _
  $region27: #{resnet_forward.15} parent=0 // pred_check_branch
    %651 = sbr.rel (0) target = $region29
  $region28: #{resnet_forward.15} parent=0 // pred_region
    _
  $region29: #{resnet_forward.15} parent=0 // pred_fallthru
    _

// kernel: resnet_forward.16
$region0: #{resnet_forward.16}
  #allocation0 [shape = 'u32[]', space=smem, size = 0x4, offset = 0x4, fixed_abs, tag = 'smem constant byte address 0x4 - core index']
  #allocation1 [shape = 'u32[144,128]{1,0:T(1,128)}', space=vmem, size = 0x12000, scoped, tag = 'internal scratch']
  #allocation2 [shape = 'f32[8,256]{1,0:T(8,128)}', space=vmem, size = 0x2000, scoped, tag = 'scratch operand']
  %s0 = inlined_call_operand.vmem [shape: bf16[8,640], index: 0, kind: input, shape index: {}]
  %s1 = inlined_call_operand.vmem [shape: bf16[640,256], index: 1, kind: input, shape index: {}]
  %s2 = inlined_call_operand.vmem [shape: f32[2,256], index: 2, kind: input, shape index: {}]
  %s3 = inlined_call_operand.vmem [shape: bf16[8,128], index: 3, kind: output, shape index: {0}]
  %s4 = inlined_call_operand.vmem [shape: f32[8,128], index: 4, kind: output, shape index: {1}]
  %5 = xla_tuple %s3, %s4
  %s6 = sld [smem:[#allocation0]]
  $region34: #{resnet_forward.16} parent=0
    _
  %s8 = ssub.s32 1, %s6
  %s9 = scalar_select 0, %s8, %s6
  // Predicated region
  $region2: #{resnet_forward.16} parent=0 // pred_check
    _
  $region3: #{resnet_forward.16} parent=0 // pred_check_branch
    %11 = sbr.rel (0) target = $region5
  $region4: #{resnet_forward.16} parent=0 // pred_region
    _
  $region5: #{resnet_forward.16} parent=0 // pred_fallthru
    _
  // Predicated region
  $region6: #{resnet_forward.16} parent=0 // pred_check
    _
  $region7: #{resnet_forward.16} parent=0 // pred_check_branch
    %13 = sbr.rel (0) target = $region9
  $region8: #{resnet_forward.16} parent=0 // pred_region
    _
  $region9: #{resnet_forward.16} parent=0 // pred_fallthru
    _
  // Predicated region
  $region10: #{resnet_forward.16} parent=0 // pred_check
    _
  $region11: #{resnet_forward.16} parent=0 // pred_check_branch
    %15 = sbr.rel (0) target = $region13
  $region12: #{resnet_forward.16} parent=0 // pred_region
    _
  $region13: #{resnet_forward.16} parent=0 // pred_fallthru
    _
  %v17 = vld [vmem:[%s0] sm:$0xff]
  %v18 = vld [vmem:[%s0 + $0x8] sm:$0xff]
  %v19 = vld [vmem:[%s0 + $0x10] sm:$0xf]
  %v20 = vld [vmem:[%s1] sm:$0xff]
  %v21 = vld [vmem:[%s1 + $0x8] sm:$0xff]
  %v22 = vld [vmem:[%s1 + $0x10] sm:$0xff]
  %v23 = vld [vmem:[%s1 + $0x18] sm:$0xff]
  %v24 = vld [vmem:[%s1 + $0x20] sm:$0xff]
  %v25 = vld [vmem:[%s1 + $0x28] sm:$0xff]
  %v26 = vld [vmem:[%s1 + $0x30] sm:$0xff]
  %v27 = vld [vmem:[%s1 + $0x38] sm:$0xff]
  %v28 = vld [vmem:[%s1 + $0x40] sm:$0xff]
  %v29 = vld [vmem:[%s1 + $0x48] sm:$0xff]
  %v30 = vld [vmem:[%s1 + $0x50] sm:$0xff]
  %v31 = vld [vmem:[%s1 + $0x58] sm:$0xff]
  %v32 = vld [vmem:[%s1 + $0x60] sm:$0xff]
  %v33 = vld [vmem:[%s1 + $0x68] sm:$0xff]
  %v34 = vld [vmem:[%s1 + $0x70] sm:$0xff]
  %v35 = vld [vmem:[%s1 + $0x78] sm:$0xff]
  %v36 = vld [vmem:[%s1 + $0x80] sm:$0xff]
  %v37 = vld [vmem:[%s1 + $0x88] sm:$0xff]
  %v38 = vld [vmem:[%s1 + $0x90] sm:$0xff]
  %v39 = vld [vmem:[%s1 + $0x98] sm:$0xff]
  %v40 = vld [vmem:[%s1 + $0xa0] sm:$0xff]
  %v41 = vld [vmem:[%s1 + $0xa8] sm:$0xff]
  %v42 = vld [vmem:[%s1 + $0xb0] sm:$0xff]
  %v43 = vld [vmem:[%s1 + $0xb8] sm:$0xff]
  %v44 = vld [vmem:[%s1 + $0xc0] sm:$0xff]
  %v45 = vld [vmem:[%s1 + $0xc8] sm:$0xff]
  %v46 = vld [vmem:[%s1 + $0xd0] sm:$0xff]
  %v47 = vld [vmem:[%s1 + $0xd8] sm:$0xff]
  %v48 = vld [vmem:[%s1 + $0xe0] sm:$0xff]
  %v49 = vld [vmem:[%s1 + $0xe8] sm:$0xff]
  %v50 = vld [vmem:[%s1 + $0xf0] sm:$0xff]
  %v51 = vld [vmem:[%s1 + $0xf8] sm:$0xff]
  %v52 = vld [vmem:[%s1 + $0x100] sm:$0xff]
  %v53 = vld [vmem:[%s1 + $0x108] sm:$0xff]
  %v54 = vld [vmem:[%s1 + $0x110] sm:$0xff]
  %v55 = vld [vmem:[%s1 + $0x118] sm:$0xff]
  %v56 = vld [vmem:[%s1 + $0x120] sm:$0xff]
  %v57 = vld [vmem:[%s1 + $0x128] sm:$0xff]
  %v58 = vld [vmem:[%s1 + $0x130] sm:$0xff]
  %v59 = vld [vmem:[%s1 + $0x138] sm:$0xff]
  %v60 = vld [vmem:[%s1 + $0x140] sm:$0xff]
  %v61 = vld [vmem:[%s1 + $0x148] sm:$0xff]
  %v62 = vld [vmem:[%s1 + $0x150] sm:$0xff]
  %v63 = vld [vmem:[%s1 + $0x158] sm:$0xff]
  %v64 = vld [vmem:[%s1 + $0x160] sm:$0xff]
  %v65 = vld [vmem:[%s1 + $0x168] sm:$0xff]
  %v66 = vld [vmem:[%s1 + $0x170] sm:$0xff]
  %v67 = vld [vmem:[%s1 + $0x178] sm:$0xff]
  %v68 = vld [vmem:[%s1 + $0x180] sm:$0xff]
  %v69 = vld [vmem:[%s1 + $0x188] sm:$0xff]
  %v70 = vld [vmem:[%s1 + $0x190] sm:$0xff]
  %v71 = vld [vmem:[%s1 + $0x198] sm:$0xff]
  %v72 = vld [vmem:[%s1 + $0x1a0] sm:$0xff]
  %v73 = vld [vmem:[%s1 + $0x1a8] sm:$0xff]
  %v74 = vld [vmem:[%s1 + $0x1b0] sm:$0xff]
  %v75 = vld [vmem:[%s1 + $0x1b8] sm:$0xff]
  %v76 = vld [vmem:[%s1 + $0x1c0] sm:$0xff]
  %v77 = vld [vmem:[%s1 + $0x1c8] sm:$0xff]
  %v78 = vld [vmem:[%s1 + $0x1d0] sm:$0xff]
  %v79 = vld [vmem:[%s1 + $0x1d8] sm:$0xff]
  %v80 = vld [vmem:[%s1 + $0x1e0] sm:$0xff]
  %v81 = vld [vmem:[%s1 + $0x1e8] sm:$0xff]
  %v82 = vld [vmem:[%s1 + $0x1f0] sm:$0xff]
  %v83 = vld [vmem:[%s1 + $0x1f8] sm:$0xff]
  %v84 = vld [vmem:[%s1 + $0x200] sm:$0xff]
  %v85 = vld [vmem:[%s1 + $0x208] sm:$0xff]
  %v86 = vld [vmem:[%s1 + $0x210] sm:$0xff]
  %v87 = vld [vmem:[%s1 + $0x218] sm:$0xff]
  %v88 = vld [vmem:[%s1 + $0x220] sm:$0xff]
  %v89 = vld [vmem:[%s1 + $0x228] sm:$0xff]
  %v90 = vld [vmem:[%s1 + $0x230] sm:$0xff]
  %v91 = vld [vmem:[%s1 + $0x238] sm:$0xff]
  %v92 = vld [vmem:[%s1 + $0x240] sm:$0xff]
  %v93 = vld [vmem:[%s1 + $0x248] sm:$0xff]
  %v94 = vld [vmem:[%s1 + $0x250] sm:$0xff]
  %v95 = vld [vmem:[%s1 + $0x258] sm:$0xff]
  %v96 = vld [vmem:[%s1 + $0x260] sm:$0xff]
  %v97 = vld [vmem:[%s1 + $0x268] sm:$0xff]
  %v98 = vld [vmem:[%s1 + $0x270] sm:$0xff]
  %v99 = vld [vmem:[%s1 + $0x278] sm:$0xff]
  %v103 = vunpack.c.l.b16 %v17
  %v104 = vunpack.c.h.b16 %v17
  %v105 = vunpack.c.l.b16 %v18
  %v106 = vunpack.c.h.b16 %v18
  %v107 = vunpack.c.l.b16 %v19
  %v108 = vpack.c.b16 %v103, %v103
  %v109 = vpack.c.b16 %v104, %v104
  %v110 = vpack.c.b16 %v105, %v105
  %v111 = vpack.c.b16 %v106, %v106
  %v112 = vpack.c.b16 %v107, %v107
  %v198 = vunpack.c.l.b16 %v20
  %v199 = vunpack.c.h.b16 %v20
  %v200 = vunpack.c.l.b16 %v21
  %v201 = vunpack.c.h.b16 %v21
  %v202 = vunpack.c.l.b16 %v22
  %v203 = vunpack.c.h.b16 %v22
  %v204 = vunpack.c.l.b16 %v23
  %v205 = vunpack.c.h.b16 %v23
  %v206 = vunpack.c.l.b16 %v24
  %v207 = vunpack.c.h.b16 %v24
  %v208 = vunpack.c.l.b16 %v25
  %v209 = vunpack.c.h.b16 %v25
  %v210 = vunpack.c.l.b16 %v26
  %v211 = vunpack.c.h.b16 %v26
  %v212 = vunpack.c.l.b16 %v27
  %v213 = vunpack.c.h.b16 %v27
  %v214 = vunpack.c.l.b16 %v28
  %v215 = vunpack.c.h.b16 %v28
  %v216 = vunpack.c.l.b16 %v29
  %v217 = vunpack.c.h.b16 %v29
  %v218 = vunpack.c.l.b16 %v30
  %v219 = vunpack.c.h.b16 %v30
  %v220 = vunpack.c.l.b16 %v31
  %v221 = vunpack.c.h.b16 %v31
  %v222 = vunpack.c.l.b16 %v32
  %v223 = vunpack.c.h.b16 %v32
  %v224 = vunpack.c.l.b16 %v33
  %v225 = vunpack.c.h.b16 %v33
  %v226 = vunpack.c.l.b16 %v34
  %v227 = vunpack.c.h.b16 %v34
  %v228 = vunpack.c.l.b16 %v35
  %v229 = vunpack.c.h.b16 %v35
  %v230 = vunpack.c.l.b16 %v36
  %v231 = vunpack.c.h.b16 %v36
  %v232 = vunpack.c.l.b16 %v37
  %v233 = vunpack.c.h.b16 %v37
  %v234 = vunpack.c.l.b16 %v38
  %v235 = vunpack.c.h.b16 %v38
  %v236 = vunpack.c.l.b16 %v39
  %v237 = vunpack.c.h.b16 %v39
  %v238 = vunpack.c.l.b16 %v40
  %v239 = vunpack.c.h.b16 %v40
  %v240 = vunpack.c.l.b16 %v41
  %v241 = vunpack.c.h.b16 %v41
  %v242 = vunpack.c.l.b16 %v42
  %v243 = vunpack.c.h.b16 %v42
  %v244 = vunpack.c.l.b16 %v43
  %v245 = vunpack.c.h.b16 %v43
  %v246 = vunpack.c.l.b16 %v44
  %v247 = vunpack.c.h.b16 %v44
  %v248 = vunpack.c.l.b16 %v45
  %v249 = vunpack.c.h.b16 %v45
  %v250 = vunpack.c.l.b16 %v46
  %v251 = vunpack.c.h.b16 %v46
  %v252 = vunpack.c.l.b16 %v47
  %v253 = vunpack.c.h.b16 %v47
  %v254 = vunpack.c.l.b16 %v48
  %v255 = vunpack.c.h.b16 %v48
  %v256 = vunpack.c.l.b16 %v49
  %v257 = vunpack.c.h.b16 %v49
  %v258 = vunpack.c.l.b16 %v50
  %v259 = vunpack.c.h.b16 %v50
  %v260 = vunpack.c.l.b16 %v51
  %v261 = vunpack.c.h.b16 %v51
  %v262 = vunpack.c.l.b16 %v52
  %v263 = vunpack.c.h.b16 %v52
  %v264 = vunpack.c.l.b16 %v53
  %v265 = vunpack.c.h.b16 %v53
  %v266 = vunpack.c.l.b16 %v54
  %v267 = vunpack.c.h.b16 %v54
  %v268 = vunpack.c.l.b16 %v55
  %v269 = vunpack.c.h.b16 %v55
  %v270 = vunpack.c.l.b16 %v56
  %v271 = vunpack.c.h.b16 %v56
  %v272 = vunpack.c.l.b16 %v57
  %v273 = vunpack.c.h.b16 %v57
  %v274 = vunpack.c.l.b16 %v58
  %v275 = vunpack.c.h.b16 %v58
  %v276 = vunpack.c.l.b16 %v59
  %v277 = vunpack.c.h.b16 %v59
  %v278 = vunpack.c.l.b16 %v60
  %v279 = vunpack.c.h.b16 %v60
  %v280 = vunpack.c.l.b16 %v61
  %v281 = vunpack.c.h.b16 %v61
  %v282 = vunpack.c.l.b16 %v62
  %v283 = vunpack.c.h.b16 %v62
  %v284 = vunpack.c.l.b16 %v63
  %v285 = vunpack.c.h.b16 %v63
  %v286 = vunpack.c.l.b16 %v64
  %v287 = vunpack.c.h.b16 %v64
  %v288 = vunpack.c.l.b16 %v65
  %v289 = vunpack.c.h.b16 %v65
  %v290 = vunpack.c.l.b16 %v66
  %v291 = vunpack.c.h.b16 %v66
  %v292 = vunpack.c.l.b16 %v67
  %v293 = vunpack.c.h.b16 %v67
  %v294 = vunpack.c.l.b16 %v68
  %v295 = vunpack.c.h.b16 %v68
  %v296 = vunpack.c.l.b16 %v69
  %v297 = vunpack.c.h.b16 %v69
  %v298 = vunpack.c.l.b16 %v70
  %v299 = vunpack.c.h.b16 %v70
  %v300 = vunpack.c.l.b16 %v71
  %v301 = vunpack.c.h.b16 %v71
  %v302 = vunpack.c.l.b16 %v72
  %v303 = vunpack.c.h.b16 %v72
  %v304 = vunpack.c.l.b16 %v73
  %v305 = vunpack.c.h.b16 %v73
  %v306 = vunpack.c.l.b16 %v74
  %v307 = vunpack.c.h.b16 %v74
  %v308 = vunpack.c.l.b16 %v75
  %v309 = vunpack.c.h.b16 %v75
  %v310 = vunpack.c.l.b16 %v76
  %v311 = vunpack.c.h.b16 %v76
  %v312 = vunpack.c.l.b16 %v77
  %v313 = vunpack.c.h.b16 %v77
  %v314 = vunpack.c.l.b16 %v78
  %v315 = vunpack.c.h.b16 %v78
  %v316 = vunpack.c.l.b16 %v79
  %v317 = vunpack.c.h.b16 %v79
  %v318 = vunpack.c.l.b16 %v80
  %v319 = vunpack.c.h.b16 %v80
  %v320 = vunpack.c.l.b16 %v81
  %v321 = vunpack.c.h.b16 %v81
  %v322 = vunpack.c.l.b16 %v82
  %v323 = vunpack.c.h.b16 %v82
  %v324 = vunpack.c.l.b16 %v83
  %v325 = vunpack.c.h.b16 %v83
  %v326 = vunpack.c.l.b16 %v84
  %v327 = vunpack.c.h.b16 %v84
  %v328 = vunpack.c.l.b16 %v85
  %v329 = vunpack.c.h.b16 %v85
  %v330 = vunpack.c.l.b16 %v86
  %v331 = vunpack.c.h.b16 %v86
  %v332 = vunpack.c.l.b16 %v87
  %v333 = vunpack.c.h.b16 %v87
  %v334 = vunpack.c.l.b16 %v88
  %v335 = vunpack.c.h.b16 %v88
  %v336 = vunpack.c.l.b16 %v89
  %v337 = vunpack.c.h.b16 %v89
  %v338 = vunpack.c.l.b16 %v90
  %v339 = vunpack.c.h.b16 %v90
  %v340 = vunpack.c.l.b16 %v91
  %v341 = vunpack.c.h.b16 %v91
  %v342 = vunpack.c.l.b16 %v92
  %v343 = vunpack.c.h.b16 %v92
  %v344 = vunpack.c.l.b16 %v93
  %v345 = vunpack.c.h.b16 %v93
  %v346 = vunpack.c.l.b16 %v94
  %v347 = vunpack.c.h.b16 %v94
  %v348 = vunpack.c.l.b16 %v95
  %v349 = vunpack.c.h.b16 %v95
  %v350 = vunpack.c.l.b16 %v96
  %v351 = vunpack.c.h.b16 %v96
  %v352 = vunpack.c.l.b16 %v97
  %v353 = vunpack.c.h.b16 %v97
  %v354 = vunpack.c.l.b16 %v98
  %v355 = vunpack.c.h.b16 %v98
  %v356 = vunpack.c.l.b16 %v99
  %v357 = vunpack.c.h.b16 %v99
  %v358 = vpack.c.b16 %v200, %v198
  %v359 = vpack.c.b16 %v201, %v199
  %v360 = vpack.c.b16 %v204, %v202
  %v361 = vpack.c.b16 %v205, %v203
  %v362 = vpack.c.b16 %v208, %v206
  %v363 = vpack.c.b16 %v209, %v207
  %v364 = vpack.c.b16 %v212, %v210
  %v365 = vpack.c.b16 %v213, %v211
  %v366 = vpack.c.b16 %v216, %v214
  %v367 = vpack.c.b16 %v217, %v215
  %v368 = vpack.c.b16 %v220, %v218
  %v369 = vpack.c.b16 %v221, %v219
  %v370 = vpack.c.b16 %v224, %v222
  %v371 = vpack.c.b16 %v225, %v223
  %v372 = vpack.c.b16 %v228, %v226
  %v373 = vpack.c.b16 %v229, %v227
  %v374 = vpack.c.b16 %v232, %v230
  %v375 = vpack.c.b16 %v233, %v231
  %v376 = vpack.c.b16 %v236, %v234
  %v377 = vpack.c.b16 %v237, %v235
  %v378 = vpack.c.b16 %v240, %v238
  %v379 = vpack.c.b16 %v241, %v239
  %v380 = vpack.c.b16 %v244, %v242
  %v381 = vpack.c.b16 %v245, %v243
  %v382 = vpack.c.b16 %v248, %v246
  %v383 = vpack.c.b16 %v249, %v247
  %v384 = vpack.c.b16 %v252, %v250
  %v385 = vpack.c.b16 %v253, %v251
  %v386 = vpack.c.b16 %v256, %v254
  %v387 = vpack.c.b16 %v257, %v255
  %v388 = vpack.c.b16 %v260, %v258
  %v389 = vpack.c.b16 %v261, %v259
  %v390 = vpack.c.b16 %v264, %v262
  %v391 = vpack.c.b16 %v265, %v263
  %v392 = vpack.c.b16 %v268, %v266
  %v393 = vpack.c.b16 %v269, %v267
  %v394 = vpack.c.b16 %v272, %v270
  %v395 = vpack.c.b16 %v273, %v271
  %v396 = vpack.c.b16 %v276, %v274
  %v397 = vpack.c.b16 %v277, %v275
  %v398 = vpack.c.b16 %v280, %v278
  %v399 = vpack.c.b16 %v281, %v279
  %v400 = vpack.c.b16 %v284, %v282
  %v401 = vpack.c.b16 %v285, %v283
  %v402 = vpack.c.b16 %v288, %v286
  %v403 = vpack.c.b16 %v289, %v287
  %v404 = vpack.c.b16 %v292, %v290
  %v405 = vpack.c.b16 %v293, %v291
  %v406 = vpack.c.b16 %v296, %v294
  %v407 = vpack.c.b16 %v297, %v295
  %v408 = vpack.c.b16 %v300, %v298
  %v409 = vpack.c.b16 %v301, %v299
  %v410 = vpack.c.b16 %v304, %v302
  %v411 = vpack.c.b16 %v305, %v303
  %v412 = vpack.c.b16 %v308, %v306
  %v413 = vpack.c.b16 %v309, %v307
  %v414 = vpack.c.b16 %v312, %v310
  %v415 = vpack.c.b16 %v313, %v311
  %v416 = vpack.c.b16 %v316, %v314
  %v417 = vpack.c.b16 %v317, %v315
  %v418 = vpack.c.b16 %v320, %v318
  %v419 = vpack.c.b16 %v321, %v319
  %v420 = vpack.c.b16 %v324, %v322
  %v421 = vpack.c.b16 %v325, %v323
  %v422 = vpack.c.b16 %v328, %v326
  %v423 = vpack.c.b16 %v329, %v327
  %v424 = vpack.c.b16 %v332, %v330
  %v425 = vpack.c.b16 %v333, %v331
  %v426 = vpack.c.b16 %v336, %v334
  %v427 = vpack.c.b16 %v337, %v335
  %v428 = vpack.c.b16 %v340, %v338
  %v429 = vpack.c.b16 %v341, %v339
  %v430 = vpack.c.b16 %v344, %v342
  %v431 = vpack.c.b16 %v345, %v343
  %v432 = vpack.c.b16 %v348, %v346
  %v433 = vpack.c.b16 %v349, %v347
  %v434 = vpack.c.b16 %v352, %v350
  %v435 = vpack.c.b16 %v353, %v351
  %v436 = vpack.c.b16 %v356, %v354
  %v437 = vpack.c.b16 %v357, %v355
  %518 = vmatprep.subr.bf16.mxu0 %v359
  %519 = vmatpush1.bf16.msra.mxu0 %v358
  %520 = vmatprep.subr.bf16.mxu0 %v361
  %521 = vmatpush1.bf16.msra.mxu0 %v360
  %522 = vmatprep.subr.bf16.mxu0 %v363
  %523 = vmatpush1.bf16.msra.mxu0 %v362
  %524 = vmatprep.subr.bf16.mxu0 %v365
  %525 = vmatpush1.bf16.msra.mxu0 %v364
  %526 = vmatprep.subr.bf16.mxu0 %v367
  %527 = vmatpush1.bf16.msra.mxu0 %v366
  %528 = vmatprep.subr.bf16.mxu0 %v369
  %529 = vmatpush1.bf16.msra.mxu0 %v368
  %530 = vmatprep.subr.bf16.mxu0 %v371
  %531 = vmatpush1.bf16.msra.mxu0 %v370
  %532 = vmatprep.subr.bf16.mxu0 %v373
  %533 = vmatpush1.bf16.msra.mxu0 %v372
  %534 = vmatprep.subr.bf16.mxu0 %v375
  %535 = vmatpush1.bf16.msra.mxu0 %v374
  %536 = vmatprep.subr.bf16.mxu0 %v377
  %537 = vmatpush1.bf16.msra.mxu0 %v376
  %538 = vmatprep.subr.bf16.mxu0 %v379
  %539 = vmatpush1.bf16.msra.mxu0 %v378
  %540 = vmatprep.subr.bf16.mxu0 %v381
  %541 = vmatpush1.bf16.msra.mxu0 %v380
  %542 = vmatprep.subr.bf16.mxu0 %v383
  %543 = vmatpush1.bf16.msra.mxu0 %v382
  %544 = vmatprep.subr.bf16.mxu0 %v385
  %545 = vmatpush1.bf16.msra.mxu0 %v384
  %546 = vmatprep.subr.bf16.mxu0 %v387
  %547 = vmatpush1.bf16.msra.mxu0 %v386
  %548 = vmatprep.subr.bf16.mxu0 %v389
  %549 = vmatpush1.bf16.msra.mxu0 %v388
  %550 = vmatprep.mubr.bf16.mxu0 %v109
  %551 = vmatmul.mubr.bf16.gmra.mrb[0].mxu0 %v108
  %v552 = vpop.f32.mrb[0].mxu0
  %v553 = vadd.f32 0.0, %v552
  %v554 = vpop.f32.mrb[0].mxu0
  %v555 = vadd.f32 0.0, %v554
  %v556 = vpop.f32.mrb[0].mxu0
  %v557 = vpop.f32.mrb[0].mxu0
  %558 = vdwg.mxu0
  %559 = vmatprep.subr.bf16.mxu0 %v391
  %560 = vmatpush1.bf16.msra.mxu0 %v390
  %561 = vmatprep.subr.bf16.mxu0 %v393
  %562 = vmatpush1.bf16.msra.mxu0 %v392
  %563 = vmatprep.subr.bf16.mxu0 %v395
  %564 = vmatpush1.bf16.msra.mxu0 %v394
  %565 = vmatprep.subr.bf16.mxu0 %v397
  %566 = vmatpush1.bf16.msra.mxu0 %v396
  %567 = vmatprep.subr.bf16.mxu0 %v399
  %568 = vmatpush1.bf16.msra.mxu0 %v398
  %569 = vmatprep.subr.bf16.mxu0 %v401
  %570 = vmatpush1.bf16.msra.mxu0 %v400
  %571 = vmatprep.subr.bf16.mxu0 %v403
  %572 = vmatpush1.bf16.msra.mxu0 %v402
  %573 = vmatprep.subr.bf16.mxu0 %v405
  %574 = vmatpush1.bf16.msra.mxu0 %v404
  %575 = vmatprep.subr.bf16.mxu0 %v407
  %576 = vmatpush1.bf16.msra.mxu0 %v406
  %577 = vmatprep.subr.bf16.mxu0 %v409
  %578 = vmatpush1.bf16.msra.mxu0 %v408
  %579 = vmatprep.subr.bf16.mxu0 %v411
  %580 = vmatpush1.bf16.msra.mxu0 %v410
  %581 = vmatprep.subr.bf16.mxu0 %v413
  %582 = vmatpush1.bf16.msra.mxu0 %v412
  %583 = vmatprep.subr.bf16.mxu0 %v415
  %584 = vmatpush1.bf16.msra.mxu0 %v414
  %585 = vmatprep.subr.bf16.mxu0 %v417
  %586 = vmatpush1.bf16.msra.mxu0 %v416
  %587 = vmatprep.subr.bf16.mxu0 %v419
  %588 = vmatpush1.bf16.msra.mxu0 %v418
  %589 = vmatprep.subr.bf16.mxu0 %v421
  %590 = vmatpush1.bf16.msra.mxu0 %v420
  %591 = vmatprep.mubr.bf16.mxu0 %v111
  %592 = vmatmul.mubr.bf16.gmra.mrb[0].mxu0 %v110
  %v593 = vpop.f32.mrb[0].mxu0
  %v594 = vadd.f32 %v553, %v593
  %v595 = vpop.f32.mrb[0].mxu0
  %v596 = vadd.f32 %v555, %v595
  %v597 = vpop.f32.mrb[0].mxu0
  %v598 = vpop.f32.mrb[0].mxu0
  %599 = vdwg.mxu0
  %600 = vmatprep.subr.bf16.mxu0 %v423
  %601 = vmatpush1.bf16.msra.mxu0 %v422
  %602 = vmatprep.subr.bf16.mxu0 %v425
  %603 = vmatpush1.bf16.msra.mxu0 %v424
  %604 = vmatprep.subr.bf16.mxu0 %v427
  %605 = vmatpush1.bf16.msra.mxu0 %v426
  %606 = vmatprep.subr.bf16.mxu0 %v429
  %607 = vmatpush1.bf16.msra.mxu0 %v428
  %608 = vmatprep.subr.bf16.mxu0 %v431
  %609 = vmatpush1.bf16.msra.mxu0 %v430
  %610 = vmatprep.subr.bf16.mxu0 %v433
  %611 = vmatpush1.bf16.msra.mxu0 %v432
  %612 = vmatprep.subr.bf16.mxu0 %v435
  %613 = vmatpush1.bf16.msra.mxu0 %v434
  %614 = vmatprep.subr.bf16.mxu0 %v437
  %615 = vmatpush1.bf16.msra.mxu0 %v436
  %616 = vmatprep.subr.bf16.mxu0 0
  %617 = vmatpush1.bf16.msra.mxu0 0
  %618 = vmatprep.subr.bf16.mxu0 0
  %619 = vmatpush1.bf16.msra.mxu0 0
  %620 = vmatprep.subr.bf16.mxu0 0
  %621 = vmatpush1.bf16.msra.mxu0 0
  %622 = vmatprep.subr.bf16.mxu0 0
  %623 = vmatpush1.bf16.msra.mxu0 0
  %624 = vmatprep.subr.bf16.mxu0 0
  %625 = vmatpush1.bf16.msra.mxu0 0
  %626 = vmatprep.subr.bf16.mxu0 0
  %627 = vmatpush1.bf16.msra.mxu0 0
  %628 = vmatprep.subr.bf16.mxu0 0
  %629 = vmatpush1.bf16.msra.mxu0 0
  %630 = vmatprep.subr.bf16.mxu0 0
  %631 = vmatpush1.bf16.msra.mxu0 0
  %632 = vmatprep.mubr.bf16.mxu0 0
  %633 = vmatmul.mubr.bf16.gmra.mrb[0].mxu0 %v112
  %v634 = vpop.f32.mrb[0].mxu0
  %v635 = vadd.f32 %v594, %v634
  %v636 = vpop.f32.mrb[0].mxu0
  %v637 = vadd.f32 %v596, %v636
  %v638 = vpop.f32.mrb[0].mxu0
  %v639 = vpop.f32.mrb[0].mxu0
  %640 = vdwg.mxu0
  %641 = vst [vmem:[#allocation2] sm:$0xff] %v635
  %642 = vst [vmem:[#allocation2 + $0x8] sm:$0xff] %v637
  %p643 = scmp.eq.s32.totalorder 0, 0
  // Predicated region
  $region14: #{resnet_forward.16} parent=0 // pred_check
    %p644 = pneg %p643
  $region15: #{resnet_forward.16} parent=0 // pred_check_branch
    %646 = sbr.rel (%p644) target = $region17
  $region16: #{resnet_forward.16} parent=0 // pred_region
    %v647 = vld [vmem:[#allocation2] sm:$0xff]
    %v648 = vld [vmem:[#allocation2 + $0x8] sm:$0xff]
    %v649 = vrot.slane %v647, 4
    %v650 = vadd.f32 %v647, %v649
    %v651 = vrot.slane %v650, 2
    %v652 = vadd.f32 %v650, %v651
    %v653 = vrot.slane %v652, 1
    %v654 = vadd.f32 %v652, %v653
    %v655 = vrot.slane %v648, 4
    %v656 = vadd.f32 %v648, %v655
    %v657 = vrot.slane %v656, 2
    %v658 = vadd.f32 %v656, %v657
    %v659 = vrot.slane %v658, 1
    %v660 = vadd.f32 %v658, %v659
    %v661 = vmul.f32 %v654, 0.125
    %v662 = vmul.f32 %v660, 0.125
    %v663 = vsub.f32 %v647, %v661
    %v664 = vsub.f32 %v648, %v662
    %v665 = vmul.f32 %v663, %v663
    %v666 = vmul.f32 %v664, %v664
    %v667 = vrot.slane %v665, 4
    %v668 = vadd.f32 %v665, %v667
    %v669 = vrot.slane %v668, 2
    %v670 = vadd.f32 %v668, %v669
    %v671 = vrot.slane %v670, 1
    %v672 = vadd.f32 %v670, %v671
    %v673 = vrot.slane %v666, 4
    %v674 = vadd.f32 %v666, %v673
    %v675 = vrot.slane %v674, 2
    %v676 = vadd.f32 %v674, %v675
    %v677 = vrot.slane %v676, 1
    %v678 = vadd.f32 %v676, %v677
    %v679 = vmul.f32 %v661, 0.0
    %v680 = vmul.f32 %v662, 0.0
    %v681 = vmul.f32 %v679, %v661
    %v682 = vmul.f32 %v680, %v662
    %v683 = vsub.f32 %v672, %v681
    %v684 = vsub.f32 %v678, %v682
    %v685 = vmul.f32 %v683, 0.125
    %v686 = vmul.f32 %v684, 0.125
    %v687 = vmax.f32 %v685, 0.0
    %v688 = vmax.f32 %v686, 0.0
    %v689 = vld [vmem:[%s2] ss:$2 sm:$0x3]
    %v690 = vadd.f32 %v687, 1e-05
    %v691 = vadd.f32 %v688, 1e-05
    %v692 = vrsqrt.pop %v690
    %v693 = vrsqrt.pop %v691
    %v696 = vcombine.low %v692, %v693
    %v698 = vunpack.c.l.s4 1966171168
    %v699 = vunpack.c.0.s8 %v698
    %v700 = vlaneseq
    %v701 = vshrl.u32 %v700, 7
    %v702 = vsub.s32 %v699, %v701
    %v703 = vrot.slane %v696, %v702
    %v705 = vunpack.c.l.s4 1966171168
    %v706 = vunpack.c.0.s8 %v705
    %v707 = vlaneseq
    %v708 = vshrl.u32 %v707, 7
    %v709 = vsub.s32 %v706, %v708
    %v710 = vrot.slane %v703, %v709
    %v712 = vmul.f32 %v689, %v710
    %s713 = scalar_lea.vmem %s2, 1
    %v714 = vld [vmem:[%s713] ss:$2 sm:$0x3]
    %v716 = vlaneseq
    %v717 = vshrl.u32 %v716, 7
    %v718 = vsub.s32 0, %v717
    %v719 = vrot.slane %v712, %v718
    %v720 = vlaneseq
    %v721 = vshrl.u32 %v720, 7
    %v722 = vsub.s32 1, %v721
    %v723 = vrot.slane %v712, %v722
    %v726 = vmul.f32 %v661, %v719
    %v727 = vmul.f32 %v662, %v723
    %v730 = vcombine.low %v726, %v727
    %v732 = vunpack.c.l.s4 1966171168
    %v733 = vunpack.c.0.s8 %v732
    %v734 = vlaneseq
    %v735 = vshrl.u32 %v734, 7
    %v736 = vsub.s32 %v733, %v735
    %v737 = vrot.slane %v730, %v736
    %v739 = vunpack.c.l.s4 1966171168
    %v740 = vunpack.c.0.s8 %v739
    %v741 = vlaneseq
    %v742 = vshrl.u32 %v741, 7
    %v743 = vsub.s32 %v740, %v742
    %v744 = vrot.slane %v737, %v743
    %v746 = vsub.f32 %v714, %v744
    %v747 = vmul.f32 %v647, %v719
    %v748 = vmul.f32 %v648, %v723
    %v750 = vlaneseq
    %v751 = vshrl.u32 %v750, 7
    %v752 = vsub.s32 0, %v751
    %v753 = vrot.slane %v746, %v752
    %v754 = vlaneseq
    %v755 = vshrl.u32 %v754, 7
    %v756 = vsub.s32 1, %v755
    %v757 = vrot.slane %v746, %v756
    %v760 = vadd.f32 %v747, %v753
    %v761 = vadd.f32 %v748, %v757
    %v762 = vmax.f32 %v760, 0.0
    %v763 = vpack.c.bf16 %v762, %v762
    %764 = vst [vmem:[%s3] sm:$0xf] %v763
    %765 = vst [vmem:[%s4] sm:$0xff] %v761
  $region17: #{resnet_forward.16} parent=0 // pred_fallthru
    _
  // Predicated region
  $region18: #{resnet_forward.16} parent=0 // pred_check
    _
  $region19: #{resnet_forward.16} parent=0 // pred_check_branch
    %767 = sbr.rel (0) target = $region21
  $region20: #{resnet_forward.16} parent=0 // pred_region
    _
  $region21: #{resnet_forward.16} parent=0 // pred_fallthru
    _
  // Predicated region
  $region22: #{resnet_forward.16} parent=0 // pred_check
    _
  $region23: #{resnet_forward.16} parent=0 // pred_check_branch
    %769 = sbr.rel (0) target = $region25
  $region24: #{resnet_forward.16} parent=0 // pred_region
    _
  $region25: #{resnet_forward.16} parent=0 // pred_fallthru
    _
  // Predicated region
  $region26: #{resnet_forward.16} parent=0 // pred_check
    _
  $region27: #{resnet_forward.16} parent=0 // pred_check_branch
    %771 = sbr.rel (0) target = $region29
  $region28: #{resnet_forward.16} parent=0 // pred_region
    _
  $region29: #{resnet_forward.16} parent=0 // pred_fallthru
    _
  // Predicated region
  $region30: #{resnet_forward.16} parent=0 // pred_check
    _
  $region31: #{resnet_forward.16} parent=0 // pred_check_branch
    %773 = sbr.rel (0) target = $region33
  $region32: #{resnet_forward.16} parent=0 // pred_region
    _
  $region33: #{resnet_forward.16} parent=0 // pred_fallthru
    _

// kernel: resnet_forward.17
$region0: #{resnet_forward.17}
  #allocation0 [shape = 'u32[]', space=smem, size = 0x4, offset = 0x4, fixed_abs, tag = 'smem constant byte address 0x4 - core index']
  #allocation1 [shape = 'u32[144,128]{1,0:T(1,128)}', space=vmem, size = 0x12000, scoped, tag = 'internal scratch']
  #allocation2 [shape = 'f32[8,128]{1,0:T(8,128)}', space=vmem, size = 0x1000, scoped, tag = 'scratch operand']
  %s0 = inlined_call_operand.vmem [shape: bf16[8,1152], index: 0, kind: input, shape index: {}]
  %s1 = inlined_call_operand.vmem [shape: bf16[1152,128], index: 1, kind: input, shape index: {}]
  %s2 = inlined_call_operand.vmem [shape: f32[2,128], index: 2, kind: input, shape index: {}]
  %s3 = inlined_call_operand.vmem [shape: f32[8,128], index: 3, kind: input, shape index: {}]
  %s4 = inlined_call_operand.vmem [shape: f32[2,8], index: 4, kind: input, shape index: {}]
  %s5 = inlined_call_operand.vmem [shape: f32[128,128], index: 5, kind: input, shape index: {}]
  %s6 = inlined_call_operand.vmem [shape: f32[1,128], index: 6, kind: input, shape index: {}]
  %s7 = inlined_call_operand.hbm [shape: bf16[8,128], index: 7, kind: output, shape index: {0}]
  %s8 = inlined_call_operand.hbm [shape: f32[2,128], index: 8, kind: output, shape index: {1}]
  %9 = xla_tuple %s7, %s8
  %s10 = sld [smem:[#allocation0]]
  $region50: #{resnet_forward.17} parent=0
    _
  %s12 = ssub.s32 1, %s10
  %s13 = scalar_select 0, %s12, %s10
  $region1: #{resnet_forward.17} parent=0
    #allocation3 [shape = 'u8[2048]{0}', space=vmem, size = 0x800, scoped, tag = 'output window, operand 0, single buffered']
    #allocation4 [shape = 's32[1]{0}', space=sflag, size = 0x4, scoped, tag = 'scoped memory for resnet_forward.17']
    #allocation5 [shape = 'u8[1024]{0}', space=vmem, size = 0x400, scoped, tag = 'output window, operand 1, single buffered']
    #allocation6 [shape = 's32[1]{0}', space=sflag, size = 0x4, scoped, tag = 'scoped memory for resnet_forward.17']
    %14 = vsyncpa [#allocation4], 0
    %15 = vsyncpa [#allocation6], 0
    // Predicated region
    $region2: #{resnet_forward.17} parent=1 // pred_check
      _
    $region3: #{resnet_forward.17} parent=1 // pred_check_branch
      %17 = sbr.rel (0) target = $region5
    $region4: #{resnet_forward.17} parent=1 // pred_region
      _
    $region5: #{resnet_forward.17} parent=1 // pred_fallthru
      _
    // Predicated region
    $region6: #{resnet_forward.17} parent=1 // pred_check
      _
    $region7: #{resnet_forward.17} parent=1 // pred_check_branch
      %19 = sbr.rel (0) target = $region9
    $region8: #{resnet_forward.17} parent=1 // pred_region
      _
    $region9: #{resnet_forward.17} parent=1 // pred_fallthru
      _
    // Predicated region
    $region10: #{resnet_forward.17} parent=1 // pred_check
      _
    $region11: #{resnet_forward.17} parent=1 // pred_check_branch
      %21 = sbr.rel (0) target = $region13
    $region12: #{resnet_forward.17} parent=1 // pred_region
      _
    $region13: #{resnet_forward.17} parent=1 // pred_fallthru
      _
    // Predicated region
    $region14: #{resnet_forward.17} parent=1 // pred_check
      _
    $region15: #{resnet_forward.17} parent=1 // pred_check_branch
      %23 = sbr.rel (0) target = $region17
    $region16: #{resnet_forward.17} parent=1 // pred_region
      _
    $region17: #{resnet_forward.17} parent=1 // pred_fallthru
      _
    // Predicated region
    $region18: #{resnet_forward.17} parent=1 // pred_check
      _
    $region19: #{resnet_forward.17} parent=1 // pred_check_branch
      %25 = sbr.rel (0) target = $region21
    $region20: #{resnet_forward.17} parent=1 // pred_region
      _
    $region21: #{resnet_forward.17} parent=1 // pred_fallthru
      _
    // Predicated region
    $region22: #{resnet_forward.17} parent=1 // pred_check
      _
    $region23: #{resnet_forward.17} parent=1 // pred_check_branch
      %27 = sbr.rel (0) target = $region25
    $region24: #{resnet_forward.17} parent=1 // pred_region
      _
    $region25: #{resnet_forward.17} parent=1 // pred_fallthru
      _
    // Predicated region
    $region26: #{resnet_forward.17} parent=1 // pred_check
      _
    $region27: #{resnet_forward.17} parent=1 // pred_check_branch
      %29 = sbr.rel (0) target = $region29
    $region28: #{resnet_forward.17} parent=1 // pred_region
      _
    $region29: #{resnet_forward.17} parent=1 // pred_fallthru
      _
    %v31 = vld [vmem:[%s0] sm:$0xff]
    %v32 = vld [vmem:[%s0 + $0x8] sm:$0xff]
    %v33 = vld [vmem:[%s0 + $0x10] sm:$0xff]
    %v34 = vld [vmem:[%s0 + $0x18] sm:$0xff]
    %v35 = vld [vmem:[%s0 + $0x20] sm:$0xf]
    %v36 = vld [vmem:[%s1] sm:$0xf]
    %v37 = vld [vmem:[%s1 + $0x4] sm:$0xf]
    %v38 = vld [vmem:[%s1 + $0x8] sm:$0xf]
    %v39 = vld [vmem:[%s1 + $0xc] sm:$0xf]
    %v40 = vld [vmem:[%s1 + $0x10] sm:$0xf]
    %v41 = vld [vmem:[%s1 + $0x14] sm:$0xf]
    %v42 = vld [vmem:[%s1 + $0x18] sm:$0xf]
    %v43 = vld [vmem:[%s1 + $0x1c] sm:$0xf]
    %v44 = vld [vmem:[%s1 + $0x20] sm:$0xf]
    %v45 = vld [vmem:[%s1 + $0x24] sm:$0xf]
    %v46 = vld [vmem:[%s1 + $0x28] sm:$0xf]
    %v47 = vld [vmem:[%s1 + $0x2c] sm:$0xf]
    %v48 = vld [vmem:[%s1 + $0x30] sm:$0xf]
    %v49 = vld [vmem:[%s1 + $0x34] sm:$0xf]
    %v50 = vld [vmem:[%s1 + $0x38] sm:$0xf]
    %v51 = vld [vmem:[%s1 + $0x3c] sm:$0xf]
    %v52 = vld [vmem:[%s1 + $0x40] sm:$0xf]
    %v53 = vld [vmem:[%s1 + $0x44] sm:$0xf]
    %v54 = vld [vmem:[%s1 + $0x48] sm:$0xf]
    %v55 = vld [vmem:[%s1 + $0x4c] sm:$0xf]
    %v56 = vld [vmem:[%s1 + $0x50] sm:$0xf]
    %v57 = vld [vmem:[%s1 + $0x54] sm:$0xf]
    %v58 = vld [vmem:[%s1 + $0x58] sm:$0xf]
    %v59 = vld [vmem:[%s1 + $0x5c] sm:$0xf]
    %v60 = vld [vmem:[%s1 + $0x60] sm:$0xf]
    %v61 = vld [vmem:[%s1 + $0x64] sm:$0xf]
    %v62 = vld [vmem:[%s1 + $0x68] sm:$0xf]
    %v63 = vld [vmem:[%s1 + $0x6c] sm:$0xf]
    %v64 = vld [vmem:[%s1 + $0x70] sm:$0xf]
    %v65 = vld [vmem:[%s1 + $0x74] sm:$0xf]
    %v66 = vld [vmem:[%s1 + $0x78] sm:$0xf]
    %v67 = vld [vmem:[%s1 + $0x7c] sm:$0xf]
    %v68 = vld [vmem:[%s1 + $0x80] sm:$0xf]
    %v69 = vld [vmem:[%s1 + $0x84] sm:$0xf]
    %v70 = vld [vmem:[%s1 + $0x88] sm:$0xf]
    %v71 = vld [vmem:[%s1 + $0x8c] sm:$0xf]
    %v72 = vld [vmem:[%s1 + $0x90] sm:$0xf]
    %v73 = vld [vmem:[%s1 + $0x94] sm:$0xf]
    %v74 = vld [vmem:[%s1 + $0x98] sm:$0xf]
    %v75 = vld [vmem:[%s1 + $0x9c] sm:$0xf]
    %v76 = vld [vmem:[%s1 + $0xa0] sm:$0xf]
    %v77 = vld [vmem:[%s1 + $0xa4] sm:$0xf]
    %v78 = vld [vmem:[%s1 + $0xa8] sm:$0xf]
    %v79 = vld [vmem:[%s1 + $0xac] sm:$0xf]
    %v80 = vld [vmem:[%s1 + $0xb0] sm:$0xf]
    %v81 = vld [vmem:[%s1 + $0xb4] sm:$0xf]
    %v82 = vld [vmem:[%s1 + $0xb8] sm:$0xf]
    %v83 = vld [vmem:[%s1 + $0xbc] sm:$0xf]
    %v84 = vld [vmem:[%s1 + $0xc0] sm:$0xf]
    %v85 = vld [vmem:[%s1 + $0xc4] sm:$0xf]
    %v86 = vld [vmem:[%s1 + $0xc8] sm:$0xf]
    %v87 = vld [vmem:[%s1 + $0xcc] sm:$0xf]
    %v88 = vld [vmem:[%s1 + $0xd0] sm:$0xf]
    %v89 = vld [vmem:[%s1 + $0xd4] sm:$0xf]
    %v90 = vld [vmem:[%s1 + $0xd8] sm:$0xf]
    %v91 = vld [vmem:[%s1 + $0xdc] sm:$0xf]
    %v92 = vld [vmem:[%s1 + $0xe0] sm:$0xf]
    %v93 = vld [vmem:[%s1 + $0xe4] sm:$0xf]
    %v94 = vld [vmem:[%s1 + $0xe8] sm:$0xf]
    %v95 = vld [vmem:[%s1 + $0xec] sm:$0xf]
    %v96 = vld [vmem:[%s1 + $0xf0] sm:$0xf]
    %v97 = vld [vmem:[%s1 + $0xf4] sm:$0xf]
    %v98 = vld [vmem:[%s1 + $0xf8] sm:$0xf]
    %v99 = vld [vmem:[%s1 + $0xfc] sm:$0xf]
    %v100 = vld [vmem:[%s1 + $0x100] sm:$0xf]
    %v101 = vld [vmem:[%s1 + $0x104] sm:$0xf]
    %v102 = vld [vmem:[%s1 + $0x108] sm:$0xf]
    %v103 = vld [vmem:[%s1 + $0x10c] sm:$0xf]
    %v104 = vld [vmem:[%s1 + $0x110] sm:$0xf]
    %v105 = vld [vmem:[%s1 + $0x114] sm:$0xf]
    %v106 = vld [vmem:[%s1 + $0x118] sm:$0xf]
    %v107 = vld [vmem:[%s1 + $0x11c] sm:$0xf]
    %v108 = vld [vmem:[%s1 + $0x120] sm:$0xf]
    %v109 = vld [vmem:[%s1 + $0x124] sm:$0xf]
    %v110 = vld [vmem:[%s1 + $0x128] sm:$0xf]
    %v111 = vld [vmem:[%s1 + $0x12c] sm:$0xf]
    %v112 = vld [vmem:[%s1 + $0x130] sm:$0xf]
    %v113 = vld [vmem:[%s1 + $0x134] sm:$0xf]
    %v114 = vld [vmem:[%s1 + $0x138] sm:$0xf]
    %v115 = vld [vmem:[%s1 + $0x13c] sm:$0xf]
    %v116 = vld [vmem:[%s1 + $0x140] sm:$0xf]
    %v117 = vld [vmem:[%s1 + $0x144] sm:$0xf]
    %v118 = vld [vmem:[%s1 + $0x148] sm:$0xf]
    %v119 = vld [vmem:[%s1 + $0x14c] sm:$0xf]
    %v120 = vld [vmem:[%s1 + $0x150] sm:$0xf]
    %v121 = vld [vmem:[%s1 + $0x154] sm:$0xf]
    %v122 = vld [vmem:[%s1 + $0x158] sm:$0xf]
    %v123 = vld [vmem:[%s1 + $0x15c] sm:$0xf]
    %v124 = vld [vmem:[%s1 + $0x160] sm:$0xf]
    %v125 = vld [vmem:[%s1 + $0x164] sm:$0xf]
    %v126 = vld [vmem:[%s1 + $0x168] sm:$0xf]
    %v127 = vld [vmem:[%s1 + $0x16c] sm:$0xf]
    %v128 = vld [vmem:[%s1 + $0x170] sm:$0xf]
    %v129 = vld [vmem:[%s1 + $0x174] sm:$0xf]
    %v130 = vld [vmem:[%s1 + $0x178] sm:$0xf]
    %v131 = vld [vmem:[%s1 + $0x17c] sm:$0xf]
    %v132 = vld [vmem:[%s1 + $0x180] sm:$0xf]
    %v133 = vld [vmem:[%s1 + $0x184] sm:$0xf]
    %v134 = vld [vmem:[%s1 + $0x188] sm:$0xf]
    %v135 = vld [vmem:[%s1 + $0x18c] sm:$0xf]
    %v136 = vld [vmem:[%s1 + $0x190] sm:$0xf]
    %v137 = vld [vmem:[%s1 + $0x194] sm:$0xf]
    %v138 = vld [vmem:[%s1 + $0x198] sm:$0xf]
    %v139 = vld [vmem:[%s1 + $0x19c] sm:$0xf]
    %v140 = vld [vmem:[%s1 + $0x1a0] sm:$0xf]
    %v141 = vld [vmem:[%s1 + $0x1a4] sm:$0xf]
    %v142 = vld [vmem:[%s1 + $0x1a8] sm:$0xf]
    %v143 = vld [vmem:[%s1 + $0x1ac] sm:$0xf]
    %v144 = vld [vmem:[%s1 + $0x1b0] sm:$0xf]
    %v145 = vld [vmem:[%s1 + $0x1b4] sm:$0xf]
    %v146 = vld [vmem:[%s1 + $0x1b8] sm:$0xf]
    %v147 = vld [vmem:[%s1 + $0x1bc] sm:$0xf]
    %v148 = vld [vmem:[%s1 + $0x1c0] sm:$0xf]
    %v149 = vld [vmem:[%s1 + $0x1c4] sm:$0xf]
    %v150 = vld [vmem:[%s1 + $0x1c8] sm:$0xf]
    %v151 = vld [vmem:[%s1 + $0x1cc] sm:$0xf]
    %v152 = vld [vmem:[%s1 + $0x1d0] sm:$0xf]
    %v153 = vld [vmem:[%s1 + $0x1d4] sm:$0xf]
    %v154 = vld [vmem:[%s1 + $0x1d8] sm:$0xf]
    %v155 = vld [vmem:[%s1 + $0x1dc] sm:$0xf]
    %v156 = vld [vmem:[%s1 + $0x1e0] sm:$0xf]
    %v157 = vld [vmem:[%s1 + $0x1e4] sm:$0xf]
    %v158 = vld [vmem:[%s1 + $0x1e8] sm:$0xf]
    %v159 = vld [vmem:[%s1 + $0x1ec] sm:$0xf]
    %v160 = vld [vmem:[%s1 + $0x1f0] sm:$0xf]
    %v161 = vld [vmem:[%s1 + $0x1f4] sm:$0xf]
    %v162 = vld [vmem:[%s1 + $0x1f8] sm:$0xf]
    %v163 = vld [vmem:[%s1 + $0x1fc] sm:$0xf]
    %v164 = vld [vmem:[%s1 + $0x200] sm:$0xf]
    %v165 = vld [vmem:[%s1 + $0x204] sm:$0xf]
    %v166 = vld [vmem:[%s1 + $0x208] sm:$0xf]
    %v167 = vld [vmem:[%s1 + $0x20c] sm:$0xf]
    %v168 = vld [vmem:[%s1 + $0x210] sm:$0xf]
    %v169 = vld [vmem:[%s1 + $0x214] sm:$0xf]
    %v170 = vld [vmem:[%s1 + $0x218] sm:$0xf]
    %v171 = vld [vmem:[%s1 + $0x21c] sm:$0xf]
    %v172 = vld [vmem:[%s1 + $0x220] sm:$0xf]
    %v173 = vld [vmem:[%s1 + $0x224] sm:$0xf]
    %v174 = vld [vmem:[%s1 + $0x228] sm:$0xf]
    %v175 = vld [vmem:[%s1 + $0x22c] sm:$0xf]
    %v176 = vld [vmem:[%s1 + $0x230] sm:$0xf]
    %v177 = vld [vmem:[%s1 + $0x234] sm:$0xf]
    %v178 = vld [vmem:[%s1 + $0x238] sm:$0xf]
    %v179 = vld [vmem:[%s1 + $0x23c] sm:$0xf]
    %v185 = vunpack.c.l.b16 %v31
    %v186 = vunpack.c.h.b16 %v31
    %v187 = vunpack.c.l.b16 %v32
    %v188 = vunpack.c.h.b16 %v32
    %v189 = vunpack.c.l.b16 %v33
    %v190 = vunpack.c.h.b16 %v33
    %v191 = vunpack.c.l.b16 %v34
    %v192 = vunpack.c.h.b16 %v34
    %v193 = vunpack.c.l.b16 %v35
    %v194 = vpack.c.b16 %v185, %v185
    %v195 = vpack.c.b16 %v186, %v186
    %v196 = vpack.c.b16 %v187, %v187
    %v197 = vpack.c.b16 %v188, %v188
    %v198 = vpack.c.b16 %v189, %v189
    %v199 = vpack.c.b16 %v190, %v190
    %v200 = vpack.c.b16 %v191, %v191
    %v201 = vpack.c.b16 %v192, %v192
    %v202 = vpack.c.b16 %v193, %v193
    %v356 = vunpack.c.l.b16 %v36
    %v357 = vunpack.c.l.b16 %v37
    %v358 = vunpack.c.l.b16 %v38
    %v359 = vunpack.c.l.b16 %v39
    %v360 = vunpack.c.l.b16 %v40
    %v361 = vunpack.c.l.b16 %v41
    %v362 = vunpack.c.l.b16 %v42
    %v363 = vunpack.c.l.b16 %v43
    %v364 = vunpack.c.l.b16 %v44
    %v365 = vunpack.c.l.b16 %v45
    %v366 = vunpack.c.l.b16 %v46
    %v367 = vunpack.c.l.b16 %v47
    %v368 = vunpack.c.l.b16 %v48
    %v369 = vunpack.c.l.b16 %v49
    %v370 = vunpack.c.l.b16 %v50
    %v371 = vunpack.c.l.b16 %v51
    %v372 = vunpack.c.l.b16 %v52
    %v373 = vunpack.c.l.b16 %v53
    %v374 = vunpack.c.l.b16 %v54
    %v375 = vunpack.c.l.b16 %v55
    %v376 = vunpack.c.l.b16 %v56
    %v377 = vunpack.c.l.b16 %v57
    %v378 = vunpack.c.l.b16 %v58
    %v379 = vunpack.c.l.b16 %v59
    %v380 = vunpack.c.l.b16 %v60
    %v381 = vunpack.c.l.b16 %v61
    %v382 = vunpack.c.l.b16 %v62
    %v383 = vunpack.c.l.b16 %v63
    %v384 = vunpack.c.l.b16 %v64
    %v385 = vunpack.c.l.b16 %v65
    %v386 = vunpack.c.l.b16 %v66
    %v387 = vunpack.c.l.b16 %v67
    %v388 = vunpack.c.l.b16 %v68
    %v389 = vunpack.c.l.b16 %v69
    %v390 = vunpack.c.l.b16 %v70
    %v391 = vunpack.c.l.b16 %v71
    %v392 = vunpack.c.l.b16 %v72
    %v393 = vunpack.c.l.b16 %v73
    %v394 = vunpack.c.l.b16 %v74
    %v395 = vunpack.c.l.b16 %v75
    %v396 = vunpack.c.l.b16 %v76
    %v397 = vunpack.c.l.b16 %v77
    %v398 = vunpack.c.l.b16 %v78
    %v399 = vunpack.c.l.b16 %v79
    %v400 = vunpack.c.l.b16 %v80
    %v401 = vunpack.c.l.b16 %v81
    %v402 = vunpack.c.l.b16 %v82
    %v403 = vunpack.c.l.b16 %v83
    %v404 = vunpack.c.l.b16 %v84
    %v405 = vunpack.c.l.b16 %v85
    %v406 = vunpack.c.l.b16 %v86
    %v407 = vunpack.c.l.b16 %v87
    %v408 = vunpack.c.l.b16 %v88
    %v409 = vunpack.c.l.b16 %v89
    %v410 = vunpack.c.l.b16 %v90
    %v411 = vunpack.c.l.b16 %v91
    %v412 = vunpack.c.l.b16 %v92
    %v413 = vunpack.c.l.b16 %v93
    %v414 = vunpack.c.l.b16 %v94
    %v415 = vunpack.c.l.b16 %v95
    %v416 = vunpack.c.l.b16 %v96
    %v417 = vunpack.c.l.b16 %v97
    %v418 = vunpack.c.l.b16 %v98
    %v419 = vunpack.c.l.b16 %v99
    %v420 = vunpack.c.l.b16 %v100
    %v421 = vunpack.c.l.b16 %v101
    %v422 = vunpack.c.l.b16 %v102
    %v423 = vunpack.c.l.b16 %v103
    %v424 = vunpack.c.l.b16 %v104
    %v425 = vunpack.c.l.b16 %v105
    %v426 = vunpack.c.l.b16 %v106
    %v427 = vunpack.c.l.b16 %v107
    %v428 = vunpack.c.l.b16 %v108
    %v429 = vunpack.c.l.b16 %v109
    %v430 = vunpack.c.l.b16 %v110
    %v431 = vunpack.c.l.b16 %v111
    %v432 = vunpack.c.l.b16 %v112
    %v433 = vunpack.c.l.b16 %v113
    %v434 = vunpack.c.l.b16 %v114
    %v435 = vunpack.c.l.b16 %v115
    %v436 = vunpack.c.l.b16 %v116
    %v437 = vunpack.c.l.b16 %v117
    %v438 = vunpack.c.l.b16 %v118
    %v439 = vunpack.c.l.b16 %v119
    %v440 = vunpack.c.l.b16 %v120
    %v441 = vunpack.c.l.b16 %v121
    %v442 = vunpack.c.l.b16 %v122
    %v443 = vunpack.c.l.b16 %v123
    %v444 = vunpack.c.l.b16 %v124
    %v445 = vunpack.c.l.b16 %v125
    %v446 = vunpack.c.l.b16 %v126
    %v447 = vunpack.c.l.b16 %v127
    %v448 = vunpack.c.l.b16 %v128
    %v449 = vunpack.c.l.b16 %v129
    %v450 = vunpack.c.l.b16 %v130
    %v451 = vunpack.c.l.b16 %v131
    %v452 = vunpack.c.l.b16 %v132
    %v453 = vunpack.c.l.b16 %v133
    %v454 = vunpack.c.l.b16 %v134
    %v455 = vunpack.c.l.b16 %v135
    %v456 = vunpack.c.l.b16 %v136
    %v457 = vunpack.c.l.b16 %v137
    %v458 = vunpack.c.l.b16 %v138
    %v459 = vunpack.c.l.b16 %v139
    %v460 = vunpack.c.l.b16 %v140
    %v461 = vunpack.c.l.b16 %v141
    %v462 = vunpack.c.l.b16 %v142
    %v463 = vunpack.c.l.b16 %v143
    %v464 = vunpack.c.l.b16 %v144
    %v465 = vunpack.c.l.b16 %v145
    %v466 = vunpack.c.l.b16 %v146
    %v467 = vunpack.c.l.b16 %v147
    %v468 = vunpack.c.l.b16 %v148
    %v469 = vunpack.c.l.b16 %v149
    %v470 = vunpack.c.l.b16 %v150
    %v471 = vunpack.c.l.b16 %v151
    %v472 = vunpack.c.l.b16 %v152
    %v473 = vunpack.c.l.b16 %v153
    %v474 = vunpack.c.l.b16 %v154
    %v475 = vunpack.c.l.b16 %v155
    %v476 = vunpack.c.l.b16 %v156
    %v477 = vunpack.c.l.b16 %v157
    %v478 = vunpack.c.l.b16 %v158
    %v479 = vunpack.c.l.b16 %v159
    %v480 = vunpack.c.l.b16 %v160
    %v481 = vunpack.c.l.b16 %v161
    %v482 = vunpack.c.l.b16 %v162
    %v483 = vunpack.c.l.b16 %v163
    %v484 = vunpack.c.l.b16 %v164
    %v485 = vunpack.c.l.b16 %v165
    %v486 = vunpack.c.l.b16 %v166
    %v487 = vunpack.c.l.b16 %v167
    %v488 = vunpack.c.l.b16 %v168
    %v489 = vunpack.c.l.b16 %v169
    %v490 = vunpack.c.l.b16 %v170
    %v491 = vunpack.c.l.b16 %v171
    %v492 = vunpack.c.l.b16 %v172
    %v493 = vunpack.c.l.b16 %v173
    %v494 = vunpack.c.l.b16 %v174
    %v495 = vunpack.c.l.b16 %v175
    %v496 = vunpack.c.l.b16 %v176
    %v497 = vunpack.c.l.b16 %v177
    %v498 = vunpack.c.l.b16 %v178
    %v499 = vunpack.c.l.b16 %v179
    %v500 = vpack.c.b16 %v357, %v356
    %v501 = vpack.c.b16 %v359, %v358
    %v502 = vpack.c.b16 %v361, %v360
    %v503 = vpack.c.b16 %v363, %v362
    %v504 = vpack.c.b16 %v365, %v364
    %v505 = vpack.c.b16 %v367, %v366
    %v506 = vpack.c.b16 %v369, %v368
    %v507 = vpack.c.b16 %v371, %v370
    %v508 = vpack.c.b16 %v373, %v372
    %v509 = vpack.c.b16 %v375, %v374
    %v510 = vpack.c.b16 %v377, %v376
    %v511 = vpack.c.b16 %v379, %v378
    %v512 = vpack.c.b16 %v381, %v380
    %v513 = vpack.c.b16 %v383, %v382
    %v514 = vpack.c.b16 %v385, %v384
    %v515 = vpack.c.b16 %v387, %v386
    %v516 = vpack.c.b16 %v389, %v388
    %v517 = vpack.c.b16 %v391, %v390
    %v518 = vpack.c.b16 %v393, %v392
    %v519 = vpack.c.b16 %v395, %v394
    %v520 = vpack.c.b16 %v397, %v396
    %v521 = vpack.c.b16 %v399, %v398
    %v522 = vpack.c.b16 %v401, %v400
    %v523 = vpack.c.b16 %v403, %v402
    %v524 = vpack.c.b16 %v405, %v404
    %v525 = vpack.c.b16 %v407, %v406
    %v526 = vpack.c.b16 %v409, %v408
    %v527 = vpack.c.b16 %v411, %v410
    %v528 = vpack.c.b16 %v413, %v412
    %v529 = vpack.c.b16 %v415, %v414
    %v530 = vpack.c.b16 %v417, %v416
    %v531 = vpack.c.b16 %v419, %v418
    %v532 = vpack.c.b16 %v421, %v420
    %v533 = vpack.c.b16 %v423, %v422
    %v534 = vpack.c.b16 %v425, %v424
    %v535 = vpack.c.b16 %v427, %v426
    %v536 = vpack.c.b16 %v429, %v428
    %v537 = vpack.c.b16 %v431, %v430
    %v538 = vpack.c.b16 %v433, %v432
    %v539 = vpack.c.b16 %v435, %v434
    %v540 = vpack.c.b16 %v437, %v436
    %v541 = vpack.c.b16 %v439, %v438
    %v542 = vpack.c.b16 %v441, %v440
    %v543 = vpack.c.b16 %v443, %v442
    %v544 = vpack.c.b16 %v445, %v444
    %v545 = vpack.c.b16 %v447, %v446
    %v546 = vpack.c.b16 %v449, %v448
    %v547 = vpack.c.b16 %v451, %v450
    %v548 = vpack.c.b16 %v453, %v452
    %v549 = vpack.c.b16 %v455, %v454
    %v550 = vpack.c.b16 %v457, %v456
    %v551 = vpack.c.b16 %v459, %v458
    %v552 = vpack.c.b16 %v461, %v460
    %v553 = vpack.c.b16 %v463, %v462
    %v554 = vpack.c.b16 %v465, %v464
    %v555 = vpack.c.b16 %v467, %v466
    %v556 = vpack.c.b16 %v469, %v468
    %v557 = vpack.c.b16 %v471, %v470
    %v558 = vpack.c.b16 %v473, %v472
    %v559 = vpack.c.b16 %v475, %v474
    %v560 = vpack.c.b16 %v477, %v476
    %v561 = vpack.c.b16 %v479, %v478
    %v562 = vpack.c.b16 %v481, %v480
    %v563 = vpack.c.b16 %v483, %v482
    %v564 = vpack.c.b16 %v485, %v484
    %v565 = vpack.c.b16 %v487, %v486
    %v566 = vpack.c.b16 %v489, %v488
    %v567 = vpack.c.b16 %v491, %v490
    %v568 = vpack.c.b16 %v493, %v492
    %v569 = vpack.c.b16 %v495, %v494
    %v570 = vpack.c.b16 %v497, %v496
    %v571 = vpack.c.b16 %v499, %v498
    %644 = vmatprep.subr.bf16.mxu0 0
    %645 = vmatpush1.bf16.msra.mxu0 %v500
    %646 = vmatprep.subr.bf16.mxu0 0
    %647 = vmatpush1.bf16.msra.mxu0 %v501
    %648 = vmatprep.subr.bf16.mxu0 0
    %649 = vmatpush1.bf16.msra.mxu0 %v502
    %650 = vmatprep.subr.bf16.mxu0 0
    %651 = vmatpush1.bf16.msra.mxu0 %v503
    %652 = vmatprep.subr.bf16.mxu0 0
    %653 = vmatpush1.bf16.msra.mxu0 %v504
    %654 = vmatprep.subr.bf16.mxu0 0
    %655 = vmatpush1.bf16.msra.mxu0 %v505
    %656 = vmatprep.subr.bf16.mxu0 0
    %657 = vmatpush1.bf16.msra.mxu0 %v506
    %658 = vmatprep.subr.bf16.mxu0 0
    %659 = vmatpush1.bf16.msra.mxu0 %v507
    %660 = vmatprep.subr.bf16.mxu0 0
    %661 = vmatpush1.bf16.msra.mxu0 %v508
    %662 = vmatprep.subr.bf16.mxu0 0
    %663 = vmatpush1.bf16.msra.mxu0 %v509
    %664 = vmatprep.subr.bf16.mxu0 0
    %665 = vmatpush1.bf16.msra.mxu0 %v510
    %666 = vmatprep.subr.bf16.mxu0 0
    %667 = vmatpush1.bf16.msra.mxu0 %v511
    %668 = vmatprep.subr.bf16.mxu0 0
    %669 = vmatpush1.bf16.msra.mxu0 %v512
    %670 = vmatprep.subr.bf16.mxu0 0
    %671 = vmatpush1.bf16.msra.mxu0 %v513
    %672 = vmatprep.subr.bf16.mxu0 0
    %673 = vmatpush1.bf16.msra.mxu0 %v514
    %674 = vmatprep.subr.bf16.mxu0 0
    %675 = vmatpush1.bf16.msra.mxu0 %v515
    %676 = vmatprep.mubr.bf16.mxu0 %v195
    %677 = vmatmul.mubr.bf16.gmra.mrb[0].mxu0 %v194
    %v678 = vpop.f32.mrb[0].mxu0
    %v679 = vadd.f32 0.0, %v678
    %v680 = vpop.f32.mrb[0].mxu0
    %v681 = vpop.f32.mrb[0].mxu0
    %v682 = vpop.f32.mrb[0].mxu0
    %683 = vdwg.mxu0
    %684 = vmatprep.subr.bf16.mxu0 0
    %685 = vmatpush1.bf16.msra.mxu0 %v516
    %686 = vmatprep.subr.bf16.mxu0 0
    %687 = vmatpush1.bf16.msra.mxu0 %v517
    %688 = vmatprep.subr.bf16.mxu0 0
    %689 = vmatpush1.bf16.msra.mxu0 %v518
    %690 = vmatprep.subr.bf16.mxu0 0
    %691 = vmatpush1.bf16.msra.mxu0 %v519
    %692 = vmatprep.subr.bf16.mxu0 0
    %693 = vmatpush1.bf16.msra.mxu0 %v520
    %694 = vmatprep.subr.bf16.mxu0 0
    %695 = vmatpush1.bf16.msra.mxu0 %v521
    %696 = vmatprep.subr.bf16.mxu0 0
    %697 = vmatpush1.bf16.msra.mxu0 %v522
    %698 = vmatprep.subr.bf16.mxu0 0
    %699 = vmatpush1.bf16.msra.mxu0 %v523
    %700 = vmatprep.subr.bf16.mxu0 0
    %701 = vmatpush1.bf16.msra.mxu0 %v524
    %702 = vmatprep.subr.bf16.mxu0 0
    %703 = vmatpush1.bf16.msra.mxu0 %v525
    %704 = vmatprep.subr.bf16.mxu0 0
    %705 = vmatpush1.bf16.msra.mxu0 %v526
    %706 = vmatprep.subr.bf16.mxu0 0
    %707 = vmatpush1.bf16.msra.mxu0 %v527
    %708 = vmatprep.subr.bf16.mxu0 0
    %709 = vmatpush1.bf16.msra.mxu0 %v528
    %710 = vmatprep.subr.bf16.mxu0 0
    %711 = vmatpush1.bf16.msra.mxu0 %v529
    %712 = vmatprep.subr.bf16.mxu0 0
    %713 = vmatpush1.bf16.msra.mxu0 %v530
    %714 = vmatprep.subr.bf16.mxu0 0
    %715 = vmatpush1.bf16.msra.mxu0 %v531
    %716 = vmatprep.mubr.bf16.mxu0 %v197
    %717 = vmatmul.mubr.bf16.gmra.mrb[0].mxu0 %v196
    %v718 = vpop.f32.mrb[0].mxu0
    %v719 = vadd.f32 %v679, %v718
    %v720 = vpop.f32.mrb[0].mxu0
    %v721 = vpop.f32.mrb[0].mxu0
    %v722 = vpop.f32.mrb[0].mxu0
    %723 = vdwg.mxu0
    %724 = vmatprep.subr.bf16.mxu0 0
    %725 = vmatpush1.bf16.msra.mxu0 %v532
    %726 = vmatprep.subr.bf16.mxu0 0
    %727 = vmatpush1.bf16.msra.mxu0 %v533
    %728 = vmatprep.subr.bf16.mxu0 0
    %729 = vmatpush1.bf16.msra.mxu0 %v534
    %730 = vmatprep.subr.bf16.mxu0 0
    %731 = vmatpush1.bf16.msra.mxu0 %v535
    %732 = vmatprep.subr.bf16.mxu0 0
    %733 = vmatpush1.bf16.msra.mxu0 %v536
    %734 = vmatprep.subr.bf16.mxu0 0
    %735 = vmatpush1.bf16.msra.mxu0 %v537
    %736 = vmatprep.subr.bf16.mxu0 0
    %737 = vmatpush1.bf16.msra.mxu0 %v538
    %738 = vmatprep.subr.bf16.mxu0 0
    %739 = vmatpush1.bf16.msra.mxu0 %v539
    %740 = vmatprep.subr.bf16.mxu0 0
    %741 = vmatpush1.bf16.msra.mxu0 %v540
    %742 = vmatprep.subr.bf16.mxu0 0
    %743 = vmatpush1.bf16.msra.mxu0 %v541
    %744 = vmatprep.subr.bf16.mxu0 0
    %745 = vmatpush1.bf16.msra.mxu0 %v542
    %746 = vmatprep.subr.bf16.mxu0 0
    %747 = vmatpush1.bf16.msra.mxu0 %v543
    %748 = vmatprep.subr.bf16.mxu0 0
    %749 = vmatpush1.bf16.msra.mxu0 %v544
    %750 = vmatprep.subr.bf16.mxu0 0
    %751 = vmatpush1.bf16.msra.mxu0 %v545
    %752 = vmatprep.subr.bf16.mxu0 0
    %753 = vmatpush1.bf16.msra.mxu0 %v546
    %754 = vmatprep.subr.bf16.mxu0 0
    %755 = vmatpush1.bf16.msra.mxu0 %v547
    %756 = vmatprep.mubr.bf16.mxu0 %v199
    %757 = vmatmul.mubr.bf16.gmra.mrb[0].mxu0 %v198
    %v758 = vpop.f32.mrb[0].mxu0
    %v759 = vadd.f32 %v719, %v758
    %v760 = vpop.f32.mrb[0].mxu0
    %v761 = vpop.f32.mrb[0].mxu0
    %v762 = vpop.f32.mrb[0].mxu0
    %763 = vdwg.mxu0
    %764 = vmatprep.subr.bf16.mxu0 0
    %765 = vmatpush1.bf16.msra.mxu0 %v548
    %766 = vmatprep.subr.bf16.mxu0 0
    %767 = vmatpush1.bf16.msra.mxu0 %v549
    %768 = vmatprep.subr.bf16.mxu0 0
    %769 = vmatpush1.bf16.msra.mxu0 %v550
    %770 = vmatprep.subr.bf16.mxu0 0
    %771 = vmatpush1.bf16.msra.mxu0 %v551
    %772 = vmatprep.subr.bf16.mxu0 0
    %773 = vmatpush1.bf16.msra.mxu0 %v552
    %774 = vmatprep.subr.bf16.mxu0 0
    %775 = vmatpush1.bf16.msra.mxu0 %v553
    %776 = vmatprep.subr.bf16.mxu0 0
    %777 = vmatpush1.bf16.msra.mxu0 %v554
    %778 = vmatprep.subr.bf16.mxu0 0
    %779 = vmatpush1.bf16.msra.mxu0 %v555
    %780 = vmatprep.subr.bf16.mxu0 0
    %781 = vmatpush1.bf16.msra.mxu0 %v556
    %782 = vmatprep.subr.bf16.mxu0 0
    %783 = vmatpush1.bf16.msra.mxu0 %v557
    %784 = vmatprep.subr.bf16.mxu0 0
    %785 = vmatpush1.bf16.msra.mxu0 %v558
    %786 = vmatprep.subr.bf16.mxu0 0
    %787 = vmatpush1.bf16.msra.mxu0 %v559
    %788 = vmatprep.subr.bf16.mxu0 0
    %789 = vmatpush1.bf16.msra.mxu0 %v560
    %790 = vmatprep.subr.bf16.mxu0 0
    %791 = vmatpush1.bf16.msra.mxu0 %v561
    %792 = vmatprep.subr.bf16.mxu0 0
    %793 = vmatpush1.bf16.msra.mxu0 %v562
    %794 = vmatprep.subr.bf16.mxu0 0
    %795 = vmatpush1.bf16.msra.mxu0 %v563
    %796 = vmatprep.mubr.bf16.mxu0 %v201
    %797 = vmatmul.mubr.bf16.gmra.mrb[0].mxu0 %v200
    %v798 = vpop.f32.mrb[0].mxu0
    %v799 = vadd.f32 %v759, %v798
    %v800 = vpop.f32.mrb[0].mxu0
    %v801 = vpop.f32.mrb[0].mxu0
    %v802 = vpop.f32.mrb[0].mxu0
    %803 = vdwg.mxu0
    %804 = vmatprep.subr.bf16.mxu0 0
    %805 = vmatpush1.bf16.msra.mxu0 %v564
    %806 = vmatprep.subr.bf16.mxu0 0
    %807 = vmatpush1.bf16.msra.mxu0 %v565
    %808 = vmatprep.subr.bf16.mxu0 0
    %809 = vmatpush1.bf16.msra.mxu0 %v566
    %810 = vmatprep.subr.bf16.mxu0 0
    %811 = vmatpush1.bf16.msra.mxu0 %v567
    %812 = vmatprep.subr.bf16.mxu0 0
    %813 = vmatpush1.bf16.msra.mxu0 %v568
    %814 = vmatprep.subr.bf16.mxu0 0
    %815 = vmatpush1.bf16.msra.mxu0 %v569
    %816 = vmatprep.subr.bf16.mxu0 0
    %817 = vmatpush1.bf16.msra.mxu0 %v570
    %818 = vmatprep.subr.bf16.mxu0 0
    %819 = vmatpush1.bf16.msra.mxu0 %v571
    %820 = vmatprep.subr.bf16.mxu0 0
    %821 = vmatpush1.bf16.msra.mxu0 0
    %822 = vmatprep.subr.bf16.mxu0 0
    %823 = vmatpush1.bf16.msra.mxu0 0
    %824 = vmatprep.subr.bf16.mxu0 0
    %825 = vmatpush1.bf16.msra.mxu0 0
    %826 = vmatprep.subr.bf16.mxu0 0
    %827 = vmatpush1.bf16.msra.mxu0 0
    %828 = vmatprep.subr.bf16.mxu0 0
    %829 = vmatpush1.bf16.msra.mxu0 0
    %830 = vmatprep.subr.bf16.mxu0 0
    %831 = vmatpush1.bf16.msra.mxu0 0
    %832 = vmatprep.subr.bf16.mxu0 0
    %833 = vmatpush1.bf16.msra.mxu0 0
    %834 = vmatprep.subr.bf16.mxu0 0
    %835 = vmatpush1.bf16.msra.mxu0 0
    %836 = vmatprep.mubr.bf16.mxu0 0
    %837 = vmatmul.mubr.bf16.gmra.mrb[0].mxu0 %v202
    %v838 = vpop.f32.mrb[0].mxu0
    %v839 = vadd.f32 %v799, %v838
    %v840 = vpop.f32.mrb[0].mxu0
    %v841 = vpop.f32.mrb[0].mxu0
    %v842 = vpop.f32.mrb[0].mxu0
    %843 = vdwg.mxu0
    %844 = vst [vmem:[#allocation2] sm:$0xff] %v839
    %p845 = scmp.eq.s32.totalorder 0, 0
    // Predicated region
    $region30: #{resnet_forward.17} parent=1 // pred_check
      %p846 = pneg %p845
    $region31: #{resnet_forward.17} parent=1 // pred_check_branch
      %848 = sbr.rel (%p846) target = $region33
    $region32: #{resnet_forward.17} parent=1 // pred_region
      %v849 = vld [vmem:[#allocation2] sm:$0xff]
      %v850 = vrot.slane %v849, 4
      %v851 = vadd.f32 %v849, %v850
      %v852 = vrot.slane %v851, 2
      %v853 = vadd.f32 %v851, %v852
      %v854 = vrot.slane %v853, 1
      %v855 = vadd.f32 %v853, %v854
      %v856 = vmul.f32 %v855, 0.125
      %v857 = vsub.f32 %v849, %v856
      %v858 = vmul.f32 %v857, %v857
      %v859 = vrot.slane %v858, 4
      %v860 = vadd.f32 %v858, %v859
      %v861 = vrot.slane %v860, 2
      %v862 = vadd.f32 %v860, %v861
      %v863 = vrot.slane %v862, 1
      %v864 = vadd.f32 %v862, %v863
      %v865 = vmul.f32 %v856, 0.0
      %v866 = vmul.f32 %v865, %v856
      %v867 = vsub.f32 %v864, %v866
      %v868 = vmul.f32 %v867, 0.125
      %v869 = vmax.f32 %v868, 0.0
      %v870 = vld [vmem:[%s2] sm:$0x1]
      %v871 = vadd.f32 %v869, 1e-05
      %v872 = vrsqrt.pop %v871
      %v873 = vmul.f32 %v870, %v872
      %v874 = vld [vmem:[%s2 + $0x1] sm:$0x1]
      %v875 = vmul.f32 %v856, %v873
      %v876 = vsub.f32 %v874, %v875
      %v877 = vlaneseq
      %v878 = vshrl.u32 %v877, 7
      %v879 = vsub.s32 0, %v878
      %v880 = vrot.slane %v873, %v879
      %v881 = vmul.f32 %v849, %v880
      %v882 = vlaneseq
      %v883 = vshrl.u32 %v882, 7
      %v884 = vsub.s32 0, %v883
      %v885 = vrot.slane %v876, %v884
      %v886 = vadd.f32 %v881, %v885
      %v887 = vld [vmem:[%s3] sm:$0xff]
      %v888 = vadd.f32 %v886, %v887
      %v889 = vmax.f32 %v888, 0.0
      %v890 = vpack.c.bf16 %v889, %v889
      %891 = vst [vmem:[#allocation3] sm:$0xf] %v890
      %v892 = vld [vmem:[%s4] sm:$0x3]
      %vm893 = vcmask 64512
      %v895 = vsel %vm893, %v892, 0
      %897 = vmatprep.subr.mxu0 0.0
      %898 = vmatpush1.msra.mxu0 %v889
      %899 = vmatprep.subr.mxu0 0.0
      %900 = vmatpush1.msra.mxu0 0.0
      %901 = vmatprep.subr.mxu0 0.0
      %902 = vmatpush1.msra.mxu0 0.0
      %903 = vmatprep.subr.mxu0 0.0
      %904 = vmatpush1.msra.mxu0 0.0
      %905 = vmatprep.subr.mxu0 0.0
      %906 = vmatpush1.msra.mxu0 0.0
      %907 = vmatprep.subr.mxu0 0.0
      %908 = vmatpush1.msra.mxu0 0.0
      %909 = vmatprep.subr.mxu0 0.0
      %910 = vmatpush1.msra.mxu0 0.0
      %911 = vmatprep.subr.mxu0 0.0
      %912 = vmatpush1.msra.mxu0 0.0
      %913 = vmatprep.subr.mxu0 0.0
      %914 = vmatpush1.msra.mxu0 0.0
      %915 = vmatprep.subr.mxu0 0.0
      %916 = vmatpush1.msra.mxu0 0.0
      %917 = vmatprep.subr.mxu0 0.0
      %918 = vmatpush1.msra.mxu0 0.0
      %919 = vmatprep.subr.mxu0 0.0
      %920 = vmatpush1.msra.mxu0 0.0
      %921 = vmatprep.subr.mxu0 0.0
      %922 = vmatpush1.msra.mxu0 0.0
      %923 = vmatprep.subr.mxu0 0.0
      %924 = vmatpush1.msra.mxu0 0.0
      %925 = vmatprep.subr.mxu0 0.0
      %926 = vmatpush1.msra.mxu0 0.0
      %927 = vmatprep.subr.mxu0 0.0
      %928 = vmatpush1.msra.mxu0 0.0
      %929 = vmatprep.subr.mxu0 0.0
      %930 = vmatpush1.msra.mxu0 0.0
      %931 = vmatprep.subr.mxu0 0.0
      %932 = vmatpush1.msra.mxu0 0.0
      %933 = vmatprep.subr.mxu0 0.0
      %934 = vmatpush1.msra.mxu0 0.0
      %935 = vmatprep.subr.mxu0 0.0
      %936 = vmatpush1.msra.mxu0 0.0
      %937 = vmatprep.subr.mxu0 0.0
      %938 = vmatpush1.msra.mxu0 0.0
      %939 = vmatprep.subr.mxu0 0.0
      %940 = vmatpush1.msra.mxu0 0.0
      %941 = vmatprep.subr.mxu0 0.0
      %942 = vmatpush1.msra.mxu0 0.0
      %943 = vmatprep.subr.mxu0 0.0
      %944 = vmatpush1.msra.mxu0 0.0
      %945 = vmatprep.subr.mxu0 0.0
      %946 = vmatpush1.msra.mxu0 0.0
      %947 = vmatprep.subr.mxu0 0.0
      %948 = vmatpush1.msra.mxu0 0.0
      %949 = vmatprep.subr.mxu0 0.0
      %950 = vmatpush1.msra.mxu0 0.0
      %951 = vmatprep.subr.mxu0 0.0
      %952 = vmatpush1.msra.mxu0 0.0
      %953 = vmatprep.subr.mxu0 0.0
      %954 = vmatpush1.msra.mxu0 0.0
      %955 = vmatprep.subr.mxu0 0.0
      %956 = vmatpush1.msra.mxu0 0.0
      %957 = vmatprep.subr.mxu0 0.0
      %958 = vmatpush1.msra.mxu0 0.0
      %959 = vmatprep.subr.mxu0 0.0
      %960 = vmatpush1.msra.mxu0 0.0
      %961 = vmatprep.mubr.f32.mxu0 0.0
      %962 = vmatmul.mubr.f32.gmra.mrb[0].mxu0 %v895
      %v963 = vpop.f32.mrb[0].mxu0
      %v964 = vadd.f32 0.0, %v963
      %v965 = vpop.f32.mrb[0].mxu0
      %966 = vdwg.mxu0
      %v967 = vld [vmem:[%s5] sm:$0xff]
      %v968 = vld [vmem:[%s5 + $0x8] sm:$0xff]
      %v969 = vld [vmem:[%s5 + $0x10] sm:$0xff]
      %v970 = vld [vmem:[%s5 + $0x18] sm:$0xff]
      %v971 = vld [vmem:[%s5 + $0x20] sm:$0xff]
      %v972 = vld [vmem:[%s5 + $0x28] sm:$0xff]
      %v973 = vld [vmem:[%s5 + $0x30] sm:$0xff]
      %v974 = vld [vmem:[%s5 + $0x38] sm:$0xff]
      %v975 = vld [vmem:[%s5 + $0x40] sm:$0xff]
      %v976 = vld [vmem:[%s5 + $0x48] sm:$0xff]
      %v977 = vld [vmem:[%s5 + $0x50] sm:$0xff]
      %v978 = vld [vmem:[%s5 + $0x58] sm:$0xff]
      %v979 = vld [vmem:[%s5 + $0x60] sm:$0xff]
      %v980 = vld [vmem:[%s5 + $0x68] sm:$0xff]
      %v981 = vld [vmem:[%s5 + $0x70] sm:$0xff]
      %v982 = vld [vmem:[%s5 + $0x78] sm:$0xff]
      %v983 = vld [vmem:[%s6] sm:$0x1]
      %v985 = vlaneseq
      %v986 = vshrl.u32 %v985, 7
      %v987 = vsub.s32 0, %v986
      %v988 = vrot.slane %v983, %v987
      %990 = vmatprep.subr.mxu0 0.0
      %991 = vmatpush1.msra.mxu0 %v967
      %992 = vmatprep.subr.mxu0 0.0
      %993 = vmatpush1.msra.mxu0 %v968
      %994 = vmatprep.subr.mxu0 0.0
      %995 = vmatpush1.msra.mxu0 %v969
      %996 = vmatprep.subr.mxu0 0.0
      %997 = vmatpush1.msra.mxu0 %v970
      %998 = vmatprep.subr.mxu0 0.0
      %999 = vmatpush1.msra.mxu0 %v971
      %1000 = vmatprep.subr.mxu0 0.0
      %1001 = vmatpush1.msra.mxu0 %v972
      %1002 = vmatprep.subr.mxu0 0.0
      %1003 = vmatpush1.msra.mxu0 %v973
      %1004 = vmatprep.subr.mxu0 0.0
      %1005 = vmatpush1.msra.mxu0 %v974
      %1006 = vmatprep.subr.mxu0 0.0
      %1007 = vmatpush1.msra.mxu0 %v975
      %1008 = vmatprep.subr.mxu0 0.0
      %1009 = vmatpush1.msra.mxu0 %v976
      %1010 = vmatprep.subr.mxu0 0.0
      %1011 = vmatpush1.msra.mxu0 %v977
      %1012 = vmatprep.subr.mxu0 0.0
      %1013 = vmatpush1.msra.mxu0 %v978
      %1014 = vmatprep.subr.mxu0 0.0
      %1015 = vmatpush1.msra.mxu0 %v979
      %1016 = vmatprep.subr.mxu0 0.0
      %1017 = vmatpush1.msra.mxu0 %v980
      %1018 = vmatprep.subr.mxu0 0.0
      %1019 = vmatpush1.msra.mxu0 %v981
      %1020 = vmatprep.subr.mxu0 0.0
      %1021 = vmatpush1.msra.mxu0 %v982
      %1022 = vmatprep.subr.mxu0 0.0
      %1023 = vmatpush1.msra.mxu0 0.0
      %1024 = vmatprep.subr.mxu0 0.0
      %1025 = vmatpush1.msra.mxu0 0.0
      %1026 = vmatprep.subr.mxu0 0.0
      %1027 = vmatpush1.msra.mxu0 0.0
      %1028 = vmatprep.subr.mxu0 0.0
      %1029 = vmatpush1.msra.mxu0 0.0
      %1030 = vmatprep.subr.mxu0 0.0
      %1031 = vmatpush1.msra.mxu0 0.0
      %1032 = vmatprep.subr.mxu0 0.0
      %1033 = vmatpush1.msra.mxu0 0.0
      %1034 = vmatprep.subr.mxu0 0.0
      %1035 = vmatpush1.msra.mxu0 0.0
      %1036 = vmatprep.subr.mxu0 0.0
      %1037 = vmatpush1.msra.mxu0 0.0
      %1038 = vmatprep.subr.mxu0 0.0
      %1039 = vmatpush1.msra.mxu0 0.0
      %1040 = vmatprep.subr.mxu0 0.0
      %1041 = vmatpush1.msra.mxu0 0.0
      %1042 = vmatprep.subr.mxu0 0.0
      %1043 = vmatpush1.msra.mxu0 0.0
      %1044 = vmatprep.subr.mxu0 0.0
      %1045 = vmatpush1.msra.mxu0 0.0
      %1046 = vmatprep.subr.mxu0 0.0
      %1047 = vmatpush1.msra.mxu0 0.0
      %1048 = vmatprep.subr.mxu0 0.0
      %1049 = vmatpush1.msra.mxu0 0.0
      %1050 = vmatprep.subr.mxu0 0.0
      %1051 = vmatpush1.msra.mxu0 0.0
      %1052 = vmatprep.subr.mxu0 0.0
      %1053 = vmatpush1.msra.mxu0 0.0
      %1054 = vmatprep.mubr.f32.mxu0 0.0
      %1055 = vmatmul.mubr.f32.gmra.mrb[0].mxu0 %v964
      %v1056 = vpop.f32.mrb[0].mxu0
      %v1057 = vadd.f32 %v988, %v1056
      %v1058 = vpop.f32.mrb[0].mxu0
      %1059 = vdwg.mxu0
      %1060 = vst [vmem:[#allocation5] sm:$0x3] %v1057
    $region33: #{resnet_forward.17} parent=1 // pred_fallthru
      _
    // Predicated region
    $region34: #{resnet_forward.17} parent=1 // pred_check
      _
    $region35: #{resnet_forward.17} parent=1 // pred_check_branch
      %1062 = sbr.rel (0) target = $region37
    $region36: #{resnet_forward.17} parent=1 // pred_region
      %s1064 = ssub.s32 64, 64
      %1065 = vsyncadd [#allocation4], %s1064
      %s1067 = sshll.u32 [#allocation3], 4
      %s1068 = int_to_ptr.vmem [resolvable:$true] %s1067
      %1070 = dma.vmem_to_hbm [thread:$0]  %s1068, 64, %s7, [#allocation4]
    $region37: #{resnet_forward.17} parent=1 // pred_fallthru
      _
    // Predicated region
    $region38: #{resnet_forward.17} parent=1 // pred_check
      _
    $region39: #{resnet_forward.17} parent=1 // pred_check_branch
      %1072 = sbr.rel (0) target = $region41
    $region40: #{resnet_forward.17} parent=1 // pred_region
      %s1074 = ssub.s32 32, 32
      %1075 = vsyncadd [#allocation6], %s1074
      %s1077 = sshll.u32 [#allocation5], 4
      %s1078 = int_to_ptr.vmem [resolvable:$true] %s1077
      %1080 = dma.vmem_to_hbm [thread:$0]  %s1078, 32, %s8, [#allocation6]
    $region41: #{resnet_forward.17} parent=1 // pred_fallthru
      _
    // Predicated region
    $region42: #{resnet_forward.17} parent=1 // pred_check
      _
    $region43: #{resnet_forward.17} parent=1 // pred_check_branch
      %1082 = sbr.rel (0) target = $region45
    $region44: #{resnet_forward.17} parent=1 // pred_region
      %1083 = dma.done [#allocation4], 64
    $region45: #{resnet_forward.17} parent=1 // pred_fallthru
      _
    // Predicated region
    $region46: #{resnet_forward.17} parent=1 // pred_check
      _
    $region47: #{resnet_forward.17} parent=1 // pred_check_branch
      %1085 = sbr.rel (0) target = $region49
    $region48: #{resnet_forward.17} parent=1 // pred_region
      %1086 = dma.done [#allocation6], 32
    $region49: #{resnet_forward.17} parent=1 // pred_fallthru
      _
    %1087 = vsyncpa [#allocation4], 1
    %1088 = vsyncpa [#allocation6], 1

</llo_original>
